<compile_context>
chip_gen: v6e
topology: v6e:2x2x1
jax: 0.10.0
libtpu: 0.0.40
codegen_flags: <defaults>
</compile_context>

<pallas_src>
import math

import jax
import jax.numpy as jnp
from jax import lax
from jax.experimental import pallas as pl
from jax.experimental.pallas import tpu as pltpu

NZ = 100            # noise dims
EMB = 10            # digit-embedding dims
N_CLASSES = 10
NGF = 16
NC = 1
BN_EPS = 1e-5
L1_HW = 4           # layer-1 output spatial size (4x4)
L1_SP = L1_HW * L1_HW


# ----------------------------- Pallas kernels ------------------------------

def l1_matmul_bn_relu_kernel(x_ref, w_ref, fold_ref, bcast_ref, g_ref, b_ref, o_ref):
    # x: [N, 110]   w: [110, 16*64] with feature order (h, w, c)
    # fold: [16*64, 64] one-hot channel fold,  bcast = fold.T
    # g/b: [1, 16*64] gamma/beta pre-tiled over the 16 spatial positions.
    y = jnp.dot(x_ref[...], w_ref[...], preferred_element_type=jnp.float32)   # [N, 1024]
    col_m = jnp.mean(y, axis=0, keepdims=True)                                # [1, 1024]
    col_m2 = jnp.mean(y * y, axis=0, keepdims=True)
    ch_m = jnp.dot(col_m, fold_ref[...], preferred_element_type=jnp.float32) * (1.0 / L1_SP)
    ch_m2 = jnp.dot(col_m2, fold_ref[...], preferred_element_type=jnp.float32) * (1.0 / L1_SP)
    inv = lax.rsqrt(ch_m2 - ch_m * ch_m + BN_EPS)                             # [1, 64]
    mean_b = jnp.dot(ch_m, bcast_ref[...], preferred_element_type=jnp.float32)  # [1, 1024]
    inv_b = jnp.dot(inv, bcast_ref[...], preferred_element_type=jnp.float32)
    yn = (y - mean_b) * inv_b * g_ref[...] + b_ref[...]
    o_ref[...] = jnp.maximum(yn, 0.0)


def matmul_bn_relu_kernel(p_ref, w_ref, g_ref, b_ref, o_ref):
    # p: [M, K] patches (rows = (n, oh, ow)),  w: [K, Cout]
    # Training-mode BatchNorm: batch stats per channel over all rows, one-pass sum/sumsq.
    y = jnp.dot(p_ref[...], w_ref[...], preferred_element_type=jnp.float32)
    m = jnp.mean(y, axis=0, keepdims=True)
    m2 = jnp.mean(y * y, axis=0, keepdims=True)
    yn = (y - m) * lax.rsqrt(m2 - m * m + BN_EPS) * g_ref[...] + b_ref[...]
    o_ref[...] = jnp.maximum(yn, 0.0)


def matmul_tanh_kernel(p_ref, w_ref, o_ref):
    y = jnp.dot(p_ref[...], w_ref[...], preferred_element_type=jnp.float32)
    o_ref[...] = jnp.tanh(y)


def _vmem_call(kernel, out_shape, *args, flops=0, transcendentals=0):
    """Run a kernel with every operand as a whole-array VMEM block (shapes are tiny)."""
    bytes_accessed = int(sum(a.size * a.dtype.itemsize for a in args)
                         + math.prod(out_shape.shape) * out_shape.dtype.itemsize)
    return pl.pallas_call(
        kernel,
        out_shape=out_shape,
        in_specs=[pl.BlockSpec(memory_space=pltpu.MemorySpace.VMEM)] * len(args),
        out_specs=pl.BlockSpec(memory_space=pltpu.MemorySpace.VMEM),
        cost_estimate=pl.CostEstimate(flops=int(flops),
                                      transcendentals=int(transcendentals),
                                      bytes_accessed=bytes_accessed),
    )(*args)


# ------------------------------ XLA glue ------------------------------------

def _deconv_patches(a, k, stride, p):
    """Transposed-conv -> conv equivalence on NHWC activations.

    a: [N, H, W, C]. Zero-dilate spatially by (stride-1), edge-pad by (k-1-p),
    then gather stride-1 kxk patches. Returns ([N*Ho*Wo, k*k*C], Ho, Wo) with
    patch-feature order (kh, kw, c) and row order (n, oh, ow)."""
    n, h, w, c = a.shape
    ep = k - 1 - p
    zero = jnp.array(0, dtype=a.dtype)
    ap = lax.pad(a, zero, ((0, 0, 0), (ep, ep, stride - 1), (ep, ep, stride - 1), (0, 0, 0)))
    ho = (h - 1) * stride - 2 * p + k
    wo = (w - 1) * stride - 2 * p + k
    cols = [ap[:, i:i + ho, j:j + wo, :] for i in range(k) for j in range(k)]
    pat = jnp.concatenate(cols, axis=-1)                    # [N, Ho, Wo, k*k*C]
    return pat.reshape(n * ho * wo, k * k * c), ho, wo


def _deconv_weight_matrix(wt):
    """PyTorch ConvTranspose2d weight [Cin, Cout, k, k] -> matmul weight [k*k*Cin, Cout]
    for the equivalent stride-1 conv (spatial flip + in/out channel swap), with row
    ordering (kh, kw, cin) matching _deconv_patches."""
    cin, cout, kh, kw = wt.shape
    w = jnp.flip(wt, axis=(2, 3)).transpose(2, 3, 0, 1)     # [kh, kw, Cin, Cout]
    return w.reshape(kh * kw * cin, cout)


def init_params(key):
    ks = jax.random.split(key, 11)

    def nrm(k, shape, scale=0.05):
        return scale * jax.random.normal(k, shape, jnp.float32)

    # Raw (PyTorch-layout) parameters.
    raw = {
        "emb": nrm(ks[0], (N_CLASSES, EMB), 1.0),
        "wt1": nrm(ks[1], (NZ + EMB, NGF * 4, 4, 4)),   # ConvTranspose2d(110, 64, 4, 1, 0)
        "wt2": nrm(ks[2], (NGF * 4, NGF * 2, 3, 3)),    # ConvTranspose2d( 64, 32, 3, 2, 1)
        "wt3": nrm(ks[3], (NGF * 2, NGF, 4, 4)),        # ConvTranspose2d( 32, 16, 4, 2, 1)
        "wt4": nrm(ks[4], (NGF, NC, 4, 4)),             # ConvTranspose2d( 16,  1, 4, 2, 1)
        "g1": 1.0 + 0.1 * jax.random.normal(ks[5], (NGF * 4,), jnp.float32),
        "b1": 0.1 * jax.random.normal(ks[6], (NGF * 4,), jnp.float32),
        "g2": 1.0 + 0.1 * jax.random.normal(ks[7], (NGF * 2,), jnp.float32),
        "b2": 0.1 * jax.random.normal(ks[8], (NGF * 2,), jnp.float32),
        "g3": 1.0 + 0.1 * jax.random.normal(ks[9], (NGF,), jnp.float32),
        "b3": 0.1 * jax.random.normal(ks[10], (NGF,), jnp.float32),
    }

    # One-time weight pre-transforms (matmul-ready, no per-call transposes/reshapes).
    fold1 = jnp.tile(jnp.eye(NGF * 4, dtype=jnp.float32), (L1_SP, 1))      # [1024, 64]
    params = {
        "emb": raw["emb"],
        # layer 1: [110] -> [(h, w, c)] so the output reshapes straight to NHWC.
        "w1m": raw["wt1"].transpose(0, 2, 3, 1).reshape(NZ + EMB, L1_SP * NGF * 4),
        "fold1": fold1,
        "bcast1": fold1.T,
        "g1t": jnp.tile(raw["g1"], L1_SP)[None, :],
        "b1t": jnp.tile(raw["b1"], L1_SP)[None, :],
        "w2m": _deconv_weight_matrix(raw["wt2"]),        # [576, 32]
        "g2": raw["g2"][None, :], "b2": raw["b2"][None, :],
        "w3m": _deconv_weight_matrix(raw["wt3"]),        # [512, 16]
        "g3": raw["g3"][None, :], "b3": raw["b3"][None, :],
        "w4m": _deconv_weight_matrix(raw["wt4"]),        # [256, 1]
    }
    return params, raw


@jax.jit
def generator_forward(noise, digit, params):
    n = noise.shape[0]
    emb = jnp.take(params["emb"], digit, axis=0)                    # [N, 10]
    x = jnp.concatenate([emb, noise], axis=-1)                      # [N, 110]

    # L1: ConvTranspose(110->64, k4, s1, p0) on a 1x1 input == matmul, fused BN+ReLU.
    y1 = _vmem_call(l1_matmul_bn_relu_kernel,
                    jax.ShapeDtypeStruct((n, L1_SP * NGF * 4), jnp.float32),
                    x, params["w1m"], params["fold1"], params["bcast1"],
                    params["g1t"], params["b1t"],
                    flops=2 * n * (NZ + EMB) * L1_SP * NGF * 4, transcendentals=NGF * 4)
    a1 = y1.reshape(n, L1_HW, L1_HW, NGF * 4)                       # NHWC, no transpose

    # L2: ConvTranspose(64->32, k3, s2, p1): 4x4 -> 7x7, fused BN+ReLU.
    p2, h2, w2 = _deconv_patches(a1, 3, 2, 1)                       # [N*49, 576]
    y2 = _vmem_call(matmul_bn_relu_kernel,
                    jax.ShapeDtypeStruct((p2.shape[0], NGF * 2), jnp.float32),
                    p2, params["w2m"], params["g2"], params["b2"],
                    flops=2 * p2.shape[0] * p2.shape[1] * NGF * 2, transcendentals=NGF * 2)
    a2 = y2.reshape(n, h2, w2, NGF * 2)

    # L3: ConvTranspose(32->16, k4, s2, p1): 7x7 -> 14x14, fused BN+ReLU.
    p3, h3, w3 = _deconv_patches(a2, 4, 2, 1)                       # [N*196, 512]
    y3 = _vmem_call(matmul_bn_relu_kernel,
                    jax.ShapeDtypeStruct((p3.shape[0], NGF), jnp.float32),
                    p3, params["w3m"], params["g3"], params["b3"],
                    flops=2 * p3.shape[0] * p3.shape[1] * NGF, transcendentals=NGF)
    a3 = y3.reshape(n, h3, w3, NGF)

    # L4: ConvTranspose(16->1, k4, s2, p1): 14x14 -> 28x28, fused Tanh.
    p4, h4, w4 = _deconv_patches(a3, 4, 2, 1)                       # [N*784, 256]
    y4 = _vmem_call(matmul_tanh_kernel,
                    jax.ShapeDtypeStruct((p4.shape[0], NC), jnp.float32),
                    p4, params["w4m"],
                    flops=2 * p4.shape[0] * p4.shape[1] * NC, transcendentals=p4.shape[0])

    # rows are (n, oh, ow), channel dim is size 1 -> NCHW is a pure reshape (no transpose).
    return y4.reshape(n, NC, h4, w4)


# ------------------------- pure-JAX reference (check) ------------------------

def reference_forward(noise, digit, raw):
    n = noise.shape[0]
    x = jnp.concatenate([raw["emb"][digit], noise], axis=-1).reshape(n, NZ + EMB, 1, 1)

    def deconv(x, wt, stride, pad):
        k = wt.shape[-1]
        w = jnp.flip(wt, axis=(2, 3)).transpose(1, 0, 2, 3)          # OIHW
        return lax.conv_general_dilated(
            x, w, window_strides=(1, 1),
            padding=[(k - 1 - pad, k - 1 - pad)] * 2,
            lhs_dilation=(stride, stride),
            dimension_numbers=("NCHW", "OIHW", "NCHW"),
            precision=lax.Precision.HIGHEST)

    def bn(y, g, b):   # training-mode batch stats, biased variance
        m = y.mean(axis=(0, 2, 3), keepdims=True)
        v = ((y - m) ** 2).mean(axis=(0, 2, 3), keepdims=True)
        return (y - m) * lax.rsqrt(v + BN_EPS) * g.reshape(1, -1, 1, 1) + b.reshape(1, -1, 1, 1)

    y = jax.nn.relu(bn(deconv(x, raw["wt1"], 1, 0), raw["g1"], raw["b1"]))
    y = jax.nn.relu(bn(deconv(y, raw["wt2"], 2, 1), raw["g2"], raw["b2"]))
    y = jax.nn.relu(bn(deconv(y, raw["wt3"], 2, 1), raw["g3"], raw["b3"]))
    return jnp.tanh(deconv(y, raw["wt4"], 2, 1))


# ----------------------------------- main ------------------------------------

if __name__ == "__main__":
    key = jax.random.PRNGKey(0)
    k_noise, k_digit, k_param = jax.random.split(key, 3)

    b_size = 2
    noise = jax.random.normal(k_noise, (b_size, NZ), jnp.float32)
    digit = jax.random.randint(k_digit, (b_size,), 0, N_CLASSES, jnp.int32)
    params, raw = init_params(k_param)

    out = jax.block_until_ready(generator_forward(noise, digit, params))
    assert out.shape == (b_size, NC, 28, 28), out.shape

    ref = jax.block_until_ready(reference_forward(noise, digit, raw))
    max_err = float(jnp.max(jnp.abs(out - ref)))
    assert jnp.allclose(out, ref, atol=2e-3, rtol=2e-3), max_err

    print("KERNEL_OK")
</pallas_src>

<mosaic_0001>
module attributes {stable_mosaic.version = 11 : i64} {
  func.func @l1_matmul_bn_relu_kernel(%arg0: memref<2x110xf32, #tpu.memory_space<vmem>>, %arg1: memref<110x1024xf32, #tpu.memory_space<vmem>>, %arg2: memref<1024x64xf32, #tpu.memory_space<vmem>>, %arg3: memref<64x1024xf32, #tpu.memory_space<vmem>>, %arg4: memref<1x1024xf32, #tpu.memory_space<vmem>>, %arg5: memref<1x1024xf32, #tpu.memory_space<vmem>>, %arg6: memref<2x1024xf32, #tpu.memory_space<vmem>>) attributes {dimension_semantics = [], scalar_prefetch = 0 : i64, scratch_operands = 0 : i64, tpu.core_type = #tpu.core_type<tc>} {
    %c0 = arith.constant 0 : index
    %c0_0 = arith.constant 0 : index
    %0 = vector.load %arg0[%c0, %c0_0] : memref<2x110xf32, #tpu.memory_space<vmem>>, vector<2x110xf32>
    %c0_1 = arith.constant 0 : index
    %c0_2 = arith.constant 0 : index
    %1 = vector.load %arg1[%c0_1, %c0_2] : memref<110x1024xf32, #tpu.memory_space<vmem>>, vector<110x1024xf32>
    %cst = arith.constant dense<0.000000e+00> : vector<2x1024xf32>
    %2 = tpu.matmul %0, %1, %cst {dimension_numbers = #tpu.dot_dimension_numbers<[1], [0], [0], [1], [0, 0, 1, 1], [], []>} : vector<2x110xf32>, vector<110x1024xf32>, vector<2x1024xf32> -> vector<2x1024xf32>
    %cst_3 = arith.constant dense<0.000000e+00> : vector<1024xf32>
    %3 = vector.multi_reduction <add>, %2, %cst_3 [0] : vector<2x1024xf32> to vector<1024xf32>
    %4 = vector.shape_cast %3 : vector<1024xf32> to vector<1x1024xf32>
    %cst_4 = arith.constant 2.000000e+00 : f32
    %5 = vector.broadcast %cst_4 : f32 to vector<1x1024xf32>
    %6 = arith.divf %4, %5 : vector<1x1024xf32>
    %7 = arith.mulf %2, %2 : vector<2x1024xf32>
    %cst_5 = arith.constant dense<0.000000e+00> : vector<1024xf32>
    %8 = vector.multi_reduction <add>, %7, %cst_5 [0] : vector<2x1024xf32> to vector<1024xf32>
    %9 = vector.shape_cast %8 : vector<1024xf32> to vector<1x1024xf32>
    %cst_6 = arith.constant 2.000000e+00 : f32
    %10 = vector.broadcast %cst_6 : f32 to vector<1x1024xf32>
    %11 = arith.divf %9, %10 : vector<1x1024xf32>
    %c0_7 = arith.constant 0 : index
    %c0_8 = arith.constant 0 : index
    %12 = vector.load %arg2[%c0_7, %c0_8] : memref<1024x64xf32, #tpu.memory_space<vmem>>, vector<1024x64xf32>
    %cst_9 = arith.constant dense<0.000000e+00> : vector<1x64xf32>
    %13 = tpu.matmul %6, %12, %cst_9 {dimension_numbers = #tpu.dot_dimension_numbers<[1], [0], [0], [1], [0, 0, 1, 1], [], []>} : vector<1x1024xf32>, vector<1024x64xf32>, vector<1x64xf32> -> vector<1x64xf32>
    %cst_10 = arith.constant 6.250000e-02 : f32
    %14 = vector.broadcast %cst_10 : f32 to vector<1x64xf32>
    %15 = arith.mulf %13, %14 : vector<1x64xf32>
    %c0_11 = arith.constant 0 : index
    %c0_12 = arith.constant 0 : index
    %16 = vector.load %arg2[%c0_11, %c0_12] : memref<1024x64xf32, #tpu.memory_space<vmem>>, vector<1024x64xf32>
    %cst_13 = arith.constant dense<0.000000e+00> : vector<1x64xf32>
    %17 = tpu.matmul %11, %16, %cst_13 {dimension_numbers = #tpu.dot_dimension_numbers<[1], [0], [0], [1], [0, 0, 1, 1], [], []>} : vector<1x1024xf32>, vector<1024x64xf32>, vector<1x64xf32> -> vector<1x64xf32>
    %cst_14 = arith.constant 6.250000e-02 : f32
    %18 = vector.broadcast %cst_14 : f32 to vector<1x64xf32>
    %19 = arith.mulf %17, %18 : vector<1x64xf32>
    %20 = arith.mulf %15, %15 : vector<1x64xf32>
    %21 = arith.subf %19, %20 : vector<1x64xf32>
    %cst_15 = arith.constant 9.99999974E-6 : f32
    %22 = vector.broadcast %cst_15 : f32 to vector<1x64xf32>
    %23 = arith.addf %21, %22 : vector<1x64xf32>
    %24 = math.rsqrt %23 : vector<1x64xf32>
    %c0_16 = arith.constant 0 : index
    %c0_17 = arith.constant 0 : index
    %25 = vector.load %arg3[%c0_16, %c0_17] : memref<64x1024xf32, #tpu.memory_space<vmem>>, vector<64x1024xf32>
    %cst_18 = arith.constant dense<0.000000e+00> : vector<1x1024xf32>
    %26 = tpu.matmul %15, %25, %cst_18 {dimension_numbers = #tpu.dot_dimension_numbers<[1], [0], [0], [1], [0, 0, 1, 1], [], []>} : vector<1x64xf32>, vector<64x1024xf32>, vector<1x1024xf32> -> vector<1x1024xf32>
    %c0_19 = arith.constant 0 : index
    %c0_20 = arith.constant 0 : index
    %27 = vector.load %arg3[%c0_19, %c0_20] : memref<64x1024xf32, #tpu.memory_space<vmem>>, vector<64x1024xf32>
    %cst_21 = arith.constant dense<0.000000e+00> : vector<1x1024xf32>
    %28 = tpu.matmul %24, %27, %cst_21 {dimension_numbers = #tpu.dot_dimension_numbers<[1], [0], [0], [1], [0, 0, 1, 1], [], []>} : vector<1x64xf32>, vector<64x1024xf32>, vector<1x1024xf32> -> vector<1x1024xf32>
    %29 = vector.broadcast %26 : vector<1x1024xf32> to vector<2x1024xf32>
    %30 = arith.subf %2, %29 : vector<2x1024xf32>
    %31 = vector.broadcast %28 : vector<1x1024xf32> to vector<2x1024xf32>
    %32 = arith.mulf %30, %31 : vector<2x1024xf32>
    %c0_22 = arith.constant 0 : index
    %c0_23 = arith.constant 0 : index
    %33 = vector.load %arg4[%c0_22, %c0_23] : memref<1x1024xf32, #tpu.memory_space<vmem>>, vector<1x1024xf32>
    %34 = vector.broadcast %33 : vector<1x1024xf32> to vector<2x1024xf32>
    %35 = arith.mulf %32, %34 : vector<2x1024xf32>
    %c0_24 = arith.constant 0 : index
    %c0_25 = arith.constant 0 : index
    %36 = vector.load %arg5[%c0_24, %c0_25] : memref<1x1024xf32, #tpu.memory_space<vmem>>, vector<1x1024xf32>
    %37 = vector.broadcast %36 : vector<1x1024xf32> to vector<2x1024xf32>
    %38 = arith.addf %35, %37 : vector<2x1024xf32>
    %cst_26 = arith.constant 0.000000e+00 : f32
    %39 = vector.broadcast %cst_26 : f32 to vector<2x1024xf32>
    %40 = arith.maximumf %38, %39 : vector<2x1024xf32>
    %c0_27 = arith.constant 0 : index
    %c0_28 = arith.constant 0 : index
    %41 = vector.load %arg6[%c0_27, %c0_28] : memref<2x1024xf32, #tpu.memory_space<vmem>>, vector<2x1024xf32>
    tpu.vector_store %arg6[%c0_27, %c0_28], %40 {strides = array<i32>} : memref<2x1024xf32, #tpu.memory_space<vmem>>, vector<2x1024xf32>,
    return
  }
}

module attributes {stable_mosaic.version = 11 : i64} {
  func.func @matmul_bn_relu_kernel(%arg0: memref<98x576xf32, #tpu.memory_space<vmem>>, %arg1: memref<576x32xf32, #tpu.memory_space<vmem>>, %arg2: memref<1x32xf32, #tpu.memory_space<vmem>>, %arg3: memref<1x32xf32, #tpu.memory_space<vmem>>, %arg4: memref<98x32xf32, #tpu.memory_space<vmem>>) attributes {dimension_semantics = [], scalar_prefetch = 0 : i64, scratch_operands = 0 : i64, tpu.core_type = #tpu.core_type<tc>} {
    %c0 = arith.constant 0 : index
    %c0_0 = arith.constant 0 : index
    %0 = vector.load %arg0[%c0, %c0_0] : memref<98x576xf32, #tpu.memory_space<vmem>>, vector<98x576xf32>
    %c0_1 = arith.constant 0 : index
    %c0_2 = arith.constant 0 : index
    %1 = vector.load %arg1[%c0_1, %c0_2] : memref<576x32xf32, #tpu.memory_space<vmem>>, vector<576x32xf32>
    %cst = arith.constant dense<0.000000e+00> : vector<98x32xf32>
    %2 = tpu.matmul %0, %1, %cst {dimension_numbers = #tpu.dot_dimension_numbers<[1], [0], [0], [1], [0, 0, 1, 1], [], []>} : vector<98x576xf32>, vector<576x32xf32>, vector<98x32xf32> -> vector<98x32xf32>
    %cst_3 = arith.constant dense<0.000000e+00> : vector<32xf32>
    %3 = vector.multi_reduction <add>, %2, %cst_3 [0] : vector<98x32xf32> to vector<32xf32>
    %4 = vector.shape_cast %3 : vector<32xf32> to vector<1x32xf32>
    %cst_4 = arith.constant 9.800000e+01 : f32
    %5 = vector.broadcast %cst_4 : f32 to vector<1x32xf32>
    %6 = arith.divf %4, %5 : vector<1x32xf32>
    %7 = arith.mulf %2, %2 : vector<98x32xf32>
    %cst_5 = arith.constant dense<0.000000e+00> : vector<32xf32>
    %8 = vector.multi_reduction <add>, %7, %cst_5 [0] : vector<98x32xf32> to vector<32xf32>
    %9 = vector.shape_cast %8 : vector<32xf32> to vector<1x32xf32>
    %cst_6 = arith.constant 9.800000e+01 : f32
    %10 = vector.broadcast %cst_6 : f32 to vector<1x32xf32>
    %11 = arith.divf %9, %10 : vector<1x32xf32>
    %12 = vector.broadcast %6 : vector<1x32xf32> to vector<98x32xf32>
    %13 = arith.subf %2, %12 : vector<98x32xf32>
    %14 = arith.mulf %6, %6 : vector<1x32xf32>
    %15 = arith.subf %11, %14 : vector<1x32xf32>
    %cst_7 = arith.constant 9.99999974E-6 : f32
    %16 = vector.broadcast %cst_7 : f32 to vector<1x32xf32>
    %17 = arith.addf %15, %16 : vector<1x32xf32>
    %18 = math.rsqrt %17 : vector<1x32xf32>
    %19 = vector.broadcast %18 : vector<1x32xf32> to vector<98x32xf32>
    %20 = arith.mulf %13, %19 : vector<98x32xf32>
    %c0_8 = arith.constant 0 : index
    %c0_9 = arith.constant 0 : index
    %21 = vector.load %arg2[%c0_8, %c0_9] : memref<1x32xf32, #tpu.memory_space<vmem>>, vector<1x32xf32>
    %22 = vector.broadcast %21 : vector<1x32xf32> to vector<98x32xf32>
    %23 = arith.mulf %20, %22 : vector<98x32xf32>
    %c0_10 = arith.constant 0 : index
    %c0_11 = arith.constant 0 : index
    %24 = vector.load %arg3[%c0_10, %c0_11] : memref<1x32xf32, #tpu.memory_space<vmem>>, vector<1x32xf32>
    %25 = vector.broadcast %24 : vector<1x32xf32> to vector<98x32xf32>
    %26 = arith.addf %23, %25 : vector<98x32xf32>
    %cst_12 = arith.constant 0.000000e+00 : f32
    %27 = vector.broadcast %cst_12 : f32 to vector<98x32xf32>
    %28 = arith.maximumf %26, %27 : vector<98x32xf32>
    %c0_13 = arith.constant 0 : index
    %c0_14 = arith.constant 0 : index
    %29 = vector.load %arg4[%c0_13, %c0_14] : memref<98x32xf32, #tpu.memory_space<vmem>>, vector<98x32xf32>
    tpu.vector_store %arg4[%c0_13, %c0_14], %28 {strides = array<i32>} : memref<98x32xf32, #tpu.memory_space<vmem>>, vector<98x32xf32>,
    return
  }
}

module attributes {stable_mosaic.version = 11 : i64} {
  func.func @matmul_bn_relu_kernel(%arg0: memref<392x512xf32, #tpu.memory_space<vmem>>, %arg1: memref<512x16xf32, #tpu.memory_space<vmem>>, %arg2: memref<1x16xf32, #tpu.memory_space<vmem>>, %arg3: memref<1x16xf32, #tpu.memory_space<vmem>>, %arg4: memref<392x16xf32, #tpu.memory_space<vmem>>) attributes {dimension_semantics = [], scalar_prefetch = 0 : i64, scratch_operands = 0 : i64, tpu.core_type = #tpu.core_type<tc>} {
    %c0 = arith.constant 0 : index
    %c0_0 = arith.constant 0 : index
    %0 = vector.load %arg0[%c0, %c0_0] : memref<392x512xf32, #tpu.memory_space<vmem>>, vector<392x512xf32>
    %c0_1 = arith.constant 0 : index
    %c0_2 = arith.constant 0 : index
    %1 = vector.load %arg1[%c0_1, %c0_2] : memref<512x16xf32, #tpu.memory_space<vmem>>, vector<512x16xf32>
    %cst = arith.constant dense<0.000000e+00> : vector<392x16xf32>
    %2 = tpu.matmul %0, %1, %cst {dimension_numbers = #tpu.dot_dimension_numbers<[1], [0], [0], [1], [0, 0, 1, 1], [], []>} : vector<392x512xf32>, vector<512x16xf32>, vector<392x16xf32> -> vector<392x16xf32>
    %cst_3 = arith.constant dense<0.000000e+00> : vector<16xf32>
    %3 = vector.multi_reduction <add>, %2, %cst_3 [0] : vector<392x16xf32> to vector<16xf32>
    %4 = vector.shape_cast %3 : vector<16xf32> to vector<1x16xf32>
    %cst_4 = arith.constant 3.920000e+02 : f32
    %5 = vector.broadcast %cst_4 : f32 to vector<1x16xf32>
    %6 = arith.divf %4, %5 : vector<1x16xf32>
    %7 = arith.mulf %2, %2 : vector<392x16xf32>
    %cst_5 = arith.constant dense<0.000000e+00> : vector<16xf32>
    %8 = vector.multi_reduction <add>, %7, %cst_5 [0] : vector<392x16xf32> to vector<16xf32>
    %9 = vector.shape_cast %8 : vector<16xf32> to vector<1x16xf32>
    %cst_6 = arith.constant 3.920000e+02 : f32
    %10 = vector.broadcast %cst_6 : f32 to vector<1x16xf32>
    %11 = arith.divf %9, %10 : vector<1x16xf32>
    %12 = vector.broadcast %6 : vector<1x16xf32> to vector<392x16xf32>
    %13 = arith.subf %2, %12 : vector<392x16xf32>
    %14 = arith.mulf %6, %6 : vector<1x16xf32>
    %15 = arith.subf %11, %14 : vector<1x16xf32>
    %cst_7 = arith.constant 9.99999974E-6 : f32
    %16 = vector.broadcast %cst_7 : f32 to vector<1x16xf32>
    %17 = arith.addf %15, %16 : vector<1x16xf32>
    %18 = math.rsqrt %17 : vector<1x16xf32>
    %19 = vector.broadcast %18 : vector<1x16xf32> to vector<392x16xf32>
    %20 = arith.mulf %13, %19 : vector<392x16xf32>
    %c0_8 = arith.constant 0 : index
    %c0_9 = arith.constant 0 : index
    %21 = vector.load %arg2[%c0_8, %c0_9] : memref<1x16xf32, #tpu.memory_space<vmem>>, vector<1x16xf32>
    %22 = vector.broadcast %21 : vector<1x16xf32> to vector<392x16xf32>
    %23 = arith.mulf %20, %22 : vector<392x16xf32>
    %c0_10 = arith.constant 0 : index
    %c0_11 = arith.constant 0 : index
    %24 = vector.load %arg3[%c0_10, %c0_11] : memref<1x16xf32, #tpu.memory_space<vmem>>, vector<1x16xf32>
    %25 = vector.broadcast %24 : vector<1x16xf32> to vector<392x16xf32>
    %26 = arith.addf %23, %25 : vector<392x16xf32>
    %cst_12 = arith.constant 0.000000e+00 : f32
    %27 = vector.broadcast %cst_12 : f32 to vector<392x16xf32>
    %28 = arith.maximumf %26, %27 : vector<392x16xf32>
    %c0_13 = arith.constant 0 : index
    %c0_14 = arith.constant 0 : index
    %29 = vector.load %arg4[%c0_13, %c0_14] : memref<392x16xf32, #tpu.memory_space<vmem>>, vector<392x16xf32>
    tpu.vector_store %arg4[%c0_13, %c0_14], %28 {strides = array<i32>} : memref<392x16xf32, #tpu.memory_space<vmem>>, vector<392x16xf32>,
    return
  }
}

module attributes {stable_mosaic.version = 11 : i64} {
  func.func @matmul_tanh_kernel(%arg0: memref<1568x256xf32, #tpu.memory_space<vmem>>, %arg1: memref<256x1xf32, #tpu.memory_space<vmem>>, %arg2: memref<1568x1xf32, #tpu.memory_space<vmem>>) attributes {dimension_semantics = [], scalar_prefetch = 0 : i64, scratch_operands = 0 : i64, tpu.core_type = #tpu.core_type<tc>} {
    %c0 = arith.constant 0 : index
    %c0_0 = arith.constant 0 : index
    %0 = vector.load %arg0[%c0, %c0_0] : memref<1568x256xf32, #tpu.memory_space<vmem>>, vector<1568x256xf32>
    %c0_1 = arith.constant 0 : index
    %c0_2 = arith.constant 0 : index
    %1 = vector.load %arg1[%c0_1, %c0_2] : memref<256x1xf32, #tpu.memory_space<vmem>>, vector<256x1xf32>
    %cst = arith.constant dense<0.000000e+00> : vector<1568x1xf32>
    %2 = tpu.matmul %0, %1, %cst {dimension_numbers = #tpu.dot_dimension_numbers<[1], [0], [0], [1], [0, 0, 1, 1], [], []>} : vector<1568x256xf32>, vector<256x1xf32>, vector<1568x1xf32> -> vector<1568x1xf32>
    %3 = math.tanh %2 : vector<1568x1xf32>
    %c0_3 = arith.constant 0 : index
    %c0_4 = arith.constant 0 : index
    %4 = vector.load %arg2[%c0_3, %c0_4] : memref<1568x1xf32, #tpu.memory_space<vmem>>, vector<1568x1xf32>
    tpu.vector_store %arg2[%c0_3, %c0_4], %3 {strides = array<i32>} : memref<1568x1xf32, #tpu.memory_space<vmem>>, vector<1568x1xf32>,
    return
  }
}

</mosaic_0001>

<llo_original>
// kernel: generator_forward.5
$region0: #{generator_forward.5}
  #allocation0 [shape = 'u32[]', space=smem, size = 0x4, offset = 0x4, fixed_abs, tag = 'smem constant byte address 0x4 - core index']
  #allocation1 [shape = 'u32[144,128]{1,0:T(1,128)}', space=vmem, size = 0x12000, scoped, tag = 'internal scratch']
  %s0 = inlined_call_operand.vmem [shape: f32[98,576], index: 0, kind: input, shape index: {}]
  %s1 = inlined_call_operand.vmem [shape: f32[576,32], index: 1, kind: input, shape index: {}]
  %s2 = inlined_call_operand.hbm [shape: f32[1,32], index: 2, kind: input, shape index: {}]
  %s3 = inlined_call_operand.hbm [shape: f32[1,32], index: 3, kind: input, shape index: {}]
  %s4 = inlined_call_operand.vmem [shape: f32[98,32], index: 4, kind: output, shape index: {}]
  %s5 = sld [smem:[#allocation0]]
  $region34: #{generator_forward.5} parent=0
    _
  %s7 = ssub.s32 1, %s5
  %s8 = scalar_select 0, %s7, %s5
  $region1: #{generator_forward.5} parent=0
    #allocation2 [shape = 'u8[512]{0}', space=vmem, size = 0x400, scoped, tag = 'input window, operand 2, single buffered']
    #allocation3 [shape = 's32[1]{0}', space=sflag, size = 0x4, scoped, tag = 'scoped memory for generator_forward.5']
    #allocation4 [shape = 'u8[512]{0}', space=vmem, size = 0x400, scoped, tag = 'input window, operand 3, single buffered']
    #allocation5 [shape = 's32[1]{0}', space=sflag, size = 0x4, scoped, tag = 'scoped memory for generator_forward.5']
    %9 = vsyncpa [#allocation3], 0
    %10 = vsyncpa [#allocation5], 0
    // Predicated region
    $region2: #{generator_forward.5} parent=1 // pred_check
      _
    $region3: #{generator_forward.5} parent=1 // pred_check_branch
      %12 = sbr.rel (0) target = $region5
    $region4: #{generator_forward.5} parent=1 // pred_region
      _
    $region5: #{generator_forward.5} parent=1 // pred_fallthru
      _
    // Predicated region
    $region6: #{generator_forward.5} parent=1 // pred_check
      _
    $region7: #{generator_forward.5} parent=1 // pred_check_branch
      %14 = sbr.rel (0) target = $region9
    $region8: #{generator_forward.5} parent=1 // pred_region
      _
    $region9: #{generator_forward.5} parent=1 // pred_fallthru
      _
    // Predicated region
    $region10: #{generator_forward.5} parent=1 // pred_check
      _
    $region11: #{generator_forward.5} parent=1 // pred_check_branch
      %16 = sbr.rel (0) target = $region13
    $region12: #{generator_forward.5} parent=1 // pred_region
      %s18 = ssub.s32 16, 16
      %19 = vsyncadd [#allocation3], %s18
      %s21 = sshll.u32 [#allocation2], 4
      %s22 = int_to_ptr.vmem [resolvable:$true] %s21
      %24 = dma.hbm_to_vmem [thread:$0]  %s2, 16, %s22, [#allocation3]
    $region13: #{generator_forward.5} parent=1 // pred_fallthru
      _
    // Predicated region
    $region14: #{generator_forward.5} parent=1 // pred_check
      _
    $region15: #{generator_forward.5} parent=1 // pred_check_branch
      %26 = sbr.rel (0) target = $region17
    $region16: #{generator_forward.5} parent=1 // pred_region
      %s28 = ssub.s32 16, 16
      %29 = vsyncadd [#allocation5], %s28
      %s31 = sshll.u32 [#allocation4], 4
      %s32 = int_to_ptr.vmem [resolvable:$true] %s31
      %34 = dma.hbm_to_vmem [thread:$0]  %s3, 16, %s32, [#allocation5]
    $region17: #{generator_forward.5} parent=1 // pred_fallthru
      _
    // Predicated region
    $region18: #{generator_forward.5} parent=1 // pred_check
      _
    $region19: #{generator_forward.5} parent=1 // pred_check_branch
      %36 = sbr.rel (0) target = $region21
    $region20: #{generator_forward.5} parent=1 // pred_region
      %37 = dma.done [#allocation3], 16
    $region21: #{generator_forward.5} parent=1 // pred_fallthru
      _
    // Predicated region
    $region22: #{generator_forward.5} parent=1 // pred_check
      _
    $region23: #{generator_forward.5} parent=1 // pred_check_branch
      %39 = sbr.rel (0) target = $region25
    $region24: #{generator_forward.5} parent=1 // pred_region
      %40 = dma.done [#allocation5], 16
    $region25: #{generator_forward.5} parent=1 // pred_fallthru
      _
    %v41 = vld [vmem:[%s0] sm:$0xff]
    %v42 = vld [vmem:[%s0 + $0x8] sm:$0xff]
    %v43 = vld [vmem:[%s0 + $0x10] sm:$0xff]
    %v44 = vld [vmem:[%s0 + $0x18] sm:$0xff]
    %v45 = vld [vmem:[%s0 + $0x20] sm:$0xff]
    %v46 = vld [vmem:[%s0 + $0x28] sm:$0xff]
    %v47 = vld [vmem:[%s0 + $0x30] sm:$0xff]
    %v48 = vld [vmem:[%s0 + $0x38] sm:$0xff]
    %v49 = vld [vmem:[%s0 + $0x40] sm:$0xff]
    %v50 = vld [vmem:[%s0 + $0x48] sm:$0xff]
    %v51 = vld [vmem:[%s0 + $0x50] sm:$0xff]
    %v52 = vld [vmem:[%s0 + $0x58] sm:$0xff]
    %v53 = vld [vmem:[%s0 + $0x60] sm:$0xff]
    %v54 = vld [vmem:[%s0 + $0x68] sm:$0xff]
    %v55 = vld [vmem:[%s0 + $0x70] sm:$0xff]
    %v56 = vld [vmem:[%s0 + $0x78] sm:$0xff]
    %v57 = vld [vmem:[%s0 + $0x80] sm:$0xff]
    %v58 = vld [vmem:[%s0 + $0x88] sm:$0xff]
    %v59 = vld [vmem:[%s0 + $0x90] sm:$0xff]
    %v60 = vld [vmem:[%s0 + $0x98] sm:$0xff]
    %v61 = vld [vmem:[%s0 + $0xa0] sm:$0xff]
    %v62 = vld [vmem:[%s0 + $0xa8] sm:$0xff]
    %v63 = vld [vmem:[%s0 + $0xb0] sm:$0xff]
    %v64 = vld [vmem:[%s0 + $0xb8] sm:$0xff]
    %v65 = vld [vmem:[%s0 + $0xc0] sm:$0xff]
    %v66 = vld [vmem:[%s0 + $0xc8] sm:$0xff]
    %v67 = vld [vmem:[%s0 + $0xd0] sm:$0xff]
    %v68 = vld [vmem:[%s0 + $0xd8] sm:$0xff]
    %v69 = vld [vmem:[%s0 + $0xe0] sm:$0xff]
    %v70 = vld [vmem:[%s0 + $0xe8] sm:$0xff]
    %v71 = vld [vmem:[%s0 + $0xf0] sm:$0xff]
    %v72 = vld [vmem:[%s0 + $0xf8] sm:$0xff]
    %v73 = vld [vmem:[%s0 + $0x100] sm:$0xff]
    %v74 = vld [vmem:[%s0 + $0x108] sm:$0xff]
    %v75 = vld [vmem:[%s0 + $0x110] sm:$0xff]
    %v76 = vld [vmem:[%s0 + $0x118] sm:$0xff]
    %v77 = vld [vmem:[%s0 + $0x120] sm:$0xff]
    %v78 = vld [vmem:[%s0 + $0x128] sm:$0xff]
    %v79 = vld [vmem:[%s0 + $0x130] sm:$0xff]
    %v80 = vld [vmem:[%s0 + $0x138] sm:$0xff]
    %v81 = vld [vmem:[%s0 + $0x140] sm:$0xff]
    %v82 = vld [vmem:[%s0 + $0x148] sm:$0xff]
    %v83 = vld [vmem:[%s0 + $0x150] sm:$0xff]
    %v84 = vld [vmem:[%s0 + $0x158] sm:$0xff]
    %v85 = vld [vmem:[%s0 + $0x160] sm:$0xff]
    %v86 = vld [vmem:[%s0 + $0x168] sm:$0xff]
    %v87 = vld [vmem:[%s0 + $0x170] sm:$0xff]
    %v88 = vld [vmem:[%s0 + $0x178] sm:$0xff]
    %v89 = vld [vmem:[%s0 + $0x180] sm:$0xff]
    %v90 = vld [vmem:[%s0 + $0x188] sm:$0xff]
    %v91 = vld [vmem:[%s0 + $0x190] sm:$0xff]
    %v92 = vld [vmem:[%s0 + $0x198] sm:$0xff]
    %v93 = vld [vmem:[%s0 + $0x1a0] sm:$0xff]
    %v94 = vld [vmem:[%s0 + $0x1a8] sm:$0xff]
    %v95 = vld [vmem:[%s0 + $0x1b0] sm:$0xff]
    %v96 = vld [vmem:[%s0 + $0x1b8] sm:$0xff]
    %v97 = vld [vmem:[%s0 + $0x1c0] sm:$0xff]
    %v98 = vld [vmem:[%s0 + $0x1c8] sm:$0xff]
    %v99 = vld [vmem:[%s0 + $0x1d0] sm:$0xff]
    %v100 = vld [vmem:[%s0 + $0x1d8] sm:$0xff]
    %v101 = vld [vmem:[%s0 + $0x1e0] sm:$0x3]
    %v102 = vld [vmem:[%s0 + $0x1e8] sm:$0x3]
    %v103 = vld [vmem:[%s0 + $0x1f0] sm:$0x3]
    %v104 = vld [vmem:[%s0 + $0x1f8] sm:$0x3]
    %v105 = vld [vmem:[%s0 + $0x200] sm:$0x3]
    %v106 = vld [vmem:[%s1] sm:$0xff]
    %v107 = vld [vmem:[%s1 + $0x8] sm:$0xff]
    %v108 = vld [vmem:[%s1 + $0x10] sm:$0xff]
    %v109 = vld [vmem:[%s1 + $0x18] sm:$0xff]
    %v110 = vld [vmem:[%s1 + $0x20] sm:$0xff]
    %v111 = vld [vmem:[%s1 + $0x28] sm:$0xff]
    %v112 = vld [vmem:[%s1 + $0x30] sm:$0xff]
    %v113 = vld [vmem:[%s1 + $0x38] sm:$0xff]
    %v114 = vld [vmem:[%s1 + $0x40] sm:$0xff]
    %v115 = vld [vmem:[%s1 + $0x48] sm:$0xff]
    %v116 = vld [vmem:[%s1 + $0x50] sm:$0xff]
    %v117 = vld [vmem:[%s1 + $0x58] sm:$0xff]
    %v118 = vld [vmem:[%s1 + $0x60] sm:$0xff]
    %v119 = vld [vmem:[%s1 + $0x68] sm:$0xff]
    %v120 = vld [vmem:[%s1 + $0x70] sm:$0xff]
    %v121 = vld [vmem:[%s1 + $0x78] sm:$0xff]
    %v122 = vld [vmem:[%s1 + $0x80] sm:$0xff]
    %v123 = vld [vmem:[%s1 + $0x88] sm:$0xff]
    %v124 = vld [vmem:[%s1 + $0x90] sm:$0xff]
    %v125 = vld [vmem:[%s1 + $0x98] sm:$0xff]
    %v126 = vld [vmem:[%s1 + $0xa0] sm:$0xff]
    %v127 = vld [vmem:[%s1 + $0xa8] sm:$0xff]
    %v128 = vld [vmem:[%s1 + $0xb0] sm:$0xff]
    %v129 = vld [vmem:[%s1 + $0xb8] sm:$0xff]
    %v130 = vld [vmem:[%s1 + $0xc0] sm:$0xff]
    %v131 = vld [vmem:[%s1 + $0xc8] sm:$0xff]
    %v132 = vld [vmem:[%s1 + $0xd0] sm:$0xff]
    %v133 = vld [vmem:[%s1 + $0xd8] sm:$0xff]
    %v134 = vld [vmem:[%s1 + $0xe0] sm:$0xff]
    %v135 = vld [vmem:[%s1 + $0xe8] sm:$0xff]
    %v136 = vld [vmem:[%s1 + $0xf0] sm:$0xff]
    %v137 = vld [vmem:[%s1 + $0xf8] sm:$0xff]
    %v138 = vld [vmem:[%s1 + $0x100] sm:$0xff]
    %v139 = vld [vmem:[%s1 + $0x108] sm:$0xff]
    %v140 = vld [vmem:[%s1 + $0x110] sm:$0xff]
    %v141 = vld [vmem:[%s1 + $0x118] sm:$0xff]
    %v142 = vld [vmem:[%s1 + $0x120] sm:$0xff]
    %v143 = vld [vmem:[%s1 + $0x128] sm:$0xff]
    %v144 = vld [vmem:[%s1 + $0x130] sm:$0xff]
    %v145 = vld [vmem:[%s1 + $0x138] sm:$0xff]
    %v146 = vld [vmem:[%s1 + $0x140] sm:$0xff]
    %v147 = vld [vmem:[%s1 + $0x148] sm:$0xff]
    %v148 = vld [vmem:[%s1 + $0x150] sm:$0xff]
    %v149 = vld [vmem:[%s1 + $0x158] sm:$0xff]
    %v150 = vld [vmem:[%s1 + $0x160] sm:$0xff]
    %v151 = vld [vmem:[%s1 + $0x168] sm:$0xff]
    %v152 = vld [vmem:[%s1 + $0x170] sm:$0xff]
    %v153 = vld [vmem:[%s1 + $0x178] sm:$0xff]
    %v154 = vld [vmem:[%s1 + $0x180] sm:$0xff]
    %v155 = vld [vmem:[%s1 + $0x188] sm:$0xff]
    %v156 = vld [vmem:[%s1 + $0x190] sm:$0xff]
    %v157 = vld [vmem:[%s1 + $0x198] sm:$0xff]
    %v158 = vld [vmem:[%s1 + $0x1a0] sm:$0xff]
    %v159 = vld [vmem:[%s1 + $0x1a8] sm:$0xff]
    %v160 = vld [vmem:[%s1 + $0x1b0] sm:$0xff]
    %v161 = vld [vmem:[%s1 + $0x1b8] sm:$0xff]
    %v162 = vld [vmem:[%s1 + $0x1c0] sm:$0xff]
    %v163 = vld [vmem:[%s1 + $0x1c8] sm:$0xff]
    %v164 = vld [vmem:[%s1 + $0x1d0] sm:$0xff]
    %v165 = vld [vmem:[%s1 + $0x1d8] sm:$0xff]
    %v166 = vld [vmem:[%s1 + $0x1e0] sm:$0xff]
    %v167 = vld [vmem:[%s1 + $0x1e8] sm:$0xff]
    %v168 = vld [vmem:[%s1 + $0x1f0] sm:$0xff]
    %v169 = vld [vmem:[%s1 + $0x1f8] sm:$0xff]
    %v170 = vld [vmem:[%s1 + $0x200] sm:$0xff]
    %v171 = vld [vmem:[%s1 + $0x208] sm:$0xff]
    %v172 = vld [vmem:[%s1 + $0x210] sm:$0xff]
    %v173 = vld [vmem:[%s1 + $0x218] sm:$0xff]
    %v174 = vld [vmem:[%s1 + $0x220] sm:$0xff]
    %v175 = vld [vmem:[%s1 + $0x228] sm:$0xff]
    %v176 = vld [vmem:[%s1 + $0x230] sm:$0xff]
    %v177 = vld [vmem:[%s1 + $0x238] sm:$0xff]
    %vm178 = vcmask 523264
    %v180 = vsel %vm178, %v45, 0
    %v183 = vsel %vm178, %v50, 0
    %v186 = vsel %vm178, %v55, 0
    %v189 = vsel %vm178, %v60, 0
    %v192 = vsel %vm178, %v65, 0
    %v195 = vsel %vm178, %v70, 0
    %v198 = vsel %vm178, %v75, 0
    %v201 = vsel %vm178, %v80, 0
    %v204 = vsel %vm178, %v85, 0
    %v207 = vsel %vm178, %v90, 0
    %v210 = vsel %vm178, %v95, 0
    %v213 = vsel %vm178, %v100, 0
    %v216 = vsel %vm178, %v105, 0
    %218 = vmatprep.subr.mxu0 0.0
    %219 = vmatpush1.msra.mxu0 %v121
    %220 = vmatprep.subr.mxu0 0.0
    %221 = vmatpush1.msra.mxu0 %v120
    %222 = vmatprep.subr.mxu0 0.0
    %223 = vmatpush1.msra.mxu0 %v119
    %224 = vmatprep.subr.mxu0 0.0
    %225 = vmatpush1.msra.mxu0 %v118
    %226 = vmatprep.subr.mxu0 0.0
    %227 = vmatpush1.msra.mxu0 %v117
    %228 = vmatprep.subr.mxu0 0.0
    %229 = vmatpush1.msra.mxu0 %v116
    %230 = vmatprep.subr.mxu0 0.0
    %231 = vmatpush1.msra.mxu0 %v115
    %232 = vmatprep.subr.mxu0 0.0
    %233 = vmatpush1.msra.mxu0 %v114
    %234 = vmatprep.subr.mxu0 0.0
    %235 = vmatpush1.msra.mxu0 %v113
    %236 = vmatprep.subr.mxu0 0.0
    %237 = vmatpush1.msra.mxu0 %v112
    %238 = vmatprep.subr.mxu0 0.0
    %239 = vmatpush1.msra.mxu0 %v111
    %240 = vmatprep.subr.mxu0 0.0
    %241 = vmatpush1.msra.mxu0 %v110
    %242 = vmatprep.subr.mxu0 0.0
    %243 = vmatpush1.msra.mxu0 %v109
    %244 = vmatprep.subr.mxu0 0.0
    %245 = vmatpush1.msra.mxu0 %v108
    %246 = vmatprep.subr.mxu0 0.0
    %247 = vmatpush1.msra.mxu0 %v107
    %248 = vmatprep.subr.mxu0 0.0
    %249 = vmatpush1.msra.mxu0 %v106
    %250 = vmatprep.subr.mxu0 0.0
    %251 = vmatpush2.msra.mxu0 %v137
    %252 = vmatprep.subr.mxu0 0.0
    %253 = vmatpush2.msra.mxu0 %v136
    %254 = vmatprep.subr.mxu0 0.0
    %255 = vmatpush2.msra.mxu0 %v135
    %256 = vmatprep.subr.mxu0 0.0
    %257 = vmatpush2.msra.mxu0 %v134
    %258 = vmatprep.subr.mxu0 0.0
    %259 = vmatpush2.msra.mxu0 %v133
    %260 = vmatprep.subr.mxu0 0.0
    %261 = vmatpush2.msra.mxu0 %v132
    %262 = vmatprep.subr.mxu0 0.0
    %263 = vmatpush2.msra.mxu0 %v131
    %264 = vmatprep.subr.mxu0 0.0
    %265 = vmatpush2.msra.mxu0 %v130
    %266 = vmatprep.subr.mxu0 0.0
    %267 = vmatpush2.msra.mxu0 %v129
    %268 = vmatprep.subr.mxu0 0.0
    %269 = vmatpush2.msra.mxu0 %v128
    %270 = vmatprep.subr.mxu0 0.0
    %271 = vmatpush2.msra.mxu0 %v127
    %272 = vmatprep.subr.mxu0 0.0
    %273 = vmatpush2.msra.mxu0 %v126
    %274 = vmatprep.subr.mxu0 0.0
    %275 = vmatpush2.msra.mxu0 %v125
    %276 = vmatprep.subr.mxu0 0.0
    %277 = vmatpush2.msra.mxu0 %v124
    %278 = vmatprep.subr.mxu0 0.0
    %279 = vmatpush2.msra.mxu0 %v123
    %280 = vmatprep.subr.mxu0 0.0
    %281 = vmatpush2.msra.mxu0 %v122
    %282 = vmatprep.mubr.f32.mxu0 %v42
    %283 = vmatmul.mubr.f32.gmra.mxu0 %v41
    %v284 = vpop.f32.mrf.mxu0
    %v285 = vadd.f32 0.0, %v284
    %v286 = vpop.f32.mrf.mxu0
    %287 = vmatprep.mubr.f32.mxu0 %v47
    %288 = vmatmul.mubr.f32.gmra.mxu0 %v46
    %v289 = vpop.f32.mrf.mxu0
    %v290 = vadd.f32 0.0, %v289
    %v291 = vpop.f32.mrf.mxu0
    %292 = vmatprep.mubr.f32.mxu0 %v52
    %293 = vmatmul.mubr.f32.gmra.mxu0 %v51
    %v294 = vpop.f32.mrf.mxu0
    %v295 = vadd.f32 0.0, %v294
    %v296 = vpop.f32.mrf.mxu0
    %297 = vmatprep.mubr.f32.mxu0 %v57
    %298 = vmatmul.mubr.f32.gmra.mxu0 %v56
    %v299 = vpop.f32.mrf.mxu0
    %v300 = vadd.f32 0.0, %v299
    %v301 = vpop.f32.mrf.mxu0
    %302 = vmatprep.mubr.f32.mxu0 %v62
    %303 = vmatmul.mubr.f32.gmra.mxu0 %v61
    %v304 = vpop.f32.mrf.mxu0
    %v305 = vadd.f32 0.0, %v304
    %v306 = vpop.f32.mrf.mxu0
    %307 = vmatprep.mubr.f32.mxu0 %v67
    %308 = vmatmul.mubr.f32.gmra.mxu0 %v66
    %v309 = vpop.f32.mrf.mxu0
    %v310 = vadd.f32 0.0, %v309
    %v311 = vpop.f32.mrf.mxu0
    %312 = vmatprep.mubr.f32.mxu0 %v72
    %313 = vmatmul.mubr.f32.gmra.mxu0 %v71
    %v314 = vpop.f32.mrf.mxu0
    %v315 = vadd.f32 0.0, %v314
    %v316 = vpop.f32.mrf.mxu0
    %317 = vmatprep.mubr.f32.mxu0 %v77
    %318 = vmatmul.mubr.f32.gmra.mxu0 %v76
    %v319 = vpop.f32.mrf.mxu0
    %v320 = vadd.f32 0.0, %v319
    %v321 = vpop.f32.mrf.mxu0
    %322 = vmatprep.mubr.f32.mxu0 %v82
    %323 = vmatmul.mubr.f32.gmra.mxu0 %v81
    %v324 = vpop.f32.mrf.mxu0
    %v325 = vadd.f32 0.0, %v324
    %v326 = vpop.f32.mrf.mxu0
    %327 = vmatprep.mubr.f32.mxu0 %v87
    %328 = vmatmul.mubr.f32.gmra.mxu0 %v86
    %v329 = vpop.f32.mrf.mxu0
    %v330 = vadd.f32 0.0, %v329
    %v331 = vpop.f32.mrf.mxu0
    %332 = vmatprep.mubr.f32.mxu0 %v92
    %333 = vmatmul.mubr.f32.gmra.mxu0 %v91
    %v334 = vpop.f32.mrf.mxu0
    %v335 = vadd.f32 0.0, %v334
    %v336 = vpop.f32.mrf.mxu0
    %337 = vmatprep.mubr.f32.mxu0 %v97
    %338 = vmatmul.mubr.f32.gmra.mxu0 %v96
    %v339 = vpop.f32.mrf.mxu0
    %v340 = vadd.f32 0.0, %v339
    %v341 = vpop.f32.mrf.mxu0
    %342 = vmatprep.mubr.f32.mxu0 %v102
    %343 = vmatmul.mubr.f32.gmra.mxu0 %v101
    %v344 = vpop.f32.mrf.mxu0
    %v345 = vadd.f32 0.0, %v344
    %v346 = vpop.f32.mrf.mxu0
    %347 = vdwg.mxu0
    %348 = vmatprep.subr.mxu0 0.0
    %349 = vmatpush1.msra.mxu0 %v153
    %350 = vmatprep.subr.mxu0 0.0
    %351 = vmatpush1.msra.mxu0 %v152
    %352 = vmatprep.subr.mxu0 0.0
    %353 = vmatpush1.msra.mxu0 %v151
    %354 = vmatprep.subr.mxu0 0.0
    %355 = vmatpush1.msra.mxu0 %v150
    %356 = vmatprep.subr.mxu0 0.0
    %357 = vmatpush1.msra.mxu0 %v149
    %358 = vmatprep.subr.mxu0 0.0
    %359 = vmatpush1.msra.mxu0 %v148
    %360 = vmatprep.subr.mxu0 0.0
    %361 = vmatpush1.msra.mxu0 %v147
    %362 = vmatprep.subr.mxu0 0.0
    %363 = vmatpush1.msra.mxu0 %v146
    %364 = vmatprep.subr.mxu0 0.0
    %365 = vmatpush1.msra.mxu0 %v145
    %366 = vmatprep.subr.mxu0 0.0
    %367 = vmatpush1.msra.mxu0 %v144
    %368 = vmatprep.subr.mxu0 0.0
    %369 = vmatpush1.msra.mxu0 %v143
    %370 = vmatprep.subr.mxu0 0.0
    %371 = vmatpush1.msra.mxu0 %v142
    %372 = vmatprep.subr.mxu0 0.0
    %373 = vmatpush1.msra.mxu0 %v141
    %374 = vmatprep.subr.mxu0 0.0
    %375 = vmatpush1.msra.mxu0 %v140
    %376 = vmatprep.subr.mxu0 0.0
    %377 = vmatpush1.msra.mxu0 %v139
    %378 = vmatprep.subr.mxu0 0.0
    %379 = vmatpush1.msra.mxu0 %v138
    %380 = vmatprep.subr.mxu0 0.0
    %381 = vmatpush2.msra.mxu0 %v169
    %382 = vmatprep.subr.mxu0 0.0
    %383 = vmatpush2.msra.mxu0 %v168
    %384 = vmatprep.subr.mxu0 0.0
    %385 = vmatpush2.msra.mxu0 %v167
    %386 = vmatprep.subr.mxu0 0.0
    %387 = vmatpush2.msra.mxu0 %v166
    %388 = vmatprep.subr.mxu0 0.0
    %389 = vmatpush2.msra.mxu0 %v165
    %390 = vmatprep.subr.mxu0 0.0
    %391 = vmatpush2.msra.mxu0 %v164
    %392 = vmatprep.subr.mxu0 0.0
    %393 = vmatpush2.msra.mxu0 %v163
    %394 = vmatprep.subr.mxu0 0.0
    %395 = vmatpush2.msra.mxu0 %v162
    %396 = vmatprep.subr.mxu0 0.0
    %397 = vmatpush2.msra.mxu0 %v161
    %398 = vmatprep.subr.mxu0 0.0
    %399 = vmatpush2.msra.mxu0 %v160
    %400 = vmatprep.subr.mxu0 0.0
    %401 = vmatpush2.msra.mxu0 %v159
    %402 = vmatprep.subr.mxu0 0.0
    %403 = vmatpush2.msra.mxu0 %v158
    %404 = vmatprep.subr.mxu0 0.0
    %405 = vmatpush2.msra.mxu0 %v157
    %406 = vmatprep.subr.mxu0 0.0
    %407 = vmatpush2.msra.mxu0 %v156
    %408 = vmatprep.subr.mxu0 0.0
    %409 = vmatpush2.msra.mxu0 %v155
    %410 = vmatprep.subr.mxu0 0.0
    %411 = vmatpush2.msra.mxu0 %v154
    %412 = vmatprep.mubr.f32.mxu0 %v44
    %413 = vmatmul.mubr.f32.gmra.mxu0 %v43
    %v414 = vpop.f32.mrf.mxu0
    %v415 = vadd.f32 %v285, %v414
    %v416 = vpop.f32.mrf.mxu0
    %417 = vmatprep.mubr.f32.mxu0 %v49
    %418 = vmatmul.mubr.f32.gmra.mxu0 %v48
    %v419 = vpop.f32.mrf.mxu0
    %v420 = vadd.f32 %v290, %v419
    %v421 = vpop.f32.mrf.mxu0
    %422 = vmatprep.mubr.f32.mxu0 %v54
    %423 = vmatmul.mubr.f32.gmra.mxu0 %v53
    %v424 = vpop.f32.mrf.mxu0
    %v425 = vadd.f32 %v295, %v424
    %v426 = vpop.f32.mrf.mxu0
    %427 = vmatprep.mubr.f32.mxu0 %v59
    %428 = vmatmul.mubr.f32.gmra.mxu0 %v58
    %v429 = vpop.f32.mrf.mxu0
    %v430 = vadd.f32 %v300, %v429
    %v431 = vpop.f32.mrf.mxu0
    %432 = vmatprep.mubr.f32.mxu0 %v64
    %433 = vmatmul.mubr.f32.gmra.mxu0 %v63
    %v434 = vpop.f32.mrf.mxu0
    %v435 = vadd.f32 %v305, %v434
    %v436 = vpop.f32.mrf.mxu0
    %437 = vmatprep.mubr.f32.mxu0 %v69
    %438 = vmatmul.mubr.f32.gmra.mxu0 %v68
    %v439 = vpop.f32.mrf.mxu0
    %v440 = vadd.f32 %v310, %v439
    %v441 = vpop.f32.mrf.mxu0
    %442 = vmatprep.mubr.f32.mxu0 %v74
    %443 = vmatmul.mubr.f32.gmra.mxu0 %v73
    %v444 = vpop.f32.mrf.mxu0
    %v445 = vadd.f32 %v315, %v444
    %v446 = vpop.f32.mrf.mxu0
    %447 = vmatprep.mubr.f32.mxu0 %v79
    %448 = vmatmul.mubr.f32.gmra.mxu0 %v78
    %v449 = vpop.f32.mrf.mxu0
    %v450 = vadd.f32 %v320, %v449
    %v451 = vpop.f32.mrf.mxu0
    %452 = vmatprep.mubr.f32.mxu0 %v84
    %453 = vmatmul.mubr.f32.gmra.mxu0 %v83
    %v454 = vpop.f32.mrf.mxu0
    %v455 = vadd.f32 %v325, %v454
    %v456 = vpop.f32.mrf.mxu0
    %457 = vmatprep.mubr.f32.mxu0 %v89
    %458 = vmatmul.mubr.f32.gmra.mxu0 %v88
    %v459 = vpop.f32.mrf.mxu0
    %v460 = vadd.f32 %v330, %v459
    %v461 = vpop.f32.mrf.mxu0
    %462 = vmatprep.mubr.f32.mxu0 %v94
    %463 = vmatmul.mubr.f32.gmra.mxu0 %v93
    %v464 = vpop.f32.mrf.mxu0
    %v465 = vadd.f32 %v335, %v464
    %v466 = vpop.f32.mrf.mxu0
    %467 = vmatprep.mubr.f32.mxu0 %v99
    %468 = vmatmul.mubr.f32.gmra.mxu0 %v98
    %v469 = vpop.f32.mrf.mxu0
    %v470 = vadd.f32 %v340, %v469
    %v471 = vpop.f32.mrf.mxu0
    %472 = vmatprep.mubr.f32.mxu0 %v104
    %473 = vmatmul.mubr.f32.gmra.mxu0 %v103
    %v474 = vpop.f32.mrf.mxu0
    %v475 = vadd.f32 %v345, %v474
    %v476 = vpop.f32.mrf.mxu0
    %477 = vdwg.mxu0
    %478 = vmatprep.subr.mxu0 0.0
    %479 = vmatpush1.msra.mxu0 0.0
    %480 = vmatprep.subr.mxu0 0.0
    %481 = vmatpush1.msra.mxu0 0.0
    %482 = vmatprep.subr.mxu0 0.0
    %483 = vmatpush1.msra.mxu0 0.0
    %484 = vmatprep.subr.mxu0 0.0
    %485 = vmatpush1.msra.mxu0 0.0
    %486 = vmatprep.subr.mxu0 0.0
    %487 = vmatpush1.msra.mxu0 0.0
    %488 = vmatprep.subr.mxu0 0.0
    %489 = vmatpush1.msra.mxu0 0.0
    %490 = vmatprep.subr.mxu0 0.0
    %491 = vmatpush1.msra.mxu0 0.0
    %492 = vmatprep.subr.mxu0 0.0
    %493 = vmatpush1.msra.mxu0 0.0
    %494 = vmatprep.subr.mxu0 0.0
    %495 = vmatpush1.msra.mxu0 %v177
    %496 = vmatprep.subr.mxu0 0.0
    %497 = vmatpush1.msra.mxu0 %v176
    %498 = vmatprep.subr.mxu0 0.0
    %499 = vmatpush1.msra.mxu0 %v175
    %500 = vmatprep.subr.mxu0 0.0
    %501 = vmatpush1.msra.mxu0 %v174
    %502 = vmatprep.subr.mxu0 0.0
    %503 = vmatpush1.msra.mxu0 %v173
    %504 = vmatprep.subr.mxu0 0.0
    %505 = vmatpush1.msra.mxu0 %v172
    %506 = vmatprep.subr.mxu0 0.0
    %507 = vmatpush1.msra.mxu0 %v171
    %508 = vmatprep.subr.mxu0 0.0
    %509 = vmatpush1.msra.mxu0 %v170
    %510 = vmatprep.subr.mxu0 0.0
    %511 = vmatpush2.msra.mxu0 0.0
    %512 = vmatprep.subr.mxu0 0.0
    %513 = vmatpush2.msra.mxu0 0.0
    %514 = vmatprep.subr.mxu0 0.0
    %515 = vmatpush2.msra.mxu0 0.0
    %516 = vmatprep.subr.mxu0 0.0
    %517 = vmatpush2.msra.mxu0 0.0
    %518 = vmatprep.subr.mxu0 0.0
    %519 = vmatpush2.msra.mxu0 0.0
    %520 = vmatprep.subr.mxu0 0.0
    %521 = vmatpush2.msra.mxu0 0.0
    %522 = vmatprep.subr.mxu0 0.0
    %523 = vmatpush2.msra.mxu0 0.0
    %524 = vmatprep.subr.mxu0 0.0
    %525 = vmatpush2.msra.mxu0 0.0
    %526 = vmatprep.subr.mxu0 0.0
    %527 = vmatpush2.msra.mxu0 0.0
    %528 = vmatprep.subr.mxu0 0.0
    %529 = vmatpush2.msra.mxu0 0.0
    %530 = vmatprep.subr.mxu0 0.0
    %531 = vmatpush2.msra.mxu0 0.0
    %532 = vmatprep.subr.mxu0 0.0
    %533 = vmatpush2.msra.mxu0 0.0
    %534 = vmatprep.subr.mxu0 0.0
    %535 = vmatpush2.msra.mxu0 0.0
    %536 = vmatprep.subr.mxu0 0.0
    %537 = vmatpush2.msra.mxu0 0.0
    %538 = vmatprep.subr.mxu0 0.0
    %539 = vmatpush2.msra.mxu0 0.0
    %540 = vmatprep.subr.mxu0 0.0
    %541 = vmatpush2.msra.mxu0 0.0
    %542 = vmatprep.mubr.f32.mxu0 0.0
    %543 = vmatmul.mubr.f32.gmra.mxu0 %v180
    %v544 = vpop.f32.mrf.mxu0
    %v545 = vadd.f32 %v415, %v544
    %v546 = vpop.f32.mrf.mxu0
    %547 = vmatprep.mubr.f32.mxu0 0.0
    %548 = vmatmul.mubr.f32.gmra.mxu0 %v183
    %v549 = vpop.f32.mrf.mxu0
    %v550 = vadd.f32 %v420, %v549
    %v551 = vpop.f32.mrf.mxu0
    %552 = vmatprep.mubr.f32.mxu0 0.0
    %553 = vmatmul.mubr.f32.gmra.mxu0 %v186
    %v554 = vpop.f32.mrf.mxu0
    %v555 = vadd.f32 %v425, %v554
    %v556 = vpop.f32.mrf.mxu0
    %557 = vmatprep.mubr.f32.mxu0 0.0
    %558 = vmatmul.mubr.f32.gmra.mxu0 %v189
    %v559 = vpop.f32.mrf.mxu0
    %v560 = vadd.f32 %v430, %v559
    %v561 = vpop.f32.mrf.mxu0
    %562 = vmatprep.mubr.f32.mxu0 0.0
    %563 = vmatmul.mubr.f32.gmra.mxu0 %v192
    %v564 = vpop.f32.mrf.mxu0
    %v565 = vadd.f32 %v435, %v564
    %v566 = vpop.f32.mrf.mxu0
    %567 = vmatprep.mubr.f32.mxu0 0.0
    %568 = vmatmul.mubr.f32.gmra.mxu0 %v195
    %v569 = vpop.f32.mrf.mxu0
    %v570 = vadd.f32 %v440, %v569
    %v571 = vpop.f32.mrf.mxu0
    %572 = vmatprep.mubr.f32.mxu0 0.0
    %573 = vmatmul.mubr.f32.gmra.mxu0 %v198
    %v574 = vpop.f32.mrf.mxu0
    %v575 = vadd.f32 %v445, %v574
    %v576 = vpop.f32.mrf.mxu0
    %577 = vmatprep.mubr.f32.mxu0 0.0
    %578 = vmatmul.mubr.f32.gmra.mxu0 %v201
    %v579 = vpop.f32.mrf.mxu0
    %v580 = vadd.f32 %v450, %v579
    %v581 = vpop.f32.mrf.mxu0
    %582 = vmatprep.mubr.f32.mxu0 0.0
    %583 = vmatmul.mubr.f32.gmra.mxu0 %v204
    %v584 = vpop.f32.mrf.mxu0
    %v585 = vadd.f32 %v455, %v584
    %v586 = vpop.f32.mrf.mxu0
    %587 = vmatprep.mubr.f32.mxu0 0.0
    %588 = vmatmul.mubr.f32.gmra.mxu0 %v207
    %v589 = vpop.f32.mrf.mxu0
    %v590 = vadd.f32 %v460, %v589
    %v591 = vpop.f32.mrf.mxu0
    %592 = vmatprep.mubr.f32.mxu0 0.0
    %593 = vmatmul.mubr.f32.gmra.mxu0 %v210
    %v594 = vpop.f32.mrf.mxu0
    %v595 = vadd.f32 %v465, %v594
    %v596 = vpop.f32.mrf.mxu0
    %597 = vmatprep.mubr.f32.mxu0 0.0
    %598 = vmatmul.mubr.f32.gmra.mxu0 %v213
    %v599 = vpop.f32.mrf.mxu0
    %v600 = vadd.f32 %v470, %v599
    %v601 = vpop.f32.mrf.mxu0
    %602 = vmatprep.mubr.f32.mxu0 0.0
    %603 = vmatmul.mubr.f32.gmra.mxu0 %v216
    %v604 = vpop.f32.mrf.mxu0
    %v605 = vadd.f32 %v475, %v604
    %v606 = vpop.f32.mrf.mxu0
    %607 = vdwg.mxu0
    %vm608 = vcmask 261120
    %v609 = vsel %vm608, %v545, 0.0
    %v610 = vsel %vm608, %v550, 0.0
    %v611 = vadd.f32 %v609, %v610
    %v612 = vsel %vm608, %v555, 0.0
    %v613 = vadd.f32 %v611, %v612
    %v614 = vsel %vm608, %v560, 0.0
    %v615 = vadd.f32 %v613, %v614
    %v616 = vsel %vm608, %v565, 0.0
    %v617 = vadd.f32 %v615, %v616
    %v618 = vsel %vm608, %v570, 0.0
    %v619 = vadd.f32 %v617, %v618
    %v620 = vsel %vm608, %v575, 0.0
    %v621 = vadd.f32 %v619, %v620
    %v622 = vsel %vm608, %v580, 0.0
    %v623 = vadd.f32 %v621, %v622
    %v624 = vsel %vm608, %v585, 0.0
    %v625 = vadd.f32 %v623, %v624
    %v626 = vsel %vm608, %v590, 0.0
    %v627 = vadd.f32 %v625, %v626
    %v628 = vsel %vm608, %v595, 0.0
    %v629 = vadd.f32 %v627, %v628
    %v630 = vsel %vm608, %v600, 0.0
    %v631 = vadd.f32 %v629, %v630
    %vm632 = vcmask 254976
    %v633 = vsel %vm632, %v605, 0.0
    %v634 = vadd.f32 %v631, %v633
    %v635 = vrot.slane %v634, 4
    %v636 = vadd.f32 %v634, %v635
    %v637 = vrot.slane %v636, 2
    %v638 = vadd.f32 %v636, %v637
    %v639 = vrot.slane %v638, 1
    %v640 = vadd.f32 %v638, %v639
    %v641 = vrcp.pop 98.0
    %v642 = vmul.f32 %v640, %v641
    %v643 = vmul.f32 %v545, %v545
    %v644 = vmul.f32 %v550, %v550
    %v645 = vmul.f32 %v555, %v555
    %v646 = vmul.f32 %v560, %v560
    %v647 = vmul.f32 %v565, %v565
    %v648 = vmul.f32 %v570, %v570
    %v649 = vmul.f32 %v575, %v575
    %v650 = vmul.f32 %v580, %v580
    %v651 = vmul.f32 %v585, %v585
    %v652 = vmul.f32 %v590, %v590
    %v653 = vmul.f32 %v595, %v595
    %v654 = vmul.f32 %v600, %v600
    %v655 = vmul.f32 %v605, %v605
    %v656 = vsel %vm608, %v643, 0.0
    %v657 = vsel %vm608, %v644, 0.0
    %v658 = vadd.f32 %v656, %v657
    %v659 = vsel %vm608, %v645, 0.0
    %v660 = vadd.f32 %v658, %v659
    %v661 = vsel %vm608, %v646, 0.0
    %v662 = vadd.f32 %v660, %v661
    %v663 = vsel %vm608, %v647, 0.0
    %v664 = vadd.f32 %v662, %v663
    %v665 = vsel %vm608, %v648, 0.0
    %v666 = vadd.f32 %v664, %v665
    %v667 = vsel %vm608, %v649, 0.0
    %v668 = vadd.f32 %v666, %v667
    %v669 = vsel %vm608, %v650, 0.0
    %v670 = vadd.f32 %v668, %v669
    %v671 = vsel %vm608, %v651, 0.0
    %v672 = vadd.f32 %v670, %v671
    %v673 = vsel %vm608, %v652, 0.0
    %v674 = vadd.f32 %v672, %v673
    %v675 = vsel %vm608, %v653, 0.0
    %v676 = vadd.f32 %v674, %v675
    %v677 = vsel %vm608, %v654, 0.0
    %v678 = vadd.f32 %v676, %v677
    %v679 = vsel %vm632, %v655, 0.0
    %v680 = vadd.f32 %v678, %v679
    %v681 = vrot.slane %v680, 4
    %v682 = vadd.f32 %v680, %v681
    %v683 = vrot.slane %v682, 2
    %v684 = vadd.f32 %v682, %v683
    %v685 = vrot.slane %v684, 1
    %v686 = vadd.f32 %v684, %v685
    %v687 = vmul.f32 %v686, %v641
    %v688 = vsub.f32 %v545, %v642
    %v689 = vsub.f32 %v550, %v642
    %v690 = vsub.f32 %v555, %v642
    %v691 = vsub.f32 %v560, %v642
    %v692 = vsub.f32 %v565, %v642
    %v693 = vsub.f32 %v570, %v642
    %v694 = vsub.f32 %v575, %v642
    %v695 = vsub.f32 %v580, %v642
    %v696 = vsub.f32 %v585, %v642
    %v697 = vsub.f32 %v590, %v642
    %v698 = vsub.f32 %v595, %v642
    %v699 = vsub.f32 %v600, %v642
    %v700 = vsub.f32 %v605, %v642
    %v701 = vmul.f32 %v642, %v642
    %v702 = vsub.f32 %v687, %v701
    %v703 = vadd.f32 %v702, 1e-05
    %v704 = vrsqrt.pop %v703
    %v705 = vmul.f32 %v688, %v704
    %v706 = vmul.f32 %v689, %v704
    %v707 = vmul.f32 %v690, %v704
    %v708 = vmul.f32 %v691, %v704
    %v709 = vmul.f32 %v692, %v704
    %v710 = vmul.f32 %v693, %v704
    %v711 = vmul.f32 %v694, %v704
    %v712 = vmul.f32 %v695, %v704
    %v713 = vmul.f32 %v696, %v704
    %v714 = vmul.f32 %v697, %v704
    %v715 = vmul.f32 %v698, %v704
    %v716 = vmul.f32 %v699, %v704
    %v717 = vmul.f32 %v700, %v704
    %v718 = vld [vmem:[#allocation2] sm:$0x1]
    %v720 = vlaneseq
    %v721 = vshrl.u32 %v720, 7
    %v722 = vsub.s32 0, %v721
    %v723 = vrot.slane %v718, %v722
    %v725 = vmul.f32 %v705, %v723
    %v726 = vmul.f32 %v706, %v723
    %v727 = vmul.f32 %v707, %v723
    %v728 = vmul.f32 %v708, %v723
    %v729 = vmul.f32 %v709, %v723
    %v730 = vmul.f32 %v710, %v723
    %v731 = vmul.f32 %v711, %v723
    %v732 = vmul.f32 %v712, %v723
    %v733 = vmul.f32 %v713, %v723
    %v734 = vmul.f32 %v714, %v723
    %v735 = vmul.f32 %v715, %v723
    %v736 = vmul.f32 %v716, %v723
    %v737 = vmul.f32 %v717, %v723
    %v738 = vld [vmem:[#allocation4] sm:$0x1]
    %v740 = vlaneseq
    %v741 = vshrl.u32 %v740, 7
    %v742 = vsub.s32 0, %v741
    %v743 = vrot.slane %v738, %v742
    %v745 = vadd.f32 %v725, %v743
    %v746 = vadd.f32 %v726, %v743
    %v747 = vadd.f32 %v727, %v743
    %v748 = vadd.f32 %v728, %v743
    %v749 = vadd.f32 %v729, %v743
    %v750 = vadd.f32 %v730, %v743
    %v751 = vadd.f32 %v731, %v743
    %v752 = vadd.f32 %v732, %v743
    %v753 = vadd.f32 %v733, %v743
    %v754 = vadd.f32 %v734, %v743
    %v755 = vadd.f32 %v735, %v743
    %v756 = vadd.f32 %v736, %v743
    %v757 = vadd.f32 %v737, %v743
    %v758 = vmax.f32 %v745, 0.0
    %v759 = vmax.f32 %v746, 0.0
    %v760 = vmax.f32 %v747, 0.0
    %v761 = vmax.f32 %v748, 0.0
    %v762 = vmax.f32 %v749, 0.0
    %v763 = vmax.f32 %v750, 0.0
    %v764 = vmax.f32 %v751, 0.0
    %v765 = vmax.f32 %v752, 0.0
    %v766 = vmax.f32 %v753, 0.0
    %v767 = vmax.f32 %v754, 0.0
    %v768 = vmax.f32 %v755, 0.0
    %v769 = vmax.f32 %v756, 0.0
    %v770 = vmax.f32 %v757, 0.0
    %771 = vst.msk [vmem:[%s4] sm:$0xff] %vm608, %v758
    %772 = vst.msk [vmem:[%s4 + $0x8] sm:$0xff] %vm608, %v759
    %773 = vst.msk [vmem:[%s4 + $0x10] sm:$0xff] %vm608, %v760
    %774 = vst.msk [vmem:[%s4 + $0x18] sm:$0xff] %vm608, %v761
    %775 = vst.msk [vmem:[%s4 + $0x20] sm:$0xff] %vm608, %v762
    %776 = vst.msk [vmem:[%s4 + $0x28] sm:$0xff] %vm608, %v763
    %777 = vst.msk [vmem:[%s4 + $0x30] sm:$0xff] %vm608, %v764
    %778 = vst.msk [vmem:[%s4 + $0x38] sm:$0xff] %vm608, %v765
    %779 = vst.msk [vmem:[%s4 + $0x40] sm:$0xff] %vm608, %v766
    %780 = vst.msk [vmem:[%s4 + $0x48] sm:$0xff] %vm608, %v767
    %781 = vst.msk [vmem:[%s4 + $0x50] sm:$0xff] %vm608, %v768
    %782 = vst.msk [vmem:[%s4 + $0x58] sm:$0xff] %vm608, %v769
    %783 = vst.msk [vmem:[%s4 + $0x60] sm:$0x3] %vm632, %v770
    // Predicated region
    $region26: #{generator_forward.5} parent=1 // pred_check
      _
    $region27: #{generator_forward.5} parent=1 // pred_check_branch
      %785 = sbr.rel (0) target = $region29
    $region28: #{generator_forward.5} parent=1 // pred_region
      _
    $region29: #{generator_forward.5} parent=1 // pred_fallthru
      _
    // Predicated region
    $region30: #{generator_forward.5} parent=1 // pred_check
      _
    $region31: #{generator_forward.5} parent=1 // pred_check_branch
      %787 = sbr.rel (0) target = $region33
    $region32: #{generator_forward.5} parent=1 // pred_region
      _
    $region33: #{generator_forward.5} parent=1 // pred_fallthru
      _
    %788 = vsyncpa [#allocation3], 1
    %789 = vsyncpa [#allocation5], 1

// kernel: generator_forward.4
$region0: #{generator_forward.4}
  #allocation0 [shape = 'u32[]', space=smem, size = 0x4, offset = 0x4, fixed_abs, tag = 'smem constant byte address 0x4 - core index']
  #allocation1 [shape = 'u32[144,128]{1,0:T(1,128)}', space=vmem, size = 0x12000, scoped, tag = 'internal scratch']
  %s0 = inlined_call_operand.vmem [shape: f32[2,110], index: 0, kind: input, shape index: {}]
  %s1 = inlined_call_operand.hbm [shape: f32[110,1024], index: 1, kind: input, shape index: {}]
  %s2 = inlined_call_operand.vmem [shape: f32[1024,64], index: 2, kind: input, shape index: {}]
  %s3 = inlined_call_operand.hbm [shape: f32[64,1024], index: 3, kind: input, shape index: {}]
  %s4 = inlined_call_operand.hbm [shape: f32[1,1024], index: 4, kind: input, shape index: {}]
  %s5 = inlined_call_operand.hbm [shape: f32[1,1024], index: 5, kind: input, shape index: {}]
  %s6 = inlined_call_operand.vmem [shape: f32[2,1024], index: 6, kind: output, shape index: {}]
  %s7 = sld [smem:[#allocation0]]
  $region50: #{generator_forward.4} parent=0
    _
  %s9 = ssub.s32 1, %s7
  %s10 = scalar_select 0, %s9, %s7
  $region1: #{generator_forward.4} parent=0
    #allocation2 [shape = 'u8[458752]{0}', space=vmem, size = 0x70000, scoped, tag = 'input window, operand 1, single buffered']
    #allocation3 [shape = 's32[1]{0}', space=sflag, size = 0x4, scoped, tag = 'scoped memory for generator_forward.4']
    #allocation4 [shape = 'u8[262144]{0}', space=vmem, size = 0x40000, scoped, tag = 'input window, operand 3, single buffered']
    #allocation5 [shape = 's32[1]{0}', space=sflag, size = 0x4, scoped, tag = 'scoped memory for generator_forward.4']
    #allocation6 [shape = 'u8[4096]{0}', space=vmem, size = 0x1000, scoped, tag = 'input window, operand 4, single buffered']
    #allocation7 [shape = 'u8[4096]{0}', space=vmem, size = 0x1000, scoped, tag = 'input window, operand 5, single buffered']
    #allocation8 [shape = 's32[1]{0}', space=sflag, size = 0x4, scoped, tag = 'scoped memory for generator_forward.4']
    %11 = vsyncpa [#allocation3], 0
    %12 = vsyncpa [#allocation5], 0
    %13 = vsyncpa [#allocation8], 0
    // Predicated region
    $region2: #{generator_forward.4} parent=1 // pred_check
      _
    $region3: #{generator_forward.4} parent=1 // pred_check_branch
      %15 = sbr.rel (0) target = $region5
    $region4: #{generator_forward.4} parent=1 // pred_region
      _
    $region5: #{generator_forward.4} parent=1 // pred_fallthru
      _
    // Predicated region
    $region6: #{generator_forward.4} parent=1 // pred_check
      _
    $region7: #{generator_forward.4} parent=1 // pred_check_branch
      %17 = sbr.rel (0) target = $region9
    $region8: #{generator_forward.4} parent=1 // pred_region
      %s19 = ssub.s32 14336, 14336
      %20 = vsyncadd [#allocation3], %s19
      %s21 = sshll.u32 [#allocation2], 4
      %s22 = int_to_ptr.vmem [resolvable:$true] %s21
      %27 = dma.hbm_to_vmem [thread:$0]  %s1, 14336, %s22, [#allocation3], 1024, 1024, 64
    $region9: #{generator_forward.4} parent=1 // pred_fallthru
      _
    // Predicated region
    $region10: #{generator_forward.4} parent=1 // pred_check
      _
    $region11: #{generator_forward.4} parent=1 // pred_check_branch
      %29 = sbr.rel (0) target = $region13
    $region12: #{generator_forward.4} parent=1 // pred_region
      _
    $region13: #{generator_forward.4} parent=1 // pred_fallthru
      _
    // Predicated region
    $region14: #{generator_forward.4} parent=1 // pred_check
      _
    $region15: #{generator_forward.4} parent=1 // pred_check_branch
      %31 = sbr.rel (0) target = $region17
    $region16: #{generator_forward.4} parent=1 // pred_region
      %s33 = ssub.s32 8192, 8192
      %34 = vsyncadd [#allocation5], %s33
      %s35 = sshll.u32 [#allocation4], 4
      %s36 = int_to_ptr.vmem [resolvable:$true] %s35
      %41 = dma.hbm_to_vmem [thread:$0]  %s3, 8192, %s36, [#allocation5], 1024, 1024, 64
    $region17: #{generator_forward.4} parent=1 // pred_fallthru
      _
    // Predicated region
    $region18: #{generator_forward.4} parent=1 // pred_check
      _
    $region19: #{generator_forward.4} parent=1 // pred_check_branch
      %43 = sbr.rel (0) target = $region21
    $region20: #{generator_forward.4} parent=1 // pred_region
      %s45 = ssub.s32 128, 128
      %46 = vsyncadd [#allocation5], %s45
      %s48 = sshll.u32 [#allocation6], 4
      %s49 = int_to_ptr.vmem [resolvable:$true] %s48
      %51 = dma.hbm_to_vmem [thread:$0]  %s4, 128, %s49, [#allocation5]
    $region21: #{generator_forward.4} parent=1 // pred_fallthru
      _
    // Predicated region
    $region22: #{generator_forward.4} parent=1 // pred_check
      _
    $region23: #{generator_forward.4} parent=1 // pred_check_branch
      %53 = sbr.rel (0) target = $region25
    $region24: #{generator_forward.4} parent=1 // pred_region
      %s55 = ssub.s32 128, 128
      %56 = vsyncadd [#allocation8], %s55
      %s58 = sshll.u32 [#allocation7], 4
      %s59 = int_to_ptr.vmem [resolvable:$true] %s58
      %61 = dma.hbm_to_vmem [thread:$0]  %s5, 128, %s59, [#allocation8]
    $region25: #{generator_forward.4} parent=1 // pred_fallthru
      _
    // Predicated region
    $region26: #{generator_forward.4} parent=1 // pred_check
      _
    $region27: #{generator_forward.4} parent=1 // pred_check_branch
      %63 = sbr.rel (0) target = $region29
    $region28: #{generator_forward.4} parent=1 // pred_region
      %64 = dma.done [#allocation3], 14336
    $region29: #{generator_forward.4} parent=1 // pred_fallthru
      _
    // Predicated region
    $region30: #{generator_forward.4} parent=1 // pred_check
      _
    $region31: #{generator_forward.4} parent=1 // pred_check_branch
      %66 = sbr.rel (0) target = $region33
    $region32: #{generator_forward.4} parent=1 // pred_region
      %67 = dma.done [#allocation5], 8192
    $region33: #{generator_forward.4} parent=1 // pred_fallthru
      _
    // Predicated region
    $region34: #{generator_forward.4} parent=1 // pred_check
      _
    $region35: #{generator_forward.4} parent=1 // pred_check_branch
      %69 = sbr.rel (0) target = $region37
    $region36: #{generator_forward.4} parent=1 // pred_region
      %70 = dma.done [#allocation5], 128
    $region37: #{generator_forward.4} parent=1 // pred_fallthru
      _
    // Predicated region
    $region38: #{generator_forward.4} parent=1 // pred_check
      _
    $region39: #{generator_forward.4} parent=1 // pred_check_branch
      %72 = sbr.rel (0) target = $region41
    $region40: #{generator_forward.4} parent=1 // pred_region
      %73 = dma.done [#allocation8], 128
    $region41: #{generator_forward.4} parent=1 // pred_fallthru
      _
    %v74 = vld [vmem:[%s0] sm:$0x3]
    %v75 = vld [vmem:[#allocation2] sm:$0xff]
    %v76 = vld [vmem:[#allocation2 + $0x8] sm:$0xff]
    %v77 = vld [vmem:[#allocation2 + $0x10] sm:$0xff]
    %v78 = vld [vmem:[#allocation2 + $0x18] sm:$0xff]
    %v79 = vld [vmem:[#allocation2 + $0x20] sm:$0xff]
    %v80 = vld [vmem:[#allocation2 + $0x28] sm:$0xff]
    %v81 = vld [vmem:[#allocation2 + $0x30] sm:$0xff]
    %v82 = vld [vmem:[#allocation2 + $0x38] sm:$0xff]
    %v83 = vld [vmem:[#allocation2 + $0x40] sm:$0xff]
    %v84 = vld [vmem:[#allocation2 + $0x48] sm:$0xff]
    %v85 = vld [vmem:[#allocation2 + $0x50] sm:$0xff]
    %v86 = vld [vmem:[#allocation2 + $0x58] sm:$0xff]
    %v87 = vld [vmem:[#allocation2 + $0x60] sm:$0xff]
    %v88 = vld [vmem:[#allocation2 + $0x68] sm:$0xff]
    %v89 = vld [vmem:[#allocation2 + $0x70] sm:$0xff]
    %v90 = vld [vmem:[#allocation2 + $0x78] sm:$0xff]
    %v91 = vld [vmem:[#allocation2 + $0x80] sm:$0xff]
    %v92 = vld [vmem:[#allocation2 + $0x88] sm:$0xff]
    %v93 = vld [vmem:[#allocation2 + $0x90] sm:$0xff]
    %v94 = vld [vmem:[#allocation2 + $0x98] sm:$0xff]
    %v95 = vld [vmem:[#allocation2 + $0xa0] sm:$0xff]
    %v96 = vld [vmem:[#allocation2 + $0xa8] sm:$0xff]
    %v97 = vld [vmem:[#allocation2 + $0xb0] sm:$0xff]
    %v98 = vld [vmem:[#allocation2 + $0xb8] sm:$0xff]
    %v99 = vld [vmem:[#allocation2 + $0xc0] sm:$0xff]
    %v100 = vld [vmem:[#allocation2 + $0xc8] sm:$0xff]
    %v101 = vld [vmem:[#allocation2 + $0xd0] sm:$0xff]
    %v102 = vld [vmem:[#allocation2 + $0xd8] sm:$0xff]
    %v103 = vld [vmem:[#allocation2 + $0xe0] sm:$0xff]
    %v104 = vld [vmem:[#allocation2 + $0xe8] sm:$0xff]
    %v105 = vld [vmem:[#allocation2 + $0xf0] sm:$0xff]
    %v106 = vld [vmem:[#allocation2 + $0xf8] sm:$0xff]
    %v107 = vld [vmem:[#allocation2 + $0x100] sm:$0xff]
    %v108 = vld [vmem:[#allocation2 + $0x108] sm:$0xff]
    %v109 = vld [vmem:[#allocation2 + $0x110] sm:$0xff]
    %v110 = vld [vmem:[#allocation2 + $0x118] sm:$0xff]
    %v111 = vld [vmem:[#allocation2 + $0x120] sm:$0xff]
    %v112 = vld [vmem:[#allocation2 + $0x128] sm:$0xff]
    %v113 = vld [vmem:[#allocation2 + $0x130] sm:$0xff]
    %v114 = vld [vmem:[#allocation2 + $0x138] sm:$0xff]
    %v115 = vld [vmem:[#allocation2 + $0x140] sm:$0xff]
    %v116 = vld [vmem:[#allocation2 + $0x148] sm:$0xff]
    %v117 = vld [vmem:[#allocation2 + $0x150] sm:$0xff]
    %v118 = vld [vmem:[#allocation2 + $0x158] sm:$0xff]
    %v119 = vld [vmem:[#allocation2 + $0x160] sm:$0xff]
    %v120 = vld [vmem:[#allocation2 + $0x168] sm:$0xff]
    %v121 = vld [vmem:[#allocation2 + $0x170] sm:$0xff]
    %v122 = vld [vmem:[#allocation2 + $0x178] sm:$0xff]
    %v123 = vld [vmem:[#allocation2 + $0x180] sm:$0xff]
    %v124 = vld [vmem:[#allocation2 + $0x188] sm:$0xff]
    %v125 = vld [vmem:[#allocation2 + $0x190] sm:$0xff]
    %v126 = vld [vmem:[#allocation2 + $0x198] sm:$0xff]
    %v127 = vld [vmem:[#allocation2 + $0x1a0] sm:$0xff]
    %v128 = vld [vmem:[#allocation2 + $0x1a8] sm:$0xff]
    %v129 = vld [vmem:[#allocation2 + $0x1b0] sm:$0xff]
    %v130 = vld [vmem:[#allocation2 + $0x1b8] sm:$0xff]
    %v131 = vld [vmem:[#allocation2 + $0x1c0] sm:$0xff]
    %v132 = vld [vmem:[#allocation2 + $0x1c8] sm:$0xff]
    %v133 = vld [vmem:[#allocation2 + $0x1d0] sm:$0xff]
    %v134 = vld [vmem:[#allocation2 + $0x1d8] sm:$0xff]
    %v135 = vld [vmem:[#allocation2 + $0x1e0] sm:$0xff]
    %v136 = vld [vmem:[#allocation2 + $0x1e8] sm:$0xff]
    %v137 = vld [vmem:[#allocation2 + $0x1f0] sm:$0xff]
    %v138 = vld [vmem:[#allocation2 + $0x1f8] sm:$0xff]
    %v139 = vld [vmem:[#allocation2 + $0x200] sm:$0xff]
    %v140 = vld [vmem:[#allocation2 + $0x208] sm:$0xff]
    %v141 = vld [vmem:[#allocation2 + $0x210] sm:$0xff]
    %v142 = vld [vmem:[#allocation2 + $0x218] sm:$0xff]
    %v143 = vld [vmem:[#allocation2 + $0x220] sm:$0xff]
    %v144 = vld [vmem:[#allocation2 + $0x228] sm:$0xff]
    %v145 = vld [vmem:[#allocation2 + $0x230] sm:$0xff]
    %v146 = vld [vmem:[#allocation2 + $0x238] sm:$0xff]
    %v147 = vld [vmem:[#allocation2 + $0x240] sm:$0xff]
    %v148 = vld [vmem:[#allocation2 + $0x248] sm:$0xff]
    %v149 = vld [vmem:[#allocation2 + $0x250] sm:$0xff]
    %v150 = vld [vmem:[#allocation2 + $0x258] sm:$0xff]
    %v151 = vld [vmem:[#allocation2 + $0x260] sm:$0xff]
    %v152 = vld [vmem:[#allocation2 + $0x268] sm:$0xff]
    %v153 = vld [vmem:[#allocation2 + $0x270] sm:$0xff]
    %v154 = vld [vmem:[#allocation2 + $0x278] sm:$0xff]
    %v155 = vld [vmem:[#allocation2 + $0x280] sm:$0xff]
    %v156 = vld [vmem:[#allocation2 + $0x288] sm:$0xff]
    %v157 = vld [vmem:[#allocation2 + $0x290] sm:$0xff]
    %v158 = vld [vmem:[#allocation2 + $0x298] sm:$0xff]
    %v159 = vld [vmem:[#allocation2 + $0x2a0] sm:$0xff]
    %v160 = vld [vmem:[#allocation2 + $0x2a8] sm:$0xff]
    %v161 = vld [vmem:[#allocation2 + $0x2b0] sm:$0xff]
    %v162 = vld [vmem:[#allocation2 + $0x2b8] sm:$0xff]
    %v163 = vld [vmem:[#allocation2 + $0x2c0] sm:$0xff]
    %v164 = vld [vmem:[#allocation2 + $0x2c8] sm:$0xff]
    %v165 = vld [vmem:[#allocation2 + $0x2d0] sm:$0xff]
    %v166 = vld [vmem:[#allocation2 + $0x2d8] sm:$0xff]
    %v167 = vld [vmem:[#allocation2 + $0x2e0] sm:$0xff]
    %v168 = vld [vmem:[#allocation2 + $0x2e8] sm:$0xff]
    %v169 = vld [vmem:[#allocation2 + $0x2f0] sm:$0xff]
    %v170 = vld [vmem:[#allocation2 + $0x2f8] sm:$0xff]
    %v171 = vld [vmem:[#allocation2 + $0x300] sm:$0xff]
    %v172 = vld [vmem:[#allocation2 + $0x308] sm:$0xff]
    %v173 = vld [vmem:[#allocation2 + $0x310] sm:$0xff]
    %v174 = vld [vmem:[#allocation2 + $0x318] sm:$0xff]
    %v175 = vld [vmem:[#allocation2 + $0x320] sm:$0xff]
    %v176 = vld [vmem:[#allocation2 + $0x328] sm:$0xff]
    %v177 = vld [vmem:[#allocation2 + $0x330] sm:$0xff]
    %v178 = vld [vmem:[#allocation2 + $0x338] sm:$0xff]
    %v179 = vld [vmem:[#allocation2 + $0x340] sm:$0x3f]
    %v180 = vld [vmem:[#allocation2 + $0x348] sm:$0x3f]
    %v181 = vld [vmem:[#allocation2 + $0x350] sm:$0x3f]
    %v182 = vld [vmem:[#allocation2 + $0x358] sm:$0x3f]
    %v183 = vld [vmem:[#allocation2 + $0x360] sm:$0x3f]
    %v184 = vld [vmem:[#allocation2 + $0x368] sm:$0x3f]
    %v185 = vld [vmem:[#allocation2 + $0x370] sm:$0x3f]
    %v186 = vld [vmem:[#allocation2 + $0x378] sm:$0x3f]
    %vm187 = vcmask 900096
    %v189 = vsel %vm187, %v74, 0
    %vm191 = vcmask 1045504
    %v193 = vsel %vm191, %v179, 0
    %v196 = vsel %vm191, %v180, 0
    %v199 = vsel %vm191, %v181, 0
    %v202 = vsel %vm191, %v182, 0
    %v205 = vsel %vm191, %v183, 0
    %v208 = vsel %vm191, %v184, 0
    %v211 = vsel %vm191, %v185, 0
    %v214 = vsel %vm191, %v186, 0
    %216 = vmatprep.subr.mxu0 0.0
    %217 = vmatpush1.msra.mxu0 0.0
    %218 = vmatprep.subr.mxu0 0.0
    %219 = vmatpush1.msra.mxu0 0.0
    %220 = vmatprep.subr.mxu0 %v196
    %221 = vmatpush1.msra.mxu0 %v193
    %222 = vmatprep.subr.mxu0 %v172
    %223 = vmatpush1.msra.mxu0 %v171
    %224 = vmatprep.subr.mxu0 %v164
    %225 = vmatpush1.msra.mxu0 %v163
    %226 = vmatprep.subr.mxu0 %v156
    %227 = vmatpush1.msra.mxu0 %v155
    %228 = vmatprep.subr.mxu0 %v148
    %229 = vmatpush1.msra.mxu0 %v147
    %230 = vmatprep.subr.mxu0 %v140
    %231 = vmatpush1.msra.mxu0 %v139
    %232 = vmatprep.subr.mxu0 %v132
    %233 = vmatpush1.msra.mxu0 %v131
    %234 = vmatprep.subr.mxu0 %v124
    %235 = vmatpush1.msra.mxu0 %v123
    %236 = vmatprep.subr.mxu0 %v116
    %237 = vmatpush1.msra.mxu0 %v115
    %238 = vmatprep.subr.mxu0 %v108
    %239 = vmatpush1.msra.mxu0 %v107
    %240 = vmatprep.subr.mxu0 %v100
    %241 = vmatpush1.msra.mxu0 %v99
    %242 = vmatprep.subr.mxu0 %v92
    %243 = vmatpush1.msra.mxu0 %v91
    %244 = vmatprep.subr.mxu0 %v84
    %245 = vmatpush1.msra.mxu0 %v83
    %246 = vmatprep.subr.mxu0 %v76
    %247 = vmatpush1.msra.mxu0 %v75
    %248 = vmatprep.subr.mxu0 0.0
    %249 = vmatpush2.msra.mxu0 0.0
    %250 = vmatprep.subr.mxu0 0.0
    %251 = vmatpush2.msra.mxu0 0.0
    %252 = vmatprep.subr.mxu0 0.0
    %253 = vmatpush2.msra.mxu0 0.0
    %254 = vmatprep.subr.mxu0 0.0
    %255 = vmatpush2.msra.mxu0 0.0
    %256 = vmatprep.subr.mxu0 0.0
    %257 = vmatpush2.msra.mxu0 0.0
    %258 = vmatprep.subr.mxu0 0.0
    %259 = vmatpush2.msra.mxu0 0.0
    %260 = vmatprep.subr.mxu0 0.0
    %261 = vmatpush2.msra.mxu0 0.0
    %262 = vmatprep.subr.mxu0 0.0
    %263 = vmatpush2.msra.mxu0 0.0
    %264 = vmatprep.subr.mxu0 0.0
    %265 = vmatpush2.msra.mxu0 0.0
    %266 = vmatprep.subr.mxu0 0.0
    %267 = vmatpush2.msra.mxu0 0.0
    %268 = vmatprep.subr.mxu0 0.0
    %269 = vmatpush2.msra.mxu0 0.0
    %270 = vmatprep.subr.mxu0 0.0
    %271 = vmatpush2.msra.mxu0 0.0
    %272 = vmatprep.subr.mxu0 0.0
    %273 = vmatpush2.msra.mxu0 0.0
    %274 = vmatprep.subr.mxu0 0.0
    %275 = vmatpush2.msra.mxu0 0.0
    %276 = vmatprep.subr.mxu0 0.0
    %277 = vmatpush2.msra.mxu0 0.0
    %278 = vmatprep.subr.mxu0 0.0
    %279 = vmatpush2.msra.mxu0 0.0
    %280 = vmatprep.mubr.f32.mxu0 0.0
    %281 = vmatmul.mubr.f32.gmra.mxu0 %v189
    %v282 = vpop.f32.mrf.mxu0
    %v283 = vadd.f32 0.0, %v282
    %v284 = vpop.f32.mrf.mxu0
    %v285 = vadd.f32 0.0, %v284
    %286 = vdwg.mxu0
    %287 = vmatprep.subr.mxu0 0.0
    %288 = vmatpush1.msra.mxu0 0.0
    %289 = vmatprep.subr.mxu0 0.0
    %290 = vmatpush1.msra.mxu0 0.0
    %291 = vmatprep.subr.mxu0 %v202
    %292 = vmatpush1.msra.mxu0 %v199
    %293 = vmatprep.subr.mxu0 %v174
    %294 = vmatpush1.msra.mxu0 %v173
    %295 = vmatprep.subr.mxu0 %v166
    %296 = vmatpush1.msra.mxu0 %v165
    %297 = vmatprep.subr.mxu0 %v158
    %298 = vmatpush1.msra.mxu0 %v157
    %299 = vmatprep.subr.mxu0 %v150
    %300 = vmatpush1.msra.mxu0 %v149
    %301 = vmatprep.subr.mxu0 %v142
    %302 = vmatpush1.msra.mxu0 %v141
    %303 = vmatprep.subr.mxu0 %v134
    %304 = vmatpush1.msra.mxu0 %v133
    %305 = vmatprep.subr.mxu0 %v126
    %306 = vmatpush1.msra.mxu0 %v125
    %307 = vmatprep.subr.mxu0 %v118
    %308 = vmatpush1.msra.mxu0 %v117
    %309 = vmatprep.subr.mxu0 %v110
    %310 = vmatpush1.msra.mxu0 %v109
    %311 = vmatprep.subr.mxu0 %v102
    %312 = vmatpush1.msra.mxu0 %v101
    %313 = vmatprep.subr.mxu0 %v94
    %314 = vmatpush1.msra.mxu0 %v93
    %315 = vmatprep.subr.mxu0 %v86
    %316 = vmatpush1.msra.mxu0 %v85
    %317 = vmatprep.subr.mxu0 %v78
    %318 = vmatpush1.msra.mxu0 %v77
    %319 = vmatprep.subr.mxu0 0.0
    %320 = vmatpush2.msra.mxu0 0.0
    %321 = vmatprep.subr.mxu0 0.0
    %322 = vmatpush2.msra.mxu0 0.0
    %323 = vmatprep.subr.mxu0 0.0
    %324 = vmatpush2.msra.mxu0 0.0
    %325 = vmatprep.subr.mxu0 0.0
    %326 = vmatpush2.msra.mxu0 0.0
    %327 = vmatprep.subr.mxu0 0.0
    %328 = vmatpush2.msra.mxu0 0.0
    %329 = vmatprep.subr.mxu0 0.0
    %330 = vmatpush2.msra.mxu0 0.0
    %331 = vmatprep.subr.mxu0 0.0
    %332 = vmatpush2.msra.mxu0 0.0
    %333 = vmatprep.subr.mxu0 0.0
    %334 = vmatpush2.msra.mxu0 0.0
    %335 = vmatprep.subr.mxu0 0.0
    %336 = vmatpush2.msra.mxu0 0.0
    %337 = vmatprep.subr.mxu0 0.0
    %338 = vmatpush2.msra.mxu0 0.0
    %339 = vmatprep.subr.mxu0 0.0
    %340 = vmatpush2.msra.mxu0 0.0
    %341 = vmatprep.subr.mxu0 0.0
    %342 = vmatpush2.msra.mxu0 0.0
    %343 = vmatprep.subr.mxu0 0.0
    %344 = vmatpush2.msra.mxu0 0.0
    %345 = vmatprep.subr.mxu0 0.0
    %346 = vmatpush2.msra.mxu0 0.0
    %347 = vmatprep.subr.mxu0 0.0
    %348 = vmatpush2.msra.mxu0 0.0
    %349 = vmatprep.subr.mxu0 0.0
    %350 = vmatpush2.msra.mxu0 0.0
    %351 = vmatprep.mubr.f32.mxu0 0.0
    %352 = vmatmul.mubr.f32.gmra.mxu0 %v189
    %v353 = vpop.f32.mrf.mxu0
    %v354 = vadd.f32 0.0, %v353
    %v355 = vpop.f32.mrf.mxu0
    %v356 = vadd.f32 0.0, %v355
    %357 = vdwg.mxu0
    %358 = vmatprep.subr.mxu0 0.0
    %359 = vmatpush1.msra.mxu0 0.0
    %360 = vmatprep.subr.mxu0 0.0
    %361 = vmatpush1.msra.mxu0 0.0
    %362 = vmatprep.subr.mxu0 %v208
    %363 = vmatpush1.msra.mxu0 %v205
    %364 = vmatprep.subr.mxu0 %v176
    %365 = vmatpush1.msra.mxu0 %v175
    %366 = vmatprep.subr.mxu0 %v168
    %367 = vmatpush1.msra.mxu0 %v167
    %368 = vmatprep.subr.mxu0 %v160
    %369 = vmatpush1.msra.mxu0 %v159
    %370 = vmatprep.subr.mxu0 %v152
    %371 = vmatpush1.msra.mxu0 %v151
    %372 = vmatprep.subr.mxu0 %v144
    %373 = vmatpush1.msra.mxu0 %v143
    %374 = vmatprep.subr.mxu0 %v136
    %375 = vmatpush1.msra.mxu0 %v135
    %376 = vmatprep.subr.mxu0 %v128
    %377 = vmatpush1.msra.mxu0 %v127
    %378 = vmatprep.subr.mxu0 %v120
    %379 = vmatpush1.msra.mxu0 %v119
    %380 = vmatprep.subr.mxu0 %v112
    %381 = vmatpush1.msra.mxu0 %v111
    %382 = vmatprep.subr.mxu0 %v104
    %383 = vmatpush1.msra.mxu0 %v103
    %384 = vmatprep.subr.mxu0 %v96
    %385 = vmatpush1.msra.mxu0 %v95
    %386 = vmatprep.subr.mxu0 %v88
    %387 = vmatpush1.msra.mxu0 %v87
    %388 = vmatprep.subr.mxu0 %v80
    %389 = vmatpush1.msra.mxu0 %v79
    %390 = vmatprep.subr.mxu0 0.0
    %391 = vmatpush2.msra.mxu0 0.0
    %392 = vmatprep.subr.mxu0 0.0
    %393 = vmatpush2.msra.mxu0 0.0
    %394 = vmatprep.subr.mxu0 0.0
    %395 = vmatpush2.msra.mxu0 0.0
    %396 = vmatprep.subr.mxu0 0.0
    %397 = vmatpush2.msra.mxu0 0.0
    %398 = vmatprep.subr.mxu0 0.0
    %399 = vmatpush2.msra.mxu0 0.0
    %400 = vmatprep.subr.mxu0 0.0
    %401 = vmatpush2.msra.mxu0 0.0
    %402 = vmatprep.subr.mxu0 0.0
    %403 = vmatpush2.msra.mxu0 0.0
    %404 = vmatprep.subr.mxu0 0.0
    %405 = vmatpush2.msra.mxu0 0.0
    %406 = vmatprep.subr.mxu0 0.0
    %407 = vmatpush2.msra.mxu0 0.0
    %408 = vmatprep.subr.mxu0 0.0
    %409 = vmatpush2.msra.mxu0 0.0
    %410 = vmatprep.subr.mxu0 0.0
    %411 = vmatpush2.msra.mxu0 0.0
    %412 = vmatprep.subr.mxu0 0.0
    %413 = vmatpush2.msra.mxu0 0.0
    %414 = vmatprep.subr.mxu0 0.0
    %415 = vmatpush2.msra.mxu0 0.0
    %416 = vmatprep.subr.mxu0 0.0
    %417 = vmatpush2.msra.mxu0 0.0
    %418 = vmatprep.subr.mxu0 0.0
    %419 = vmatpush2.msra.mxu0 0.0
    %420 = vmatprep.subr.mxu0 0.0
    %421 = vmatpush2.msra.mxu0 0.0
    %422 = vmatprep.mubr.f32.mxu0 0.0
    %423 = vmatmul.mubr.f32.gmra.mxu0 %v189
    %v424 = vpop.f32.mrf.mxu0
    %v425 = vadd.f32 0.0, %v424
    %v426 = vpop.f32.mrf.mxu0
    %v427 = vadd.f32 0.0, %v426
    %428 = vdwg.mxu0
    %429 = vmatprep.subr.mxu0 0.0
    %430 = vmatpush1.msra.mxu0 0.0
    %431 = vmatprep.subr.mxu0 0.0
    %432 = vmatpush1.msra.mxu0 0.0
    %433 = vmatprep.subr.mxu0 %v214
    %434 = vmatpush1.msra.mxu0 %v211
    %435 = vmatprep.subr.mxu0 %v178
    %436 = vmatpush1.msra.mxu0 %v177
    %437 = vmatprep.subr.mxu0 %v170
    %438 = vmatpush1.msra.mxu0 %v169
    %439 = vmatprep.subr.mxu0 %v162
    %440 = vmatpush1.msra.mxu0 %v161
    %441 = vmatprep.subr.mxu0 %v154
    %442 = vmatpush1.msra.mxu0 %v153
    %443 = vmatprep.subr.mxu0 %v146
    %444 = vmatpush1.msra.mxu0 %v145
    %445 = vmatprep.subr.mxu0 %v138
    %446 = vmatpush1.msra.mxu0 %v137
    %447 = vmatprep.subr.mxu0 %v130
    %448 = vmatpush1.msra.mxu0 %v129
    %449 = vmatprep.subr.mxu0 %v122
    %450 = vmatpush1.msra.mxu0 %v121
    %451 = vmatprep.subr.mxu0 %v114
    %452 = vmatpush1.msra.mxu0 %v113
    %453 = vmatprep.subr.mxu0 %v106
    %454 = vmatpush1.msra.mxu0 %v105
    %455 = vmatprep.subr.mxu0 %v98
    %456 = vmatpush1.msra.mxu0 %v97
    %457 = vmatprep.subr.mxu0 %v90
    %458 = vmatpush1.msra.mxu0 %v89
    %459 = vmatprep.subr.mxu0 %v82
    %460 = vmatpush1.msra.mxu0 %v81
    %461 = vmatprep.subr.mxu0 0.0
    %462 = vmatpush2.msra.mxu0 0.0
    %463 = vmatprep.subr.mxu0 0.0
    %464 = vmatpush2.msra.mxu0 0.0
    %465 = vmatprep.subr.mxu0 0.0
    %466 = vmatpush2.msra.mxu0 0.0
    %467 = vmatprep.subr.mxu0 0.0
    %468 = vmatpush2.msra.mxu0 0.0
    %469 = vmatprep.subr.mxu0 0.0
    %470 = vmatpush2.msra.mxu0 0.0
    %471 = vmatprep.subr.mxu0 0.0
    %472 = vmatpush2.msra.mxu0 0.0
    %473 = vmatprep.subr.mxu0 0.0
    %474 = vmatpush2.msra.mxu0 0.0
    %475 = vmatprep.subr.mxu0 0.0
    %476 = vmatpush2.msra.mxu0 0.0
    %477 = vmatprep.subr.mxu0 0.0
    %478 = vmatpush2.msra.mxu0 0.0
    %479 = vmatprep.subr.mxu0 0.0
    %480 = vmatpush2.msra.mxu0 0.0
    %481 = vmatprep.subr.mxu0 0.0
    %482 = vmatpush2.msra.mxu0 0.0
    %483 = vmatprep.subr.mxu0 0.0
    %484 = vmatpush2.msra.mxu0 0.0
    %485 = vmatprep.subr.mxu0 0.0
    %486 = vmatpush2.msra.mxu0 0.0
    %487 = vmatprep.subr.mxu0 0.0
    %488 = vmatpush2.msra.mxu0 0.0
    %489 = vmatprep.subr.mxu0 0.0
    %490 = vmatpush2.msra.mxu0 0.0
    %491 = vmatprep.subr.mxu0 0.0
    %492 = vmatpush2.msra.mxu0 0.0
    %493 = vmatprep.mubr.f32.mxu0 0.0
    %494 = vmatmul.mubr.f32.gmra.mxu0 %v189
    %v495 = vpop.f32.mrf.mxu0
    %v496 = vadd.f32 0.0, %v495
    %v497 = vpop.f32.mrf.mxu0
    %v498 = vadd.f32 0.0, %v497
    %499 = vdwg.mxu0
    %vm500 = vcmask 1041408
    %v501 = vsel %vm500, %v283, 0.0
    %v502 = vrot.slane %v501, 4
    %v503 = vadd.f32 %v501, %v502
    %v504 = vrot.slane %v503, 2
    %v505 = vadd.f32 %v503, %v504
    %v506 = vrot.slane %v505, 1
    %v507 = vadd.f32 %v505, %v506
    %v508 = vsel %vm500, %v285, 0.0
    %v509 = vrot.slane %v508, 4
    %v510 = vadd.f32 %v508, %v509
    %v511 = vrot.slane %v510, 2
    %v512 = vadd.f32 %v510, %v511
    %v513 = vrot.slane %v512, 1
    %v514 = vadd.f32 %v512, %v513
    %v515 = vsel %vm500, %v354, 0.0
    %v516 = vrot.slane %v515, 4
    %v517 = vadd.f32 %v515, %v516
    %v518 = vrot.slane %v517, 2
    %v519 = vadd.f32 %v517, %v518
    %v520 = vrot.slane %v519, 1
    %v521 = vadd.f32 %v519, %v520
    %v522 = vsel %vm500, %v356, 0.0
    %v523 = vrot.slane %v522, 4
    %v524 = vadd.f32 %v522, %v523
    %v525 = vrot.slane %v524, 2
    %v526 = vadd.f32 %v524, %v525
    %v527 = vrot.slane %v526, 1
    %v528 = vadd.f32 %v526, %v527
    %v529 = vsel %vm500, %v425, 0.0
    %v530 = vrot.slane %v529, 4
    %v531 = vadd.f32 %v529, %v530
    %v532 = vrot.slane %v531, 2
    %v533 = vadd.f32 %v531, %v532
    %v534 = vrot.slane %v533, 1
    %v535 = vadd.f32 %v533, %v534
    %v536 = vsel %vm500, %v427, 0.0
    %v537 = vrot.slane %v536, 4
    %v538 = vadd.f32 %v536, %v537
    %v539 = vrot.slane %v538, 2
    %v540 = vadd.f32 %v538, %v539
    %v541 = vrot.slane %v540, 1
    %v542 = vadd.f32 %v540, %v541
    %v543 = vsel %vm500, %v496, 0.0
    %v544 = vrot.slane %v543, 4
    %v545 = vadd.f32 %v543, %v544
    %v546 = vrot.slane %v545, 2
    %v547 = vadd.f32 %v545, %v546
    %v548 = vrot.slane %v547, 1
    %v549 = vadd.f32 %v547, %v548
    %v550 = vsel %vm500, %v498, 0.0
    %v551 = vrot.slane %v550, 4
    %v552 = vadd.f32 %v550, %v551
    %v553 = vrot.slane %v552, 2
    %v554 = vadd.f32 %v552, %v553
    %v555 = vrot.slane %v554, 1
    %v556 = vadd.f32 %v554, %v555
    %v557 = vrcp.pop 2.0
    %v558 = vmul.f32 %v507, %v557
    %v559 = vmul.f32 %v514, %v557
    %v560 = vmul.f32 %v521, %v557
    %v561 = vmul.f32 %v528, %v557
    %v562 = vmul.f32 %v535, %v557
    %v563 = vmul.f32 %v542, %v557
    %v564 = vmul.f32 %v549, %v557
    %v565 = vmul.f32 %v556, %v557
    %v566 = vmul.f32 %v283, %v283
    %v567 = vmul.f32 %v285, %v285
    %v568 = vmul.f32 %v354, %v354
    %v569 = vmul.f32 %v356, %v356
    %v570 = vmul.f32 %v425, %v425
    %v571 = vmul.f32 %v427, %v427
    %v572 = vmul.f32 %v496, %v496
    %v573 = vmul.f32 %v498, %v498
    %v574 = vsel %vm500, %v566, 0.0
    %v575 = vrot.slane %v574, 4
    %v576 = vadd.f32 %v574, %v575
    %v577 = vrot.slane %v576, 2
    %v578 = vadd.f32 %v576, %v577
    %v579 = vrot.slane %v578, 1
    %v580 = vadd.f32 %v578, %v579
    %v581 = vsel %vm500, %v567, 0.0
    %v582 = vrot.slane %v581, 4
    %v583 = vadd.f32 %v581, %v582
    %v584 = vrot.slane %v583, 2
    %v585 = vadd.f32 %v583, %v584
    %v586 = vrot.slane %v585, 1
    %v587 = vadd.f32 %v585, %v586
    %v588 = vsel %vm500, %v568, 0.0
    %v589 = vrot.slane %v588, 4
    %v590 = vadd.f32 %v588, %v589
    %v591 = vrot.slane %v590, 2
    %v592 = vadd.f32 %v590, %v591
    %v593 = vrot.slane %v592, 1
    %v594 = vadd.f32 %v592, %v593
    %v595 = vsel %vm500, %v569, 0.0
    %v596 = vrot.slane %v595, 4
    %v597 = vadd.f32 %v595, %v596
    %v598 = vrot.slane %v597, 2
    %v599 = vadd.f32 %v597, %v598
    %v600 = vrot.slane %v599, 1
    %v601 = vadd.f32 %v599, %v600
    %v602 = vsel %vm500, %v570, 0.0
    %v603 = vrot.slane %v602, 4
    %v604 = vadd.f32 %v602, %v603
    %v605 = vrot.slane %v604, 2
    %v606 = vadd.f32 %v604, %v605
    %v607 = vrot.slane %v606, 1
    %v608 = vadd.f32 %v606, %v607
    %v609 = vsel %vm500, %v571, 0.0
    %v610 = vrot.slane %v609, 4
    %v611 = vadd.f32 %v609, %v610
    %v612 = vrot.slane %v611, 2
    %v613 = vadd.f32 %v611, %v612
    %v614 = vrot.slane %v613, 1
    %v615 = vadd.f32 %v613, %v614
    %v616 = vsel %vm500, %v572, 0.0
    %v617 = vrot.slane %v616, 4
    %v618 = vadd.f32 %v616, %v617
    %v619 = vrot.slane %v618, 2
    %v620 = vadd.f32 %v618, %v619
    %v621 = vrot.slane %v620, 1
    %v622 = vadd.f32 %v620, %v621
    %v623 = vsel %vm500, %v573, 0.0
    %v624 = vrot.slane %v623, 4
    %v625 = vadd.f32 %v623, %v624
    %v626 = vrot.slane %v625, 2
    %v627 = vadd.f32 %v625, %v626
    %v628 = vrot.slane %v627, 1
    %v629 = vadd.f32 %v627, %v628
    %v630 = vmul.f32 %v580, %v557
    %v631 = vmul.f32 %v587, %v557
    %v632 = vmul.f32 %v594, %v557
    %v633 = vmul.f32 %v601, %v557
    %v634 = vmul.f32 %v608, %v557
    %v635 = vmul.f32 %v615, %v557
    %v636 = vmul.f32 %v622, %v557
    %v637 = vmul.f32 %v629, %v557
    %v638 = vld [vmem:[%s2] sm:$0xff]
    %v639 = vld [vmem:[%s2 + $0x8] sm:$0xff]
    %v640 = vld [vmem:[%s2 + $0x10] sm:$0xff]
    %v641 = vld [vmem:[%s2 + $0x18] sm:$0xff]
    %v642 = vld [vmem:[%s2 + $0x20] sm:$0xff]
    %v643 = vld [vmem:[%s2 + $0x28] sm:$0xff]
    %v644 = vld [vmem:[%s2 + $0x30] sm:$0xff]
    %v645 = vld [vmem:[%s2 + $0x38] sm:$0xff]
    %v646 = vld [vmem:[%s2 + $0x40] sm:$0xff]
    %v647 = vld [vmem:[%s2 + $0x48] sm:$0xff]
    %v648 = vld [vmem:[%s2 + $0x50] sm:$0xff]
    %v649 = vld [vmem:[%s2 + $0x58] sm:$0xff]
    %v650 = vld [vmem:[%s2 + $0x60] sm:$0xff]
    %v651 = vld [vmem:[%s2 + $0x68] sm:$0xff]
    %v652 = vld [vmem:[%s2 + $0x70] sm:$0xff]
    %v653 = vld [vmem:[%s2 + $0x78] sm:$0xff]
    %v654 = vld [vmem:[%s2 + $0x80] sm:$0xff]
    %v655 = vld [vmem:[%s2 + $0x88] sm:$0xff]
    %v656 = vld [vmem:[%s2 + $0x90] sm:$0xff]
    %v657 = vld [vmem:[%s2 + $0x98] sm:$0xff]
    %v658 = vld [vmem:[%s2 + $0xa0] sm:$0xff]
    %v659 = vld [vmem:[%s2 + $0xa8] sm:$0xff]
    %v660 = vld [vmem:[%s2 + $0xb0] sm:$0xff]
    %v661 = vld [vmem:[%s2 + $0xb8] sm:$0xff]
    %v662 = vld [vmem:[%s2 + $0xc0] sm:$0xff]
    %v663 = vld [vmem:[%s2 + $0xc8] sm:$0xff]
    %v664 = vld [vmem:[%s2 + $0xd0] sm:$0xff]
    %v665 = vld [vmem:[%s2 + $0xd8] sm:$0xff]
    %v666 = vld [vmem:[%s2 + $0xe0] sm:$0xff]
    %v667 = vld [vmem:[%s2 + $0xe8] sm:$0xff]
    %v668 = vld [vmem:[%s2 + $0xf0] sm:$0xff]
    %v669 = vld [vmem:[%s2 + $0xf8] sm:$0xff]
    %v670 = vld [vmem:[%s2 + $0x100] sm:$0xff]
    %v671 = vld [vmem:[%s2 + $0x108] sm:$0xff]
    %v672 = vld [vmem:[%s2 + $0x110] sm:$0xff]
    %v673 = vld [vmem:[%s2 + $0x118] sm:$0xff]
    %v674 = vld [vmem:[%s2 + $0x120] sm:$0xff]
    %v675 = vld [vmem:[%s2 + $0x128] sm:$0xff]
    %v676 = vld [vmem:[%s2 + $0x130] sm:$0xff]
    %v677 = vld [vmem:[%s2 + $0x138] sm:$0xff]
    %v678 = vld [vmem:[%s2 + $0x140] sm:$0xff]
    %v679 = vld [vmem:[%s2 + $0x148] sm:$0xff]
    %v680 = vld [vmem:[%s2 + $0x150] sm:$0xff]
    %v681 = vld [vmem:[%s2 + $0x158] sm:$0xff]
    %v682 = vld [vmem:[%s2 + $0x160] sm:$0xff]
    %v683 = vld [vmem:[%s2 + $0x168] sm:$0xff]
    %v684 = vld [vmem:[%s2 + $0x170] sm:$0xff]
    %v685 = vld [vmem:[%s2 + $0x178] sm:$0xff]
    %v686 = vld [vmem:[%s2 + $0x180] sm:$0xff]
    %v687 = vld [vmem:[%s2 + $0x188] sm:$0xff]
    %v688 = vld [vmem:[%s2 + $0x190] sm:$0xff]
    %v689 = vld [vmem:[%s2 + $0x198] sm:$0xff]
    %v690 = vld [vmem:[%s2 + $0x1a0] sm:$0xff]
    %v691 = vld [vmem:[%s2 + $0x1a8] sm:$0xff]
    %v692 = vld [vmem:[%s2 + $0x1b0] sm:$0xff]
    %v693 = vld [vmem:[%s2 + $0x1b8] sm:$0xff]
    %v694 = vld [vmem:[%s2 + $0x1c0] sm:$0xff]
    %v695 = vld [vmem:[%s2 + $0x1c8] sm:$0xff]
    %v696 = vld [vmem:[%s2 + $0x1d0] sm:$0xff]
    %v697 = vld [vmem:[%s2 + $0x1d8] sm:$0xff]
    %v698 = vld [vmem:[%s2 + $0x1e0] sm:$0xff]
    %v699 = vld [vmem:[%s2 + $0x1e8] sm:$0xff]
    %v700 = vld [vmem:[%s2 + $0x1f0] sm:$0xff]
    %v701 = vld [vmem:[%s2 + $0x1f8] sm:$0xff]
    %v702 = vld [vmem:[%s2 + $0x200] sm:$0xff]
    %v703 = vld [vmem:[%s2 + $0x208] sm:$0xff]
    %v704 = vld [vmem:[%s2 + $0x210] sm:$0xff]
    %v705 = vld [vmem:[%s2 + $0x218] sm:$0xff]
    %v706 = vld [vmem:[%s2 + $0x220] sm:$0xff]
    %v707 = vld [vmem:[%s2 + $0x228] sm:$0xff]
    %v708 = vld [vmem:[%s2 + $0x230] sm:$0xff]
    %v709 = vld [vmem:[%s2 + $0x238] sm:$0xff]
    %v710 = vld [vmem:[%s2 + $0x240] sm:$0xff]
    %v711 = vld [vmem:[%s2 + $0x248] sm:$0xff]
    %v712 = vld [vmem:[%s2 + $0x250] sm:$0xff]
    %v713 = vld [vmem:[%s2 + $0x258] sm:$0xff]
    %v714 = vld [vmem:[%s2 + $0x260] sm:$0xff]
    %v715 = vld [vmem:[%s2 + $0x268] sm:$0xff]
    %v716 = vld [vmem:[%s2 + $0x270] sm:$0xff]
    %v717 = vld [vmem:[%s2 + $0x278] sm:$0xff]
    %v718 = vld [vmem:[%s2 + $0x280] sm:$0xff]
    %v719 = vld [vmem:[%s2 + $0x288] sm:$0xff]
    %v720 = vld [vmem:[%s2 + $0x290] sm:$0xff]
    %v721 = vld [vmem:[%s2 + $0x298] sm:$0xff]
    %v722 = vld [vmem:[%s2 + $0x2a0] sm:$0xff]
    %v723 = vld [vmem:[%s2 + $0x2a8] sm:$0xff]
    %v724 = vld [vmem:[%s2 + $0x2b0] sm:$0xff]
    %v725 = vld [vmem:[%s2 + $0x2b8] sm:$0xff]
    %v726 = vld [vmem:[%s2 + $0x2c0] sm:$0xff]
    %v727 = vld [vmem:[%s2 + $0x2c8] sm:$0xff]
    %v728 = vld [vmem:[%s2 + $0x2d0] sm:$0xff]
    %v729 = vld [vmem:[%s2 + $0x2d8] sm:$0xff]
    %v730 = vld [vmem:[%s2 + $0x2e0] sm:$0xff]
    %v731 = vld [vmem:[%s2 + $0x2e8] sm:$0xff]
    %v732 = vld [vmem:[%s2 + $0x2f0] sm:$0xff]
    %v733 = vld [vmem:[%s2 + $0x2f8] sm:$0xff]
    %v734 = vld [vmem:[%s2 + $0x300] sm:$0xff]
    %v735 = vld [vmem:[%s2 + $0x308] sm:$0xff]
    %v736 = vld [vmem:[%s2 + $0x310] sm:$0xff]
    %v737 = vld [vmem:[%s2 + $0x318] sm:$0xff]
    %v738 = vld [vmem:[%s2 + $0x320] sm:$0xff]
    %v739 = vld [vmem:[%s2 + $0x328] sm:$0xff]
    %v740 = vld [vmem:[%s2 + $0x330] sm:$0xff]
    %v741 = vld [vmem:[%s2 + $0x338] sm:$0xff]
    %v742 = vld [vmem:[%s2 + $0x340] sm:$0xff]
    %v743 = vld [vmem:[%s2 + $0x348] sm:$0xff]
    %v744 = vld [vmem:[%s2 + $0x350] sm:$0xff]
    %v745 = vld [vmem:[%s2 + $0x358] sm:$0xff]
    %v746 = vld [vmem:[%s2 + $0x360] sm:$0xff]
    %v747 = vld [vmem:[%s2 + $0x368] sm:$0xff]
    %v748 = vld [vmem:[%s2 + $0x370] sm:$0xff]
    %v749 = vld [vmem:[%s2 + $0x378] sm:$0xff]
    %v750 = vld [vmem:[%s2 + $0x380] sm:$0xff]
    %v751 = vld [vmem:[%s2 + $0x388] sm:$0xff]
    %v752 = vld [vmem:[%s2 + $0x390] sm:$0xff]
    %v753 = vld [vmem:[%s2 + $0x398] sm:$0xff]
    %v754 = vld [vmem:[%s2 + $0x3a0] sm:$0xff]
    %v755 = vld [vmem:[%s2 + $0x3a8] sm:$0xff]
    %v756 = vld [vmem:[%s2 + $0x3b0] sm:$0xff]
    %v757 = vld [vmem:[%s2 + $0x3b8] sm:$0xff]
    %v758 = vld [vmem:[%s2 + $0x3c0] sm:$0xff]
    %v759 = vld [vmem:[%s2 + $0x3c8] sm:$0xff]
    %v760 = vld [vmem:[%s2 + $0x3d0] sm:$0xff]
    %v761 = vld [vmem:[%s2 + $0x3d8] sm:$0xff]
    %v762 = vld [vmem:[%s2 + $0x3e0] sm:$0xff]
    %v763 = vld [vmem:[%s2 + $0x3e8] sm:$0xff]
    %v764 = vld [vmem:[%s2 + $0x3f0] sm:$0xff]
    %v765 = vld [vmem:[%s2 + $0x3f8] sm:$0xff]
    %766 = vmatprep.subr.mxu0 0.0
    %767 = vmatpush1.msra.mxu0 %v653
    %768 = vmatprep.subr.mxu0 0.0
    %769 = vmatpush1.msra.mxu0 %v652
    %770 = vmatprep.subr.mxu0 0.0
    %771 = vmatpush1.msra.mxu0 %v651
    %772 = vmatprep.subr.mxu0 0.0
    %773 = vmatpush1.msra.mxu0 %v650
    %774 = vmatprep.subr.mxu0 0.0
    %775 = vmatpush1.msra.mxu0 %v649
    %776 = vmatprep.subr.mxu0 0.0
    %777 = vmatpush1.msra.mxu0 %v648
    %778 = vmatprep.subr.mxu0 0.0
    %779 = vmatpush1.msra.mxu0 %v647
    %780 = vmatprep.subr.mxu0 0.0
    %781 = vmatpush1.msra.mxu0 %v646
    %782 = vmatprep.subr.mxu0 0.0
    %783 = vmatpush1.msra.mxu0 %v645
    %784 = vmatprep.subr.mxu0 0.0
    %785 = vmatpush1.msra.mxu0 %v644
    %786 = vmatprep.subr.mxu0 0.0
    %787 = vmatpush1.msra.mxu0 %v643
    %788 = vmatprep.subr.mxu0 0.0
    %789 = vmatpush1.msra.mxu0 %v642
    %790 = vmatprep.subr.mxu0 0.0
    %791 = vmatpush1.msra.mxu0 %v641
    %792 = vmatprep.subr.mxu0 0.0
    %793 = vmatpush1.msra.mxu0 %v640
    %794 = vmatprep.subr.mxu0 0.0
    %795 = vmatpush1.msra.mxu0 %v639
    %796 = vmatprep.subr.mxu0 0.0
    %797 = vmatpush1.msra.mxu0 %v638
    %798 = vmatprep.subr.mxu0 0.0
    %799 = vmatpush2.msra.mxu0 %v669
    %800 = vmatprep.subr.mxu0 0.0
    %801 = vmatpush2.msra.mxu0 %v668
    %802 = vmatprep.subr.mxu0 0.0
    %803 = vmatpush2.msra.mxu0 %v667
    %804 = vmatprep.subr.mxu0 0.0
    %805 = vmatpush2.msra.mxu0 %v666
    %806 = vmatprep.subr.mxu0 0.0
    %807 = vmatpush2.msra.mxu0 %v665
    %808 = vmatprep.subr.mxu0 0.0
    %809 = vmatpush2.msra.mxu0 %v664
    %810 = vmatprep.subr.mxu0 0.0
    %811 = vmatpush2.msra.mxu0 %v663
    %812 = vmatprep.subr.mxu0 0.0
    %813 = vmatpush2.msra.mxu0 %v662
    %814 = vmatprep.subr.mxu0 0.0
    %815 = vmatpush2.msra.mxu0 %v661
    %816 = vmatprep.subr.mxu0 0.0
    %817 = vmatpush2.msra.mxu0 %v660
    %818 = vmatprep.subr.mxu0 0.0
    %819 = vmatpush2.msra.mxu0 %v659
    %820 = vmatprep.subr.mxu0 0.0
    %821 = vmatpush2.msra.mxu0 %v658
    %822 = vmatprep.subr.mxu0 0.0
    %823 = vmatpush2.msra.mxu0 %v657
    %824 = vmatprep.subr.mxu0 0.0
    %825 = vmatpush2.msra.mxu0 %v656
    %826 = vmatprep.subr.mxu0 0.0
    %827 = vmatpush2.msra.mxu0 %v655
    %828 = vmatprep.subr.mxu0 0.0
    %829 = vmatpush2.msra.mxu0 %v654
    %830 = vmatprep.mubr.f32.mxu0 %v559
    %831 = vmatmul.mubr.f32.gmra.mxu0 %v558
    %v832 = vpop.f32.mrf.mxu0
    %v833 = vadd.f32 0.0, %v832
    %v834 = vpop.f32.mrf.mxu0
    %835 = vdwg.mxu0
    %836 = vmatprep.subr.mxu0 0.0
    %837 = vmatpush1.msra.mxu0 %v685
    %838 = vmatprep.subr.mxu0 0.0
    %839 = vmatpush1.msra.mxu0 %v684
    %840 = vmatprep.subr.mxu0 0.0
    %841 = vmatpush1.msra.mxu0 %v683
    %842 = vmatprep.subr.mxu0 0.0
    %843 = vmatpush1.msra.mxu0 %v682
    %844 = vmatprep.subr.mxu0 0.0
    %845 = vmatpush1.msra.mxu0 %v681
    %846 = vmatprep.subr.mxu0 0.0
    %847 = vmatpush1.msra.mxu0 %v680
    %848 = vmatprep.subr.mxu0 0.0
    %849 = vmatpush1.msra.mxu0 %v679
    %850 = vmatprep.subr.mxu0 0.0
    %851 = vmatpush1.msra.mxu0 %v678
    %852 = vmatprep.subr.mxu0 0.0
    %853 = vmatpush1.msra.mxu0 %v677
    %854 = vmatprep.subr.mxu0 0.0
    %855 = vmatpush1.msra.mxu0 %v676
    %856 = vmatprep.subr.mxu0 0.0
    %857 = vmatpush1.msra.mxu0 %v675
    %858 = vmatprep.subr.mxu0 0.0
    %859 = vmatpush1.msra.mxu0 %v674
    %860 = vmatprep.subr.mxu0 0.0
    %861 = vmatpush1.msra.mxu0 %v673
    %862 = vmatprep.subr.mxu0 0.0
    %863 = vmatpush1.msra.mxu0 %v672
    %864 = vmatprep.subr.mxu0 0.0
    %865 = vmatpush1.msra.mxu0 %v671
    %866 = vmatprep.subr.mxu0 0.0
    %867 = vmatpush1.msra.mxu0 %v670
    %868 = vmatprep.subr.mxu0 0.0
    %869 = vmatpush2.msra.mxu0 %v701
    %870 = vmatprep.subr.mxu0 0.0
    %871 = vmatpush2.msra.mxu0 %v700
    %872 = vmatprep.subr.mxu0 0.0
    %873 = vmatpush2.msra.mxu0 %v699
    %874 = vmatprep.subr.mxu0 0.0
    %875 = vmatpush2.msra.mxu0 %v698
    %876 = vmatprep.subr.mxu0 0.0
    %877 = vmatpush2.msra.mxu0 %v697
    %878 = vmatprep.subr.mxu0 0.0
    %879 = vmatpush2.msra.mxu0 %v696
    %880 = vmatprep.subr.mxu0 0.0
    %881 = vmatpush2.msra.mxu0 %v695
    %882 = vmatprep.subr.mxu0 0.0
    %883 = vmatpush2.msra.mxu0 %v694
    %884 = vmatprep.subr.mxu0 0.0
    %885 = vmatpush2.msra.mxu0 %v693
    %886 = vmatprep.subr.mxu0 0.0
    %887 = vmatpush2.msra.mxu0 %v692
    %888 = vmatprep.subr.mxu0 0.0
    %889 = vmatpush2.msra.mxu0 %v691
    %890 = vmatprep.subr.mxu0 0.0
    %891 = vmatpush2.msra.mxu0 %v690
    %892 = vmatprep.subr.mxu0 0.0
    %893 = vmatpush2.msra.mxu0 %v689
    %894 = vmatprep.subr.mxu0 0.0
    %895 = vmatpush2.msra.mxu0 %v688
    %896 = vmatprep.subr.mxu0 0.0
    %897 = vmatpush2.msra.mxu0 %v687
    %898 = vmatprep.subr.mxu0 0.0
    %899 = vmatpush2.msra.mxu0 %v686
    %900 = vmatprep.mubr.f32.mxu0 %v561
    %901 = vmatmul.mubr.f32.gmra.mxu0 %v560
    %v902 = vpop.f32.mrf.mxu0
    %v903 = vadd.f32 %v833, %v902
    %v904 = vpop.f32.mrf.mxu0
    %905 = vdwg.mxu0
    %906 = vmatprep.subr.mxu0 0.0
    %907 = vmatpush1.msra.mxu0 %v717
    %908 = vmatprep.subr.mxu0 0.0
    %909 = vmatpush1.msra.mxu0 %v716
    %910 = vmatprep.subr.mxu0 0.0
    %911 = vmatpush1.msra.mxu0 %v715
    %912 = vmatprep.subr.mxu0 0.0
    %913 = vmatpush1.msra.mxu0 %v714
    %914 = vmatprep.subr.mxu0 0.0
    %915 = vmatpush1.msra.mxu0 %v713
    %916 = vmatprep.subr.mxu0 0.0
    %917 = vmatpush1.msra.mxu0 %v712
    %918 = vmatprep.subr.mxu0 0.0
    %919 = vmatpush1.msra.mxu0 %v711
    %920 = vmatprep.subr.mxu0 0.0
    %921 = vmatpush1.msra.mxu0 %v710
    %922 = vmatprep.subr.mxu0 0.0
    %923 = vmatpush1.msra.mxu0 %v709
    %924 = vmatprep.subr.mxu0 0.0
    %925 = vmatpush1.msra.mxu0 %v708
    %926 = vmatprep.subr.mxu0 0.0
    %927 = vmatpush1.msra.mxu0 %v707
    %928 = vmatprep.subr.mxu0 0.0
    %929 = vmatpush1.msra.mxu0 %v706
    %930 = vmatprep.subr.mxu0 0.0
    %931 = vmatpush1.msra.mxu0 %v705
    %932 = vmatprep.subr.mxu0 0.0
    %933 = vmatpush1.msra.mxu0 %v704
    %934 = vmatprep.subr.mxu0 0.0
    %935 = vmatpush1.msra.mxu0 %v703
    %936 = vmatprep.subr.mxu0 0.0
    %937 = vmatpush1.msra.mxu0 %v702
    %938 = vmatprep.subr.mxu0 0.0
    %939 = vmatpush2.msra.mxu0 %v733
    %940 = vmatprep.subr.mxu0 0.0
    %941 = vmatpush2.msra.mxu0 %v732
    %942 = vmatprep.subr.mxu0 0.0
    %943 = vmatpush2.msra.mxu0 %v731
    %944 = vmatprep.subr.mxu0 0.0
    %945 = vmatpush2.msra.mxu0 %v730
    %946 = vmatprep.subr.mxu0 0.0
    %947 = vmatpush2.msra.mxu0 %v729
    %948 = vmatprep.subr.mxu0 0.0
    %949 = vmatpush2.msra.mxu0 %v728
    %950 = vmatprep.subr.mxu0 0.0
    %951 = vmatpush2.msra.mxu0 %v727
    %952 = vmatprep.subr.mxu0 0.0
    %953 = vmatpush2.msra.mxu0 %v726
    %954 = vmatprep.subr.mxu0 0.0
    %955 = vmatpush2.msra.mxu0 %v725
    %956 = vmatprep.subr.mxu0 0.0
    %957 = vmatpush2.msra.mxu0 %v724
    %958 = vmatprep.subr.mxu0 0.0
    %959 = vmatpush2.msra.mxu0 %v723
    %960 = vmatprep.subr.mxu0 0.0
    %961 = vmatpush2.msra.mxu0 %v722
    %962 = vmatprep.subr.mxu0 0.0
    %963 = vmatpush2.msra.mxu0 %v721
    %964 = vmatprep.subr.mxu0 0.0
    %965 = vmatpush2.msra.mxu0 %v720
    %966 = vmatprep.subr.mxu0 0.0
    %967 = vmatpush2.msra.mxu0 %v719
    %968 = vmatprep.subr.mxu0 0.0
    %969 = vmatpush2.msra.mxu0 %v718
    %970 = vmatprep.mubr.f32.mxu0 %v563
    %971 = vmatmul.mubr.f32.gmra.mxu0 %v562
    %v972 = vpop.f32.mrf.mxu0
    %v973 = vadd.f32 %v903, %v972
    %v974 = vpop.f32.mrf.mxu0
    %975 = vdwg.mxu0
    %976 = vmatprep.subr.mxu0 0.0
    %977 = vmatpush1.msra.mxu0 %v749
    %978 = vmatprep.subr.mxu0 0.0
    %979 = vmatpush1.msra.mxu0 %v748
    %980 = vmatprep.subr.mxu0 0.0
    %981 = vmatpush1.msra.mxu0 %v747
    %982 = vmatprep.subr.mxu0 0.0
    %983 = vmatpush1.msra.mxu0 %v746
    %984 = vmatprep.subr.mxu0 0.0
    %985 = vmatpush1.msra.mxu0 %v745
    %986 = vmatprep.subr.mxu0 0.0
    %987 = vmatpush1.msra.mxu0 %v744
    %988 = vmatprep.subr.mxu0 0.0
    %989 = vmatpush1.msra.mxu0 %v743
    %990 = vmatprep.subr.mxu0 0.0
    %991 = vmatpush1.msra.mxu0 %v742
    %992 = vmatprep.subr.mxu0 0.0
    %993 = vmatpush1.msra.mxu0 %v741
    %994 = vmatprep.subr.mxu0 0.0
    %995 = vmatpush1.msra.mxu0 %v740
    %996 = vmatprep.subr.mxu0 0.0
    %997 = vmatpush1.msra.mxu0 %v739
    %998 = vmatprep.subr.mxu0 0.0
    %999 = vmatpush1.msra.mxu0 %v738
    %1000 = vmatprep.subr.mxu0 0.0
    %1001 = vmatpush1.msra.mxu0 %v737
    %1002 = vmatprep.subr.mxu0 0.0
    %1003 = vmatpush1.msra.mxu0 %v736
    %1004 = vmatprep.subr.mxu0 0.0
    %1005 = vmatpush1.msra.mxu0 %v735
    %1006 = vmatprep.subr.mxu0 0.0
    %1007 = vmatpush1.msra.mxu0 %v734
    %1008 = vmatprep.subr.mxu0 0.0
    %1009 = vmatpush2.msra.mxu0 %v765
    %1010 = vmatprep.subr.mxu0 0.0
    %1011 = vmatpush2.msra.mxu0 %v764
    %1012 = vmatprep.subr.mxu0 0.0
    %1013 = vmatpush2.msra.mxu0 %v763
    %1014 = vmatprep.subr.mxu0 0.0
    %1015 = vmatpush2.msra.mxu0 %v762
    %1016 = vmatprep.subr.mxu0 0.0
    %1017 = vmatpush2.msra.mxu0 %v761
    %1018 = vmatprep.subr.mxu0 0.0
    %1019 = vmatpush2.msra.mxu0 %v760
    %1020 = vmatprep.subr.mxu0 0.0
    %1021 = vmatpush2.msra.mxu0 %v759
    %1022 = vmatprep.subr.mxu0 0.0
    %1023 = vmatpush2.msra.mxu0 %v758
    %1024 = vmatprep.subr.mxu0 0.0
    %1025 = vmatpush2.msra.mxu0 %v757
    %1026 = vmatprep.subr.mxu0 0.0
    %1027 = vmatpush2.msra.mxu0 %v756
    %1028 = vmatprep.subr.mxu0 0.0
    %1029 = vmatpush2.msra.mxu0 %v755
    %1030 = vmatprep.subr.mxu0 0.0
    %1031 = vmatpush2.msra.mxu0 %v754
    %1032 = vmatprep.subr.mxu0 0.0
    %1033 = vmatpush2.msra.mxu0 %v753
    %1034 = vmatprep.subr.mxu0 0.0
    %1035 = vmatpush2.msra.mxu0 %v752
    %1036 = vmatprep.subr.mxu0 0.0
    %1037 = vmatpush2.msra.mxu0 %v751
    %1038 = vmatprep.subr.mxu0 0.0
    %1039 = vmatpush2.msra.mxu0 %v750
    %1040 = vmatprep.mubr.f32.mxu0 %v565
    %1041 = vmatmul.mubr.f32.gmra.mxu0 %v564
    %v1042 = vpop.f32.mrf.mxu0
    %v1043 = vadd.f32 %v973, %v1042
    %v1044 = vpop.f32.mrf.mxu0
    %1045 = vdwg.mxu0
    %v1046 = vmul.f32 %v1043, 0.0625
    %1047 = vmatprep.subr.mxu0 0.0
    %1048 = vmatpush1.msra.mxu0 %v653
    %1049 = vmatprep.subr.mxu0 0.0
    %1050 = vmatpush1.msra.mxu0 %v652
    %1051 = vmatprep.subr.mxu0 0.0
    %1052 = vmatpush1.msra.mxu0 %v651
    %1053 = vmatprep.subr.mxu0 0.0
    %1054 = vmatpush1.msra.mxu0 %v650
    %1055 = vmatprep.subr.mxu0 0.0
    %1056 = vmatpush1.msra.mxu0 %v649
    %1057 = vmatprep.subr.mxu0 0.0
    %1058 = vmatpush1.msra.mxu0 %v648
    %1059 = vmatprep.subr.mxu0 0.0
    %1060 = vmatpush1.msra.mxu0 %v647
    %1061 = vmatprep.subr.mxu0 0.0
    %1062 = vmatpush1.msra.mxu0 %v646
    %1063 = vmatprep.subr.mxu0 0.0
    %1064 = vmatpush1.msra.mxu0 %v645
    %1065 = vmatprep.subr.mxu0 0.0
    %1066 = vmatpush1.msra.mxu0 %v644
    %1067 = vmatprep.subr.mxu0 0.0
    %1068 = vmatpush1.msra.mxu0 %v643
    %1069 = vmatprep.subr.mxu0 0.0
    %1070 = vmatpush1.msra.mxu0 %v642
    %1071 = vmatprep.subr.mxu0 0.0
    %1072 = vmatpush1.msra.mxu0 %v641
    %1073 = vmatprep.subr.mxu0 0.0
    %1074 = vmatpush1.msra.mxu0 %v640
    %1075 = vmatprep.subr.mxu0 0.0
    %1076 = vmatpush1.msra.mxu0 %v639
    %1077 = vmatprep.subr.mxu0 0.0
    %1078 = vmatpush1.msra.mxu0 %v638
    %1079 = vmatprep.subr.mxu0 0.0
    %1080 = vmatpush2.msra.mxu0 %v669
    %1081 = vmatprep.subr.mxu0 0.0
    %1082 = vmatpush2.msra.mxu0 %v668
    %1083 = vmatprep.subr.mxu0 0.0
    %1084 = vmatpush2.msra.mxu0 %v667
    %1085 = vmatprep.subr.mxu0 0.0
    %1086 = vmatpush2.msra.mxu0 %v666
    %1087 = vmatprep.subr.mxu0 0.0
    %1088 = vmatpush2.msra.mxu0 %v665
    %1089 = vmatprep.subr.mxu0 0.0
    %1090 = vmatpush2.msra.mxu0 %v664
    %1091 = vmatprep.subr.mxu0 0.0
    %1092 = vmatpush2.msra.mxu0 %v663
    %1093 = vmatprep.subr.mxu0 0.0
    %1094 = vmatpush2.msra.mxu0 %v662
    %1095 = vmatprep.subr.mxu0 0.0
    %1096 = vmatpush2.msra.mxu0 %v661
    %1097 = vmatprep.subr.mxu0 0.0
    %1098 = vmatpush2.msra.mxu0 %v660
    %1099 = vmatprep.subr.mxu0 0.0
    %1100 = vmatpush2.msra.mxu0 %v659
    %1101 = vmatprep.subr.mxu0 0.0
    %1102 = vmatpush2.msra.mxu0 %v658
    %1103 = vmatprep.subr.mxu0 0.0
    %1104 = vmatpush2.msra.mxu0 %v657
    %1105 = vmatprep.subr.mxu0 0.0
    %1106 = vmatpush2.msra.mxu0 %v656
    %1107 = vmatprep.subr.mxu0 0.0
    %1108 = vmatpush2.msra.mxu0 %v655
    %1109 = vmatprep.subr.mxu0 0.0
    %1110 = vmatpush2.msra.mxu0 %v654
    %1111 = vmatprep.mubr.f32.mxu0 %v631
    %1112 = vmatmul.mubr.f32.gmra.mxu0 %v630
    %v1113 = vpop.f32.mrf.mxu0
    %v1114 = vadd.f32 0.0, %v1113
    %v1115 = vpop.f32.mrf.mxu0
    %1116 = vdwg.mxu0
    %1117 = vmatprep.subr.mxu0 0.0
    %1118 = vmatpush1.msra.mxu0 %v685
    %1119 = vmatprep.subr.mxu0 0.0
    %1120 = vmatpush1.msra.mxu0 %v684
    %1121 = vmatprep.subr.mxu0 0.0
    %1122 = vmatpush1.msra.mxu0 %v683
    %1123 = vmatprep.subr.mxu0 0.0
    %1124 = vmatpush1.msra.mxu0 %v682
    %1125 = vmatprep.subr.mxu0 0.0
    %1126 = vmatpush1.msra.mxu0 %v681
    %1127 = vmatprep.subr.mxu0 0.0
    %1128 = vmatpush1.msra.mxu0 %v680
    %1129 = vmatprep.subr.mxu0 0.0
    %1130 = vmatpush1.msra.mxu0 %v679
    %1131 = vmatprep.subr.mxu0 0.0
    %1132 = vmatpush1.msra.mxu0 %v678
    %1133 = vmatprep.subr.mxu0 0.0
    %1134 = vmatpush1.msra.mxu0 %v677
    %1135 = vmatprep.subr.mxu0 0.0
    %1136 = vmatpush1.msra.mxu0 %v676
    %1137 = vmatprep.subr.mxu0 0.0
    %1138 = vmatpush1.msra.mxu0 %v675
    %1139 = vmatprep.subr.mxu0 0.0
    %1140 = vmatpush1.msra.mxu0 %v674
    %1141 = vmatprep.subr.mxu0 0.0
    %1142 = vmatpush1.msra.mxu0 %v673
    %1143 = vmatprep.subr.mxu0 0.0
    %1144 = vmatpush1.msra.mxu0 %v672
    %1145 = vmatprep.subr.mxu0 0.0
    %1146 = vmatpush1.msra.mxu0 %v671
    %1147 = vmatprep.subr.mxu0 0.0
    %1148 = vmatpush1.msra.mxu0 %v670
    %1149 = vmatprep.subr.mxu0 0.0
    %1150 = vmatpush2.msra.mxu0 %v701
    %1151 = vmatprep.subr.mxu0 0.0
    %1152 = vmatpush2.msra.mxu0 %v700
    %1153 = vmatprep.subr.mxu0 0.0
    %1154 = vmatpush2.msra.mxu0 %v699
    %1155 = vmatprep.subr.mxu0 0.0
    %1156 = vmatpush2.msra.mxu0 %v698
    %1157 = vmatprep.subr.mxu0 0.0
    %1158 = vmatpush2.msra.mxu0 %v697
    %1159 = vmatprep.subr.mxu0 0.0
    %1160 = vmatpush2.msra.mxu0 %v696
    %1161 = vmatprep.subr.mxu0 0.0
    %1162 = vmatpush2.msra.mxu0 %v695
    %1163 = vmatprep.subr.mxu0 0.0
    %1164 = vmatpush2.msra.mxu0 %v694
    %1165 = vmatprep.subr.mxu0 0.0
    %1166 = vmatpush2.msra.mxu0 %v693
    %1167 = vmatprep.subr.mxu0 0.0
    %1168 = vmatpush2.msra.mxu0 %v692
    %1169 = vmatprep.subr.mxu0 0.0
    %1170 = vmatpush2.msra.mxu0 %v691
    %1171 = vmatprep.subr.mxu0 0.0
    %1172 = vmatpush2.msra.mxu0 %v690
    %1173 = vmatprep.subr.mxu0 0.0
    %1174 = vmatpush2.msra.mxu0 %v689
    %1175 = vmatprep.subr.mxu0 0.0
    %1176 = vmatpush2.msra.mxu0 %v688
    %1177 = vmatprep.subr.mxu0 0.0
    %1178 = vmatpush2.msra.mxu0 %v687
    %1179 = vmatprep.subr.mxu0 0.0
    %1180 = vmatpush2.msra.mxu0 %v686
    %1181 = vmatprep.mubr.f32.mxu0 %v633
    %1182 = vmatmul.mubr.f32.gmra.mxu0 %v632
    %v1183 = vpop.f32.mrf.mxu0
    %v1184 = vadd.f32 %v1114, %v1183
    %v1185 = vpop.f32.mrf.mxu0
    %1186 = vdwg.mxu0
    %1187 = vmatprep.subr.mxu0 0.0
    %1188 = vmatpush1.msra.mxu0 %v717
    %1189 = vmatprep.subr.mxu0 0.0
    %1190 = vmatpush1.msra.mxu0 %v716
    %1191 = vmatprep.subr.mxu0 0.0
    %1192 = vmatpush1.msra.mxu0 %v715
    %1193 = vmatprep.subr.mxu0 0.0
    %1194 = vmatpush1.msra.mxu0 %v714
    %1195 = vmatprep.subr.mxu0 0.0
    %1196 = vmatpush1.msra.mxu0 %v713
    %1197 = vmatprep.subr.mxu0 0.0
    %1198 = vmatpush1.msra.mxu0 %v712
    %1199 = vmatprep.subr.mxu0 0.0
    %1200 = vmatpush1.msra.mxu0 %v711
    %1201 = vmatprep.subr.mxu0 0.0
    %1202 = vmatpush1.msra.mxu0 %v710
    %1203 = vmatprep.subr.mxu0 0.0
    %1204 = vmatpush1.msra.mxu0 %v709
    %1205 = vmatprep.subr.mxu0 0.0
    %1206 = vmatpush1.msra.mxu0 %v708
    %1207 = vmatprep.subr.mxu0 0.0
    %1208 = vmatpush1.msra.mxu0 %v707
    %1209 = vmatprep.subr.mxu0 0.0
    %1210 = vmatpush1.msra.mxu0 %v706
    %1211 = vmatprep.subr.mxu0 0.0
    %1212 = vmatpush1.msra.mxu0 %v705
    %1213 = vmatprep.subr.mxu0 0.0
    %1214 = vmatpush1.msra.mxu0 %v704
    %1215 = vmatprep.subr.mxu0 0.0
    %1216 = vmatpush1.msra.mxu0 %v703
    %1217 = vmatprep.subr.mxu0 0.0
    %1218 = vmatpush1.msra.mxu0 %v702
    %1219 = vmatprep.subr.mxu0 0.0
    %1220 = vmatpush2.msra.mxu0 %v733
    %1221 = vmatprep.subr.mxu0 0.0
    %1222 = vmatpush2.msra.mxu0 %v732
    %1223 = vmatprep.subr.mxu0 0.0
    %1224 = vmatpush2.msra.mxu0 %v731
    %1225 = vmatprep.subr.mxu0 0.0
    %1226 = vmatpush2.msra.mxu0 %v730
    %1227 = vmatprep.subr.mxu0 0.0
    %1228 = vmatpush2.msra.mxu0 %v729
    %1229 = vmatprep.subr.mxu0 0.0
    %1230 = vmatpush2.msra.mxu0 %v728
    %1231 = vmatprep.subr.mxu0 0.0
    %1232 = vmatpush2.msra.mxu0 %v727
    %1233 = vmatprep.subr.mxu0 0.0
    %1234 = vmatpush2.msra.mxu0 %v726
    %1235 = vmatprep.subr.mxu0 0.0
    %1236 = vmatpush2.msra.mxu0 %v725
    %1237 = vmatprep.subr.mxu0 0.0
    %1238 = vmatpush2.msra.mxu0 %v724
    %1239 = vmatprep.subr.mxu0 0.0
    %1240 = vmatpush2.msra.mxu0 %v723
    %1241 = vmatprep.subr.mxu0 0.0
    %1242 = vmatpush2.msra.mxu0 %v722
    %1243 = vmatprep.subr.mxu0 0.0
    %1244 = vmatpush2.msra.mxu0 %v721
    %1245 = vmatprep.subr.mxu0 0.0
    %1246 = vmatpush2.msra.mxu0 %v720
    %1247 = vmatprep.subr.mxu0 0.0
    %1248 = vmatpush2.msra.mxu0 %v719
    %1249 = vmatprep.subr.mxu0 0.0
    %1250 = vmatpush2.msra.mxu0 %v718
    %1251 = vmatprep.mubr.f32.mxu0 %v635
    %1252 = vmatmul.mubr.f32.gmra.mxu0 %v634
    %v1253 = vpop.f32.mrf.mxu0
    %v1254 = vadd.f32 %v1184, %v1253
    %v1255 = vpop.f32.mrf.mxu0
    %1256 = vdwg.mxu0
    %1257 = vmatprep.subr.mxu0 0.0
    %1258 = vmatpush1.msra.mxu0 %v749
    %1259 = vmatprep.subr.mxu0 0.0
    %1260 = vmatpush1.msra.mxu0 %v748
    %1261 = vmatprep.subr.mxu0 0.0
    %1262 = vmatpush1.msra.mxu0 %v747
    %1263 = vmatprep.subr.mxu0 0.0
    %1264 = vmatpush1.msra.mxu0 %v746
    %1265 = vmatprep.subr.mxu0 0.0
    %1266 = vmatpush1.msra.mxu0 %v745
    %1267 = vmatprep.subr.mxu0 0.0
    %1268 = vmatpush1.msra.mxu0 %v744
    %1269 = vmatprep.subr.mxu0 0.0
    %1270 = vmatpush1.msra.mxu0 %v743
    %1271 = vmatprep.subr.mxu0 0.0
    %1272 = vmatpush1.msra.mxu0 %v742
    %1273 = vmatprep.subr.mxu0 0.0
    %1274 = vmatpush1.msra.mxu0 %v741
    %1275 = vmatprep.subr.mxu0 0.0
    %1276 = vmatpush1.msra.mxu0 %v740
    %1277 = vmatprep.subr.mxu0 0.0
    %1278 = vmatpush1.msra.mxu0 %v739
    %1279 = vmatprep.subr.mxu0 0.0
    %1280 = vmatpush1.msra.mxu0 %v738
    %1281 = vmatprep.subr.mxu0 0.0
    %1282 = vmatpush1.msra.mxu0 %v737
    %1283 = vmatprep.subr.mxu0 0.0
    %1284 = vmatpush1.msra.mxu0 %v736
    %1285 = vmatprep.subr.mxu0 0.0
    %1286 = vmatpush1.msra.mxu0 %v735
    %1287 = vmatprep.subr.mxu0 0.0
    %1288 = vmatpush1.msra.mxu0 %v734
    %1289 = vmatprep.subr.mxu0 0.0
    %1290 = vmatpush2.msra.mxu0 %v765
    %1291 = vmatprep.subr.mxu0 0.0
    %1292 = vmatpush2.msra.mxu0 %v764
    %1293 = vmatprep.subr.mxu0 0.0
    %1294 = vmatpush2.msra.mxu0 %v763
    %1295 = vmatprep.subr.mxu0 0.0
    %1296 = vmatpush2.msra.mxu0 %v762
    %1297 = vmatprep.subr.mxu0 0.0
    %1298 = vmatpush2.msra.mxu0 %v761
    %1299 = vmatprep.subr.mxu0 0.0
    %1300 = vmatpush2.msra.mxu0 %v760
    %1301 = vmatprep.subr.mxu0 0.0
    %1302 = vmatpush2.msra.mxu0 %v759
    %1303 = vmatprep.subr.mxu0 0.0
    %1304 = vmatpush2.msra.mxu0 %v758
    %1305 = vmatprep.subr.mxu0 0.0
    %1306 = vmatpush2.msra.mxu0 %v757
    %1307 = vmatprep.subr.mxu0 0.0
    %1308 = vmatpush2.msra.mxu0 %v756
    %1309 = vmatprep.subr.mxu0 0.0
    %1310 = vmatpush2.msra.mxu0 %v755
    %1311 = vmatprep.subr.mxu0 0.0
    %1312 = vmatpush2.msra.mxu0 %v754
    %1313 = vmatprep.subr.mxu0 0.0
    %1314 = vmatpush2.msra.mxu0 %v753
    %1315 = vmatprep.subr.mxu0 0.0
    %1316 = vmatpush2.msra.mxu0 %v752
    %1317 = vmatprep.subr.mxu0 0.0
    %1318 = vmatpush2.msra.mxu0 %v751
    %1319 = vmatprep.subr.mxu0 0.0
    %1320 = vmatpush2.msra.mxu0 %v750
    %1321 = vmatprep.mubr.f32.mxu0 %v637
    %1322 = vmatmul.mubr.f32.gmra.mxu0 %v636
    %v1323 = vpop.f32.mrf.mxu0
    %v1324 = vadd.f32 %v1254, %v1323
    %v1325 = vpop.f32.mrf.mxu0
    %1326 = vdwg.mxu0
    %v1327 = vmul.f32 %v1324, 0.0625
    %v1328 = vmul.f32 %v1046, %v1046
    %v1329 = vsub.f32 %v1327, %v1328
    %v1330 = vadd.f32 %v1329, 1e-05
    %v1331 = vrsqrt.pop %v1330
    %v1332 = vld [vmem:[#allocation4] sm:$0xff]
    %v1333 = vld [vmem:[#allocation4 + $0x8] sm:$0xff]
    %v1334 = vld [vmem:[#allocation4 + $0x10] sm:$0xff]
    %v1335 = vld [vmem:[#allocation4 + $0x18] sm:$0xff]
    %v1336 = vld [vmem:[#allocation4 + $0x20] sm:$0xff]
    %v1337 = vld [vmem:[#allocation4 + $0x28] sm:$0xff]
    %v1338 = vld [vmem:[#allocation4 + $0x30] sm:$0xff]
    %v1339 = vld [vmem:[#allocation4 + $0x38] sm:$0xff]
    %v1340 = vld [vmem:[#allocation4 + $0x40] sm:$0xff]
    %v1341 = vld [vmem:[#allocation4 + $0x48] sm:$0xff]
    %v1342 = vld [vmem:[#allocation4 + $0x50] sm:$0xff]
    %v1343 = vld [vmem:[#allocation4 + $0x58] sm:$0xff]
    %v1344 = vld [vmem:[#allocation4 + $0x60] sm:$0xff]
    %v1345 = vld [vmem:[#allocation4 + $0x68] sm:$0xff]
    %v1346 = vld [vmem:[#allocation4 + $0x70] sm:$0xff]
    %v1347 = vld [vmem:[#allocation4 + $0x78] sm:$0xff]
    %v1348 = vld [vmem:[#allocation4 + $0x80] sm:$0xff]
    %v1349 = vld [vmem:[#allocation4 + $0x88] sm:$0xff]
    %v1350 = vld [vmem:[#allocation4 + $0x90] sm:$0xff]
    %v1351 = vld [vmem:[#allocation4 + $0x98] sm:$0xff]
    %v1352 = vld [vmem:[#allocation4 + $0xa0] sm:$0xff]
    %v1353 = vld [vmem:[#allocation4 + $0xa8] sm:$0xff]
    %v1354 = vld [vmem:[#allocation4 + $0xb0] sm:$0xff]
    %v1355 = vld [vmem:[#allocation4 + $0xb8] sm:$0xff]
    %v1356 = vld [vmem:[#allocation4 + $0xc0] sm:$0xff]
    %v1357 = vld [vmem:[#allocation4 + $0xc8] sm:$0xff]
    %v1358 = vld [vmem:[#allocation4 + $0xd0] sm:$0xff]
    %v1359 = vld [vmem:[#allocation4 + $0xd8] sm:$0xff]
    %v1360 = vld [vmem:[#allocation4 + $0xe0] sm:$0xff]
    %v1361 = vld [vmem:[#allocation4 + $0xe8] sm:$0xff]
    %v1362 = vld [vmem:[#allocation4 + $0xf0] sm:$0xff]
    %v1363 = vld [vmem:[#allocation4 + $0xf8] sm:$0xff]
    %v1364 = vld [vmem:[#allocation4 + $0x100] sm:$0xff]
    %v1365 = vld [vmem:[#allocation4 + $0x108] sm:$0xff]
    %v1366 = vld [vmem:[#allocation4 + $0x110] sm:$0xff]
    %v1367 = vld [vmem:[#allocation4 + $0x118] sm:$0xff]
    %v1368 = vld [vmem:[#allocation4 + $0x120] sm:$0xff]
    %v1369 = vld [vmem:[#allocation4 + $0x128] sm:$0xff]
    %v1370 = vld [vmem:[#allocation4 + $0x130] sm:$0xff]
    %v1371 = vld [vmem:[#allocation4 + $0x138] sm:$0xff]
    %v1372 = vld [vmem:[#allocation4 + $0x140] sm:$0xff]
    %v1373 = vld [vmem:[#allocation4 + $0x148] sm:$0xff]
    %v1374 = vld [vmem:[#allocation4 + $0x150] sm:$0xff]
    %v1375 = vld [vmem:[#allocation4 + $0x158] sm:$0xff]
    %v1376 = vld [vmem:[#allocation4 + $0x160] sm:$0xff]
    %v1377 = vld [vmem:[#allocation4 + $0x168] sm:$0xff]
    %v1378 = vld [vmem:[#allocation4 + $0x170] sm:$0xff]
    %v1379 = vld [vmem:[#allocation4 + $0x178] sm:$0xff]
    %v1380 = vld [vmem:[#allocation4 + $0x180] sm:$0xff]
    %v1381 = vld [vmem:[#allocation4 + $0x188] sm:$0xff]
    %v1382 = vld [vmem:[#allocation4 + $0x190] sm:$0xff]
    %v1383 = vld [vmem:[#allocation4 + $0x198] sm:$0xff]
    %v1384 = vld [vmem:[#allocation4 + $0x1a0] sm:$0xff]
    %v1385 = vld [vmem:[#allocation4 + $0x1a8] sm:$0xff]
    %v1386 = vld [vmem:[#allocation4 + $0x1b0] sm:$0xff]
    %v1387 = vld [vmem:[#allocation4 + $0x1b8] sm:$0xff]
    %v1388 = vld [vmem:[#allocation4 + $0x1c0] sm:$0xff]
    %v1389 = vld [vmem:[#allocation4 + $0x1c8] sm:$0xff]
    %v1390 = vld [vmem:[#allocation4 + $0x1d0] sm:$0xff]
    %v1391 = vld [vmem:[#allocation4 + $0x1d8] sm:$0xff]
    %v1392 = vld [vmem:[#allocation4 + $0x1e0] sm:$0xff]
    %v1393 = vld [vmem:[#allocation4 + $0x1e8] sm:$0xff]
    %v1394 = vld [vmem:[#allocation4 + $0x1f0] sm:$0xff]
    %v1395 = vld [vmem:[#allocation4 + $0x1f8] sm:$0xff]
    %vm1396 = vcmask 523264
    %v1398 = vsel %vm1396, %v1046, 0
    %1400 = vmatprep.subr.mxu0 0.0
    %1401 = vmatpush1.msra.mxu0 0.0
    %1402 = vmatprep.subr.mxu0 0.0
    %1403 = vmatpush1.msra.mxu0 0.0
    %1404 = vmatprep.subr.mxu0 0.0
    %1405 = vmatpush1.msra.mxu0 0.0
    %1406 = vmatprep.subr.mxu0 0.0
    %1407 = vmatpush1.msra.mxu0 0.0
    %1408 = vmatprep.subr.mxu0 0.0
    %1409 = vmatpush1.msra.mxu0 0.0
    %1410 = vmatprep.subr.mxu0 0.0
    %1411 = vmatpush1.msra.mxu0 0.0
    %1412 = vmatprep.subr.mxu0 0.0
    %1413 = vmatpush1.msra.mxu0 0.0
    %1414 = vmatprep.subr.mxu0 0.0
    %1415 = vmatpush1.msra.mxu0 0.0
    %1416 = vmatprep.subr.mxu0 %v1389
    %1417 = vmatpush1.msra.mxu0 %v1388
    %1418 = vmatprep.subr.mxu0 %v1381
    %1419 = vmatpush1.msra.mxu0 %v1380
    %1420 = vmatprep.subr.mxu0 %v1373
    %1421 = vmatpush1.msra.mxu0 %v1372
    %1422 = vmatprep.subr.mxu0 %v1365
    %1423 = vmatpush1.msra.mxu0 %v1364
    %1424 = vmatprep.subr.mxu0 %v1357
    %1425 = vmatpush1.msra.mxu0 %v1356
    %1426 = vmatprep.subr.mxu0 %v1349
    %1427 = vmatpush1.msra.mxu0 %v1348
    %1428 = vmatprep.subr.mxu0 %v1341
    %1429 = vmatpush1.msra.mxu0 %v1340
    %1430 = vmatprep.subr.mxu0 %v1333
    %1431 = vmatpush1.msra.mxu0 %v1332
    %1432 = vmatprep.subr.mxu0 0.0
    %1433 = vmatpush2.msra.mxu0 0.0
    %1434 = vmatprep.subr.mxu0 0.0
    %1435 = vmatpush2.msra.mxu0 0.0
    %1436 = vmatprep.subr.mxu0 0.0
    %1437 = vmatpush2.msra.mxu0 0.0
    %1438 = vmatprep.subr.mxu0 0.0
    %1439 = vmatpush2.msra.mxu0 0.0
    %1440 = vmatprep.subr.mxu0 0.0
    %1441 = vmatpush2.msra.mxu0 0.0
    %1442 = vmatprep.subr.mxu0 0.0
    %1443 = vmatpush2.msra.mxu0 0.0
    %1444 = vmatprep.subr.mxu0 0.0
    %1445 = vmatpush2.msra.mxu0 0.0
    %1446 = vmatprep.subr.mxu0 0.0
    %1447 = vmatpush2.msra.mxu0 0.0
    %1448 = vmatprep.subr.mxu0 0.0
    %1449 = vmatpush2.msra.mxu0 0.0
    %1450 = vmatprep.subr.mxu0 0.0
    %1451 = vmatpush2.msra.mxu0 0.0
    %1452 = vmatprep.subr.mxu0 0.0
    %1453 = vmatpush2.msra.mxu0 0.0
    %1454 = vmatprep.subr.mxu0 0.0
    %1455 = vmatpush2.msra.mxu0 0.0
    %1456 = vmatprep.subr.mxu0 0.0
    %1457 = vmatpush2.msra.mxu0 0.0
    %1458 = vmatprep.subr.mxu0 0.0
    %1459 = vmatpush2.msra.mxu0 0.0
    %1460 = vmatprep.subr.mxu0 0.0
    %1461 = vmatpush2.msra.mxu0 0.0
    %1462 = vmatprep.subr.mxu0 0.0
    %1463 = vmatpush2.msra.mxu0 0.0
    %1464 = vmatprep.mubr.f32.mxu0 0.0
    %1465 = vmatmul.mubr.f32.gmra.mxu0 %v1398
    %v1466 = vpop.f32.mrf.mxu0
    %v1467 = vadd.f32 0.0, %v1466
    %v1468 = vpop.f32.mrf.mxu0
    %v1469 = vadd.f32 0.0, %v1468
    %1470 = vdwg.mxu0
    %1471 = vmatprep.subr.mxu0 0.0
    %1472 = vmatpush1.msra.mxu0 0.0
    %1473 = vmatprep.subr.mxu0 0.0
    %1474 = vmatpush1.msra.mxu0 0.0
    %1475 = vmatprep.subr.mxu0 0.0
    %1476 = vmatpush1.msra.mxu0 0.0
    %1477 = vmatprep.subr.mxu0 0.0
    %1478 = vmatpush1.msra.mxu0 0.0
    %1479 = vmatprep.subr.mxu0 0.0
    %1480 = vmatpush1.msra.mxu0 0.0
    %1481 = vmatprep.subr.mxu0 0.0
    %1482 = vmatpush1.msra.mxu0 0.0
    %1483 = vmatprep.subr.mxu0 0.0
    %1484 = vmatpush1.msra.mxu0 0.0
    %1485 = vmatprep.subr.mxu0 0.0
    %1486 = vmatpush1.msra.mxu0 0.0
    %1487 = vmatprep.subr.mxu0 %v1391
    %1488 = vmatpush1.msra.mxu0 %v1390
    %1489 = vmatprep.subr.mxu0 %v1383
    %1490 = vmatpush1.msra.mxu0 %v1382
    %1491 = vmatprep.subr.mxu0 %v1375
    %1492 = vmatpush1.msra.mxu0 %v1374
    %1493 = vmatprep.subr.mxu0 %v1367
    %1494 = vmatpush1.msra.mxu0 %v1366
    %1495 = vmatprep.subr.mxu0 %v1359
    %1496 = vmatpush1.msra.mxu0 %v1358
    %1497 = vmatprep.subr.mxu0 %v1351
    %1498 = vmatpush1.msra.mxu0 %v1350
    %1499 = vmatprep.subr.mxu0 %v1343
    %1500 = vmatpush1.msra.mxu0 %v1342
    %1501 = vmatprep.subr.mxu0 %v1335
    %1502 = vmatpush1.msra.mxu0 %v1334
    %1503 = vmatprep.subr.mxu0 0.0
    %1504 = vmatpush2.msra.mxu0 0.0
    %1505 = vmatprep.subr.mxu0 0.0
    %1506 = vmatpush2.msra.mxu0 0.0
    %1507 = vmatprep.subr.mxu0 0.0
    %1508 = vmatpush2.msra.mxu0 0.0
    %1509 = vmatprep.subr.mxu0 0.0
    %1510 = vmatpush2.msra.mxu0 0.0
    %1511 = vmatprep.subr.mxu0 0.0
    %1512 = vmatpush2.msra.mxu0 0.0
    %1513 = vmatprep.subr.mxu0 0.0
    %1514 = vmatpush2.msra.mxu0 0.0
    %1515 = vmatprep.subr.mxu0 0.0
    %1516 = vmatpush2.msra.mxu0 0.0
    %1517 = vmatprep.subr.mxu0 0.0
    %1518 = vmatpush2.msra.mxu0 0.0
    %1519 = vmatprep.subr.mxu0 0.0
    %1520 = vmatpush2.msra.mxu0 0.0
    %1521 = vmatprep.subr.mxu0 0.0
    %1522 = vmatpush2.msra.mxu0 0.0
    %1523 = vmatprep.subr.mxu0 0.0
    %1524 = vmatpush2.msra.mxu0 0.0
    %1525 = vmatprep.subr.mxu0 0.0
    %1526 = vmatpush2.msra.mxu0 0.0
    %1527 = vmatprep.subr.mxu0 0.0
    %1528 = vmatpush2.msra.mxu0 0.0
    %1529 = vmatprep.subr.mxu0 0.0
    %1530 = vmatpush2.msra.mxu0 0.0
    %1531 = vmatprep.subr.mxu0 0.0
    %1532 = vmatpush2.msra.mxu0 0.0
    %1533 = vmatprep.subr.mxu0 0.0
    %1534 = vmatpush2.msra.mxu0 0.0
    %1535 = vmatprep.mubr.f32.mxu0 0.0
    %1536 = vmatmul.mubr.f32.gmra.mxu0 %v1398
    %v1537 = vpop.f32.mrf.mxu0
    %v1538 = vadd.f32 0.0, %v1537
    %v1539 = vpop.f32.mrf.mxu0
    %v1540 = vadd.f32 0.0, %v1539
    %1541 = vdwg.mxu0
    %1542 = vmatprep.subr.mxu0 0.0
    %1543 = vmatpush1.msra.mxu0 0.0
    %1544 = vmatprep.subr.mxu0 0.0
    %1545 = vmatpush1.msra.mxu0 0.0
    %1546 = vmatprep.subr.mxu0 0.0
    %1547 = vmatpush1.msra.mxu0 0.0
    %1548 = vmatprep.subr.mxu0 0.0
    %1549 = vmatpush1.msra.mxu0 0.0
    %1550 = vmatprep.subr.mxu0 0.0
    %1551 = vmatpush1.msra.mxu0 0.0
    %1552 = vmatprep.subr.mxu0 0.0
    %1553 = vmatpush1.msra.mxu0 0.0
    %1554 = vmatprep.subr.mxu0 0.0
    %1555 = vmatpush1.msra.mxu0 0.0
    %1556 = vmatprep.subr.mxu0 0.0
    %1557 = vmatpush1.msra.mxu0 0.0
    %1558 = vmatprep.subr.mxu0 %v1393
    %1559 = vmatpush1.msra.mxu0 %v1392
    %1560 = vmatprep.subr.mxu0 %v1385
    %1561 = vmatpush1.msra.mxu0 %v1384
    %1562 = vmatprep.subr.mxu0 %v1377
    %1563 = vmatpush1.msra.mxu0 %v1376
    %1564 = vmatprep.subr.mxu0 %v1369
    %1565 = vmatpush1.msra.mxu0 %v1368
    %1566 = vmatprep.subr.mxu0 %v1361
    %1567 = vmatpush1.msra.mxu0 %v1360
    %1568 = vmatprep.subr.mxu0 %v1353
    %1569 = vmatpush1.msra.mxu0 %v1352
    %1570 = vmatprep.subr.mxu0 %v1345
    %1571 = vmatpush1.msra.mxu0 %v1344
    %1572 = vmatprep.subr.mxu0 %v1337
    %1573 = vmatpush1.msra.mxu0 %v1336
    %1574 = vmatprep.subr.mxu0 0.0
    %1575 = vmatpush2.msra.mxu0 0.0
    %1576 = vmatprep.subr.mxu0 0.0
    %1577 = vmatpush2.msra.mxu0 0.0
    %1578 = vmatprep.subr.mxu0 0.0
    %1579 = vmatpush2.msra.mxu0 0.0
    %1580 = vmatprep.subr.mxu0 0.0
    %1581 = vmatpush2.msra.mxu0 0.0
    %1582 = vmatprep.subr.mxu0 0.0
    %1583 = vmatpush2.msra.mxu0 0.0
    %1584 = vmatprep.subr.mxu0 0.0
    %1585 = vmatpush2.msra.mxu0 0.0
    %1586 = vmatprep.subr.mxu0 0.0
    %1587 = vmatpush2.msra.mxu0 0.0
    %1588 = vmatprep.subr.mxu0 0.0
    %1589 = vmatpush2.msra.mxu0 0.0
    %1590 = vmatprep.subr.mxu0 0.0
    %1591 = vmatpush2.msra.mxu0 0.0
    %1592 = vmatprep.subr.mxu0 0.0
    %1593 = vmatpush2.msra.mxu0 0.0
    %1594 = vmatprep.subr.mxu0 0.0
    %1595 = vmatpush2.msra.mxu0 0.0
    %1596 = vmatprep.subr.mxu0 0.0
    %1597 = vmatpush2.msra.mxu0 0.0
    %1598 = vmatprep.subr.mxu0 0.0
    %1599 = vmatpush2.msra.mxu0 0.0
    %1600 = vmatprep.subr.mxu0 0.0
    %1601 = vmatpush2.msra.mxu0 0.0
    %1602 = vmatprep.subr.mxu0 0.0
    %1603 = vmatpush2.msra.mxu0 0.0
    %1604 = vmatprep.subr.mxu0 0.0
    %1605 = vmatpush2.msra.mxu0 0.0
    %1606 = vmatprep.mubr.f32.mxu0 0.0
    %1607 = vmatmul.mubr.f32.gmra.mxu0 %v1398
    %v1608 = vpop.f32.mrf.mxu0
    %v1609 = vadd.f32 0.0, %v1608
    %v1610 = vpop.f32.mrf.mxu0
    %v1611 = vadd.f32 0.0, %v1610
    %1612 = vdwg.mxu0
    %1613 = vmatprep.subr.mxu0 0.0
    %1614 = vmatpush1.msra.mxu0 0.0
    %1615 = vmatprep.subr.mxu0 0.0
    %1616 = vmatpush1.msra.mxu0 0.0
    %1617 = vmatprep.subr.mxu0 0.0
    %1618 = vmatpush1.msra.mxu0 0.0
    %1619 = vmatprep.subr.mxu0 0.0
    %1620 = vmatpush1.msra.mxu0 0.0
    %1621 = vmatprep.subr.mxu0 0.0
    %1622 = vmatpush1.msra.mxu0 0.0
    %1623 = vmatprep.subr.mxu0 0.0
    %1624 = vmatpush1.msra.mxu0 0.0
    %1625 = vmatprep.subr.mxu0 0.0
    %1626 = vmatpush1.msra.mxu0 0.0
    %1627 = vmatprep.subr.mxu0 0.0
    %1628 = vmatpush1.msra.mxu0 0.0
    %1629 = vmatprep.subr.mxu0 %v1395
    %1630 = vmatpush1.msra.mxu0 %v1394
    %1631 = vmatprep.subr.mxu0 %v1387
    %1632 = vmatpush1.msra.mxu0 %v1386
    %1633 = vmatprep.subr.mxu0 %v1379
    %1634 = vmatpush1.msra.mxu0 %v1378
    %1635 = vmatprep.subr.mxu0 %v1371
    %1636 = vmatpush1.msra.mxu0 %v1370
    %1637 = vmatprep.subr.mxu0 %v1363
    %1638 = vmatpush1.msra.mxu0 %v1362
    %1639 = vmatprep.subr.mxu0 %v1355
    %1640 = vmatpush1.msra.mxu0 %v1354
    %1641 = vmatprep.subr.mxu0 %v1347
    %1642 = vmatpush1.msra.mxu0 %v1346
    %1643 = vmatprep.subr.mxu0 %v1339
    %1644 = vmatpush1.msra.mxu0 %v1338
    %1645 = vmatprep.subr.mxu0 0.0
    %1646 = vmatpush2.msra.mxu0 0.0
    %1647 = vmatprep.subr.mxu0 0.0
    %1648 = vmatpush2.msra.mxu0 0.0
    %1649 = vmatprep.subr.mxu0 0.0
    %1650 = vmatpush2.msra.mxu0 0.0
    %1651 = vmatprep.subr.mxu0 0.0
    %1652 = vmatpush2.msra.mxu0 0.0
    %1653 = vmatprep.subr.mxu0 0.0
    %1654 = vmatpush2.msra.mxu0 0.0
    %1655 = vmatprep.subr.mxu0 0.0
    %1656 = vmatpush2.msra.mxu0 0.0
    %1657 = vmatprep.subr.mxu0 0.0
    %1658 = vmatpush2.msra.mxu0 0.0
    %1659 = vmatprep.subr.mxu0 0.0
    %1660 = vmatpush2.msra.mxu0 0.0
    %1661 = vmatprep.subr.mxu0 0.0
    %1662 = vmatpush2.msra.mxu0 0.0
    %1663 = vmatprep.subr.mxu0 0.0
    %1664 = vmatpush2.msra.mxu0 0.0
    %1665 = vmatprep.subr.mxu0 0.0
    %1666 = vmatpush2.msra.mxu0 0.0
    %1667 = vmatprep.subr.mxu0 0.0
    %1668 = vmatpush2.msra.mxu0 0.0
    %1669 = vmatprep.subr.mxu0 0.0
    %1670 = vmatpush2.msra.mxu0 0.0
    %1671 = vmatprep.subr.mxu0 0.0
    %1672 = vmatpush2.msra.mxu0 0.0
    %1673 = vmatprep.subr.mxu0 0.0
    %1674 = vmatpush2.msra.mxu0 0.0
    %1675 = vmatprep.subr.mxu0 0.0
    %1676 = vmatpush2.msra.mxu0 0.0
    %1677 = vmatprep.mubr.f32.mxu0 0.0
    %1678 = vmatmul.mubr.f32.gmra.mxu0 %v1398
    %v1679 = vpop.f32.mrf.mxu0
    %v1680 = vadd.f32 0.0, %v1679
    %v1681 = vpop.f32.mrf.mxu0
    %v1682 = vadd.f32 0.0, %v1681
    %1683 = vdwg.mxu0
    %v1685 = vsel %vm1396, %v1331, 0
    %1687 = vmatprep.subr.mxu0 0.0
    %1688 = vmatpush1.msra.mxu0 0.0
    %1689 = vmatprep.subr.mxu0 0.0
    %1690 = vmatpush1.msra.mxu0 0.0
    %1691 = vmatprep.subr.mxu0 0.0
    %1692 = vmatpush1.msra.mxu0 0.0
    %1693 = vmatprep.subr.mxu0 0.0
    %1694 = vmatpush1.msra.mxu0 0.0
    %1695 = vmatprep.subr.mxu0 0.0
    %1696 = vmatpush1.msra.mxu0 0.0
    %1697 = vmatprep.subr.mxu0 0.0
    %1698 = vmatpush1.msra.mxu0 0.0
    %1699 = vmatprep.subr.mxu0 0.0
    %1700 = vmatpush1.msra.mxu0 0.0
    %1701 = vmatprep.subr.mxu0 0.0
    %1702 = vmatpush1.msra.mxu0 0.0
    %1703 = vmatprep.subr.mxu0 %v1389
    %1704 = vmatpush1.msra.mxu0 %v1388
    %1705 = vmatprep.subr.mxu0 %v1381
    %1706 = vmatpush1.msra.mxu0 %v1380
    %1707 = vmatprep.subr.mxu0 %v1373
    %1708 = vmatpush1.msra.mxu0 %v1372
    %1709 = vmatprep.subr.mxu0 %v1365
    %1710 = vmatpush1.msra.mxu0 %v1364
    %1711 = vmatprep.subr.mxu0 %v1357
    %1712 = vmatpush1.msra.mxu0 %v1356
    %1713 = vmatprep.subr.mxu0 %v1349
    %1714 = vmatpush1.msra.mxu0 %v1348
    %1715 = vmatprep.subr.mxu0 %v1341
    %1716 = vmatpush1.msra.mxu0 %v1340
    %1717 = vmatprep.subr.mxu0 %v1333
    %1718 = vmatpush1.msra.mxu0 %v1332
    %1719 = vmatprep.subr.mxu0 0.0
    %1720 = vmatpush2.msra.mxu0 0.0
    %1721 = vmatprep.subr.mxu0 0.0
    %1722 = vmatpush2.msra.mxu0 0.0
    %1723 = vmatprep.subr.mxu0 0.0
    %1724 = vmatpush2.msra.mxu0 0.0
    %1725 = vmatprep.subr.mxu0 0.0
    %1726 = vmatpush2.msra.mxu0 0.0
    %1727 = vmatprep.subr.mxu0 0.0
    %1728 = vmatpush2.msra.mxu0 0.0
    %1729 = vmatprep.subr.mxu0 0.0
    %1730 = vmatpush2.msra.mxu0 0.0
    %1731 = vmatprep.subr.mxu0 0.0
    %1732 = vmatpush2.msra.mxu0 0.0
    %1733 = vmatprep.subr.mxu0 0.0
    %1734 = vmatpush2.msra.mxu0 0.0
    %1735 = vmatprep.subr.mxu0 0.0
    %1736 = vmatpush2.msra.mxu0 0.0
    %1737 = vmatprep.subr.mxu0 0.0
    %1738 = vmatpush2.msra.mxu0 0.0
    %1739 = vmatprep.subr.mxu0 0.0
    %1740 = vmatpush2.msra.mxu0 0.0
    %1741 = vmatprep.subr.mxu0 0.0
    %1742 = vmatpush2.msra.mxu0 0.0
    %1743 = vmatprep.subr.mxu0 0.0
    %1744 = vmatpush2.msra.mxu0 0.0
    %1745 = vmatprep.subr.mxu0 0.0
    %1746 = vmatpush2.msra.mxu0 0.0
    %1747 = vmatprep.subr.mxu0 0.0
    %1748 = vmatpush2.msra.mxu0 0.0
    %1749 = vmatprep.subr.mxu0 0.0
    %1750 = vmatpush2.msra.mxu0 0.0
    %1751 = vmatprep.mubr.f32.mxu0 0.0
    %1752 = vmatmul.mubr.f32.gmra.mxu0 %v1685
    %v1753 = vpop.f32.mrf.mxu0
    %v1754 = vadd.f32 0.0, %v1753
    %v1755 = vpop.f32.mrf.mxu0
    %v1756 = vadd.f32 0.0, %v1755
    %1757 = vdwg.mxu0
    %1758 = vmatprep.subr.mxu0 0.0
    %1759 = vmatpush1.msra.mxu0 0.0
    %1760 = vmatprep.subr.mxu0 0.0
    %1761 = vmatpush1.msra.mxu0 0.0
    %1762 = vmatprep.subr.mxu0 0.0
    %1763 = vmatpush1.msra.mxu0 0.0
    %1764 = vmatprep.subr.mxu0 0.0
    %1765 = vmatpush1.msra.mxu0 0.0
    %1766 = vmatprep.subr.mxu0 0.0
    %1767 = vmatpush1.msra.mxu0 0.0
    %1768 = vmatprep.subr.mxu0 0.0
    %1769 = vmatpush1.msra.mxu0 0.0
    %1770 = vmatprep.subr.mxu0 0.0
    %1771 = vmatpush1.msra.mxu0 0.0
    %1772 = vmatprep.subr.mxu0 0.0
    %1773 = vmatpush1.msra.mxu0 0.0
    %1774 = vmatprep.subr.mxu0 %v1391
    %1775 = vmatpush1.msra.mxu0 %v1390
    %1776 = vmatprep.subr.mxu0 %v1383
    %1777 = vmatpush1.msra.mxu0 %v1382
    %1778 = vmatprep.subr.mxu0 %v1375
    %1779 = vmatpush1.msra.mxu0 %v1374
    %1780 = vmatprep.subr.mxu0 %v1367
    %1781 = vmatpush1.msra.mxu0 %v1366
    %1782 = vmatprep.subr.mxu0 %v1359
    %1783 = vmatpush1.msra.mxu0 %v1358
    %1784 = vmatprep.subr.mxu0 %v1351
    %1785 = vmatpush1.msra.mxu0 %v1350
    %1786 = vmatprep.subr.mxu0 %v1343
    %1787 = vmatpush1.msra.mxu0 %v1342
    %1788 = vmatprep.subr.mxu0 %v1335
    %1789 = vmatpush1.msra.mxu0 %v1334
    %1790 = vmatprep.subr.mxu0 0.0
    %1791 = vmatpush2.msra.mxu0 0.0
    %1792 = vmatprep.subr.mxu0 0.0
    %1793 = vmatpush2.msra.mxu0 0.0
    %1794 = vmatprep.subr.mxu0 0.0
    %1795 = vmatpush2.msra.mxu0 0.0
    %1796 = vmatprep.subr.mxu0 0.0
    %1797 = vmatpush2.msra.mxu0 0.0
    %1798 = vmatprep.subr.mxu0 0.0
    %1799 = vmatpush2.msra.mxu0 0.0
    %1800 = vmatprep.subr.mxu0 0.0
    %1801 = vmatpush2.msra.mxu0 0.0
    %1802 = vmatprep.subr.mxu0 0.0
    %1803 = vmatpush2.msra.mxu0 0.0
    %1804 = vmatprep.subr.mxu0 0.0
    %1805 = vmatpush2.msra.mxu0 0.0
    %1806 = vmatprep.subr.mxu0 0.0
    %1807 = vmatpush2.msra.mxu0 0.0
    %1808 = vmatprep.subr.mxu0 0.0
    %1809 = vmatpush2.msra.mxu0 0.0
    %1810 = vmatprep.subr.mxu0 0.0
    %1811 = vmatpush2.msra.mxu0 0.0
    %1812 = vmatprep.subr.mxu0 0.0
    %1813 = vmatpush2.msra.mxu0 0.0
    %1814 = vmatprep.subr.mxu0 0.0
    %1815 = vmatpush2.msra.mxu0 0.0
    %1816 = vmatprep.subr.mxu0 0.0
    %1817 = vmatpush2.msra.mxu0 0.0
    %1818 = vmatprep.subr.mxu0 0.0
    %1819 = vmatpush2.msra.mxu0 0.0
    %1820 = vmatprep.subr.mxu0 0.0
    %1821 = vmatpush2.msra.mxu0 0.0
    %1822 = vmatprep.mubr.f32.mxu0 0.0
    %1823 = vmatmul.mubr.f32.gmra.mxu0 %v1685
    %v1824 = vpop.f32.mrf.mxu0
    %v1825 = vadd.f32 0.0, %v1824
    %v1826 = vpop.f32.mrf.mxu0
    %v1827 = vadd.f32 0.0, %v1826
    %1828 = vdwg.mxu0
    %1829 = vmatprep.subr.mxu0 0.0
    %1830 = vmatpush1.msra.mxu0 0.0
    %1831 = vmatprep.subr.mxu0 0.0
    %1832 = vmatpush1.msra.mxu0 0.0
    %1833 = vmatprep.subr.mxu0 0.0
    %1834 = vmatpush1.msra.mxu0 0.0
    %1835 = vmatprep.subr.mxu0 0.0
    %1836 = vmatpush1.msra.mxu0 0.0
    %1837 = vmatprep.subr.mxu0 0.0
    %1838 = vmatpush1.msra.mxu0 0.0
    %1839 = vmatprep.subr.mxu0 0.0
    %1840 = vmatpush1.msra.mxu0 0.0
    %1841 = vmatprep.subr.mxu0 0.0
    %1842 = vmatpush1.msra.mxu0 0.0
    %1843 = vmatprep.subr.mxu0 0.0
    %1844 = vmatpush1.msra.mxu0 0.0
    %1845 = vmatprep.subr.mxu0 %v1393
    %1846 = vmatpush1.msra.mxu0 %v1392
    %1847 = vmatprep.subr.mxu0 %v1385
    %1848 = vmatpush1.msra.mxu0 %v1384
    %1849 = vmatprep.subr.mxu0 %v1377
    %1850 = vmatpush1.msra.mxu0 %v1376
    %1851 = vmatprep.subr.mxu0 %v1369
    %1852 = vmatpush1.msra.mxu0 %v1368
    %1853 = vmatprep.subr.mxu0 %v1361
    %1854 = vmatpush1.msra.mxu0 %v1360
    %1855 = vmatprep.subr.mxu0 %v1353
    %1856 = vmatpush1.msra.mxu0 %v1352
    %1857 = vmatprep.subr.mxu0 %v1345
    %1858 = vmatpush1.msra.mxu0 %v1344
    %1859 = vmatprep.subr.mxu0 %v1337
    %1860 = vmatpush1.msra.mxu0 %v1336
    %1861 = vmatprep.subr.mxu0 0.0
    %1862 = vmatpush2.msra.mxu0 0.0
    %1863 = vmatprep.subr.mxu0 0.0
    %1864 = vmatpush2.msra.mxu0 0.0
    %1865 = vmatprep.subr.mxu0 0.0
    %1866 = vmatpush2.msra.mxu0 0.0
    %1867 = vmatprep.subr.mxu0 0.0
    %1868 = vmatpush2.msra.mxu0 0.0
    %1869 = vmatprep.subr.mxu0 0.0
    %1870 = vmatpush2.msra.mxu0 0.0
    %1871 = vmatprep.subr.mxu0 0.0
    %1872 = vmatpush2.msra.mxu0 0.0
    %1873 = vmatprep.subr.mxu0 0.0
    %1874 = vmatpush2.msra.mxu0 0.0
    %1875 = vmatprep.subr.mxu0 0.0
    %1876 = vmatpush2.msra.mxu0 0.0
    %1877 = vmatprep.subr.mxu0 0.0
    %1878 = vmatpush2.msra.mxu0 0.0
    %1879 = vmatprep.subr.mxu0 0.0
    %1880 = vmatpush2.msra.mxu0 0.0
    %1881 = vmatprep.subr.mxu0 0.0
    %1882 = vmatpush2.msra.mxu0 0.0
    %1883 = vmatprep.subr.mxu0 0.0
    %1884 = vmatpush2.msra.mxu0 0.0
    %1885 = vmatprep.subr.mxu0 0.0
    %1886 = vmatpush2.msra.mxu0 0.0
    %1887 = vmatprep.subr.mxu0 0.0
    %1888 = vmatpush2.msra.mxu0 0.0
    %1889 = vmatprep.subr.mxu0 0.0
    %1890 = vmatpush2.msra.mxu0 0.0
    %1891 = vmatprep.subr.mxu0 0.0
    %1892 = vmatpush2.msra.mxu0 0.0
    %1893 = vmatprep.mubr.f32.mxu0 0.0
    %1894 = vmatmul.mubr.f32.gmra.mxu0 %v1685
    %v1895 = vpop.f32.mrf.mxu0
    %v1896 = vadd.f32 0.0, %v1895
    %v1897 = vpop.f32.mrf.mxu0
    %v1898 = vadd.f32 0.0, %v1897
    %1899 = vdwg.mxu0
    %1900 = vmatprep.subr.mxu0 0.0
    %1901 = vmatpush1.msra.mxu0 0.0
    %1902 = vmatprep.subr.mxu0 0.0
    %1903 = vmatpush1.msra.mxu0 0.0
    %1904 = vmatprep.subr.mxu0 0.0
    %1905 = vmatpush1.msra.mxu0 0.0
    %1906 = vmatprep.subr.mxu0 0.0
    %1907 = vmatpush1.msra.mxu0 0.0
    %1908 = vmatprep.subr.mxu0 0.0
    %1909 = vmatpush1.msra.mxu0 0.0
    %1910 = vmatprep.subr.mxu0 0.0
    %1911 = vmatpush1.msra.mxu0 0.0
    %1912 = vmatprep.subr.mxu0 0.0
    %1913 = vmatpush1.msra.mxu0 0.0
    %1914 = vmatprep.subr.mxu0 0.0
    %1915 = vmatpush1.msra.mxu0 0.0
    %1916 = vmatprep.subr.mxu0 %v1395
    %1917 = vmatpush1.msra.mxu0 %v1394
    %1918 = vmatprep.subr.mxu0 %v1387
    %1919 = vmatpush1.msra.mxu0 %v1386
    %1920 = vmatprep.subr.mxu0 %v1379
    %1921 = vmatpush1.msra.mxu0 %v1378
    %1922 = vmatprep.subr.mxu0 %v1371
    %1923 = vmatpush1.msra.mxu0 %v1370
    %1924 = vmatprep.subr.mxu0 %v1363
    %1925 = vmatpush1.msra.mxu0 %v1362
    %1926 = vmatprep.subr.mxu0 %v1355
    %1927 = vmatpush1.msra.mxu0 %v1354
    %1928 = vmatprep.subr.mxu0 %v1347
    %1929 = vmatpush1.msra.mxu0 %v1346
    %1930 = vmatprep.subr.mxu0 %v1339
    %1931 = vmatpush1.msra.mxu0 %v1338
    %1932 = vmatprep.subr.mxu0 0.0
    %1933 = vmatpush2.msra.mxu0 0.0
    %1934 = vmatprep.subr.mxu0 0.0
    %1935 = vmatpush2.msra.mxu0 0.0
    %1936 = vmatprep.subr.mxu0 0.0
    %1937 = vmatpush2.msra.mxu0 0.0
    %1938 = vmatprep.subr.mxu0 0.0
    %1939 = vmatpush2.msra.mxu0 0.0
    %1940 = vmatprep.subr.mxu0 0.0
    %1941 = vmatpush2.msra.mxu0 0.0
    %1942 = vmatprep.subr.mxu0 0.0
    %1943 = vmatpush2.msra.mxu0 0.0
    %1944 = vmatprep.subr.mxu0 0.0
    %1945 = vmatpush2.msra.mxu0 0.0
    %1946 = vmatprep.subr.mxu0 0.0
    %1947 = vmatpush2.msra.mxu0 0.0
    %1948 = vmatprep.subr.mxu0 0.0
    %1949 = vmatpush2.msra.mxu0 0.0
    %1950 = vmatprep.subr.mxu0 0.0
    %1951 = vmatpush2.msra.mxu0 0.0
    %1952 = vmatprep.subr.mxu0 0.0
    %1953 = vmatpush2.msra.mxu0 0.0
    %1954 = vmatprep.subr.mxu0 0.0
    %1955 = vmatpush2.msra.mxu0 0.0
    %1956 = vmatprep.subr.mxu0 0.0
    %1957 = vmatpush2.msra.mxu0 0.0
    %1958 = vmatprep.subr.mxu0 0.0
    %1959 = vmatpush2.msra.mxu0 0.0
    %1960 = vmatprep.subr.mxu0 0.0
    %1961 = vmatpush2.msra.mxu0 0.0
    %1962 = vmatprep.subr.mxu0 0.0
    %1963 = vmatpush2.msra.mxu0 0.0
    %1964 = vmatprep.mubr.f32.mxu0 0.0
    %1965 = vmatmul.mubr.f32.gmra.mxu0 %v1685
    %v1966 = vpop.f32.mrf.mxu0
    %v1967 = vadd.f32 0.0, %v1966
    %v1968 = vpop.f32.mrf.mxu0
    %v1969 = vadd.f32 0.0, %v1968
    %1970 = vdwg.mxu0
    %v1971 = vlaneseq
    %v1972 = vshrl.u32 %v1971, 7
    %v1973 = vsub.s32 0, %v1972
    %v1974 = vrot.slane %v1467, %v1973
    %v1975 = vlaneseq
    %v1976 = vshrl.u32 %v1975, 7
    %v1977 = vsub.s32 0, %v1976
    %v1978 = vrot.slane %v1469, %v1977
    %v1979 = vlaneseq
    %v1980 = vshrl.u32 %v1979, 7
    %v1981 = vsub.s32 0, %v1980
    %v1982 = vrot.slane %v1538, %v1981
    %v1983 = vlaneseq
    %v1984 = vshrl.u32 %v1983, 7
    %v1985 = vsub.s32 0, %v1984
    %v1986 = vrot.slane %v1540, %v1985
    %v1987 = vlaneseq
    %v1988 = vshrl.u32 %v1987, 7
    %v1989 = vsub.s32 0, %v1988
    %v1990 = vrot.slane %v1609, %v1989
    %v1991 = vlaneseq
    %v1992 = vshrl.u32 %v1991, 7
    %v1993 = vsub.s32 0, %v1992
    %v1994 = vrot.slane %v1611, %v1993
    %v1995 = vlaneseq
    %v1996 = vshrl.u32 %v1995, 7
    %v1997 = vsub.s32 0, %v1996
    %v1998 = vrot.slane %v1680, %v1997
    %v1999 = vlaneseq
    %v2000 = vshrl.u32 %v1999, 7
    %v2001 = vsub.s32 0, %v2000
    %v2002 = vrot.slane %v1682, %v2001
    %v2003 = vsub.f32 %v283, %v1974
    %v2004 = vsub.f32 %v285, %v1978
    %v2005 = vsub.f32 %v354, %v1982
    %v2006 = vsub.f32 %v356, %v1986
    %v2007 = vsub.f32 %v425, %v1990
    %v2008 = vsub.f32 %v427, %v1994
    %v2009 = vsub.f32 %v496, %v1998
    %v2010 = vsub.f32 %v498, %v2002
    %v2011 = vlaneseq
    %v2012 = vshrl.u32 %v2011, 7
    %v2013 = vsub.s32 0, %v2012
    %v2014 = vrot.slane %v1754, %v2013
    %v2015 = vlaneseq
    %v2016 = vshrl.u32 %v2015, 7
    %v2017 = vsub.s32 0, %v2016
    %v2018 = vrot.slane %v1756, %v2017
    %v2019 = vlaneseq
    %v2020 = vshrl.u32 %v2019, 7
    %v2021 = vsub.s32 0, %v2020
    %v2022 = vrot.slane %v1825, %v2021
    %v2023 = vlaneseq
    %v2024 = vshrl.u32 %v2023, 7
    %v2025 = vsub.s32 0, %v2024
    %v2026 = vrot.slane %v1827, %v2025
    %v2027 = vlaneseq
    %v2028 = vshrl.u32 %v2027, 7
    %v2029 = vsub.s32 0, %v2028
    %v2030 = vrot.slane %v1896, %v2029
    %v2031 = vlaneseq
    %v2032 = vshrl.u32 %v2031, 7
    %v2033 = vsub.s32 0, %v2032
    %v2034 = vrot.slane %v1898, %v2033
    %v2035 = vlaneseq
    %v2036 = vshrl.u32 %v2035, 7
    %v2037 = vsub.s32 0, %v2036
    %v2038 = vrot.slane %v1967, %v2037
    %v2039 = vlaneseq
    %v2040 = vshrl.u32 %v2039, 7
    %v2041 = vsub.s32 0, %v2040
    %v2042 = vrot.slane %v1969, %v2041
    %v2043 = vmul.f32 %v2003, %v2014
    %v2044 = vmul.f32 %v2004, %v2018
    %v2045 = vmul.f32 %v2005, %v2022
    %v2046 = vmul.f32 %v2006, %v2026
    %v2047 = vmul.f32 %v2007, %v2030
    %v2048 = vmul.f32 %v2008, %v2034
    %v2049 = vmul.f32 %v2009, %v2038
    %v2050 = vmul.f32 %v2010, %v2042
    %v2051 = vld [vmem:[#allocation6] sm:$0xff]
    %v2053 = vlaneseq
    %v2054 = vshrl.u32 %v2053, 7
    %v2055 = vsub.s32 0, %v2054
    %v2056 = vrot.slane %v2051, %v2055
    %v2057 = vlaneseq
    %v2058 = vshrl.u32 %v2057, 7
    %v2059 = vsub.s32 1, %v2058
    %v2060 = vrot.slane %v2051, %v2059
    %v2061 = vlaneseq
    %v2062 = vshrl.u32 %v2061, 7
    %v2063 = vsub.s32 2, %v2062
    %v2064 = vrot.slane %v2051, %v2063
    %v2065 = vlaneseq
    %v2066 = vshrl.u32 %v2065, 7
    %v2067 = vsub.s32 3, %v2066
    %v2068 = vrot.slane %v2051, %v2067
    %v2069 = vlaneseq
    %v2070 = vshrl.u32 %v2069, 7
    %v2071 = vsub.s32 4, %v2070
    %v2072 = vrot.slane %v2051, %v2071
    %v2073 = vlaneseq
    %v2074 = vshrl.u32 %v2073, 7
    %v2075 = vsub.s32 5, %v2074
    %v2076 = vrot.slane %v2051, %v2075
    %v2077 = vlaneseq
    %v2078 = vshrl.u32 %v2077, 7
    %v2079 = vsub.s32 6, %v2078
    %v2080 = vrot.slane %v2051, %v2079
    %v2081 = vlaneseq
    %v2082 = vshrl.u32 %v2081, 7
    %v2083 = vsub.s32 7, %v2082
    %v2084 = vrot.slane %v2051, %v2083
    %v2093 = vmul.f32 %v2043, %v2056
    %v2094 = vmul.f32 %v2044, %v2060
    %v2095 = vmul.f32 %v2045, %v2064
    %v2096 = vmul.f32 %v2046, %v2068
    %v2097 = vmul.f32 %v2047, %v2072
    %v2098 = vmul.f32 %v2048, %v2076
    %v2099 = vmul.f32 %v2049, %v2080
    %v2100 = vmul.f32 %v2050, %v2084
    %v2101 = vld [vmem:[#allocation7] sm:$0xff]
    %v2103 = vlaneseq
    %v2104 = vshrl.u32 %v2103, 7
    %v2105 = vsub.s32 0, %v2104
    %v2106 = vrot.slane %v2101, %v2105
    %v2107 = vlaneseq
    %v2108 = vshrl.u32 %v2107, 7
    %v2109 = vsub.s32 1, %v2108
    %v2110 = vrot.slane %v2101, %v2109
    %v2111 = vlaneseq
    %v2112 = vshrl.u32 %v2111, 7
    %v2113 = vsub.s32 2, %v2112
    %v2114 = vrot.slane %v2101, %v2113
    %v2115 = vlaneseq
    %v2116 = vshrl.u32 %v2115, 7
    %v2117 = vsub.s32 3, %v2116
    %v2118 = vrot.slane %v2101, %v2117
    %v2119 = vlaneseq
    %v2120 = vshrl.u32 %v2119, 7
    %v2121 = vsub.s32 4, %v2120
    %v2122 = vrot.slane %v2101, %v2121
    %v2123 = vlaneseq
    %v2124 = vshrl.u32 %v2123, 7
    %v2125 = vsub.s32 5, %v2124
    %v2126 = vrot.slane %v2101, %v2125
    %v2127 = vlaneseq
    %v2128 = vshrl.u32 %v2127, 7
    %v2129 = vsub.s32 6, %v2128
    %v2130 = vrot.slane %v2101, %v2129
    %v2131 = vlaneseq
    %v2132 = vshrl.u32 %v2131, 7
    %v2133 = vsub.s32 7, %v2132
    %v2134 = vrot.slane %v2101, %v2133
    %v2143 = vadd.f32 %v2093, %v2106
    %v2144 = vadd.f32 %v2094, %v2110
    %v2145 = vadd.f32 %v2095, %v2114
    %v2146 = vadd.f32 %v2096, %v2118
    %v2147 = vadd.f32 %v2097, %v2122
    %v2148 = vadd.f32 %v2098, %v2126
    %v2149 = vadd.f32 %v2099, %v2130
    %v2150 = vadd.f32 %v2100, %v2134
    %v2151 = vmax.f32 %v2143, 0.0
    %v2152 = vmax.f32 %v2144, 0.0
    %v2153 = vmax.f32 %v2145, 0.0
    %v2154 = vmax.f32 %v2146, 0.0
    %v2155 = vmax.f32 %v2147, 0.0
    %v2156 = vmax.f32 %v2148, 0.0
    %v2157 = vmax.f32 %v2149, 0.0
    %v2158 = vmax.f32 %v2150, 0.0
    %v2167 = vcombine.low %v2151, %v2152
    %v2168 = vcombine.low %v2153, %v2154
    %v2170 = vunpack.c.l.s4 1983009808
    %v2171 = vunpack.c.0.s8 %v2170
    %v2172 = vlaneseq
    %v2173 = vshrl.u32 %v2172, 7
    %v2174 = vsub.s32 %v2171, %v2173
    %v2175 = vrot.slane %v2167, %v2174
    %v2177 = vunpack.c.l.s4 1983009808
    %v2178 = vunpack.c.0.s8 %v2177
    %v2179 = vlaneseq
    %v2180 = vshrl.u32 %v2179, 7
    %v2181 = vsub.s32 %v2178, %v2180
    %v2182 = vrot.slane %v2168, %v2181
    %v2183 = vcombine.low %v2175, %v2182
    %v2184 = vcombine.low %v2155, %v2156
    %v2185 = vcombine.low %v2157, %v2158
    %v2187 = vunpack.c.l.s4 1983009808
    %v2188 = vunpack.c.0.s8 %v2187
    %v2189 = vlaneseq
    %v2190 = vshrl.u32 %v2189, 7
    %v2191 = vsub.s32 %v2188, %v2190
    %v2192 = vrot.slane %v2184, %v2191
    %v2194 = vunpack.c.l.s4 1983009808
    %v2195 = vunpack.c.0.s8 %v2194
    %v2196 = vlaneseq
    %v2197 = vshrl.u32 %v2196, 7
    %v2198 = vsub.s32 %v2195, %v2197
    %v2199 = vrot.slane %v2185, %v2198
    %v2200 = vcombine.low %v2192, %v2199
    %2203 = vst [vmem:[%s6] sm:$0xff] %v2183
    %2204 = vst [vmem:[%s6 + $0x8] sm:$0xff] %v2200
    // Predicated region
    $region42: #{generator_forward.4} parent=1 // pred_check
      _
    $region43: #{generator_forward.4} parent=1 // pred_check_branch
      %2206 = sbr.rel (0) target = $region45
    $region44: #{generator_forward.4} parent=1 // pred_region
      _
    $region45: #{generator_forward.4} parent=1 // pred_fallthru
      _
    // Predicated region
    $region46: #{generator_forward.4} parent=1 // pred_check
      _
    $region47: #{generator_forward.4} parent=1 // pred_check_branch
      %2208 = sbr.rel (0) target = $region49
    $region48: #{generator_forward.4} parent=1 // pred_region
      _
    $region49: #{generator_forward.4} parent=1 // pred_fallthru
      _
    %2209 = vsyncpa [#allocation3], 1
    %2210 = vsyncpa [#allocation5], 1
    %2211 = vsyncpa [#allocation8], 1

// kernel: generator_forward.6
$region0: #{generator_forward.6}
  #allocation0 [shape = 'u32[]', space=smem, size = 0x4, offset = 0x4, fixed_abs, tag = 'smem constant byte address 0x4 - core index']
  #allocation1 [shape = 'u32[144,128]{1,0:T(1,128)}', space=vmem, size = 0x12000, scoped, tag = 'internal scratch']
  %s0 = inlined_call_operand.vmem [shape: f32[392,512], index: 0, kind: input, shape index: {}]
  %s1 = inlined_call_operand.vmem [shape: f32[512,16], index: 1, kind: input, shape index: {}]
  %s2 = inlined_call_operand.vmem [shape: f32[1,16], index: 2, kind: input, shape index: {}]
  %s3 = inlined_call_operand.vmem [shape: f32[1,16], index: 3, kind: input, shape index: {}]
  %s4 = inlined_call_operand.vmem [shape: f32[392,16], index: 4, kind: output, shape index: {}]
  %s5 = sld [smem:[#allocation0]]
  $region26: #{generator_forward.6} parent=0
    _
  %s7 = ssub.s32 1, %s5
  %s8 = scalar_select 0, %s7, %s5
  // Predicated region
  $region2: #{generator_forward.6} parent=0 // pred_check
    _
  $region3: #{generator_forward.6} parent=0 // pred_check_branch
    %10 = sbr.rel (0) target = $region5
  $region4: #{generator_forward.6} parent=0 // pred_region
    _
  $region5: #{generator_forward.6} parent=0 // pred_fallthru
    _
  // Predicated region
  $region6: #{generator_forward.6} parent=0 // pred_check
    _
  $region7: #{generator_forward.6} parent=0 // pred_check_branch
    %12 = sbr.rel (0) target = $region9
  $region8: #{generator_forward.6} parent=0 // pred_region
    _
  $region9: #{generator_forward.6} parent=0 // pred_fallthru
    _
  // Predicated region
  $region10: #{generator_forward.6} parent=0 // pred_check
    _
  $region11: #{generator_forward.6} parent=0 // pred_check_branch
    %14 = sbr.rel (0) target = $region13
  $region12: #{generator_forward.6} parent=0 // pred_region
    _
  $region13: #{generator_forward.6} parent=0 // pred_fallthru
    _
  // Predicated region
  $region14: #{generator_forward.6} parent=0 // pred_check
    _
  $region15: #{generator_forward.6} parent=0 // pred_check_branch
    %16 = sbr.rel (0) target = $region17
  $region16: #{generator_forward.6} parent=0 // pred_region
    _
  $region17: #{generator_forward.6} parent=0 // pred_fallthru
    _
  %v17 = vld [vmem:[%s0] sm:$0xff]
  %v18 = vld [vmem:[%s0 + $0x8] sm:$0xff]
  %v19 = vld [vmem:[%s0 + $0x10] sm:$0xff]
  %v20 = vld [vmem:[%s0 + $0x18] sm:$0xff]
  %v21 = vld [vmem:[%s0 + $0x20] sm:$0xff]
  %v22 = vld [vmem:[%s0 + $0x28] sm:$0xff]
  %v23 = vld [vmem:[%s0 + $0x30] sm:$0xff]
  %v24 = vld [vmem:[%s0 + $0x38] sm:$0xff]
  %v25 = vld [vmem:[%s0 + $0x40] sm:$0xff]
  %v26 = vld [vmem:[%s0 + $0x48] sm:$0xff]
  %v27 = vld [vmem:[%s0 + $0x50] sm:$0xff]
  %v28 = vld [vmem:[%s0 + $0x58] sm:$0xff]
  %v29 = vld [vmem:[%s0 + $0x60] sm:$0xff]
  %v30 = vld [vmem:[%s0 + $0x68] sm:$0xff]
  %v31 = vld [vmem:[%s0 + $0x70] sm:$0xff]
  %v32 = vld [vmem:[%s0 + $0x78] sm:$0xff]
  %v33 = vld [vmem:[%s0 + $0x80] sm:$0xff]
  %v34 = vld [vmem:[%s0 + $0x88] sm:$0xff]
  %v35 = vld [vmem:[%s0 + $0x90] sm:$0xff]
  %v36 = vld [vmem:[%s0 + $0x98] sm:$0xff]
  %v37 = vld [vmem:[%s0 + $0xa0] sm:$0xff]
  %v38 = vld [vmem:[%s0 + $0xa8] sm:$0xff]
  %v39 = vld [vmem:[%s0 + $0xb0] sm:$0xff]
  %v40 = vld [vmem:[%s0 + $0xb8] sm:$0xff]
  %v41 = vld [vmem:[%s0 + $0xc0] sm:$0xff]
  %v42 = vld [vmem:[%s0 + $0xc8] sm:$0xff]
  %v43 = vld [vmem:[%s0 + $0xd0] sm:$0xff]
  %v44 = vld [vmem:[%s0 + $0xd8] sm:$0xff]
  %v45 = vld [vmem:[%s0 + $0xe0] sm:$0xff]
  %v46 = vld [vmem:[%s0 + $0xe8] sm:$0xff]
  %v47 = vld [vmem:[%s0 + $0xf0] sm:$0xff]
  %v48 = vld [vmem:[%s0 + $0xf8] sm:$0xff]
  %v49 = vld [vmem:[%s0 + $0x100] sm:$0xff]
  %v50 = vld [vmem:[%s0 + $0x108] sm:$0xff]
  %v51 = vld [vmem:[%s0 + $0x110] sm:$0xff]
  %v52 = vld [vmem:[%s0 + $0x118] sm:$0xff]
  %v53 = vld [vmem:[%s0 + $0x120] sm:$0xff]
  %v54 = vld [vmem:[%s0 + $0x128] sm:$0xff]
  %v55 = vld [vmem:[%s0 + $0x130] sm:$0xff]
  %v56 = vld [vmem:[%s0 + $0x138] sm:$0xff]
  %v57 = vld [vmem:[%s0 + $0x140] sm:$0xff]
  %v58 = vld [vmem:[%s0 + $0x148] sm:$0xff]
  %v59 = vld [vmem:[%s0 + $0x150] sm:$0xff]
  %v60 = vld [vmem:[%s0 + $0x158] sm:$0xff]
  %v61 = vld [vmem:[%s0 + $0x160] sm:$0xff]
  %v62 = vld [vmem:[%s0 + $0x168] sm:$0xff]
  %v63 = vld [vmem:[%s0 + $0x170] sm:$0xff]
  %v64 = vld [vmem:[%s0 + $0x178] sm:$0xff]
  %v65 = vld [vmem:[%s0 + $0x180] sm:$0xff]
  %v66 = vld [vmem:[%s0 + $0x188] sm:$0xff]
  %v67 = vld [vmem:[%s0 + $0x190] sm:$0xff]
  %v68 = vld [vmem:[%s0 + $0x198] sm:$0xff]
  %v69 = vld [vmem:[%s0 + $0x1a0] sm:$0xff]
  %v70 = vld [vmem:[%s0 + $0x1a8] sm:$0xff]
  %v71 = vld [vmem:[%s0 + $0x1b0] sm:$0xff]
  %v72 = vld [vmem:[%s0 + $0x1b8] sm:$0xff]
  %v73 = vld [vmem:[%s0 + $0x1c0] sm:$0xff]
  %v74 = vld [vmem:[%s0 + $0x1c8] sm:$0xff]
  %v75 = vld [vmem:[%s0 + $0x1d0] sm:$0xff]
  %v76 = vld [vmem:[%s0 + $0x1d8] sm:$0xff]
  %v77 = vld [vmem:[%s0 + $0x1e0] sm:$0xff]
  %v78 = vld [vmem:[%s0 + $0x1e8] sm:$0xff]
  %v79 = vld [vmem:[%s0 + $0x1f0] sm:$0xff]
  %v80 = vld [vmem:[%s0 + $0x1f8] sm:$0xff]
  %v81 = vld [vmem:[%s0 + $0x200] sm:$0xff]
  %v82 = vld [vmem:[%s0 + $0x208] sm:$0xff]
  %v83 = vld [vmem:[%s0 + $0x210] sm:$0xff]
  %v84 = vld [vmem:[%s0 + $0x218] sm:$0xff]
  %v85 = vld [vmem:[%s0 + $0x220] sm:$0xff]
  %v86 = vld [vmem:[%s0 + $0x228] sm:$0xff]
  %v87 = vld [vmem:[%s0 + $0x230] sm:$0xff]
  %v88 = vld [vmem:[%s0 + $0x238] sm:$0xff]
  %v89 = vld [vmem:[%s0 + $0x240] sm:$0xff]
  %v90 = vld [vmem:[%s0 + $0x248] sm:$0xff]
  %v91 = vld [vmem:[%s0 + $0x250] sm:$0xff]
  %v92 = vld [vmem:[%s0 + $0x258] sm:$0xff]
  %v93 = vld [vmem:[%s0 + $0x260] sm:$0xff]
  %v94 = vld [vmem:[%s0 + $0x268] sm:$0xff]
  %v95 = vld [vmem:[%s0 + $0x270] sm:$0xff]
  %v96 = vld [vmem:[%s0 + $0x278] sm:$0xff]
  %v97 = vld [vmem:[%s0 + $0x280] sm:$0xff]
  %v98 = vld [vmem:[%s0 + $0x288] sm:$0xff]
  %v99 = vld [vmem:[%s0 + $0x290] sm:$0xff]
  %v100 = vld [vmem:[%s0 + $0x298] sm:$0xff]
  %v101 = vld [vmem:[%s0 + $0x2a0] sm:$0xff]
  %v102 = vld [vmem:[%s0 + $0x2a8] sm:$0xff]
  %v103 = vld [vmem:[%s0 + $0x2b0] sm:$0xff]
  %v104 = vld [vmem:[%s0 + $0x2b8] sm:$0xff]
  %v105 = vld [vmem:[%s0 + $0x2c0] sm:$0xff]
  %v106 = vld [vmem:[%s0 + $0x2c8] sm:$0xff]
  %v107 = vld [vmem:[%s0 + $0x2d0] sm:$0xff]
  %v108 = vld [vmem:[%s0 + $0x2d8] sm:$0xff]
  %v109 = vld [vmem:[%s0 + $0x2e0] sm:$0xff]
  %v110 = vld [vmem:[%s0 + $0x2e8] sm:$0xff]
  %v111 = vld [vmem:[%s0 + $0x2f0] sm:$0xff]
  %v112 = vld [vmem:[%s0 + $0x2f8] sm:$0xff]
  %v113 = vld [vmem:[%s0 + $0x300] sm:$0xff]
  %v114 = vld [vmem:[%s0 + $0x308] sm:$0xff]
  %v115 = vld [vmem:[%s0 + $0x310] sm:$0xff]
  %v116 = vld [vmem:[%s0 + $0x318] sm:$0xff]
  %v117 = vld [vmem:[%s0 + $0x320] sm:$0xff]
  %v118 = vld [vmem:[%s0 + $0x328] sm:$0xff]
  %v119 = vld [vmem:[%s0 + $0x330] sm:$0xff]
  %v120 = vld [vmem:[%s0 + $0x338] sm:$0xff]
  %v121 = vld [vmem:[%s0 + $0x340] sm:$0xff]
  %v122 = vld [vmem:[%s0 + $0x348] sm:$0xff]
  %v123 = vld [vmem:[%s0 + $0x350] sm:$0xff]
  %v124 = vld [vmem:[%s0 + $0x358] sm:$0xff]
  %v125 = vld [vmem:[%s0 + $0x360] sm:$0xff]
  %v126 = vld [vmem:[%s0 + $0x368] sm:$0xff]
  %v127 = vld [vmem:[%s0 + $0x370] sm:$0xff]
  %v128 = vld [vmem:[%s0 + $0x378] sm:$0xff]
  %v129 = vld [vmem:[%s0 + $0x380] sm:$0xff]
  %v130 = vld [vmem:[%s0 + $0x388] sm:$0xff]
  %v131 = vld [vmem:[%s0 + $0x390] sm:$0xff]
  %v132 = vld [vmem:[%s0 + $0x398] sm:$0xff]
  %v133 = vld [vmem:[%s0 + $0x3a0] sm:$0xff]
  %v134 = vld [vmem:[%s0 + $0x3a8] sm:$0xff]
  %v135 = vld [vmem:[%s0 + $0x3b0] sm:$0xff]
  %v136 = vld [vmem:[%s0 + $0x3b8] sm:$0xff]
  %v137 = vld [vmem:[%s0 + $0x3c0] sm:$0xff]
  %v138 = vld [vmem:[%s0 + $0x3c8] sm:$0xff]
  %v139 = vld [vmem:[%s0 + $0x3d0] sm:$0xff]
  %v140 = vld [vmem:[%s0 + $0x3d8] sm:$0xff]
  %v141 = vld [vmem:[%s0 + $0x3e0] sm:$0xff]
  %v142 = vld [vmem:[%s0 + $0x3e8] sm:$0xff]
  %v143 = vld [vmem:[%s0 + $0x3f0] sm:$0xff]
  %v144 = vld [vmem:[%s0 + $0x3f8] sm:$0xff]
  %v145 = vld [vmem:[%s0 + $0x400] sm:$0xff]
  %v146 = vld [vmem:[%s0 + $0x408] sm:$0xff]
  %v147 = vld [vmem:[%s0 + $0x410] sm:$0xff]
  %v148 = vld [vmem:[%s0 + $0x418] sm:$0xff]
  %v149 = vld [vmem:[%s0 + $0x420] sm:$0xff]
  %v150 = vld [vmem:[%s0 + $0x428] sm:$0xff]
  %v151 = vld [vmem:[%s0 + $0x430] sm:$0xff]
  %v152 = vld [vmem:[%s0 + $0x438] sm:$0xff]
  %v153 = vld [vmem:[%s0 + $0x440] sm:$0xff]
  %v154 = vld [vmem:[%s0 + $0x448] sm:$0xff]
  %v155 = vld [vmem:[%s0 + $0x450] sm:$0xff]
  %v156 = vld [vmem:[%s0 + $0x458] sm:$0xff]
  %v157 = vld [vmem:[%s0 + $0x460] sm:$0xff]
  %v158 = vld [vmem:[%s0 + $0x468] sm:$0xff]
  %v159 = vld [vmem:[%s0 + $0x470] sm:$0xff]
  %v160 = vld [vmem:[%s0 + $0x478] sm:$0xff]
  %v161 = vld [vmem:[%s0 + $0x480] sm:$0xff]
  %v162 = vld [vmem:[%s0 + $0x488] sm:$0xff]
  %v163 = vld [vmem:[%s0 + $0x490] sm:$0xff]
  %v164 = vld [vmem:[%s0 + $0x498] sm:$0xff]
  %v165 = vld [vmem:[%s0 + $0x4a0] sm:$0xff]
  %v166 = vld [vmem:[%s0 + $0x4a8] sm:$0xff]
  %v167 = vld [vmem:[%s0 + $0x4b0] sm:$0xff]
  %v168 = vld [vmem:[%s0 + $0x4b8] sm:$0xff]
  %v169 = vld [vmem:[%s0 + $0x4c0] sm:$0xff]
  %v170 = vld [vmem:[%s0 + $0x4c8] sm:$0xff]
  %v171 = vld [vmem:[%s0 + $0x4d0] sm:$0xff]
  %v172 = vld [vmem:[%s0 + $0x4d8] sm:$0xff]
  %v173 = vld [vmem:[%s0 + $0x4e0] sm:$0xff]
  %v174 = vld [vmem:[%s0 + $0x4e8] sm:$0xff]
  %v175 = vld [vmem:[%s0 + $0x4f0] sm:$0xff]
  %v176 = vld [vmem:[%s0 + $0x4f8] sm:$0xff]
  %v177 = vld [vmem:[%s0 + $0x500] sm:$0xff]
  %v178 = vld [vmem:[%s0 + $0x508] sm:$0xff]
  %v179 = vld [vmem:[%s0 + $0x510] sm:$0xff]
  %v180 = vld [vmem:[%s0 + $0x518] sm:$0xff]
  %v181 = vld [vmem:[%s0 + $0x520] sm:$0xff]
  %v182 = vld [vmem:[%s0 + $0x528] sm:$0xff]
  %v183 = vld [vmem:[%s0 + $0x530] sm:$0xff]
  %v184 = vld [vmem:[%s0 + $0x538] sm:$0xff]
  %v185 = vld [vmem:[%s0 + $0x540] sm:$0xff]
  %v186 = vld [vmem:[%s0 + $0x548] sm:$0xff]
  %v187 = vld [vmem:[%s0 + $0x550] sm:$0xff]
  %v188 = vld [vmem:[%s0 + $0x558] sm:$0xff]
  %v189 = vld [vmem:[%s0 + $0x560] sm:$0xff]
  %v190 = vld [vmem:[%s0 + $0x568] sm:$0xff]
  %v191 = vld [vmem:[%s0 + $0x570] sm:$0xff]
  %v192 = vld [vmem:[%s0 + $0x578] sm:$0xff]
  %v193 = vld [vmem:[%s0 + $0x580] sm:$0xff]
  %v194 = vld [vmem:[%s0 + $0x588] sm:$0xff]
  %v195 = vld [vmem:[%s0 + $0x590] sm:$0xff]
  %v196 = vld [vmem:[%s0 + $0x598] sm:$0xff]
  %v197 = vld [vmem:[%s0 + $0x5a0] sm:$0xff]
  %v198 = vld [vmem:[%s0 + $0x5a8] sm:$0xff]
  %v199 = vld [vmem:[%s0 + $0x5b0] sm:$0xff]
  %v200 = vld [vmem:[%s0 + $0x5b8] sm:$0xff]
  %v201 = vld [vmem:[%s0 + $0x5c0] sm:$0xff]
  %v202 = vld [vmem:[%s0 + $0x5c8] sm:$0xff]
  %v203 = vld [vmem:[%s0 + $0x5d0] sm:$0xff]
  %v204 = vld [vmem:[%s0 + $0x5d8] sm:$0xff]
  %v205 = vld [vmem:[%s0 + $0x5e0] sm:$0xff]
  %v206 = vld [vmem:[%s0 + $0x5e8] sm:$0xff]
  %v207 = vld [vmem:[%s0 + $0x5f0] sm:$0xff]
  %v208 = vld [vmem:[%s0 + $0x5f8] sm:$0xff]
  %v209 = vld [vmem:[%s0 + $0x600] sm:$0xff]
  %v210 = vld [vmem:[%s0 + $0x608] sm:$0xff]
  %v211 = vld [vmem:[%s0 + $0x610] sm:$0xff]
  %v212 = vld [vmem:[%s0 + $0x618] sm:$0xff]
  %v213 = vld [vmem:[%s1] sm:$0xff]
  %v214 = vld [vmem:[%s1 + $0x8] sm:$0xff]
  %v215 = vld [vmem:[%s1 + $0x10] sm:$0xff]
  %v216 = vld [vmem:[%s1 + $0x18] sm:$0xff]
  %v217 = vld [vmem:[%s1 + $0x20] sm:$0xff]
  %v218 = vld [vmem:[%s1 + $0x28] sm:$0xff]
  %v219 = vld [vmem:[%s1 + $0x30] sm:$0xff]
  %v220 = vld [vmem:[%s1 + $0x38] sm:$0xff]
  %v221 = vld [vmem:[%s1 + $0x40] sm:$0xff]
  %v222 = vld [vmem:[%s1 + $0x48] sm:$0xff]
  %v223 = vld [vmem:[%s1 + $0x50] sm:$0xff]
  %v224 = vld [vmem:[%s1 + $0x58] sm:$0xff]
  %v225 = vld [vmem:[%s1 + $0x60] sm:$0xff]
  %v226 = vld [vmem:[%s1 + $0x68] sm:$0xff]
  %v227 = vld [vmem:[%s1 + $0x70] sm:$0xff]
  %v228 = vld [vmem:[%s1 + $0x78] sm:$0xff]
  %v229 = vld [vmem:[%s1 + $0x80] sm:$0xff]
  %v230 = vld [vmem:[%s1 + $0x88] sm:$0xff]
  %v231 = vld [vmem:[%s1 + $0x90] sm:$0xff]
  %v232 = vld [vmem:[%s1 + $0x98] sm:$0xff]
  %v233 = vld [vmem:[%s1 + $0xa0] sm:$0xff]
  %v234 = vld [vmem:[%s1 + $0xa8] sm:$0xff]
  %v235 = vld [vmem:[%s1 + $0xb0] sm:$0xff]
  %v236 = vld [vmem:[%s1 + $0xb8] sm:$0xff]
  %v237 = vld [vmem:[%s1 + $0xc0] sm:$0xff]
  %v238 = vld [vmem:[%s1 + $0xc8] sm:$0xff]
  %v239 = vld [vmem:[%s1 + $0xd0] sm:$0xff]
  %v240 = vld [vmem:[%s1 + $0xd8] sm:$0xff]
  %v241 = vld [vmem:[%s1 + $0xe0] sm:$0xff]
  %v242 = vld [vmem:[%s1 + $0xe8] sm:$0xff]
  %v243 = vld [vmem:[%s1 + $0xf0] sm:$0xff]
  %v244 = vld [vmem:[%s1 + $0xf8] sm:$0xff]
  %v245 = vld [vmem:[%s1 + $0x100] sm:$0xff]
  %v246 = vld [vmem:[%s1 + $0x108] sm:$0xff]
  %v247 = vld [vmem:[%s1 + $0x110] sm:$0xff]
  %v248 = vld [vmem:[%s1 + $0x118] sm:$0xff]
  %v249 = vld [vmem:[%s1 + $0x120] sm:$0xff]
  %v250 = vld [vmem:[%s1 + $0x128] sm:$0xff]
  %v251 = vld [vmem:[%s1 + $0x130] sm:$0xff]
  %v252 = vld [vmem:[%s1 + $0x138] sm:$0xff]
  %v253 = vld [vmem:[%s1 + $0x140] sm:$0xff]
  %v254 = vld [vmem:[%s1 + $0x148] sm:$0xff]
  %v255 = vld [vmem:[%s1 + $0x150] sm:$0xff]
  %v256 = vld [vmem:[%s1 + $0x158] sm:$0xff]
  %v257 = vld [vmem:[%s1 + $0x160] sm:$0xff]
  %v258 = vld [vmem:[%s1 + $0x168] sm:$0xff]
  %v259 = vld [vmem:[%s1 + $0x170] sm:$0xff]
  %v260 = vld [vmem:[%s1 + $0x178] sm:$0xff]
  %v261 = vld [vmem:[%s1 + $0x180] sm:$0xff]
  %v262 = vld [vmem:[%s1 + $0x188] sm:$0xff]
  %v263 = vld [vmem:[%s1 + $0x190] sm:$0xff]
  %v264 = vld [vmem:[%s1 + $0x198] sm:$0xff]
  %v265 = vld [vmem:[%s1 + $0x1a0] sm:$0xff]
  %v266 = vld [vmem:[%s1 + $0x1a8] sm:$0xff]
  %v267 = vld [vmem:[%s1 + $0x1b0] sm:$0xff]
  %v268 = vld [vmem:[%s1 + $0x1b8] sm:$0xff]
  %v269 = vld [vmem:[%s1 + $0x1c0] sm:$0xff]
  %v270 = vld [vmem:[%s1 + $0x1c8] sm:$0xff]
  %v271 = vld [vmem:[%s1 + $0x1d0] sm:$0xff]
  %v272 = vld [vmem:[%s1 + $0x1d8] sm:$0xff]
  %v273 = vld [vmem:[%s1 + $0x1e0] sm:$0xff]
  %v274 = vld [vmem:[%s1 + $0x1e8] sm:$0xff]
  %v275 = vld [vmem:[%s1 + $0x1f0] sm:$0xff]
  %v276 = vld [vmem:[%s1 + $0x1f8] sm:$0xff]
  %277 = vmatprep.subr.mxu0 0.0
  %278 = vmatpush1.msra.mxu0 %v228
  %279 = vmatprep.subr.mxu0 0.0
  %280 = vmatpush1.msra.mxu0 %v227
  %281 = vmatprep.subr.mxu0 0.0
  %282 = vmatpush1.msra.mxu0 %v226
  %283 = vmatprep.subr.mxu0 0.0
  %284 = vmatpush1.msra.mxu0 %v225
  %285 = vmatprep.subr.mxu0 0.0
  %286 = vmatpush1.msra.mxu0 %v224
  %287 = vmatprep.subr.mxu0 0.0
  %288 = vmatpush1.msra.mxu0 %v223
  %289 = vmatprep.subr.mxu0 0.0
  %290 = vmatpush1.msra.mxu0 %v222
  %291 = vmatprep.subr.mxu0 0.0
  %292 = vmatpush1.msra.mxu0 %v221
  %293 = vmatprep.subr.mxu0 0.0
  %294 = vmatpush1.msra.mxu0 %v220
  %295 = vmatprep.subr.mxu0 0.0
  %296 = vmatpush1.msra.mxu0 %v219
  %297 = vmatprep.subr.mxu0 0.0
  %298 = vmatpush1.msra.mxu0 %v218
  %299 = vmatprep.subr.mxu0 0.0
  %300 = vmatpush1.msra.mxu0 %v217
  %301 = vmatprep.subr.mxu0 0.0
  %302 = vmatpush1.msra.mxu0 %v216
  %303 = vmatprep.subr.mxu0 0.0
  %304 = vmatpush1.msra.mxu0 %v215
  %305 = vmatprep.subr.mxu0 0.0
  %306 = vmatpush1.msra.mxu0 %v214
  %307 = vmatprep.subr.mxu0 0.0
  %308 = vmatpush1.msra.mxu0 %v213
  %309 = vmatprep.subr.mxu0 0.0
  %310 = vmatpush2.msra.mxu0 %v244
  %311 = vmatprep.subr.mxu0 0.0
  %312 = vmatpush2.msra.mxu0 %v243
  %313 = vmatprep.subr.mxu0 0.0
  %314 = vmatpush2.msra.mxu0 %v242
  %315 = vmatprep.subr.mxu0 0.0
  %316 = vmatpush2.msra.mxu0 %v241
  %317 = vmatprep.subr.mxu0 0.0
  %318 = vmatpush2.msra.mxu0 %v240
  %319 = vmatprep.subr.mxu0 0.0
  %320 = vmatpush2.msra.mxu0 %v239
  %321 = vmatprep.subr.mxu0 0.0
  %322 = vmatpush2.msra.mxu0 %v238
  %323 = vmatprep.subr.mxu0 0.0
  %324 = vmatpush2.msra.mxu0 %v237
  %325 = vmatprep.subr.mxu0 0.0
  %326 = vmatpush2.msra.mxu0 %v236
  %327 = vmatprep.subr.mxu0 0.0
  %328 = vmatpush2.msra.mxu0 %v235
  %329 = vmatprep.subr.mxu0 0.0
  %330 = vmatpush2.msra.mxu0 %v234
  %331 = vmatprep.subr.mxu0 0.0
  %332 = vmatpush2.msra.mxu0 %v233
  %333 = vmatprep.subr.mxu0 0.0
  %334 = vmatpush2.msra.mxu0 %v232
  %335 = vmatprep.subr.mxu0 0.0
  %336 = vmatpush2.msra.mxu0 %v231
  %337 = vmatprep.subr.mxu0 0.0
  %338 = vmatpush2.msra.mxu0 %v230
  %339 = vmatprep.subr.mxu0 0.0
  %340 = vmatpush2.msra.mxu0 %v229
  %341 = vmatprep.mubr.f32.mxu0 %v18
  %342 = vmatmul.mubr.f32.gmra.mxu0 %v17
  %v343 = vpop.f32.mrf.mxu0
  %v344 = vadd.f32 0.0, %v343
  %v345 = vpop.f32.mrf.mxu0
  %346 = vmatprep.mubr.f32.mxu0 %v22
  %347 = vmatmul.mubr.f32.gmra.mxu0 %v21
  %v348 = vpop.f32.mrf.mxu0
  %v349 = vadd.f32 0.0, %v348
  %v350 = vpop.f32.mrf.mxu0
  %351 = vmatprep.mubr.f32.mxu0 %v26
  %352 = vmatmul.mubr.f32.gmra.mxu0 %v25
  %v353 = vpop.f32.mrf.mxu0
  %v354 = vadd.f32 0.0, %v353
  %v355 = vpop.f32.mrf.mxu0
  %356 = vmatprep.mubr.f32.mxu0 %v30
  %357 = vmatmul.mubr.f32.gmra.mxu0 %v29
  %v358 = vpop.f32.mrf.mxu0
  %v359 = vadd.f32 0.0, %v358
  %v360 = vpop.f32.mrf.mxu0
  %361 = vmatprep.mubr.f32.mxu0 %v34
  %362 = vmatmul.mubr.f32.gmra.mxu0 %v33
  %v363 = vpop.f32.mrf.mxu0
  %v364 = vadd.f32 0.0, %v363
  %v365 = vpop.f32.mrf.mxu0
  %366 = vmatprep.mubr.f32.mxu0 %v38
  %367 = vmatmul.mubr.f32.gmra.mxu0 %v37
  %v368 = vpop.f32.mrf.mxu0
  %v369 = vadd.f32 0.0, %v368
  %v370 = vpop.f32.mrf.mxu0
  %371 = vmatprep.mubr.f32.mxu0 %v42
  %372 = vmatmul.mubr.f32.gmra.mxu0 %v41
  %v373 = vpop.f32.mrf.mxu0
  %v374 = vadd.f32 0.0, %v373
  %v375 = vpop.f32.mrf.mxu0
  %376 = vmatprep.mubr.f32.mxu0 %v46
  %377 = vmatmul.mubr.f32.gmra.mxu0 %v45
  %v378 = vpop.f32.mrf.mxu0
  %v379 = vadd.f32 0.0, %v378
  %v380 = vpop.f32.mrf.mxu0
  %381 = vmatprep.mubr.f32.mxu0 %v50
  %382 = vmatmul.mubr.f32.gmra.mxu0 %v49
  %v383 = vpop.f32.mrf.mxu0
  %v384 = vadd.f32 0.0, %v383
  %v385 = vpop.f32.mrf.mxu0
  %386 = vmatprep.mubr.f32.mxu0 %v54
  %387 = vmatmul.mubr.f32.gmra.mxu0 %v53
  %v388 = vpop.f32.mrf.mxu0
  %v389 = vadd.f32 0.0, %v388
  %v390 = vpop.f32.mrf.mxu0
  %391 = vmatprep.mubr.f32.mxu0 %v58
  %392 = vmatmul.mubr.f32.gmra.mxu0 %v57
  %v393 = vpop.f32.mrf.mxu0
  %v394 = vadd.f32 0.0, %v393
  %v395 = vpop.f32.mrf.mxu0
  %396 = vmatprep.mubr.f32.mxu0 %v62
  %397 = vmatmul.mubr.f32.gmra.mxu0 %v61
  %v398 = vpop.f32.mrf.mxu0
  %v399 = vadd.f32 0.0, %v398
  %v400 = vpop.f32.mrf.mxu0
  %401 = vmatprep.mubr.f32.mxu0 %v66
  %402 = vmatmul.mubr.f32.gmra.mxu0 %v65
  %v403 = vpop.f32.mrf.mxu0
  %v404 = vadd.f32 0.0, %v403
  %v405 = vpop.f32.mrf.mxu0
  %406 = vmatprep.mubr.f32.mxu0 %v70
  %407 = vmatmul.mubr.f32.gmra.mxu0 %v69
  %v408 = vpop.f32.mrf.mxu0
  %v409 = vadd.f32 0.0, %v408
  %v410 = vpop.f32.mrf.mxu0
  %411 = vmatprep.mubr.f32.mxu0 %v74
  %412 = vmatmul.mubr.f32.gmra.mxu0 %v73
  %v413 = vpop.f32.mrf.mxu0
  %v414 = vadd.f32 0.0, %v413
  %v415 = vpop.f32.mrf.mxu0
  %416 = vmatprep.mubr.f32.mxu0 %v78
  %417 = vmatmul.mubr.f32.gmra.mxu0 %v77
  %v418 = vpop.f32.mrf.mxu0
  %v419 = vadd.f32 0.0, %v418
  %v420 = vpop.f32.mrf.mxu0
  %421 = vmatprep.mubr.f32.mxu0 %v82
  %422 = vmatmul.mubr.f32.gmra.mxu0 %v81
  %v423 = vpop.f32.mrf.mxu0
  %v424 = vadd.f32 0.0, %v423
  %v425 = vpop.f32.mrf.mxu0
  %426 = vmatprep.mubr.f32.mxu0 %v86
  %427 = vmatmul.mubr.f32.gmra.mxu0 %v85
  %v428 = vpop.f32.mrf.mxu0
  %v429 = vadd.f32 0.0, %v428
  %v430 = vpop.f32.mrf.mxu0
  %431 = vmatprep.mubr.f32.mxu0 %v90
  %432 = vmatmul.mubr.f32.gmra.mxu0 %v89
  %v433 = vpop.f32.mrf.mxu0
  %v434 = vadd.f32 0.0, %v433
  %v435 = vpop.f32.mrf.mxu0
  %436 = vmatprep.mubr.f32.mxu0 %v94
  %437 = vmatmul.mubr.f32.gmra.mxu0 %v93
  %v438 = vpop.f32.mrf.mxu0
  %v439 = vadd.f32 0.0, %v438
  %v440 = vpop.f32.mrf.mxu0
  %441 = vmatprep.mubr.f32.mxu0 %v98
  %442 = vmatmul.mubr.f32.gmra.mxu0 %v97
  %v443 = vpop.f32.mrf.mxu0
  %v444 = vadd.f32 0.0, %v443
  %v445 = vpop.f32.mrf.mxu0
  %446 = vmatprep.mubr.f32.mxu0 %v102
  %447 = vmatmul.mubr.f32.gmra.mxu0 %v101
  %v448 = vpop.f32.mrf.mxu0
  %v449 = vadd.f32 0.0, %v448
  %v450 = vpop.f32.mrf.mxu0
  %451 = vmatprep.mubr.f32.mxu0 %v106
  %452 = vmatmul.mubr.f32.gmra.mxu0 %v105
  %v453 = vpop.f32.mrf.mxu0
  %v454 = vadd.f32 0.0, %v453
  %v455 = vpop.f32.mrf.mxu0
  %456 = vmatprep.mubr.f32.mxu0 %v110
  %457 = vmatmul.mubr.f32.gmra.mxu0 %v109
  %v458 = vpop.f32.mrf.mxu0
  %v459 = vadd.f32 0.0, %v458
  %v460 = vpop.f32.mrf.mxu0
  %461 = vmatprep.mubr.f32.mxu0 %v114
  %462 = vmatmul.mubr.f32.gmra.mxu0 %v113
  %v463 = vpop.f32.mrf.mxu0
  %v464 = vadd.f32 0.0, %v463
  %v465 = vpop.f32.mrf.mxu0
  %466 = vmatprep.mubr.f32.mxu0 %v118
  %467 = vmatmul.mubr.f32.gmra.mxu0 %v117
  %v468 = vpop.f32.mrf.mxu0
  %v469 = vadd.f32 0.0, %v468
  %v470 = vpop.f32.mrf.mxu0
  %471 = vmatprep.mubr.f32.mxu0 %v122
  %472 = vmatmul.mubr.f32.gmra.mxu0 %v121
  %v473 = vpop.f32.mrf.mxu0
  %v474 = vadd.f32 0.0, %v473
  %v475 = vpop.f32.mrf.mxu0
  %476 = vmatprep.mubr.f32.mxu0 %v126
  %477 = vmatmul.mubr.f32.gmra.mxu0 %v125
  %v478 = vpop.f32.mrf.mxu0
  %v479 = vadd.f32 0.0, %v478
  %v480 = vpop.f32.mrf.mxu0
  %481 = vmatprep.mubr.f32.mxu0 %v130
  %482 = vmatmul.mubr.f32.gmra.mxu0 %v129
  %v483 = vpop.f32.mrf.mxu0
  %v484 = vadd.f32 0.0, %v483
  %v485 = vpop.f32.mrf.mxu0
  %486 = vmatprep.mubr.f32.mxu0 %v134
  %487 = vmatmul.mubr.f32.gmra.mxu0 %v133
  %v488 = vpop.f32.mrf.mxu0
  %v489 = vadd.f32 0.0, %v488
  %v490 = vpop.f32.mrf.mxu0
  %491 = vmatprep.mubr.f32.mxu0 %v138
  %492 = vmatmul.mubr.f32.gmra.mxu0 %v137
  %v493 = vpop.f32.mrf.mxu0
  %v494 = vadd.f32 0.0, %v493
  %v495 = vpop.f32.mrf.mxu0
  %496 = vmatprep.mubr.f32.mxu0 %v142
  %497 = vmatmul.mubr.f32.gmra.mxu0 %v141
  %v498 = vpop.f32.mrf.mxu0
  %v499 = vadd.f32 0.0, %v498
  %v500 = vpop.f32.mrf.mxu0
  %501 = vmatprep.mubr.f32.mxu0 %v146
  %502 = vmatmul.mubr.f32.gmra.mxu0 %v145
  %v503 = vpop.f32.mrf.mxu0
  %v504 = vadd.f32 0.0, %v503
  %v505 = vpop.f32.mrf.mxu0
  %506 = vmatprep.mubr.f32.mxu0 %v150
  %507 = vmatmul.mubr.f32.gmra.mxu0 %v149
  %v508 = vpop.f32.mrf.mxu0
  %v509 = vadd.f32 0.0, %v508
  %v510 = vpop.f32.mrf.mxu0
  %511 = vmatprep.mubr.f32.mxu0 %v154
  %512 = vmatmul.mubr.f32.gmra.mxu0 %v153
  %v513 = vpop.f32.mrf.mxu0
  %v514 = vadd.f32 0.0, %v513
  %v515 = vpop.f32.mrf.mxu0
  %516 = vmatprep.mubr.f32.mxu0 %v158
  %517 = vmatmul.mubr.f32.gmra.mxu0 %v157
  %v518 = vpop.f32.mrf.mxu0
  %v519 = vadd.f32 0.0, %v518
  %v520 = vpop.f32.mrf.mxu0
  %521 = vmatprep.mubr.f32.mxu0 %v162
  %522 = vmatmul.mubr.f32.gmra.mxu0 %v161
  %v523 = vpop.f32.mrf.mxu0
  %v524 = vadd.f32 0.0, %v523
  %v525 = vpop.f32.mrf.mxu0
  %526 = vmatprep.mubr.f32.mxu0 %v166
  %527 = vmatmul.mubr.f32.gmra.mxu0 %v165
  %v528 = vpop.f32.mrf.mxu0
  %v529 = vadd.f32 0.0, %v528
  %v530 = vpop.f32.mrf.mxu0
  %531 = vmatprep.mubr.f32.mxu0 %v170
  %532 = vmatmul.mubr.f32.gmra.mxu0 %v169
  %v533 = vpop.f32.mrf.mxu0
  %v534 = vadd.f32 0.0, %v533
  %v535 = vpop.f32.mrf.mxu0
  %536 = vmatprep.mubr.f32.mxu0 %v174
  %537 = vmatmul.mubr.f32.gmra.mxu0 %v173
  %v538 = vpop.f32.mrf.mxu0
  %v539 = vadd.f32 0.0, %v538
  %v540 = vpop.f32.mrf.mxu0
  %541 = vmatprep.mubr.f32.mxu0 %v178
  %542 = vmatmul.mubr.f32.gmra.mxu0 %v177
  %v543 = vpop.f32.mrf.mxu0
  %v544 = vadd.f32 0.0, %v543
  %v545 = vpop.f32.mrf.mxu0
  %546 = vmatprep.mubr.f32.mxu0 %v182
  %547 = vmatmul.mubr.f32.gmra.mxu0 %v181
  %v548 = vpop.f32.mrf.mxu0
  %v549 = vadd.f32 0.0, %v548
  %v550 = vpop.f32.mrf.mxu0
  %551 = vmatprep.mubr.f32.mxu0 %v186
  %552 = vmatmul.mubr.f32.gmra.mxu0 %v185
  %v553 = vpop.f32.mrf.mxu0
  %v554 = vadd.f32 0.0, %v553
  %v555 = vpop.f32.mrf.mxu0
  %556 = vmatprep.mubr.f32.mxu0 %v190
  %557 = vmatmul.mubr.f32.gmra.mxu0 %v189
  %v558 = vpop.f32.mrf.mxu0
  %v559 = vadd.f32 0.0, %v558
  %v560 = vpop.f32.mrf.mxu0
  %561 = vmatprep.mubr.f32.mxu0 %v194
  %562 = vmatmul.mubr.f32.gmra.mxu0 %v193
  %v563 = vpop.f32.mrf.mxu0
  %v564 = vadd.f32 0.0, %v563
  %v565 = vpop.f32.mrf.mxu0
  %566 = vmatprep.mubr.f32.mxu0 %v198
  %567 = vmatmul.mubr.f32.gmra.mxu0 %v197
  %v568 = vpop.f32.mrf.mxu0
  %v569 = vadd.f32 0.0, %v568
  %v570 = vpop.f32.mrf.mxu0
  %571 = vmatprep.mubr.f32.mxu0 %v202
  %572 = vmatmul.mubr.f32.gmra.mxu0 %v201
  %v573 = vpop.f32.mrf.mxu0
  %v574 = vadd.f32 0.0, %v573
  %v575 = vpop.f32.mrf.mxu0
  %576 = vmatprep.mubr.f32.mxu0 %v206
  %577 = vmatmul.mubr.f32.gmra.mxu0 %v205
  %v578 = vpop.f32.mrf.mxu0
  %v579 = vadd.f32 0.0, %v578
  %v580 = vpop.f32.mrf.mxu0
  %581 = vmatprep.mubr.f32.mxu0 %v210
  %582 = vmatmul.mubr.f32.gmra.mxu0 %v209
  %v583 = vpop.f32.mrf.mxu0
  %v584 = vadd.f32 0.0, %v583
  %v585 = vpop.f32.mrf.mxu0
  %586 = vdwg.mxu0
  %587 = vmatprep.subr.mxu0 0.0
  %588 = vmatpush1.msra.mxu0 %v260
  %589 = vmatprep.subr.mxu0 0.0
  %590 = vmatpush1.msra.mxu0 %v259
  %591 = vmatprep.subr.mxu0 0.0
  %592 = vmatpush1.msra.mxu0 %v258
  %593 = vmatprep.subr.mxu0 0.0
  %594 = vmatpush1.msra.mxu0 %v257
  %595 = vmatprep.subr.mxu0 0.0
  %596 = vmatpush1.msra.mxu0 %v256
  %597 = vmatprep.subr.mxu0 0.0
  %598 = vmatpush1.msra.mxu0 %v255
  %599 = vmatprep.subr.mxu0 0.0
  %600 = vmatpush1.msra.mxu0 %v254
  %601 = vmatprep.subr.mxu0 0.0
  %602 = vmatpush1.msra.mxu0 %v253
  %603 = vmatprep.subr.mxu0 0.0
  %604 = vmatpush1.msra.mxu0 %v252
  %605 = vmatprep.subr.mxu0 0.0
  %606 = vmatpush1.msra.mxu0 %v251
  %607 = vmatprep.subr.mxu0 0.0
  %608 = vmatpush1.msra.mxu0 %v250
  %609 = vmatprep.subr.mxu0 0.0
  %610 = vmatpush1.msra.mxu0 %v249
  %611 = vmatprep.subr.mxu0 0.0
  %612 = vmatpush1.msra.mxu0 %v248
  %613 = vmatprep.subr.mxu0 0.0
  %614 = vmatpush1.msra.mxu0 %v247
  %615 = vmatprep.subr.mxu0 0.0
  %616 = vmatpush1.msra.mxu0 %v246
  %617 = vmatprep.subr.mxu0 0.0
  %618 = vmatpush1.msra.mxu0 %v245
  %619 = vmatprep.subr.mxu0 0.0
  %620 = vmatpush2.msra.mxu0 %v276
  %621 = vmatprep.subr.mxu0 0.0
  %622 = vmatpush2.msra.mxu0 %v275
  %623 = vmatprep.subr.mxu0 0.0
  %624 = vmatpush2.msra.mxu0 %v274
  %625 = vmatprep.subr.mxu0 0.0
  %626 = vmatpush2.msra.mxu0 %v273
  %627 = vmatprep.subr.mxu0 0.0
  %628 = vmatpush2.msra.mxu0 %v272
  %629 = vmatprep.subr.mxu0 0.0
  %630 = vmatpush2.msra.mxu0 %v271
  %631 = vmatprep.subr.mxu0 0.0
  %632 = vmatpush2.msra.mxu0 %v270
  %633 = vmatprep.subr.mxu0 0.0
  %634 = vmatpush2.msra.mxu0 %v269
  %635 = vmatprep.subr.mxu0 0.0
  %636 = vmatpush2.msra.mxu0 %v268
  %637 = vmatprep.subr.mxu0 0.0
  %638 = vmatpush2.msra.mxu0 %v267
  %639 = vmatprep.subr.mxu0 0.0
  %640 = vmatpush2.msra.mxu0 %v266
  %641 = vmatprep.subr.mxu0 0.0
  %642 = vmatpush2.msra.mxu0 %v265
  %643 = vmatprep.subr.mxu0 0.0
  %644 = vmatpush2.msra.mxu0 %v264
  %645 = vmatprep.subr.mxu0 0.0
  %646 = vmatpush2.msra.mxu0 %v263
  %647 = vmatprep.subr.mxu0 0.0
  %648 = vmatpush2.msra.mxu0 %v262
  %649 = vmatprep.subr.mxu0 0.0
  %650 = vmatpush2.msra.mxu0 %v261
  %651 = vmatprep.mubr.f32.mxu0 %v20
  %652 = vmatmul.mubr.f32.gmra.mxu0 %v19
  %v653 = vpop.f32.mrf.mxu0
  %v654 = vadd.f32 %v344, %v653
  %v655 = vpop.f32.mrf.mxu0
  %656 = vmatprep.mubr.f32.mxu0 %v24
  %657 = vmatmul.mubr.f32.gmra.mxu0 %v23
  %v658 = vpop.f32.mrf.mxu0
  %v659 = vadd.f32 %v349, %v658
  %v660 = vpop.f32.mrf.mxu0
  %661 = vmatprep.mubr.f32.mxu0 %v28
  %662 = vmatmul.mubr.f32.gmra.mxu0 %v27
  %v663 = vpop.f32.mrf.mxu0
  %v664 = vadd.f32 %v354, %v663
  %v665 = vpop.f32.mrf.mxu0
  %666 = vmatprep.mubr.f32.mxu0 %v32
  %667 = vmatmul.mubr.f32.gmra.mxu0 %v31
  %v668 = vpop.f32.mrf.mxu0
  %v669 = vadd.f32 %v359, %v668
  %v670 = vpop.f32.mrf.mxu0
  %671 = vmatprep.mubr.f32.mxu0 %v36
  %672 = vmatmul.mubr.f32.gmra.mxu0 %v35
  %v673 = vpop.f32.mrf.mxu0
  %v674 = vadd.f32 %v364, %v673
  %v675 = vpop.f32.mrf.mxu0
  %676 = vmatprep.mubr.f32.mxu0 %v40
  %677 = vmatmul.mubr.f32.gmra.mxu0 %v39
  %v678 = vpop.f32.mrf.mxu0
  %v679 = vadd.f32 %v369, %v678
  %v680 = vpop.f32.mrf.mxu0
  %681 = vmatprep.mubr.f32.mxu0 %v44
  %682 = vmatmul.mubr.f32.gmra.mxu0 %v43
  %v683 = vpop.f32.mrf.mxu0
  %v684 = vadd.f32 %v374, %v683
  %v685 = vpop.f32.mrf.mxu0
  %686 = vmatprep.mubr.f32.mxu0 %v48
  %687 = vmatmul.mubr.f32.gmra.mxu0 %v47
  %v688 = vpop.f32.mrf.mxu0
  %v689 = vadd.f32 %v379, %v688
  %v690 = vpop.f32.mrf.mxu0
  %691 = vmatprep.mubr.f32.mxu0 %v52
  %692 = vmatmul.mubr.f32.gmra.mxu0 %v51
  %v693 = vpop.f32.mrf.mxu0
  %v694 = vadd.f32 %v384, %v693
  %v695 = vpop.f32.mrf.mxu0
  %696 = vmatprep.mubr.f32.mxu0 %v56
  %697 = vmatmul.mubr.f32.gmra.mxu0 %v55
  %v698 = vpop.f32.mrf.mxu0
  %v699 = vadd.f32 %v389, %v698
  %v700 = vpop.f32.mrf.mxu0
  %701 = vmatprep.mubr.f32.mxu0 %v60
  %702 = vmatmul.mubr.f32.gmra.mxu0 %v59
  %v703 = vpop.f32.mrf.mxu0
  %v704 = vadd.f32 %v394, %v703
  %v705 = vpop.f32.mrf.mxu0
  %706 = vmatprep.mubr.f32.mxu0 %v64
  %707 = vmatmul.mubr.f32.gmra.mxu0 %v63
  %v708 = vpop.f32.mrf.mxu0
  %v709 = vadd.f32 %v399, %v708
  %v710 = vpop.f32.mrf.mxu0
  %711 = vmatprep.mubr.f32.mxu0 %v68
  %712 = vmatmul.mubr.f32.gmra.mxu0 %v67
  %v713 = vpop.f32.mrf.mxu0
  %v714 = vadd.f32 %v404, %v713
  %v715 = vpop.f32.mrf.mxu0
  %716 = vmatprep.mubr.f32.mxu0 %v72
  %717 = vmatmul.mubr.f32.gmra.mxu0 %v71
  %v718 = vpop.f32.mrf.mxu0
  %v719 = vadd.f32 %v409, %v718
  %v720 = vpop.f32.mrf.mxu0
  %721 = vmatprep.mubr.f32.mxu0 %v76
  %722 = vmatmul.mubr.f32.gmra.mxu0 %v75
  %v723 = vpop.f32.mrf.mxu0
  %v724 = vadd.f32 %v414, %v723
  %v725 = vpop.f32.mrf.mxu0
  %726 = vmatprep.mubr.f32.mxu0 %v80
  %727 = vmatmul.mubr.f32.gmra.mxu0 %v79
  %v728 = vpop.f32.mrf.mxu0
  %v729 = vadd.f32 %v419, %v728
  %v730 = vpop.f32.mrf.mxu0
  %731 = vmatprep.mubr.f32.mxu0 %v84
  %732 = vmatmul.mubr.f32.gmra.mxu0 %v83
  %v733 = vpop.f32.mrf.mxu0
  %v734 = vadd.f32 %v424, %v733
  %v735 = vpop.f32.mrf.mxu0
  %736 = vmatprep.mubr.f32.mxu0 %v88
  %737 = vmatmul.mubr.f32.gmra.mxu0 %v87
  %v738 = vpop.f32.mrf.mxu0
  %v739 = vadd.f32 %v429, %v738
  %v740 = vpop.f32.mrf.mxu0
  %741 = vmatprep.mubr.f32.mxu0 %v92
  %742 = vmatmul.mubr.f32.gmra.mxu0 %v91
  %v743 = vpop.f32.mrf.mxu0
  %v744 = vadd.f32 %v434, %v743
  %v745 = vpop.f32.mrf.mxu0
  %746 = vmatprep.mubr.f32.mxu0 %v96
  %747 = vmatmul.mubr.f32.gmra.mxu0 %v95
  %v748 = vpop.f32.mrf.mxu0
  %v749 = vadd.f32 %v439, %v748
  %v750 = vpop.f32.mrf.mxu0
  %751 = vmatprep.mubr.f32.mxu0 %v100
  %752 = vmatmul.mubr.f32.gmra.mxu0 %v99
  %v753 = vpop.f32.mrf.mxu0
  %v754 = vadd.f32 %v444, %v753
  %v755 = vpop.f32.mrf.mxu0
  %756 = vmatprep.mubr.f32.mxu0 %v104
  %757 = vmatmul.mubr.f32.gmra.mxu0 %v103
  %v758 = vpop.f32.mrf.mxu0
  %v759 = vadd.f32 %v449, %v758
  %v760 = vpop.f32.mrf.mxu0
  %761 = vmatprep.mubr.f32.mxu0 %v108
  %762 = vmatmul.mubr.f32.gmra.mxu0 %v107
  %v763 = vpop.f32.mrf.mxu0
  %v764 = vadd.f32 %v454, %v763
  %v765 = vpop.f32.mrf.mxu0
  %766 = vmatprep.mubr.f32.mxu0 %v112
  %767 = vmatmul.mubr.f32.gmra.mxu0 %v111
  %v768 = vpop.f32.mrf.mxu0
  %v769 = vadd.f32 %v459, %v768
  %v770 = vpop.f32.mrf.mxu0
  %771 = vmatprep.mubr.f32.mxu0 %v116
  %772 = vmatmul.mubr.f32.gmra.mxu0 %v115
  %v773 = vpop.f32.mrf.mxu0
  %v774 = vadd.f32 %v464, %v773
  %v775 = vpop.f32.mrf.mxu0
  %776 = vmatprep.mubr.f32.mxu0 %v120
  %777 = vmatmul.mubr.f32.gmra.mxu0 %v119
  %v778 = vpop.f32.mrf.mxu0
  %v779 = vadd.f32 %v469, %v778
  %v780 = vpop.f32.mrf.mxu0
  %781 = vmatprep.mubr.f32.mxu0 %v124
  %782 = vmatmul.mubr.f32.gmra.mxu0 %v123
  %v783 = vpop.f32.mrf.mxu0
  %v784 = vadd.f32 %v474, %v783
  %v785 = vpop.f32.mrf.mxu0
  %786 = vmatprep.mubr.f32.mxu0 %v128
  %787 = vmatmul.mubr.f32.gmra.mxu0 %v127
  %v788 = vpop.f32.mrf.mxu0
  %v789 = vadd.f32 %v479, %v788
  %v790 = vpop.f32.mrf.mxu0
  %791 = vmatprep.mubr.f32.mxu0 %v132
  %792 = vmatmul.mubr.f32.gmra.mxu0 %v131
  %v793 = vpop.f32.mrf.mxu0
  %v794 = vadd.f32 %v484, %v793
  %v795 = vpop.f32.mrf.mxu0
  %796 = vmatprep.mubr.f32.mxu0 %v136
  %797 = vmatmul.mubr.f32.gmra.mxu0 %v135
  %v798 = vpop.f32.mrf.mxu0
  %v799 = vadd.f32 %v489, %v798
  %v800 = vpop.f32.mrf.mxu0
  %801 = vmatprep.mubr.f32.mxu0 %v140
  %802 = vmatmul.mubr.f32.gmra.mxu0 %v139
  %v803 = vpop.f32.mrf.mxu0
  %v804 = vadd.f32 %v494, %v803
  %v805 = vpop.f32.mrf.mxu0
  %806 = vmatprep.mubr.f32.mxu0 %v144
  %807 = vmatmul.mubr.f32.gmra.mxu0 %v143
  %v808 = vpop.f32.mrf.mxu0
  %v809 = vadd.f32 %v499, %v808
  %v810 = vpop.f32.mrf.mxu0
  %811 = vmatprep.mubr.f32.mxu0 %v148
  %812 = vmatmul.mubr.f32.gmra.mxu0 %v147
  %v813 = vpop.f32.mrf.mxu0
  %v814 = vadd.f32 %v504, %v813
  %v815 = vpop.f32.mrf.mxu0
  %816 = vmatprep.mubr.f32.mxu0 %v152
  %817 = vmatmul.mubr.f32.gmra.mxu0 %v151
  %v818 = vpop.f32.mrf.mxu0
  %v819 = vadd.f32 %v509, %v818
  %v820 = vpop.f32.mrf.mxu0
  %821 = vmatprep.mubr.f32.mxu0 %v156
  %822 = vmatmul.mubr.f32.gmra.mxu0 %v155
  %v823 = vpop.f32.mrf.mxu0
  %v824 = vadd.f32 %v514, %v823
  %v825 = vpop.f32.mrf.mxu0
  %826 = vmatprep.mubr.f32.mxu0 %v160
  %827 = vmatmul.mubr.f32.gmra.mxu0 %v159
  %v828 = vpop.f32.mrf.mxu0
  %v829 = vadd.f32 %v519, %v828
  %v830 = vpop.f32.mrf.mxu0
  %831 = vmatprep.mubr.f32.mxu0 %v164
  %832 = vmatmul.mubr.f32.gmra.mxu0 %v163
  %v833 = vpop.f32.mrf.mxu0
  %v834 = vadd.f32 %v524, %v833
  %v835 = vpop.f32.mrf.mxu0
  %836 = vmatprep.mubr.f32.mxu0 %v168
  %837 = vmatmul.mubr.f32.gmra.mxu0 %v167
  %v838 = vpop.f32.mrf.mxu0
  %v839 = vadd.f32 %v529, %v838
  %v840 = vpop.f32.mrf.mxu0
  %841 = vmatprep.mubr.f32.mxu0 %v172
  %842 = vmatmul.mubr.f32.gmra.mxu0 %v171
  %v843 = vpop.f32.mrf.mxu0
  %v844 = vadd.f32 %v534, %v843
  %v845 = vpop.f32.mrf.mxu0
  %846 = vmatprep.mubr.f32.mxu0 %v176
  %847 = vmatmul.mubr.f32.gmra.mxu0 %v175
  %v848 = vpop.f32.mrf.mxu0
  %v849 = vadd.f32 %v539, %v848
  %v850 = vpop.f32.mrf.mxu0
  %851 = vmatprep.mubr.f32.mxu0 %v180
  %852 = vmatmul.mubr.f32.gmra.mxu0 %v179
  %v853 = vpop.f32.mrf.mxu0
  %v854 = vadd.f32 %v544, %v853
  %v855 = vpop.f32.mrf.mxu0
  %856 = vmatprep.mubr.f32.mxu0 %v184
  %857 = vmatmul.mubr.f32.gmra.mxu0 %v183
  %v858 = vpop.f32.mrf.mxu0
  %v859 = vadd.f32 %v549, %v858
  %v860 = vpop.f32.mrf.mxu0
  %861 = vmatprep.mubr.f32.mxu0 %v188
  %862 = vmatmul.mubr.f32.gmra.mxu0 %v187
  %v863 = vpop.f32.mrf.mxu0
  %v864 = vadd.f32 %v554, %v863
  %v865 = vpop.f32.mrf.mxu0
  %866 = vmatprep.mubr.f32.mxu0 %v192
  %867 = vmatmul.mubr.f32.gmra.mxu0 %v191
  %v868 = vpop.f32.mrf.mxu0
  %v869 = vadd.f32 %v559, %v868
  %v870 = vpop.f32.mrf.mxu0
  %871 = vmatprep.mubr.f32.mxu0 %v196
  %872 = vmatmul.mubr.f32.gmra.mxu0 %v195
  %v873 = vpop.f32.mrf.mxu0
  %v874 = vadd.f32 %v564, %v873
  %v875 = vpop.f32.mrf.mxu0
  %876 = vmatprep.mubr.f32.mxu0 %v200
  %877 = vmatmul.mubr.f32.gmra.mxu0 %v199
  %v878 = vpop.f32.mrf.mxu0
  %v879 = vadd.f32 %v569, %v878
  %v880 = vpop.f32.mrf.mxu0
  %881 = vmatprep.mubr.f32.mxu0 %v204
  %882 = vmatmul.mubr.f32.gmra.mxu0 %v203
  %v883 = vpop.f32.mrf.mxu0
  %v884 = vadd.f32 %v574, %v883
  %v885 = vpop.f32.mrf.mxu0
  %886 = vmatprep.mubr.f32.mxu0 %v208
  %887 = vmatmul.mubr.f32.gmra.mxu0 %v207
  %v888 = vpop.f32.mrf.mxu0
  %v889 = vadd.f32 %v579, %v888
  %v890 = vpop.f32.mrf.mxu0
  %891 = vmatprep.mubr.f32.mxu0 %v212
  %892 = vmatmul.mubr.f32.gmra.mxu0 %v211
  %v893 = vpop.f32.mrf.mxu0
  %v894 = vadd.f32 %v584, %v893
  %v895 = vpop.f32.mrf.mxu0
  %896 = vdwg.mxu0
  %vm897 = vcmask 130048
  %v898 = vsel %vm897, %v654, 0.0
  %v899 = vsel %vm897, %v659, 0.0
  %v900 = vadd.f32 %v898, %v899
  %v901 = vsel %vm897, %v664, 0.0
  %v902 = vadd.f32 %v900, %v901
  %v903 = vsel %vm897, %v669, 0.0
  %v904 = vadd.f32 %v902, %v903
  %v905 = vsel %vm897, %v674, 0.0
  %v906 = vadd.f32 %v904, %v905
  %v907 = vsel %vm897, %v679, 0.0
  %v908 = vadd.f32 %v906, %v907
  %v909 = vsel %vm897, %v684, 0.0
  %v910 = vadd.f32 %v908, %v909
  %v911 = vsel %vm897, %v689, 0.0
  %v912 = vadd.f32 %v910, %v911
  %v913 = vsel %vm897, %v694, 0.0
  %v914 = vadd.f32 %v912, %v913
  %v915 = vsel %vm897, %v699, 0.0
  %v916 = vadd.f32 %v914, %v915
  %v917 = vsel %vm897, %v704, 0.0
  %v918 = vadd.f32 %v916, %v917
  %v919 = vsel %vm897, %v709, 0.0
  %v920 = vadd.f32 %v918, %v919
  %v921 = vsel %vm897, %v714, 0.0
  %v922 = vadd.f32 %v920, %v921
  %v923 = vsel %vm897, %v719, 0.0
  %v924 = vadd.f32 %v922, %v923
  %v925 = vsel %vm897, %v724, 0.0
  %v926 = vadd.f32 %v924, %v925
  %v927 = vsel %vm897, %v729, 0.0
  %v928 = vadd.f32 %v926, %v927
  %v929 = vsel %vm897, %v734, 0.0
  %v930 = vadd.f32 %v928, %v929
  %v931 = vsel %vm897, %v739, 0.0
  %v932 = vadd.f32 %v930, %v931
  %v933 = vsel %vm897, %v744, 0.0
  %v934 = vadd.f32 %v932, %v933
  %v935 = vsel %vm897, %v749, 0.0
  %v936 = vadd.f32 %v934, %v935
  %v937 = vsel %vm897, %v754, 0.0
  %v938 = vadd.f32 %v936, %v937
  %v939 = vsel %vm897, %v759, 0.0
  %v940 = vadd.f32 %v938, %v939
  %v941 = vsel %vm897, %v764, 0.0
  %v942 = vadd.f32 %v940, %v941
  %v943 = vsel %vm897, %v769, 0.0
  %v944 = vadd.f32 %v942, %v943
  %v945 = vsel %vm897, %v774, 0.0
  %v946 = vadd.f32 %v944, %v945
  %v947 = vsel %vm897, %v779, 0.0
  %v948 = vadd.f32 %v946, %v947
  %v949 = vsel %vm897, %v784, 0.0
  %v950 = vadd.f32 %v948, %v949
  %v951 = vsel %vm897, %v789, 0.0
  %v952 = vadd.f32 %v950, %v951
  %v953 = vsel %vm897, %v794, 0.0
  %v954 = vadd.f32 %v952, %v953
  %v955 = vsel %vm897, %v799, 0.0
  %v956 = vadd.f32 %v954, %v955
  %v957 = vsel %vm897, %v804, 0.0
  %v958 = vadd.f32 %v956, %v957
  %v959 = vsel %vm897, %v809, 0.0
  %v960 = vadd.f32 %v958, %v959
  %v961 = vsel %vm897, %v814, 0.0
  %v962 = vadd.f32 %v960, %v961
  %v963 = vsel %vm897, %v819, 0.0
  %v964 = vadd.f32 %v962, %v963
  %v965 = vsel %vm897, %v824, 0.0
  %v966 = vadd.f32 %v964, %v965
  %v967 = vsel %vm897, %v829, 0.0
  %v968 = vadd.f32 %v966, %v967
  %v969 = vsel %vm897, %v834, 0.0
  %v970 = vadd.f32 %v968, %v969
  %v971 = vsel %vm897, %v839, 0.0
  %v972 = vadd.f32 %v970, %v971
  %v973 = vsel %vm897, %v844, 0.0
  %v974 = vadd.f32 %v972, %v973
  %v975 = vsel %vm897, %v849, 0.0
  %v976 = vadd.f32 %v974, %v975
  %v977 = vsel %vm897, %v854, 0.0
  %v978 = vadd.f32 %v976, %v977
  %v979 = vsel %vm897, %v859, 0.0
  %v980 = vadd.f32 %v978, %v979
  %v981 = vsel %vm897, %v864, 0.0
  %v982 = vadd.f32 %v980, %v981
  %v983 = vsel %vm897, %v869, 0.0
  %v984 = vadd.f32 %v982, %v983
  %v985 = vsel %vm897, %v874, 0.0
  %v986 = vadd.f32 %v984, %v985
  %v987 = vsel %vm897, %v879, 0.0
  %v988 = vadd.f32 %v986, %v987
  %v989 = vsel %vm897, %v884, 0.0
  %v990 = vadd.f32 %v988, %v989
  %v991 = vsel %vm897, %v889, 0.0
  %v992 = vadd.f32 %v990, %v991
  %v993 = vsel %vm897, %v894, 0.0
  %v994 = vadd.f32 %v992, %v993
  %v995 = vrot.slane %v994, 4
  %v996 = vadd.f32 %v994, %v995
  %v997 = vrot.slane %v996, 2
  %v998 = vadd.f32 %v996, %v997
  %v999 = vrot.slane %v998, 1
  %v1000 = vadd.f32 %v998, %v999
  %v1001 = vrcp.pop 392.0
  %v1002 = vmul.f32 %v1000, %v1001
  %v1003 = vmul.f32 %v654, %v654
  %v1004 = vmul.f32 %v659, %v659
  %v1005 = vmul.f32 %v664, %v664
  %v1006 = vmul.f32 %v669, %v669
  %v1007 = vmul.f32 %v674, %v674
  %v1008 = vmul.f32 %v679, %v679
  %v1009 = vmul.f32 %v684, %v684
  %v1010 = vmul.f32 %v689, %v689
  %v1011 = vmul.f32 %v694, %v694
  %v1012 = vmul.f32 %v699, %v699
  %v1013 = vmul.f32 %v704, %v704
  %v1014 = vmul.f32 %v709, %v709
  %v1015 = vmul.f32 %v714, %v714
  %v1016 = vmul.f32 %v719, %v719
  %v1017 = vmul.f32 %v724, %v724
  %v1018 = vmul.f32 %v729, %v729
  %v1019 = vmul.f32 %v734, %v734
  %v1020 = vmul.f32 %v739, %v739
  %v1021 = vmul.f32 %v744, %v744
  %v1022 = vmul.f32 %v749, %v749
  %v1023 = vmul.f32 %v754, %v754
  %v1024 = vmul.f32 %v759, %v759
  %v1025 = vmul.f32 %v764, %v764
  %v1026 = vmul.f32 %v769, %v769
  %v1027 = vmul.f32 %v774, %v774
  %v1028 = vmul.f32 %v779, %v779
  %v1029 = vmul.f32 %v784, %v784
  %v1030 = vmul.f32 %v789, %v789
  %v1031 = vmul.f32 %v794, %v794
  %v1032 = vmul.f32 %v799, %v799
  %v1033 = vmul.f32 %v804, %v804
  %v1034 = vmul.f32 %v809, %v809
  %v1035 = vmul.f32 %v814, %v814
  %v1036 = vmul.f32 %v819, %v819
  %v1037 = vmul.f32 %v824, %v824
  %v1038 = vmul.f32 %v829, %v829
  %v1039 = vmul.f32 %v834, %v834
  %v1040 = vmul.f32 %v839, %v839
  %v1041 = vmul.f32 %v844, %v844
  %v1042 = vmul.f32 %v849, %v849
  %v1043 = vmul.f32 %v854, %v854
  %v1044 = vmul.f32 %v859, %v859
  %v1045 = vmul.f32 %v864, %v864
  %v1046 = vmul.f32 %v869, %v869
  %v1047 = vmul.f32 %v874, %v874
  %v1048 = vmul.f32 %v879, %v879
  %v1049 = vmul.f32 %v884, %v884
  %v1050 = vmul.f32 %v889, %v889
  %v1051 = vmul.f32 %v894, %v894
  %v1052 = vsel %vm897, %v1003, 0.0
  %v1053 = vsel %vm897, %v1004, 0.0
  %v1054 = vadd.f32 %v1052, %v1053
  %v1055 = vsel %vm897, %v1005, 0.0
  %v1056 = vadd.f32 %v1054, %v1055
  %v1057 = vsel %vm897, %v1006, 0.0
  %v1058 = vadd.f32 %v1056, %v1057
  %v1059 = vsel %vm897, %v1007, 0.0
  %v1060 = vadd.f32 %v1058, %v1059
  %v1061 = vsel %vm897, %v1008, 0.0
  %v1062 = vadd.f32 %v1060, %v1061
  %v1063 = vsel %vm897, %v1009, 0.0
  %v1064 = vadd.f32 %v1062, %v1063
  %v1065 = vsel %vm897, %v1010, 0.0
  %v1066 = vadd.f32 %v1064, %v1065
  %v1067 = vsel %vm897, %v1011, 0.0
  %v1068 = vadd.f32 %v1066, %v1067
  %v1069 = vsel %vm897, %v1012, 0.0
  %v1070 = vadd.f32 %v1068, %v1069
  %v1071 = vsel %vm897, %v1013, 0.0
  %v1072 = vadd.f32 %v1070, %v1071
  %v1073 = vsel %vm897, %v1014, 0.0
  %v1074 = vadd.f32 %v1072, %v1073
  %v1075 = vsel %vm897, %v1015, 0.0
  %v1076 = vadd.f32 %v1074, %v1075
  %v1077 = vsel %vm897, %v1016, 0.0
  %v1078 = vadd.f32 %v1076, %v1077
  %v1079 = vsel %vm897, %v1017, 0.0
  %v1080 = vadd.f32 %v1078, %v1079
  %v1081 = vsel %vm897, %v1018, 0.0
  %v1082 = vadd.f32 %v1080, %v1081
  %v1083 = vsel %vm897, %v1019, 0.0
  %v1084 = vadd.f32 %v1082, %v1083
  %v1085 = vsel %vm897, %v1020, 0.0
  %v1086 = vadd.f32 %v1084, %v1085
  %v1087 = vsel %vm897, %v1021, 0.0
  %v1088 = vadd.f32 %v1086, %v1087
  %v1089 = vsel %vm897, %v1022, 0.0
  %v1090 = vadd.f32 %v1088, %v1089
  %v1091 = vsel %vm897, %v1023, 0.0
  %v1092 = vadd.f32 %v1090, %v1091
  %v1093 = vsel %vm897, %v1024, 0.0
  %v1094 = vadd.f32 %v1092, %v1093
  %v1095 = vsel %vm897, %v1025, 0.0
  %v1096 = vadd.f32 %v1094, %v1095
  %v1097 = vsel %vm897, %v1026, 0.0
  %v1098 = vadd.f32 %v1096, %v1097
  %v1099 = vsel %vm897, %v1027, 0.0
  %v1100 = vadd.f32 %v1098, %v1099
  %v1101 = vsel %vm897, %v1028, 0.0
  %v1102 = vadd.f32 %v1100, %v1101
  %v1103 = vsel %vm897, %v1029, 0.0
  %v1104 = vadd.f32 %v1102, %v1103
  %v1105 = vsel %vm897, %v1030, 0.0
  %v1106 = vadd.f32 %v1104, %v1105
  %v1107 = vsel %vm897, %v1031, 0.0
  %v1108 = vadd.f32 %v1106, %v1107
  %v1109 = vsel %vm897, %v1032, 0.0
  %v1110 = vadd.f32 %v1108, %v1109
  %v1111 = vsel %vm897, %v1033, 0.0
  %v1112 = vadd.f32 %v1110, %v1111
  %v1113 = vsel %vm897, %v1034, 0.0
  %v1114 = vadd.f32 %v1112, %v1113
  %v1115 = vsel %vm897, %v1035, 0.0
  %v1116 = vadd.f32 %v1114, %v1115
  %v1117 = vsel %vm897, %v1036, 0.0
  %v1118 = vadd.f32 %v1116, %v1117
  %v1119 = vsel %vm897, %v1037, 0.0
  %v1120 = vadd.f32 %v1118, %v1119
  %v1121 = vsel %vm897, %v1038, 0.0
  %v1122 = vadd.f32 %v1120, %v1121
  %v1123 = vsel %vm897, %v1039, 0.0
  %v1124 = vadd.f32 %v1122, %v1123
  %v1125 = vsel %vm897, %v1040, 0.0
  %v1126 = vadd.f32 %v1124, %v1125
  %v1127 = vsel %vm897, %v1041, 0.0
  %v1128 = vadd.f32 %v1126, %v1127
  %v1129 = vsel %vm897, %v1042, 0.0
  %v1130 = vadd.f32 %v1128, %v1129
  %v1131 = vsel %vm897, %v1043, 0.0
  %v1132 = vadd.f32 %v1130, %v1131
  %v1133 = vsel %vm897, %v1044, 0.0
  %v1134 = vadd.f32 %v1132, %v1133
  %v1135 = vsel %vm897, %v1045, 0.0
  %v1136 = vadd.f32 %v1134, %v1135
  %v1137 = vsel %vm897, %v1046, 0.0
  %v1138 = vadd.f32 %v1136, %v1137
  %v1139 = vsel %vm897, %v1047, 0.0
  %v1140 = vadd.f32 %v1138, %v1139
  %v1141 = vsel %vm897, %v1048, 0.0
  %v1142 = vadd.f32 %v1140, %v1141
  %v1143 = vsel %vm897, %v1049, 0.0
  %v1144 = vadd.f32 %v1142, %v1143
  %v1145 = vsel %vm897, %v1050, 0.0
  %v1146 = vadd.f32 %v1144, %v1145
  %v1147 = vsel %vm897, %v1051, 0.0
  %v1148 = vadd.f32 %v1146, %v1147
  %v1149 = vrot.slane %v1148, 4
  %v1150 = vadd.f32 %v1148, %v1149
  %v1151 = vrot.slane %v1150, 2
  %v1152 = vadd.f32 %v1150, %v1151
  %v1153 = vrot.slane %v1152, 1
  %v1154 = vadd.f32 %v1152, %v1153
  %v1155 = vmul.f32 %v1154, %v1001
  %v1156 = vsub.f32 %v654, %v1002
  %v1157 = vsub.f32 %v659, %v1002
  %v1158 = vsub.f32 %v664, %v1002
  %v1159 = vsub.f32 %v669, %v1002
  %v1160 = vsub.f32 %v674, %v1002
  %v1161 = vsub.f32 %v679, %v1002
  %v1162 = vsub.f32 %v684, %v1002
  %v1163 = vsub.f32 %v689, %v1002
  %v1164 = vsub.f32 %v694, %v1002
  %v1165 = vsub.f32 %v699, %v1002
  %v1166 = vsub.f32 %v704, %v1002
  %v1167 = vsub.f32 %v709, %v1002
  %v1168 = vsub.f32 %v714, %v1002
  %v1169 = vsub.f32 %v719, %v1002
  %v1170 = vsub.f32 %v724, %v1002
  %v1171 = vsub.f32 %v729, %v1002
  %v1172 = vsub.f32 %v734, %v1002
  %v1173 = vsub.f32 %v739, %v1002
  %v1174 = vsub.f32 %v744, %v1002
  %v1175 = vsub.f32 %v749, %v1002
  %v1176 = vsub.f32 %v754, %v1002
  %v1177 = vsub.f32 %v759, %v1002
  %v1178 = vsub.f32 %v764, %v1002
  %v1179 = vsub.f32 %v769, %v1002
  %v1180 = vsub.f32 %v774, %v1002
  %v1181 = vsub.f32 %v779, %v1002
  %v1182 = vsub.f32 %v784, %v1002
  %v1183 = vsub.f32 %v789, %v1002
  %v1184 = vsub.f32 %v794, %v1002
  %v1185 = vsub.f32 %v799, %v1002
  %v1186 = vsub.f32 %v804, %v1002
  %v1187 = vsub.f32 %v809, %v1002
  %v1188 = vsub.f32 %v814, %v1002
  %v1189 = vsub.f32 %v819, %v1002
  %v1190 = vsub.f32 %v824, %v1002
  %v1191 = vsub.f32 %v829, %v1002
  %v1192 = vsub.f32 %v834, %v1002
  %v1193 = vsub.f32 %v839, %v1002
  %v1194 = vsub.f32 %v844, %v1002
  %v1195 = vsub.f32 %v849, %v1002
  %v1196 = vsub.f32 %v854, %v1002
  %v1197 = vsub.f32 %v859, %v1002
  %v1198 = vsub.f32 %v864, %v1002
  %v1199 = vsub.f32 %v869, %v1002
  %v1200 = vsub.f32 %v874, %v1002
  %v1201 = vsub.f32 %v879, %v1002
  %v1202 = vsub.f32 %v884, %v1002
  %v1203 = vsub.f32 %v889, %v1002
  %v1204 = vsub.f32 %v894, %v1002
  %v1205 = vmul.f32 %v1002, %v1002
  %v1206 = vsub.f32 %v1155, %v1205
  %v1207 = vadd.f32 %v1206, 1e-05
  %v1208 = vrsqrt.pop %v1207
  %v1209 = vmul.f32 %v1156, %v1208
  %v1210 = vmul.f32 %v1157, %v1208
  %v1211 = vmul.f32 %v1158, %v1208
  %v1212 = vmul.f32 %v1159, %v1208
  %v1213 = vmul.f32 %v1160, %v1208
  %v1214 = vmul.f32 %v1161, %v1208
  %v1215 = vmul.f32 %v1162, %v1208
  %v1216 = vmul.f32 %v1163, %v1208
  %v1217 = vmul.f32 %v1164, %v1208
  %v1218 = vmul.f32 %v1165, %v1208
  %v1219 = vmul.f32 %v1166, %v1208
  %v1220 = vmul.f32 %v1167, %v1208
  %v1221 = vmul.f32 %v1168, %v1208
  %v1222 = vmul.f32 %v1169, %v1208
  %v1223 = vmul.f32 %v1170, %v1208
  %v1224 = vmul.f32 %v1171, %v1208
  %v1225 = vmul.f32 %v1172, %v1208
  %v1226 = vmul.f32 %v1173, %v1208
  %v1227 = vmul.f32 %v1174, %v1208
  %v1228 = vmul.f32 %v1175, %v1208
  %v1229 = vmul.f32 %v1176, %v1208
  %v1230 = vmul.f32 %v1177, %v1208
  %v1231 = vmul.f32 %v1178, %v1208
  %v1232 = vmul.f32 %v1179, %v1208
  %v1233 = vmul.f32 %v1180, %v1208
  %v1234 = vmul.f32 %v1181, %v1208
  %v1235 = vmul.f32 %v1182, %v1208
  %v1236 = vmul.f32 %v1183, %v1208
  %v1237 = vmul.f32 %v1184, %v1208
  %v1238 = vmul.f32 %v1185, %v1208
  %v1239 = vmul.f32 %v1186, %v1208
  %v1240 = vmul.f32 %v1187, %v1208
  %v1241 = vmul.f32 %v1188, %v1208
  %v1242 = vmul.f32 %v1189, %v1208
  %v1243 = vmul.f32 %v1190, %v1208
  %v1244 = vmul.f32 %v1191, %v1208
  %v1245 = vmul.f32 %v1192, %v1208
  %v1246 = vmul.f32 %v1193, %v1208
  %v1247 = vmul.f32 %v1194, %v1208
  %v1248 = vmul.f32 %v1195, %v1208
  %v1249 = vmul.f32 %v1196, %v1208
  %v1250 = vmul.f32 %v1197, %v1208
  %v1251 = vmul.f32 %v1198, %v1208
  %v1252 = vmul.f32 %v1199, %v1208
  %v1253 = vmul.f32 %v1200, %v1208
  %v1254 = vmul.f32 %v1201, %v1208
  %v1255 = vmul.f32 %v1202, %v1208
  %v1256 = vmul.f32 %v1203, %v1208
  %v1257 = vmul.f32 %v1204, %v1208
  %v1258 = vld [vmem:[%s2] sm:$0x1]
  %v1260 = vlaneseq
  %v1261 = vshrl.u32 %v1260, 7
  %v1262 = vsub.s32 0, %v1261
  %v1263 = vrot.slane %v1258, %v1262
  %v1265 = vmul.f32 %v1209, %v1263
  %v1266 = vmul.f32 %v1210, %v1263
  %v1267 = vmul.f32 %v1211, %v1263
  %v1268 = vmul.f32 %v1212, %v1263
  %v1269 = vmul.f32 %v1213, %v1263
  %v1270 = vmul.f32 %v1214, %v1263
  %v1271 = vmul.f32 %v1215, %v1263
  %v1272 = vmul.f32 %v1216, %v1263
  %v1273 = vmul.f32 %v1217, %v1263
  %v1274 = vmul.f32 %v1218, %v1263
  %v1275 = vmul.f32 %v1219, %v1263
  %v1276 = vmul.f32 %v1220, %v1263
  %v1277 = vmul.f32 %v1221, %v1263
  %v1278 = vmul.f32 %v1222, %v1263
  %v1279 = vmul.f32 %v1223, %v1263
  %v1280 = vmul.f32 %v1224, %v1263
  %v1281 = vmul.f32 %v1225, %v1263
  %v1282 = vmul.f32 %v1226, %v1263
  %v1283 = vmul.f32 %v1227, %v1263
  %v1284 = vmul.f32 %v1228, %v1263
  %v1285 = vmul.f32 %v1229, %v1263
  %v1286 = vmul.f32 %v1230, %v1263
  %v1287 = vmul.f32 %v1231, %v1263
  %v1288 = vmul.f32 %v1232, %v1263
  %v1289 = vmul.f32 %v1233, %v1263
  %v1290 = vmul.f32 %v1234, %v1263
  %v1291 = vmul.f32 %v1235, %v1263
  %v1292 = vmul.f32 %v1236, %v1263
  %v1293 = vmul.f32 %v1237, %v1263
  %v1294 = vmul.f32 %v1238, %v1263
  %v1295 = vmul.f32 %v1239, %v1263
  %v1296 = vmul.f32 %v1240, %v1263
  %v1297 = vmul.f32 %v1241, %v1263
  %v1298 = vmul.f32 %v1242, %v1263
  %v1299 = vmul.f32 %v1243, %v1263
  %v1300 = vmul.f32 %v1244, %v1263
  %v1301 = vmul.f32 %v1245, %v1263
  %v1302 = vmul.f32 %v1246, %v1263
  %v1303 = vmul.f32 %v1247, %v1263
  %v1304 = vmul.f32 %v1248, %v1263
  %v1305 = vmul.f32 %v1249, %v1263
  %v1306 = vmul.f32 %v1250, %v1263
  %v1307 = vmul.f32 %v1251, %v1263
  %v1308 = vmul.f32 %v1252, %v1263
  %v1309 = vmul.f32 %v1253, %v1263
  %v1310 = vmul.f32 %v1254, %v1263
  %v1311 = vmul.f32 %v1255, %v1263
  %v1312 = vmul.f32 %v1256, %v1263
  %v1313 = vmul.f32 %v1257, %v1263
  %v1314 = vld [vmem:[%s3] sm:$0x1]
  %v1316 = vlaneseq
  %v1317 = vshrl.u32 %v1316, 7
  %v1318 = vsub.s32 0, %v1317
  %v1319 = vrot.slane %v1314, %v1318
  %v1321 = vadd.f32 %v1265, %v1319
  %v1322 = vadd.f32 %v1266, %v1319
  %v1323 = vadd.f32 %v1267, %v1319
  %v1324 = vadd.f32 %v1268, %v1319
  %v1325 = vadd.f32 %v1269, %v1319
  %v1326 = vadd.f32 %v1270, %v1319
  %v1327 = vadd.f32 %v1271, %v1319
  %v1328 = vadd.f32 %v1272, %v1319
  %v1329 = vadd.f32 %v1273, %v1319
  %v1330 = vadd.f32 %v1274, %v1319
  %v1331 = vadd.f32 %v1275, %v1319
  %v1332 = vadd.f32 %v1276, %v1319
  %v1333 = vadd.f32 %v1277, %v1319
  %v1334 = vadd.f32 %v1278, %v1319
  %v1335 = vadd.f32 %v1279, %v1319
  %v1336 = vadd.f32 %v1280, %v1319
  %v1337 = vadd.f32 %v1281, %v1319
  %v1338 = vadd.f32 %v1282, %v1319
  %v1339 = vadd.f32 %v1283, %v1319
  %v1340 = vadd.f32 %v1284, %v1319
  %v1341 = vadd.f32 %v1285, %v1319
  %v1342 = vadd.f32 %v1286, %v1319
  %v1343 = vadd.f32 %v1287, %v1319
  %v1344 = vadd.f32 %v1288, %v1319
  %v1345 = vadd.f32 %v1289, %v1319
  %v1346 = vadd.f32 %v1290, %v1319
  %v1347 = vadd.f32 %v1291, %v1319
  %v1348 = vadd.f32 %v1292, %v1319
  %v1349 = vadd.f32 %v1293, %v1319
  %v1350 = vadd.f32 %v1294, %v1319
  %v1351 = vadd.f32 %v1295, %v1319
  %v1352 = vadd.f32 %v1296, %v1319
  %v1353 = vadd.f32 %v1297, %v1319
  %v1354 = vadd.f32 %v1298, %v1319
  %v1355 = vadd.f32 %v1299, %v1319
  %v1356 = vadd.f32 %v1300, %v1319
  %v1357 = vadd.f32 %v1301, %v1319
  %v1358 = vadd.f32 %v1302, %v1319
  %v1359 = vadd.f32 %v1303, %v1319
  %v1360 = vadd.f32 %v1304, %v1319
  %v1361 = vadd.f32 %v1305, %v1319
  %v1362 = vadd.f32 %v1306, %v1319
  %v1363 = vadd.f32 %v1307, %v1319
  %v1364 = vadd.f32 %v1308, %v1319
  %v1365 = vadd.f32 %v1309, %v1319
  %v1366 = vadd.f32 %v1310, %v1319
  %v1367 = vadd.f32 %v1311, %v1319
  %v1368 = vadd.f32 %v1312, %v1319
  %v1369 = vadd.f32 %v1313, %v1319
  %v1370 = vmax.f32 %v1321, 0.0
  %v1371 = vmax.f32 %v1322, 0.0
  %v1372 = vmax.f32 %v1323, 0.0
  %v1373 = vmax.f32 %v1324, 0.0
  %v1374 = vmax.f32 %v1325, 0.0
  %v1375 = vmax.f32 %v1326, 0.0
  %v1376 = vmax.f32 %v1327, 0.0
  %v1377 = vmax.f32 %v1328, 0.0
  %v1378 = vmax.f32 %v1329, 0.0
  %v1379 = vmax.f32 %v1330, 0.0
  %v1380 = vmax.f32 %v1331, 0.0
  %v1381 = vmax.f32 %v1332, 0.0
  %v1382 = vmax.f32 %v1333, 0.0
  %v1383 = vmax.f32 %v1334, 0.0
  %v1384 = vmax.f32 %v1335, 0.0
  %v1385 = vmax.f32 %v1336, 0.0
  %v1386 = vmax.f32 %v1337, 0.0
  %v1387 = vmax.f32 %v1338, 0.0
  %v1388 = vmax.f32 %v1339, 0.0
  %v1389 = vmax.f32 %v1340, 0.0
  %v1390 = vmax.f32 %v1341, 0.0
  %v1391 = vmax.f32 %v1342, 0.0
  %v1392 = vmax.f32 %v1343, 0.0
  %v1393 = vmax.f32 %v1344, 0.0
  %v1394 = vmax.f32 %v1345, 0.0
  %v1395 = vmax.f32 %v1346, 0.0
  %v1396 = vmax.f32 %v1347, 0.0
  %v1397 = vmax.f32 %v1348, 0.0
  %v1398 = vmax.f32 %v1349, 0.0
  %v1399 = vmax.f32 %v1350, 0.0
  %v1400 = vmax.f32 %v1351, 0.0
  %v1401 = vmax.f32 %v1352, 0.0
  %v1402 = vmax.f32 %v1353, 0.0
  %v1403 = vmax.f32 %v1354, 0.0
  %v1404 = vmax.f32 %v1355, 0.0
  %v1405 = vmax.f32 %v1356, 0.0
  %v1406 = vmax.f32 %v1357, 0.0
  %v1407 = vmax.f32 %v1358, 0.0
  %v1408 = vmax.f32 %v1359, 0.0
  %v1409 = vmax.f32 %v1360, 0.0
  %v1410 = vmax.f32 %v1361, 0.0
  %v1411 = vmax.f32 %v1362, 0.0
  %v1412 = vmax.f32 %v1363, 0.0
  %v1413 = vmax.f32 %v1364, 0.0
  %v1414 = vmax.f32 %v1365, 0.0
  %v1415 = vmax.f32 %v1366, 0.0
  %v1416 = vmax.f32 %v1367, 0.0
  %v1417 = vmax.f32 %v1368, 0.0
  %v1418 = vmax.f32 %v1369, 0.0
  %1419 = vst.msk [vmem:[%s4] sm:$0xff] %vm897, %v1370
  %1420 = vst.msk [vmem:[%s4 + $0x8] sm:$0xff] %vm897, %v1371
  %1421 = vst.msk [vmem:[%s4 + $0x10] sm:$0xff] %vm897, %v1372
  %1422 = vst.msk [vmem:[%s4 + $0x18] sm:$0xff] %vm897, %v1373
  %1423 = vst.msk [vmem:[%s4 + $0x20] sm:$0xff] %vm897, %v1374
  %1424 = vst.msk [vmem:[%s4 + $0x28] sm:$0xff] %vm897, %v1375
  %1425 = vst.msk [vmem:[%s4 + $0x30] sm:$0xff] %vm897, %v1376
  %1426 = vst.msk [vmem:[%s4 + $0x38] sm:$0xff] %vm897, %v1377
  %1427 = vst.msk [vmem:[%s4 + $0x40] sm:$0xff] %vm897, %v1378
  %1428 = vst.msk [vmem:[%s4 + $0x48] sm:$0xff] %vm897, %v1379
  %1429 = vst.msk [vmem:[%s4 + $0x50] sm:$0xff] %vm897, %v1380
  %1430 = vst.msk [vmem:[%s4 + $0x58] sm:$0xff] %vm897, %v1381
  %1431 = vst.msk [vmem:[%s4 + $0x60] sm:$0xff] %vm897, %v1382
  %1432 = vst.msk [vmem:[%s4 + $0x68] sm:$0xff] %vm897, %v1383
  %1433 = vst.msk [vmem:[%s4 + $0x70] sm:$0xff] %vm897, %v1384
  %1434 = vst.msk [vmem:[%s4 + $0x78] sm:$0xff] %vm897, %v1385
  %1435 = vst.msk [vmem:[%s4 + $0x80] sm:$0xff] %vm897, %v1386
  %1436 = vst.msk [vmem:[%s4 + $0x88] sm:$0xff] %vm897, %v1387
  %1437 = vst.msk [vmem:[%s4 + $0x90] sm:$0xff] %vm897, %v1388
  %1438 = vst.msk [vmem:[%s4 + $0x98] sm:$0xff] %vm897, %v1389
  %1439 = vst.msk [vmem:[%s4 + $0xa0] sm:$0xff] %vm897, %v1390
  %1440 = vst.msk [vmem:[%s4 + $0xa8] sm:$0xff] %vm897, %v1391
  %1441 = vst.msk [vmem:[%s4 + $0xb0] sm:$0xff] %vm897, %v1392
  %1442 = vst.msk [vmem:[%s4 + $0xb8] sm:$0xff] %vm897, %v1393
  %1443 = vst.msk [vmem:[%s4 + $0xc0] sm:$0xff] %vm897, %v1394
  %1444 = vst.msk [vmem:[%s4 + $0xc8] sm:$0xff] %vm897, %v1395
  %1445 = vst.msk [vmem:[%s4 + $0xd0] sm:$0xff] %vm897, %v1396
  %1446 = vst.msk [vmem:[%s4 + $0xd8] sm:$0xff] %vm897, %v1397
  %1447 = vst.msk [vmem:[%s4 + $0xe0] sm:$0xff] %vm897, %v1398
  %1448 = vst.msk [vmem:[%s4 + $0xe8] sm:$0xff] %vm897, %v1399
  %1449 = vst.msk [vmem:[%s4 + $0xf0] sm:$0xff] %vm897, %v1400
  %1450 = vst.msk [vmem:[%s4 + $0xf8] sm:$0xff] %vm897, %v1401
  %1451 = vst.msk [vmem:[%s4 + $0x100] sm:$0xff] %vm897, %v1402
  %1452 = vst.msk [vmem:[%s4 + $0x108] sm:$0xff] %vm897, %v1403
  %1453 = vst.msk [vmem:[%s4 + $0x110] sm:$0xff] %vm897, %v1404
  %1454 = vst.msk [vmem:[%s4 + $0x118] sm:$0xff] %vm897, %v1405
  %1455 = vst.msk [vmem:[%s4 + $0x120] sm:$0xff] %vm897, %v1406
  %1456 = vst.msk [vmem:[%s4 + $0x128] sm:$0xff] %vm897, %v1407
  %1457 = vst.msk [vmem:[%s4 + $0x130] sm:$0xff] %vm897, %v1408
  %1458 = vst.msk [vmem:[%s4 + $0x138] sm:$0xff] %vm897, %v1409
  %1459 = vst.msk [vmem:[%s4 + $0x140] sm:$0xff] %vm897, %v1410
  %1460 = vst.msk [vmem:[%s4 + $0x148] sm:$0xff] %vm897, %v1411
  %1461 = vst.msk [vmem:[%s4 + $0x150] sm:$0xff] %vm897, %v1412
  %1462 = vst.msk [vmem:[%s4 + $0x158] sm:$0xff] %vm897, %v1413
  %1463 = vst.msk [vmem:[%s4 + $0x160] sm:$0xff] %vm897, %v1414
  %1464 = vst.msk [vmem:[%s4 + $0x168] sm:$0xff] %vm897, %v1415
  %1465 = vst.msk [vmem:[%s4 + $0x170] sm:$0xff] %vm897, %v1416
  %1466 = vst.msk [vmem:[%s4 + $0x178] sm:$0xff] %vm897, %v1417
  %1467 = vst.msk [vmem:[%s4 + $0x180] sm:$0xff] %vm897, %v1418
  // Predicated region
  $region18: #{generator_forward.6} parent=0 // pred_check
    _
  $region19: #{generator_forward.6} parent=0 // pred_check_branch
    %1469 = sbr.rel (0) target = $region21
  $region20: #{generator_forward.6} parent=0 // pred_region
    _
  $region21: #{generator_forward.6} parent=0 // pred_fallthru
    _
  // Predicated region
  $region22: #{generator_forward.6} parent=0 // pred_check
    _
  $region23: #{generator_forward.6} parent=0 // pred_check_branch
    %1471 = sbr.rel (0) target = $region25
  $region24: #{generator_forward.6} parent=0 // pred_region
    _
  $region25: #{generator_forward.6} parent=0 // pred_fallthru
    _

// kernel: generator_forward.7
$region0: #{generator_forward.7}
  #allocation0 [shape = 'u32[]', space=smem, size = 0x4, offset = 0x4, fixed_abs, tag = 'smem constant byte address 0x4 - core index']
  #allocation1 [shape = 'u32[144,128]{1,0:T(1,128)}', space=vmem, size = 0x12000, scoped, tag = 'internal scratch']
  %s0 = inlined_call_operand.vmem [shape: f32[1568,256], index: 0, kind: input, shape index: {}]
  %s1 = inlined_call_operand.vmem [shape: f32[256,1], index: 1, kind: input, shape index: {}]
  %s2 = inlined_call_operand.vmem [shape: f32[1568,1], index: 2, kind: output, shape index: {}]
  %s3 = sld [smem:[#allocation0]]
  $region18: #{generator_forward.7} parent=0
    _
  %s5 = ssub.s32 1, %s3
  %s6 = scalar_select 0, %s5, %s3
  // Predicated region
  $region2: #{generator_forward.7} parent=0 // pred_check
    _
  $region3: #{generator_forward.7} parent=0 // pred_check_branch
    %8 = sbr.rel (0) target = $region5
  $region4: #{generator_forward.7} parent=0 // pred_region
    _
  $region5: #{generator_forward.7} parent=0 // pred_fallthru
    _
  // Predicated region
  $region6: #{generator_forward.7} parent=0 // pred_check
    _
  $region7: #{generator_forward.7} parent=0 // pred_check_branch
    %10 = sbr.rel (0) target = $region9
  $region8: #{generator_forward.7} parent=0 // pred_region
    _
  $region9: #{generator_forward.7} parent=0 // pred_fallthru
    _
  %v11 = vld [vmem:[%s0] sm:$0xff]
  %v12 = vld [vmem:[%s0 + $0x8] sm:$0xff]
  %v13 = vld [vmem:[%s0 + $0x10] sm:$0xff]
  %v14 = vld [vmem:[%s0 + $0x18] sm:$0xff]
  %v15 = vld [vmem:[%s0 + $0x20] sm:$0xff]
  %v16 = vld [vmem:[%s0 + $0x28] sm:$0xff]
  %v17 = vld [vmem:[%s0 + $0x30] sm:$0xff]
  %v18 = vld [vmem:[%s0 + $0x38] sm:$0xff]
  %v19 = vld [vmem:[%s0 + $0x40] sm:$0xff]
  %v20 = vld [vmem:[%s0 + $0x48] sm:$0xff]
  %v21 = vld [vmem:[%s0 + $0x50] sm:$0xff]
  %v22 = vld [vmem:[%s0 + $0x58] sm:$0xff]
  %v23 = vld [vmem:[%s0 + $0x60] sm:$0xff]
  %v24 = vld [vmem:[%s0 + $0x68] sm:$0xff]
  %v25 = vld [vmem:[%s0 + $0x70] sm:$0xff]
  %v26 = vld [vmem:[%s0 + $0x78] sm:$0xff]
  %v27 = vld [vmem:[%s0 + $0x80] sm:$0xff]
  %v28 = vld [vmem:[%s0 + $0x88] sm:$0xff]
  %v29 = vld [vmem:[%s0 + $0x90] sm:$0xff]
  %v30 = vld [vmem:[%s0 + $0x98] sm:$0xff]
  %v31 = vld [vmem:[%s0 + $0xa0] sm:$0xff]
  %v32 = vld [vmem:[%s0 + $0xa8] sm:$0xff]
  %v33 = vld [vmem:[%s0 + $0xb0] sm:$0xff]
  %v34 = vld [vmem:[%s0 + $0xb8] sm:$0xff]
  %v35 = vld [vmem:[%s0 + $0xc0] sm:$0xff]
  %v36 = vld [vmem:[%s0 + $0xc8] sm:$0xff]
  %v37 = vld [vmem:[%s0 + $0xd0] sm:$0xff]
  %v38 = vld [vmem:[%s0 + $0xd8] sm:$0xff]
  %v39 = vld [vmem:[%s0 + $0xe0] sm:$0xff]
  %v40 = vld [vmem:[%s0 + $0xe8] sm:$0xff]
  %v41 = vld [vmem:[%s0 + $0xf0] sm:$0xff]
  %v42 = vld [vmem:[%s0 + $0xf8] sm:$0xff]
  %v43 = vld [vmem:[%s0 + $0x100] sm:$0xff]
  %v44 = vld [vmem:[%s0 + $0x108] sm:$0xff]
  %v45 = vld [vmem:[%s0 + $0x110] sm:$0xff]
  %v46 = vld [vmem:[%s0 + $0x118] sm:$0xff]
  %v47 = vld [vmem:[%s0 + $0x120] sm:$0xff]
  %v48 = vld [vmem:[%s0 + $0x128] sm:$0xff]
  %v49 = vld [vmem:[%s0 + $0x130] sm:$0xff]
  %v50 = vld [vmem:[%s0 + $0x138] sm:$0xff]
  %v51 = vld [vmem:[%s0 + $0x140] sm:$0xff]
  %v52 = vld [vmem:[%s0 + $0x148] sm:$0xff]
  %v53 = vld [vmem:[%s0 + $0x150] sm:$0xff]
  %v54 = vld [vmem:[%s0 + $0x158] sm:$0xff]
  %v55 = vld [vmem:[%s0 + $0x160] sm:$0xff]
  %v56 = vld [vmem:[%s0 + $0x168] sm:$0xff]
  %v57 = vld [vmem:[%s0 + $0x170] sm:$0xff]
  %v58 = vld [vmem:[%s0 + $0x178] sm:$0xff]
  %v59 = vld [vmem:[%s0 + $0x180] sm:$0xff]
  %v60 = vld [vmem:[%s0 + $0x188] sm:$0xff]
  %v61 = vld [vmem:[%s0 + $0x190] sm:$0xff]
  %v62 = vld [vmem:[%s0 + $0x198] sm:$0xff]
  %v63 = vld [vmem:[%s0 + $0x1a0] sm:$0xff]
  %v64 = vld [vmem:[%s0 + $0x1a8] sm:$0xff]
  %v65 = vld [vmem:[%s0 + $0x1b0] sm:$0xff]
  %v66 = vld [vmem:[%s0 + $0x1b8] sm:$0xff]
  %v67 = vld [vmem:[%s0 + $0x1c0] sm:$0xff]
  %v68 = vld [vmem:[%s0 + $0x1c8] sm:$0xff]
  %v69 = vld [vmem:[%s0 + $0x1d0] sm:$0xff]
  %v70 = vld [vmem:[%s0 + $0x1d8] sm:$0xff]
  %v71 = vld [vmem:[%s0 + $0x1e0] sm:$0xff]
  %v72 = vld [vmem:[%s0 + $0x1e8] sm:$0xff]
  %v73 = vld [vmem:[%s0 + $0x1f0] sm:$0xff]
  %v74 = vld [vmem:[%s0 + $0x1f8] sm:$0xff]
  %v75 = vld [vmem:[%s0 + $0x200] sm:$0xff]
  %v76 = vld [vmem:[%s0 + $0x208] sm:$0xff]
  %v77 = vld [vmem:[%s0 + $0x210] sm:$0xff]
  %v78 = vld [vmem:[%s0 + $0x218] sm:$0xff]
  %v79 = vld [vmem:[%s0 + $0x220] sm:$0xff]
  %v80 = vld [vmem:[%s0 + $0x228] sm:$0xff]
  %v81 = vld [vmem:[%s0 + $0x230] sm:$0xff]
  %v82 = vld [vmem:[%s0 + $0x238] sm:$0xff]
  %v83 = vld [vmem:[%s0 + $0x240] sm:$0xff]
  %v84 = vld [vmem:[%s0 + $0x248] sm:$0xff]
  %v85 = vld [vmem:[%s0 + $0x250] sm:$0xff]
  %v86 = vld [vmem:[%s0 + $0x258] sm:$0xff]
  %v87 = vld [vmem:[%s0 + $0x260] sm:$0xff]
  %v88 = vld [vmem:[%s0 + $0x268] sm:$0xff]
  %v89 = vld [vmem:[%s0 + $0x270] sm:$0xff]
  %v90 = vld [vmem:[%s0 + $0x278] sm:$0xff]
  %v91 = vld [vmem:[%s0 + $0x280] sm:$0xff]
  %v92 = vld [vmem:[%s0 + $0x288] sm:$0xff]
  %v93 = vld [vmem:[%s0 + $0x290] sm:$0xff]
  %v94 = vld [vmem:[%s0 + $0x298] sm:$0xff]
  %v95 = vld [vmem:[%s0 + $0x2a0] sm:$0xff]
  %v96 = vld [vmem:[%s0 + $0x2a8] sm:$0xff]
  %v97 = vld [vmem:[%s0 + $0x2b0] sm:$0xff]
  %v98 = vld [vmem:[%s0 + $0x2b8] sm:$0xff]
  %v99 = vld [vmem:[%s0 + $0x2c0] sm:$0xff]
  %v100 = vld [vmem:[%s0 + $0x2c8] sm:$0xff]
  %v101 = vld [vmem:[%s0 + $0x2d0] sm:$0xff]
  %v102 = vld [vmem:[%s0 + $0x2d8] sm:$0xff]
  %v103 = vld [vmem:[%s0 + $0x2e0] sm:$0xff]
  %v104 = vld [vmem:[%s0 + $0x2e8] sm:$0xff]
  %v105 = vld [vmem:[%s0 + $0x2f0] sm:$0xff]
  %v106 = vld [vmem:[%s0 + $0x2f8] sm:$0xff]
  %v107 = vld [vmem:[%s0 + $0x300] sm:$0xff]
  %v108 = vld [vmem:[%s0 + $0x308] sm:$0xff]
  %v109 = vld [vmem:[%s0 + $0x310] sm:$0xff]
  %v110 = vld [vmem:[%s0 + $0x318] sm:$0xff]
  %v111 = vld [vmem:[%s0 + $0x320] sm:$0xff]
  %v112 = vld [vmem:[%s0 + $0x328] sm:$0xff]
  %v113 = vld [vmem:[%s0 + $0x330] sm:$0xff]
  %v114 = vld [vmem:[%s0 + $0x338] sm:$0xff]
  %v115 = vld [vmem:[%s0 + $0x340] sm:$0xff]
  %v116 = vld [vmem:[%s0 + $0x348] sm:$0xff]
  %v117 = vld [vmem:[%s0 + $0x350] sm:$0xff]
  %v118 = vld [vmem:[%s0 + $0x358] sm:$0xff]
  %v119 = vld [vmem:[%s0 + $0x360] sm:$0xff]
  %v120 = vld [vmem:[%s0 + $0x368] sm:$0xff]
  %v121 = vld [vmem:[%s0 + $0x370] sm:$0xff]
  %v122 = vld [vmem:[%s0 + $0x378] sm:$0xff]
  %v123 = vld [vmem:[%s0 + $0x380] sm:$0xff]
  %v124 = vld [vmem:[%s0 + $0x388] sm:$0xff]
  %v125 = vld [vmem:[%s0 + $0x390] sm:$0xff]
  %v126 = vld [vmem:[%s0 + $0x398] sm:$0xff]
  %v127 = vld [vmem:[%s0 + $0x3a0] sm:$0xff]
  %v128 = vld [vmem:[%s0 + $0x3a8] sm:$0xff]
  %v129 = vld [vmem:[%s0 + $0x3b0] sm:$0xff]
  %v130 = vld [vmem:[%s0 + $0x3b8] sm:$0xff]
  %v131 = vld [vmem:[%s0 + $0x3c0] sm:$0xff]
  %v132 = vld [vmem:[%s0 + $0x3c8] sm:$0xff]
  %v133 = vld [vmem:[%s0 + $0x3d0] sm:$0xff]
  %v134 = vld [vmem:[%s0 + $0x3d8] sm:$0xff]
  %v135 = vld [vmem:[%s0 + $0x3e0] sm:$0xff]
  %v136 = vld [vmem:[%s0 + $0x3e8] sm:$0xff]
  %v137 = vld [vmem:[%s0 + $0x3f0] sm:$0xff]
  %v138 = vld [vmem:[%s0 + $0x3f8] sm:$0xff]
  %v139 = vld [vmem:[%s0 + $0x400] sm:$0xff]
  %v140 = vld [vmem:[%s0 + $0x408] sm:$0xff]
  %v141 = vld [vmem:[%s0 + $0x410] sm:$0xff]
  %v142 = vld [vmem:[%s0 + $0x418] sm:$0xff]
  %v143 = vld [vmem:[%s0 + $0x420] sm:$0xff]
  %v144 = vld [vmem:[%s0 + $0x428] sm:$0xff]
  %v145 = vld [vmem:[%s0 + $0x430] sm:$0xff]
  %v146 = vld [vmem:[%s0 + $0x438] sm:$0xff]
  %v147 = vld [vmem:[%s0 + $0x440] sm:$0xff]
  %v148 = vld [vmem:[%s0 + $0x448] sm:$0xff]
  %v149 = vld [vmem:[%s0 + $0x450] sm:$0xff]
  %v150 = vld [vmem:[%s0 + $0x458] sm:$0xff]
  %v151 = vld [vmem:[%s0 + $0x460] sm:$0xff]
  %v152 = vld [vmem:[%s0 + $0x468] sm:$0xff]
  %v153 = vld [vmem:[%s0 + $0x470] sm:$0xff]
  %v154 = vld [vmem:[%s0 + $0x478] sm:$0xff]
  %v155 = vld [vmem:[%s0 + $0x480] sm:$0xff]
  %v156 = vld [vmem:[%s0 + $0x488] sm:$0xff]
  %v157 = vld [vmem:[%s0 + $0x490] sm:$0xff]
  %v158 = vld [vmem:[%s0 + $0x498] sm:$0xff]
  %v159 = vld [vmem:[%s0 + $0x4a0] sm:$0xff]
  %v160 = vld [vmem:[%s0 + $0x4a8] sm:$0xff]
  %v161 = vld [vmem:[%s0 + $0x4b0] sm:$0xff]
  %v162 = vld [vmem:[%s0 + $0x4b8] sm:$0xff]
  %v163 = vld [vmem:[%s0 + $0x4c0] sm:$0xff]
  %v164 = vld [vmem:[%s0 + $0x4c8] sm:$0xff]
  %v165 = vld [vmem:[%s0 + $0x4d0] sm:$0xff]
  %v166 = vld [vmem:[%s0 + $0x4d8] sm:$0xff]
  %v167 = vld [vmem:[%s0 + $0x4e0] sm:$0xff]
  %v168 = vld [vmem:[%s0 + $0x4e8] sm:$0xff]
  %v169 = vld [vmem:[%s0 + $0x4f0] sm:$0xff]
  %v170 = vld [vmem:[%s0 + $0x4f8] sm:$0xff]
  %v171 = vld [vmem:[%s0 + $0x500] sm:$0xff]
  %v172 = vld [vmem:[%s0 + $0x508] sm:$0xff]
  %v173 = vld [vmem:[%s0 + $0x510] sm:$0xff]
  %v174 = vld [vmem:[%s0 + $0x518] sm:$0xff]
  %v175 = vld [vmem:[%s0 + $0x520] sm:$0xff]
  %v176 = vld [vmem:[%s0 + $0x528] sm:$0xff]
  %v177 = vld [vmem:[%s0 + $0x530] sm:$0xff]
  %v178 = vld [vmem:[%s0 + $0x538] sm:$0xff]
  %v179 = vld [vmem:[%s0 + $0x540] sm:$0xff]
  %v180 = vld [vmem:[%s0 + $0x548] sm:$0xff]
  %v181 = vld [vmem:[%s0 + $0x550] sm:$0xff]
  %v182 = vld [vmem:[%s0 + $0x558] sm:$0xff]
  %v183 = vld [vmem:[%s0 + $0x560] sm:$0xff]
  %v184 = vld [vmem:[%s0 + $0x568] sm:$0xff]
  %v185 = vld [vmem:[%s0 + $0x570] sm:$0xff]
  %v186 = vld [vmem:[%s0 + $0x578] sm:$0xff]
  %v187 = vld [vmem:[%s0 + $0x580] sm:$0xff]
  %v188 = vld [vmem:[%s0 + $0x588] sm:$0xff]
  %v189 = vld [vmem:[%s0 + $0x590] sm:$0xff]
  %v190 = vld [vmem:[%s0 + $0x598] sm:$0xff]
  %v191 = vld [vmem:[%s0 + $0x5a0] sm:$0xff]
  %v192 = vld [vmem:[%s0 + $0x5a8] sm:$0xff]
  %v193 = vld [vmem:[%s0 + $0x5b0] sm:$0xff]
  %v194 = vld [vmem:[%s0 + $0x5b8] sm:$0xff]
  %v195 = vld [vmem:[%s0 + $0x5c0] sm:$0xff]
  %v196 = vld [vmem:[%s0 + $0x5c8] sm:$0xff]
  %v197 = vld [vmem:[%s0 + $0x5d0] sm:$0xff]
  %v198 = vld [vmem:[%s0 + $0x5d8] sm:$0xff]
  %v199 = vld [vmem:[%s0 + $0x5e0] sm:$0xff]
  %v200 = vld [vmem:[%s0 + $0x5e8] sm:$0xff]
  %v201 = vld [vmem:[%s0 + $0x5f0] sm:$0xff]
  %v202 = vld [vmem:[%s0 + $0x5f8] sm:$0xff]
  %v203 = vld [vmem:[%s0 + $0x600] sm:$0xff]
  %v204 = vld [vmem:[%s0 + $0x608] sm:$0xff]
  %v205 = vld [vmem:[%s0 + $0x610] sm:$0xff]
  %v206 = vld [vmem:[%s0 + $0x618] sm:$0xff]
  %v207 = vld [vmem:[%s0 + $0x620] sm:$0xff]
  %v208 = vld [vmem:[%s0 + $0x628] sm:$0xff]
  %v209 = vld [vmem:[%s0 + $0x630] sm:$0xff]
  %v210 = vld [vmem:[%s0 + $0x638] sm:$0xff]
  %v211 = vld [vmem:[%s0 + $0x640] sm:$0xff]
  %v212 = vld [vmem:[%s0 + $0x648] sm:$0xff]
  %v213 = vld [vmem:[%s0 + $0x650] sm:$0xff]
  %v214 = vld [vmem:[%s0 + $0x658] sm:$0xff]
  %v215 = vld [vmem:[%s0 + $0x660] sm:$0xff]
  %v216 = vld [vmem:[%s0 + $0x668] sm:$0xff]
  %v217 = vld [vmem:[%s0 + $0x670] sm:$0xff]
  %v218 = vld [vmem:[%s0 + $0x678] sm:$0xff]
  %v219 = vld [vmem:[%s0 + $0x680] sm:$0xff]
  %v220 = vld [vmem:[%s0 + $0x688] sm:$0xff]
  %v221 = vld [vmem:[%s0 + $0x690] sm:$0xff]
  %v222 = vld [vmem:[%s0 + $0x698] sm:$0xff]
  %v223 = vld [vmem:[%s0 + $0x6a0] sm:$0xff]
  %v224 = vld [vmem:[%s0 + $0x6a8] sm:$0xff]
  %v225 = vld [vmem:[%s0 + $0x6b0] sm:$0xff]
  %v226 = vld [vmem:[%s0 + $0x6b8] sm:$0xff]
  %v227 = vld [vmem:[%s0 + $0x6c0] sm:$0xff]
  %v228 = vld [vmem:[%s0 + $0x6c8] sm:$0xff]
  %v229 = vld [vmem:[%s0 + $0x6d0] sm:$0xff]
  %v230 = vld [vmem:[%s0 + $0x6d8] sm:$0xff]
  %v231 = vld [vmem:[%s0 + $0x6e0] sm:$0xff]
  %v232 = vld [vmem:[%s0 + $0x6e8] sm:$0xff]
  %v233 = vld [vmem:[%s0 + $0x6f0] sm:$0xff]
  %v234 = vld [vmem:[%s0 + $0x6f8] sm:$0xff]
  %v235 = vld [vmem:[%s0 + $0x700] sm:$0xff]
  %v236 = vld [vmem:[%s0 + $0x708] sm:$0xff]
  %v237 = vld [vmem:[%s0 + $0x710] sm:$0xff]
  %v238 = vld [vmem:[%s0 + $0x718] sm:$0xff]
  %v239 = vld [vmem:[%s0 + $0x720] sm:$0xff]
  %v240 = vld [vmem:[%s0 + $0x728] sm:$0xff]
  %v241 = vld [vmem:[%s0 + $0x730] sm:$0xff]
  %v242 = vld [vmem:[%s0 + $0x738] sm:$0xff]
  %v243 = vld [vmem:[%s0 + $0x740] sm:$0xff]
  %v244 = vld [vmem:[%s0 + $0x748] sm:$0xff]
  %v245 = vld [vmem:[%s0 + $0x750] sm:$0xff]
  %v246 = vld [vmem:[%s0 + $0x758] sm:$0xff]
  %v247 = vld [vmem:[%s0 + $0x760] sm:$0xff]
  %v248 = vld [vmem:[%s0 + $0x768] sm:$0xff]
  %v249 = vld [vmem:[%s0 + $0x770] sm:$0xff]
  %v250 = vld [vmem:[%s0 + $0x778] sm:$0xff]
  %v251 = vld [vmem:[%s0 + $0x780] sm:$0xff]
  %v252 = vld [vmem:[%s0 + $0x788] sm:$0xff]
  %v253 = vld [vmem:[%s0 + $0x790] sm:$0xff]
  %v254 = vld [vmem:[%s0 + $0x798] sm:$0xff]
  %v255 = vld [vmem:[%s0 + $0x7a0] sm:$0xff]
  %v256 = vld [vmem:[%s0 + $0x7a8] sm:$0xff]
  %v257 = vld [vmem:[%s0 + $0x7b0] sm:$0xff]
  %v258 = vld [vmem:[%s0 + $0x7b8] sm:$0xff]
  %v259 = vld [vmem:[%s0 + $0x7c0] sm:$0xff]
  %v260 = vld [vmem:[%s0 + $0x7c8] sm:$0xff]
  %v261 = vld [vmem:[%s0 + $0x7d0] sm:$0xff]
  %v262 = vld [vmem:[%s0 + $0x7d8] sm:$0xff]
  %v263 = vld [vmem:[%s0 + $0x7e0] sm:$0xff]
  %v264 = vld [vmem:[%s0 + $0x7e8] sm:$0xff]
  %v265 = vld [vmem:[%s0 + $0x7f0] sm:$0xff]
  %v266 = vld [vmem:[%s0 + $0x7f8] sm:$0xff]
  %v267 = vld [vmem:[%s0 + $0x800] sm:$0xff]
  %v268 = vld [vmem:[%s0 + $0x808] sm:$0xff]
  %v269 = vld [vmem:[%s0 + $0x810] sm:$0xff]
  %v270 = vld [vmem:[%s0 + $0x818] sm:$0xff]
  %v271 = vld [vmem:[%s0 + $0x820] sm:$0xff]
  %v272 = vld [vmem:[%s0 + $0x828] sm:$0xff]
  %v273 = vld [vmem:[%s0 + $0x830] sm:$0xff]
  %v274 = vld [vmem:[%s0 + $0x838] sm:$0xff]
  %v275 = vld [vmem:[%s0 + $0x840] sm:$0xff]
  %v276 = vld [vmem:[%s0 + $0x848] sm:$0xff]
  %v277 = vld [vmem:[%s0 + $0x850] sm:$0xff]
  %v278 = vld [vmem:[%s0 + $0x858] sm:$0xff]
  %v279 = vld [vmem:[%s0 + $0x860] sm:$0xff]
  %v280 = vld [vmem:[%s0 + $0x868] sm:$0xff]
  %v281 = vld [vmem:[%s0 + $0x870] sm:$0xff]
  %v282 = vld [vmem:[%s0 + $0x878] sm:$0xff]
  %v283 = vld [vmem:[%s0 + $0x880] sm:$0xff]
  %v284 = vld [vmem:[%s0 + $0x888] sm:$0xff]
  %v285 = vld [vmem:[%s0 + $0x890] sm:$0xff]
  %v286 = vld [vmem:[%s0 + $0x898] sm:$0xff]
  %v287 = vld [vmem:[%s0 + $0x8a0] sm:$0xff]
  %v288 = vld [vmem:[%s0 + $0x8a8] sm:$0xff]
  %v289 = vld [vmem:[%s0 + $0x8b0] sm:$0xff]
  %v290 = vld [vmem:[%s0 + $0x8b8] sm:$0xff]
  %v291 = vld [vmem:[%s0 + $0x8c0] sm:$0xff]
  %v292 = vld [vmem:[%s0 + $0x8c8] sm:$0xff]
  %v293 = vld [vmem:[%s0 + $0x8d0] sm:$0xff]
  %v294 = vld [vmem:[%s0 + $0x8d8] sm:$0xff]
  %v295 = vld [vmem:[%s0 + $0x8e0] sm:$0xff]
  %v296 = vld [vmem:[%s0 + $0x8e8] sm:$0xff]
  %v297 = vld [vmem:[%s0 + $0x8f0] sm:$0xff]
  %v298 = vld [vmem:[%s0 + $0x8f8] sm:$0xff]
  %v299 = vld [vmem:[%s0 + $0x900] sm:$0xff]
  %v300 = vld [vmem:[%s0 + $0x908] sm:$0xff]
  %v301 = vld [vmem:[%s0 + $0x910] sm:$0xff]
  %v302 = vld [vmem:[%s0 + $0x918] sm:$0xff]
  %v303 = vld [vmem:[%s0 + $0x920] sm:$0xff]
  %v304 = vld [vmem:[%s0 + $0x928] sm:$0xff]
  %v305 = vld [vmem:[%s0 + $0x930] sm:$0xff]
  %v306 = vld [vmem:[%s0 + $0x938] sm:$0xff]
  %v307 = vld [vmem:[%s0 + $0x940] sm:$0xff]
  %v308 = vld [vmem:[%s0 + $0x948] sm:$0xff]
  %v309 = vld [vmem:[%s0 + $0x950] sm:$0xff]
  %v310 = vld [vmem:[%s0 + $0x958] sm:$0xff]
  %v311 = vld [vmem:[%s0 + $0x960] sm:$0xff]
  %v312 = vld [vmem:[%s0 + $0x968] sm:$0xff]
  %v313 = vld [vmem:[%s0 + $0x970] sm:$0xff]
  %v314 = vld [vmem:[%s0 + $0x978] sm:$0xff]
  %v315 = vld [vmem:[%s0 + $0x980] sm:$0xff]
  %v316 = vld [vmem:[%s0 + $0x988] sm:$0xff]
  %v317 = vld [vmem:[%s0 + $0x990] sm:$0xff]
  %v318 = vld [vmem:[%s0 + $0x998] sm:$0xff]
  %v319 = vld [vmem:[%s0 + $0x9a0] sm:$0xff]
  %v320 = vld [vmem:[%s0 + $0x9a8] sm:$0xff]
  %v321 = vld [vmem:[%s0 + $0x9b0] sm:$0xff]
  %v322 = vld [vmem:[%s0 + $0x9b8] sm:$0xff]
  %v323 = vld [vmem:[%s0 + $0x9c0] sm:$0xff]
  %v324 = vld [vmem:[%s0 + $0x9c8] sm:$0xff]
  %v325 = vld [vmem:[%s0 + $0x9d0] sm:$0xff]
  %v326 = vld [vmem:[%s0 + $0x9d8] sm:$0xff]
  %v327 = vld [vmem:[%s0 + $0x9e0] sm:$0xff]
  %v328 = vld [vmem:[%s0 + $0x9e8] sm:$0xff]
  %v329 = vld [vmem:[%s0 + $0x9f0] sm:$0xff]
  %v330 = vld [vmem:[%s0 + $0x9f8] sm:$0xff]
  %v331 = vld [vmem:[%s0 + $0xa00] sm:$0xff]
  %v332 = vld [vmem:[%s0 + $0xa08] sm:$0xff]
  %v333 = vld [vmem:[%s0 + $0xa10] sm:$0xff]
  %v334 = vld [vmem:[%s0 + $0xa18] sm:$0xff]
  %v335 = vld [vmem:[%s0 + $0xa20] sm:$0xff]
  %v336 = vld [vmem:[%s0 + $0xa28] sm:$0xff]
  %v337 = vld [vmem:[%s0 + $0xa30] sm:$0xff]
  %v338 = vld [vmem:[%s0 + $0xa38] sm:$0xff]
  %v339 = vld [vmem:[%s0 + $0xa40] sm:$0xff]
  %v340 = vld [vmem:[%s0 + $0xa48] sm:$0xff]
  %v341 = vld [vmem:[%s0 + $0xa50] sm:$0xff]
  %v342 = vld [vmem:[%s0 + $0xa58] sm:$0xff]
  %v343 = vld [vmem:[%s0 + $0xa60] sm:$0xff]
  %v344 = vld [vmem:[%s0 + $0xa68] sm:$0xff]
  %v345 = vld [vmem:[%s0 + $0xa70] sm:$0xff]
  %v346 = vld [vmem:[%s0 + $0xa78] sm:$0xff]
  %v347 = vld [vmem:[%s0 + $0xa80] sm:$0xff]
  %v348 = vld [vmem:[%s0 + $0xa88] sm:$0xff]
  %v349 = vld [vmem:[%s0 + $0xa90] sm:$0xff]
  %v350 = vld [vmem:[%s0 + $0xa98] sm:$0xff]
  %v351 = vld [vmem:[%s0 + $0xaa0] sm:$0xff]
  %v352 = vld [vmem:[%s0 + $0xaa8] sm:$0xff]
  %v353 = vld [vmem:[%s0 + $0xab0] sm:$0xff]
  %v354 = vld [vmem:[%s0 + $0xab8] sm:$0xff]
  %v355 = vld [vmem:[%s0 + $0xac0] sm:$0xff]
  %v356 = vld [vmem:[%s0 + $0xac8] sm:$0xff]
  %v357 = vld [vmem:[%s0 + $0xad0] sm:$0xff]
  %v358 = vld [vmem:[%s0 + $0xad8] sm:$0xff]
  %v359 = vld [vmem:[%s0 + $0xae0] sm:$0xff]
  %v360 = vld [vmem:[%s0 + $0xae8] sm:$0xff]
  %v361 = vld [vmem:[%s0 + $0xaf0] sm:$0xff]
  %v362 = vld [vmem:[%s0 + $0xaf8] sm:$0xff]
  %v363 = vld [vmem:[%s0 + $0xb00] sm:$0xff]
  %v364 = vld [vmem:[%s0 + $0xb08] sm:$0xff]
  %v365 = vld [vmem:[%s0 + $0xb10] sm:$0xff]
  %v366 = vld [vmem:[%s0 + $0xb18] sm:$0xff]
  %v367 = vld [vmem:[%s0 + $0xb20] sm:$0xff]
  %v368 = vld [vmem:[%s0 + $0xb28] sm:$0xff]
  %v369 = vld [vmem:[%s0 + $0xb30] sm:$0xff]
  %v370 = vld [vmem:[%s0 + $0xb38] sm:$0xff]
  %v371 = vld [vmem:[%s0 + $0xb40] sm:$0xff]
  %v372 = vld [vmem:[%s0 + $0xb48] sm:$0xff]
  %v373 = vld [vmem:[%s0 + $0xb50] sm:$0xff]
  %v374 = vld [vmem:[%s0 + $0xb58] sm:$0xff]
  %v375 = vld [vmem:[%s0 + $0xb60] sm:$0xff]
  %v376 = vld [vmem:[%s0 + $0xb68] sm:$0xff]
  %v377 = vld [vmem:[%s0 + $0xb70] sm:$0xff]
  %v378 = vld [vmem:[%s0 + $0xb78] sm:$0xff]
  %v379 = vld [vmem:[%s0 + $0xb80] sm:$0xff]
  %v380 = vld [vmem:[%s0 + $0xb88] sm:$0xff]
  %v381 = vld [vmem:[%s0 + $0xb90] sm:$0xff]
  %v382 = vld [vmem:[%s0 + $0xb98] sm:$0xff]
  %v383 = vld [vmem:[%s0 + $0xba0] sm:$0xff]
  %v384 = vld [vmem:[%s0 + $0xba8] sm:$0xff]
  %v385 = vld [vmem:[%s0 + $0xbb0] sm:$0xff]
  %v386 = vld [vmem:[%s0 + $0xbb8] sm:$0xff]
  %v387 = vld [vmem:[%s0 + $0xbc0] sm:$0xff]
  %v388 = vld [vmem:[%s0 + $0xbc8] sm:$0xff]
  %v389 = vld [vmem:[%s0 + $0xbd0] sm:$0xff]
  %v390 = vld [vmem:[%s0 + $0xbd8] sm:$0xff]
  %v391 = vld [vmem:[%s0 + $0xbe0] sm:$0xff]
  %v392 = vld [vmem:[%s0 + $0xbe8] sm:$0xff]
  %v393 = vld [vmem:[%s0 + $0xbf0] sm:$0xff]
  %v394 = vld [vmem:[%s0 + $0xbf8] sm:$0xff]
  %v395 = vld [vmem:[%s0 + $0xc00] sm:$0xff]
  %v396 = vld [vmem:[%s0 + $0xc08] sm:$0xff]
  %v397 = vld [vmem:[%s0 + $0xc10] sm:$0xff]
  %v398 = vld [vmem:[%s0 + $0xc18] sm:$0xff]
  %v399 = vld [vmem:[%s0 + $0xc20] sm:$0xff]
  %v400 = vld [vmem:[%s0 + $0xc28] sm:$0xff]
  %v401 = vld [vmem:[%s0 + $0xc30] sm:$0xff]
  %v402 = vld [vmem:[%s0 + $0xc38] sm:$0xff]
  %v403 = vld [vmem:[%s1] sm:$0xff]
  %v404 = vld [vmem:[%s1 + $0x8] sm:$0xff]
  %v405 = vld [vmem:[%s1 + $0x10] sm:$0xff]
  %v406 = vld [vmem:[%s1 + $0x18] sm:$0xff]
  %v407 = vld [vmem:[%s1 + $0x20] sm:$0xff]
  %v408 = vld [vmem:[%s1 + $0x28] sm:$0xff]
  %v409 = vld [vmem:[%s1 + $0x30] sm:$0xff]
  %v410 = vld [vmem:[%s1 + $0x38] sm:$0xff]
  %v411 = vld [vmem:[%s1 + $0x40] sm:$0xff]
  %v412 = vld [vmem:[%s1 + $0x48] sm:$0xff]
  %v413 = vld [vmem:[%s1 + $0x50] sm:$0xff]
  %v414 = vld [vmem:[%s1 + $0x58] sm:$0xff]
  %v415 = vld [vmem:[%s1 + $0x60] sm:$0xff]
  %v416 = vld [vmem:[%s1 + $0x68] sm:$0xff]
  %v417 = vld [vmem:[%s1 + $0x70] sm:$0xff]
  %v418 = vld [vmem:[%s1 + $0x78] sm:$0xff]
  %v419 = vld [vmem:[%s1 + $0x80] sm:$0xff]
  %v420 = vld [vmem:[%s1 + $0x88] sm:$0xff]
  %v421 = vld [vmem:[%s1 + $0x90] sm:$0xff]
  %v422 = vld [vmem:[%s1 + $0x98] sm:$0xff]
  %v423 = vld [vmem:[%s1 + $0xa0] sm:$0xff]
  %v424 = vld [vmem:[%s1 + $0xa8] sm:$0xff]
  %v425 = vld [vmem:[%s1 + $0xb0] sm:$0xff]
  %v426 = vld [vmem:[%s1 + $0xb8] sm:$0xff]
  %v427 = vld [vmem:[%s1 + $0xc0] sm:$0xff]
  %v428 = vld [vmem:[%s1 + $0xc8] sm:$0xff]
  %v429 = vld [vmem:[%s1 + $0xd0] sm:$0xff]
  %v430 = vld [vmem:[%s1 + $0xd8] sm:$0xff]
  %v431 = vld [vmem:[%s1 + $0xe0] sm:$0xff]
  %v432 = vld [vmem:[%s1 + $0xe8] sm:$0xff]
  %v433 = vld [vmem:[%s1 + $0xf0] sm:$0xff]
  %v434 = vld [vmem:[%s1 + $0xf8] sm:$0xff]
  %435 = vmatprep.subr.mxu0 0.0
  %436 = vmatpush1.msra.mxu0 %v418
  %437 = vmatprep.subr.mxu0 0.0
  %438 = vmatpush1.msra.mxu0 %v417
  %439 = vmatprep.subr.mxu0 0.0
  %440 = vmatpush1.msra.mxu0 %v416
  %441 = vmatprep.subr.mxu0 0.0
  %442 = vmatpush1.msra.mxu0 %v415
  %443 = vmatprep.subr.mxu0 0.0
  %444 = vmatpush1.msra.mxu0 %v414
  %445 = vmatprep.subr.mxu0 0.0
  %446 = vmatpush1.msra.mxu0 %v413
  %447 = vmatprep.subr.mxu0 0.0
  %448 = vmatpush1.msra.mxu0 %v412
  %449 = vmatprep.subr.mxu0 0.0
  %450 = vmatpush1.msra.mxu0 %v411
  %451 = vmatprep.subr.mxu0 0.0
  %452 = vmatpush1.msra.mxu0 %v410
  %453 = vmatprep.subr.mxu0 0.0
  %454 = vmatpush1.msra.mxu0 %v409
  %455 = vmatprep.subr.mxu0 0.0
  %456 = vmatpush1.msra.mxu0 %v408
  %457 = vmatprep.subr.mxu0 0.0
  %458 = vmatpush1.msra.mxu0 %v407
  %459 = vmatprep.subr.mxu0 0.0
  %460 = vmatpush1.msra.mxu0 %v406
  %461 = vmatprep.subr.mxu0 0.0
  %462 = vmatpush1.msra.mxu0 %v405
  %463 = vmatprep.subr.mxu0 0.0
  %464 = vmatpush1.msra.mxu0 %v404
  %465 = vmatprep.subr.mxu0 0.0
  %466 = vmatpush1.msra.mxu0 %v403
  %467 = vmatprep.subr.mxu0 0.0
  %468 = vmatpush2.msra.mxu0 %v434
  %469 = vmatprep.subr.mxu0 0.0
  %470 = vmatpush2.msra.mxu0 %v433
  %471 = vmatprep.subr.mxu0 0.0
  %472 = vmatpush2.msra.mxu0 %v432
  %473 = vmatprep.subr.mxu0 0.0
  %474 = vmatpush2.msra.mxu0 %v431
  %475 = vmatprep.subr.mxu0 0.0
  %476 = vmatpush2.msra.mxu0 %v430
  %477 = vmatprep.subr.mxu0 0.0
  %478 = vmatpush2.msra.mxu0 %v429
  %479 = vmatprep.subr.mxu0 0.0
  %480 = vmatpush2.msra.mxu0 %v428
  %481 = vmatprep.subr.mxu0 0.0
  %482 = vmatpush2.msra.mxu0 %v427
  %483 = vmatprep.subr.mxu0 0.0
  %484 = vmatpush2.msra.mxu0 %v426
  %485 = vmatprep.subr.mxu0 0.0
  %486 = vmatpush2.msra.mxu0 %v425
  %487 = vmatprep.subr.mxu0 0.0
  %488 = vmatpush2.msra.mxu0 %v424
  %489 = vmatprep.subr.mxu0 0.0
  %490 = vmatpush2.msra.mxu0 %v423
  %491 = vmatprep.subr.mxu0 0.0
  %492 = vmatpush2.msra.mxu0 %v422
  %493 = vmatprep.subr.mxu0 0.0
  %494 = vmatpush2.msra.mxu0 %v421
  %495 = vmatprep.subr.mxu0 0.0
  %496 = vmatpush2.msra.mxu0 %v420
  %497 = vmatprep.subr.mxu0 0.0
  %498 = vmatpush2.msra.mxu0 %v419
  %499 = vmatprep.mubr.f32.mxu0 %v12
  %500 = vmatmul.mubr.f32.gmra.mxu0 %v11
  %v501 = vpop.f32.mrf.mxu0
  %v502 = vadd.f32 0.0, %v501
  %v503 = vpop.f32.mrf.mxu0
  %504 = vmatprep.mubr.f32.mxu0 %v14
  %505 = vmatmul.mubr.f32.gmra.mxu0 %v13
  %v506 = vpop.f32.mrf.mxu0
  %v507 = vadd.f32 0.0, %v506
  %v508 = vpop.f32.mrf.mxu0
  %509 = vmatprep.mubr.f32.mxu0 %v16
  %510 = vmatmul.mubr.f32.gmra.mxu0 %v15
  %v511 = vpop.f32.mrf.mxu0
  %v512 = vadd.f32 0.0, %v511
  %v513 = vpop.f32.mrf.mxu0
  %514 = vmatprep.mubr.f32.mxu0 %v18
  %515 = vmatmul.mubr.f32.gmra.mxu0 %v17
  %v516 = vpop.f32.mrf.mxu0
  %v517 = vadd.f32 0.0, %v516
  %v518 = vpop.f32.mrf.mxu0
  %519 = vmatprep.mubr.f32.mxu0 %v20
  %520 = vmatmul.mubr.f32.gmra.mxu0 %v19
  %v521 = vpop.f32.mrf.mxu0
  %v522 = vadd.f32 0.0, %v521
  %v523 = vpop.f32.mrf.mxu0
  %524 = vmatprep.mubr.f32.mxu0 %v22
  %525 = vmatmul.mubr.f32.gmra.mxu0 %v21
  %v526 = vpop.f32.mrf.mxu0
  %v527 = vadd.f32 0.0, %v526
  %v528 = vpop.f32.mrf.mxu0
  %529 = vmatprep.mubr.f32.mxu0 %v24
  %530 = vmatmul.mubr.f32.gmra.mxu0 %v23
  %v531 = vpop.f32.mrf.mxu0
  %v532 = vadd.f32 0.0, %v531
  %v533 = vpop.f32.mrf.mxu0
  %534 = vmatprep.mubr.f32.mxu0 %v26
  %535 = vmatmul.mubr.f32.gmra.mxu0 %v25
  %v536 = vpop.f32.mrf.mxu0
  %v537 = vadd.f32 0.0, %v536
  %v538 = vpop.f32.mrf.mxu0
  %539 = vmatprep.mubr.f32.mxu0 %v28
  %540 = vmatmul.mubr.f32.gmra.mxu0 %v27
  %v541 = vpop.f32.mrf.mxu0
  %v542 = vadd.f32 0.0, %v541
  %v543 = vpop.f32.mrf.mxu0
  %544 = vmatprep.mubr.f32.mxu0 %v30
  %545 = vmatmul.mubr.f32.gmra.mxu0 %v29
  %v546 = vpop.f32.mrf.mxu0
  %v547 = vadd.f32 0.0, %v546
  %v548 = vpop.f32.mrf.mxu0
  %549 = vmatprep.mubr.f32.mxu0 %v32
  %550 = vmatmul.mubr.f32.gmra.mxu0 %v31
  %v551 = vpop.f32.mrf.mxu0
  %v552 = vadd.f32 0.0, %v551
  %v553 = vpop.f32.mrf.mxu0
  %554 = vmatprep.mubr.f32.mxu0 %v34
  %555 = vmatmul.mubr.f32.gmra.mxu0 %v33
  %v556 = vpop.f32.mrf.mxu0
  %v557 = vadd.f32 0.0, %v556
  %v558 = vpop.f32.mrf.mxu0
  %559 = vmatprep.mubr.f32.mxu0 %v36
  %560 = vmatmul.mubr.f32.gmra.mxu0 %v35
  %v561 = vpop.f32.mrf.mxu0
  %v562 = vadd.f32 0.0, %v561
  %v563 = vpop.f32.mrf.mxu0
  %564 = vmatprep.mubr.f32.mxu0 %v38
  %565 = vmatmul.mubr.f32.gmra.mxu0 %v37
  %v566 = vpop.f32.mrf.mxu0
  %v567 = vadd.f32 0.0, %v566
  %v568 = vpop.f32.mrf.mxu0
  %569 = vmatprep.mubr.f32.mxu0 %v40
  %570 = vmatmul.mubr.f32.gmra.mxu0 %v39
  %v571 = vpop.f32.mrf.mxu0
  %v572 = vadd.f32 0.0, %v571
  %v573 = vpop.f32.mrf.mxu0
  %574 = vmatprep.mubr.f32.mxu0 %v42
  %575 = vmatmul.mubr.f32.gmra.mxu0 %v41
  %v576 = vpop.f32.mrf.mxu0
  %v577 = vadd.f32 0.0, %v576
  %v578 = vpop.f32.mrf.mxu0
  %579 = vmatprep.mubr.f32.mxu0 %v44
  %580 = vmatmul.mubr.f32.gmra.mxu0 %v43
  %v581 = vpop.f32.mrf.mxu0
  %v582 = vadd.f32 0.0, %v581
  %v583 = vpop.f32.mrf.mxu0
  %584 = vmatprep.mubr.f32.mxu0 %v46
  %585 = vmatmul.mubr.f32.gmra.mxu0 %v45
  %v586 = vpop.f32.mrf.mxu0
  %v587 = vadd.f32 0.0, %v586
  %v588 = vpop.f32.mrf.mxu0
  %589 = vmatprep.mubr.f32.mxu0 %v48
  %590 = vmatmul.mubr.f32.gmra.mxu0 %v47
  %v591 = vpop.f32.mrf.mxu0
  %v592 = vadd.f32 0.0, %v591
  %v593 = vpop.f32.mrf.mxu0
  %594 = vmatprep.mubr.f32.mxu0 %v50
  %595 = vmatmul.mubr.f32.gmra.mxu0 %v49
  %v596 = vpop.f32.mrf.mxu0
  %v597 = vadd.f32 0.0, %v596
  %v598 = vpop.f32.mrf.mxu0
  %599 = vmatprep.mubr.f32.mxu0 %v52
  %600 = vmatmul.mubr.f32.gmra.mxu0 %v51
  %v601 = vpop.f32.mrf.mxu0
  %v602 = vadd.f32 0.0, %v601
  %v603 = vpop.f32.mrf.mxu0
  %604 = vmatprep.mubr.f32.mxu0 %v54
  %605 = vmatmul.mubr.f32.gmra.mxu0 %v53
  %v606 = vpop.f32.mrf.mxu0
  %v607 = vadd.f32 0.0, %v606
  %v608 = vpop.f32.mrf.mxu0
  %609 = vmatprep.mubr.f32.mxu0 %v56
  %610 = vmatmul.mubr.f32.gmra.mxu0 %v55
  %v611 = vpop.f32.mrf.mxu0
  %v612 = vadd.f32 0.0, %v611
  %v613 = vpop.f32.mrf.mxu0
  %614 = vmatprep.mubr.f32.mxu0 %v58
  %615 = vmatmul.mubr.f32.gmra.mxu0 %v57
  %v616 = vpop.f32.mrf.mxu0
  %v617 = vadd.f32 0.0, %v616
  %v618 = vpop.f32.mrf.mxu0
  %619 = vmatprep.mubr.f32.mxu0 %v60
  %620 = vmatmul.mubr.f32.gmra.mxu0 %v59
  %v621 = vpop.f32.mrf.mxu0
  %v622 = vadd.f32 0.0, %v621
  %v623 = vpop.f32.mrf.mxu0
  %624 = vmatprep.mubr.f32.mxu0 %v62
  %625 = vmatmul.mubr.f32.gmra.mxu0 %v61
  %v626 = vpop.f32.mrf.mxu0
  %v627 = vadd.f32 0.0, %v626
  %v628 = vpop.f32.mrf.mxu0
  %629 = vmatprep.mubr.f32.mxu0 %v64
  %630 = vmatmul.mubr.f32.gmra.mxu0 %v63
  %v631 = vpop.f32.mrf.mxu0
  %v632 = vadd.f32 0.0, %v631
  %v633 = vpop.f32.mrf.mxu0
  %634 = vmatprep.mubr.f32.mxu0 %v66
  %635 = vmatmul.mubr.f32.gmra.mxu0 %v65
  %v636 = vpop.f32.mrf.mxu0
  %v637 = vadd.f32 0.0, %v636
  %v638 = vpop.f32.mrf.mxu0
  %639 = vmatprep.mubr.f32.mxu0 %v68
  %640 = vmatmul.mubr.f32.gmra.mxu0 %v67
  %v641 = vpop.f32.mrf.mxu0
  %v642 = vadd.f32 0.0, %v641
  %v643 = vpop.f32.mrf.mxu0
  %644 = vmatprep.mubr.f32.mxu0 %v70
  %645 = vmatmul.mubr.f32.gmra.mxu0 %v69
  %v646 = vpop.f32.mrf.mxu0
  %v647 = vadd.f32 0.0, %v646
  %v648 = vpop.f32.mrf.mxu0
  %649 = vmatprep.mubr.f32.mxu0 %v72
  %650 = vmatmul.mubr.f32.gmra.mxu0 %v71
  %v651 = vpop.f32.mrf.mxu0
  %v652 = vadd.f32 0.0, %v651
  %v653 = vpop.f32.mrf.mxu0
  %654 = vmatprep.mubr.f32.mxu0 %v74
  %655 = vmatmul.mubr.f32.gmra.mxu0 %v73
  %v656 = vpop.f32.mrf.mxu0
  %v657 = vadd.f32 0.0, %v656
  %v658 = vpop.f32.mrf.mxu0
  %659 = vmatprep.mubr.f32.mxu0 %v76
  %660 = vmatmul.mubr.f32.gmra.mxu0 %v75
  %v661 = vpop.f32.mrf.mxu0
  %v662 = vadd.f32 0.0, %v661
  %v663 = vpop.f32.mrf.mxu0
  %664 = vmatprep.mubr.f32.mxu0 %v78
  %665 = vmatmul.mubr.f32.gmra.mxu0 %v77
  %v666 = vpop.f32.mrf.mxu0
  %v667 = vadd.f32 0.0, %v666
  %v668 = vpop.f32.mrf.mxu0
  %669 = vmatprep.mubr.f32.mxu0 %v80
  %670 = vmatmul.mubr.f32.gmra.mxu0 %v79
  %v671 = vpop.f32.mrf.mxu0
  %v672 = vadd.f32 0.0, %v671
  %v673 = vpop.f32.mrf.mxu0
  %674 = vmatprep.mubr.f32.mxu0 %v82
  %675 = vmatmul.mubr.f32.gmra.mxu0 %v81
  %v676 = vpop.f32.mrf.mxu0
  %v677 = vadd.f32 0.0, %v676
  %v678 = vpop.f32.mrf.mxu0
  %679 = vmatprep.mubr.f32.mxu0 %v84
  %680 = vmatmul.mubr.f32.gmra.mxu0 %v83
  %v681 = vpop.f32.mrf.mxu0
  %v682 = vadd.f32 0.0, %v681
  %v683 = vpop.f32.mrf.mxu0
  %684 = vmatprep.mubr.f32.mxu0 %v86
  %685 = vmatmul.mubr.f32.gmra.mxu0 %v85
  %v686 = vpop.f32.mrf.mxu0
  %v687 = vadd.f32 0.0, %v686
  %v688 = vpop.f32.mrf.mxu0
  %689 = vmatprep.mubr.f32.mxu0 %v88
  %690 = vmatmul.mubr.f32.gmra.mxu0 %v87
  %v691 = vpop.f32.mrf.mxu0
  %v692 = vadd.f32 0.0, %v691
  %v693 = vpop.f32.mrf.mxu0
  %694 = vmatprep.mubr.f32.mxu0 %v90
  %695 = vmatmul.mubr.f32.gmra.mxu0 %v89
  %v696 = vpop.f32.mrf.mxu0
  %v697 = vadd.f32 0.0, %v696
  %v698 = vpop.f32.mrf.mxu0
  %699 = vmatprep.mubr.f32.mxu0 %v92
  %700 = vmatmul.mubr.f32.gmra.mxu0 %v91
  %v701 = vpop.f32.mrf.mxu0
  %v702 = vadd.f32 0.0, %v701
  %v703 = vpop.f32.mrf.mxu0
  %704 = vmatprep.mubr.f32.mxu0 %v94
  %705 = vmatmul.mubr.f32.gmra.mxu0 %v93
  %v706 = vpop.f32.mrf.mxu0
  %v707 = vadd.f32 0.0, %v706
  %v708 = vpop.f32.mrf.mxu0
  %709 = vmatprep.mubr.f32.mxu0 %v96
  %710 = vmatmul.mubr.f32.gmra.mxu0 %v95
  %v711 = vpop.f32.mrf.mxu0
  %v712 = vadd.f32 0.0, %v711
  %v713 = vpop.f32.mrf.mxu0
  %714 = vmatprep.mubr.f32.mxu0 %v98
  %715 = vmatmul.mubr.f32.gmra.mxu0 %v97
  %v716 = vpop.f32.mrf.mxu0
  %v717 = vadd.f32 0.0, %v716
  %v718 = vpop.f32.mrf.mxu0
  %719 = vmatprep.mubr.f32.mxu0 %v100
  %720 = vmatmul.mubr.f32.gmra.mxu0 %v99
  %v721 = vpop.f32.mrf.mxu0
  %v722 = vadd.f32 0.0, %v721
  %v723 = vpop.f32.mrf.mxu0
  %724 = vmatprep.mubr.f32.mxu0 %v102
  %725 = vmatmul.mubr.f32.gmra.mxu0 %v101
  %v726 = vpop.f32.mrf.mxu0
  %v727 = vadd.f32 0.0, %v726
  %v728 = vpop.f32.mrf.mxu0
  %729 = vmatprep.mubr.f32.mxu0 %v104
  %730 = vmatmul.mubr.f32.gmra.mxu0 %v103
  %v731 = vpop.f32.mrf.mxu0
  %v732 = vadd.f32 0.0, %v731
  %v733 = vpop.f32.mrf.mxu0
  %734 = vmatprep.mubr.f32.mxu0 %v106
  %735 = vmatmul.mubr.f32.gmra.mxu0 %v105
  %v736 = vpop.f32.mrf.mxu0
  %v737 = vadd.f32 0.0, %v736
  %v738 = vpop.f32.mrf.mxu0
  %739 = vmatprep.mubr.f32.mxu0 %v108
  %740 = vmatmul.mubr.f32.gmra.mxu0 %v107
  %v741 = vpop.f32.mrf.mxu0
  %v742 = vadd.f32 0.0, %v741
  %v743 = vpop.f32.mrf.mxu0
  %744 = vmatprep.mubr.f32.mxu0 %v110
  %745 = vmatmul.mubr.f32.gmra.mxu0 %v109
  %v746 = vpop.f32.mrf.mxu0
  %v747 = vadd.f32 0.0, %v746
  %v748 = vpop.f32.mrf.mxu0
  %749 = vmatprep.mubr.f32.mxu0 %v112
  %750 = vmatmul.mubr.f32.gmra.mxu0 %v111
  %v751 = vpop.f32.mrf.mxu0
  %v752 = vadd.f32 0.0, %v751
  %v753 = vpop.f32.mrf.mxu0
  %754 = vmatprep.mubr.f32.mxu0 %v114
  %755 = vmatmul.mubr.f32.gmra.mxu0 %v113
  %v756 = vpop.f32.mrf.mxu0
  %v757 = vadd.f32 0.0, %v756
  %v758 = vpop.f32.mrf.mxu0
  %759 = vmatprep.mubr.f32.mxu0 %v116
  %760 = vmatmul.mubr.f32.gmra.mxu0 %v115
  %v761 = vpop.f32.mrf.mxu0
  %v762 = vadd.f32 0.0, %v761
  %v763 = vpop.f32.mrf.mxu0
  %764 = vmatprep.mubr.f32.mxu0 %v118
  %765 = vmatmul.mubr.f32.gmra.mxu0 %v117
  %v766 = vpop.f32.mrf.mxu0
  %v767 = vadd.f32 0.0, %v766
  %v768 = vpop.f32.mrf.mxu0
  %769 = vmatprep.mubr.f32.mxu0 %v120
  %770 = vmatmul.mubr.f32.gmra.mxu0 %v119
  %v771 = vpop.f32.mrf.mxu0
  %v772 = vadd.f32 0.0, %v771
  %v773 = vpop.f32.mrf.mxu0
  %774 = vmatprep.mubr.f32.mxu0 %v122
  %775 = vmatmul.mubr.f32.gmra.mxu0 %v121
  %v776 = vpop.f32.mrf.mxu0
  %v777 = vadd.f32 0.0, %v776
  %v778 = vpop.f32.mrf.mxu0
  %779 = vmatprep.mubr.f32.mxu0 %v124
  %780 = vmatmul.mubr.f32.gmra.mxu0 %v123
  %v781 = vpop.f32.mrf.mxu0
  %v782 = vadd.f32 0.0, %v781
  %v783 = vpop.f32.mrf.mxu0
  %784 = vmatprep.mubr.f32.mxu0 %v126
  %785 = vmatmul.mubr.f32.gmra.mxu0 %v125
  %v786 = vpop.f32.mrf.mxu0
  %v787 = vadd.f32 0.0, %v786
  %v788 = vpop.f32.mrf.mxu0
  %789 = vmatprep.mubr.f32.mxu0 %v128
  %790 = vmatmul.mubr.f32.gmra.mxu0 %v127
  %v791 = vpop.f32.mrf.mxu0
  %v792 = vadd.f32 0.0, %v791
  %v793 = vpop.f32.mrf.mxu0
  %794 = vmatprep.mubr.f32.mxu0 %v130
  %795 = vmatmul.mubr.f32.gmra.mxu0 %v129
  %v796 = vpop.f32.mrf.mxu0
  %v797 = vadd.f32 0.0, %v796
  %v798 = vpop.f32.mrf.mxu0
  %799 = vmatprep.mubr.f32.mxu0 %v132
  %800 = vmatmul.mubr.f32.gmra.mxu0 %v131
  %v801 = vpop.f32.mrf.mxu0
  %v802 = vadd.f32 0.0, %v801
  %v803 = vpop.f32.mrf.mxu0
  %804 = vmatprep.mubr.f32.mxu0 %v134
  %805 = vmatmul.mubr.f32.gmra.mxu0 %v133
  %v806 = vpop.f32.mrf.mxu0
  %v807 = vadd.f32 0.0, %v806
  %v808 = vpop.f32.mrf.mxu0
  %809 = vmatprep.mubr.f32.mxu0 %v136
  %810 = vmatmul.mubr.f32.gmra.mxu0 %v135
  %v811 = vpop.f32.mrf.mxu0
  %v812 = vadd.f32 0.0, %v811
  %v813 = vpop.f32.mrf.mxu0
  %814 = vmatprep.mubr.f32.mxu0 %v138
  %815 = vmatmul.mubr.f32.gmra.mxu0 %v137
  %v816 = vpop.f32.mrf.mxu0
  %v817 = vadd.f32 0.0, %v816
  %v818 = vpop.f32.mrf.mxu0
  %819 = vmatprep.mubr.f32.mxu0 %v140
  %820 = vmatmul.mubr.f32.gmra.mxu0 %v139
  %v821 = vpop.f32.mrf.mxu0
  %v822 = vadd.f32 0.0, %v821
  %v823 = vpop.f32.mrf.mxu0
  %824 = vmatprep.mubr.f32.mxu0 %v142
  %825 = vmatmul.mubr.f32.gmra.mxu0 %v141
  %v826 = vpop.f32.mrf.mxu0
  %v827 = vadd.f32 0.0, %v826
  %v828 = vpop.f32.mrf.mxu0
  %829 = vmatprep.mubr.f32.mxu0 %v144
  %830 = vmatmul.mubr.f32.gmra.mxu0 %v143
  %v831 = vpop.f32.mrf.mxu0
  %v832 = vadd.f32 0.0, %v831
  %v833 = vpop.f32.mrf.mxu0
  %834 = vmatprep.mubr.f32.mxu0 %v146
  %835 = vmatmul.mubr.f32.gmra.mxu0 %v145
  %v836 = vpop.f32.mrf.mxu0
  %v837 = vadd.f32 0.0, %v836
  %v838 = vpop.f32.mrf.mxu0
  %839 = vmatprep.mubr.f32.mxu0 %v148
  %840 = vmatmul.mubr.f32.gmra.mxu0 %v147
  %v841 = vpop.f32.mrf.mxu0
  %v842 = vadd.f32 0.0, %v841
  %v843 = vpop.f32.mrf.mxu0
  %844 = vmatprep.mubr.f32.mxu0 %v150
  %845 = vmatmul.mubr.f32.gmra.mxu0 %v149
  %v846 = vpop.f32.mrf.mxu0
  %v847 = vadd.f32 0.0, %v846
  %v848 = vpop.f32.mrf.mxu0
  %849 = vmatprep.mubr.f32.mxu0 %v152
  %850 = vmatmul.mubr.f32.gmra.mxu0 %v151
  %v851 = vpop.f32.mrf.mxu0
  %v852 = vadd.f32 0.0, %v851
  %v853 = vpop.f32.mrf.mxu0
  %854 = vmatprep.mubr.f32.mxu0 %v154
  %855 = vmatmul.mubr.f32.gmra.mxu0 %v153
  %v856 = vpop.f32.mrf.mxu0
  %v857 = vadd.f32 0.0, %v856
  %v858 = vpop.f32.mrf.mxu0
  %859 = vmatprep.mubr.f32.mxu0 %v156
  %860 = vmatmul.mubr.f32.gmra.mxu0 %v155
  %v861 = vpop.f32.mrf.mxu0
  %v862 = vadd.f32 0.0, %v861
  %v863 = vpop.f32.mrf.mxu0
  %864 = vmatprep.mubr.f32.mxu0 %v158
  %865 = vmatmul.mubr.f32.gmra.mxu0 %v157
  %v866 = vpop.f32.mrf.mxu0
  %v867 = vadd.f32 0.0, %v866
  %v868 = vpop.f32.mrf.mxu0
  %869 = vmatprep.mubr.f32.mxu0 %v160
  %870 = vmatmul.mubr.f32.gmra.mxu0 %v159
  %v871 = vpop.f32.mrf.mxu0
  %v872 = vadd.f32 0.0, %v871
  %v873 = vpop.f32.mrf.mxu0
  %874 = vmatprep.mubr.f32.mxu0 %v162
  %875 = vmatmul.mubr.f32.gmra.mxu0 %v161
  %v876 = vpop.f32.mrf.mxu0
  %v877 = vadd.f32 0.0, %v876
  %v878 = vpop.f32.mrf.mxu0
  %879 = vmatprep.mubr.f32.mxu0 %v164
  %880 = vmatmul.mubr.f32.gmra.mxu0 %v163
  %v881 = vpop.f32.mrf.mxu0
  %v882 = vadd.f32 0.0, %v881
  %v883 = vpop.f32.mrf.mxu0
  %884 = vmatprep.mubr.f32.mxu0 %v166
  %885 = vmatmul.mubr.f32.gmra.mxu0 %v165
  %v886 = vpop.f32.mrf.mxu0
  %v887 = vadd.f32 0.0, %v886
  %v888 = vpop.f32.mrf.mxu0
  %889 = vmatprep.mubr.f32.mxu0 %v168
  %890 = vmatmul.mubr.f32.gmra.mxu0 %v167
  %v891 = vpop.f32.mrf.mxu0
  %v892 = vadd.f32 0.0, %v891
  %v893 = vpop.f32.mrf.mxu0
  %894 = vmatprep.mubr.f32.mxu0 %v170
  %895 = vmatmul.mubr.f32.gmra.mxu0 %v169
  %v896 = vpop.f32.mrf.mxu0
  %v897 = vadd.f32 0.0, %v896
  %v898 = vpop.f32.mrf.mxu0
  %899 = vmatprep.mubr.f32.mxu0 %v172
  %900 = vmatmul.mubr.f32.gmra.mxu0 %v171
  %v901 = vpop.f32.mrf.mxu0
  %v902 = vadd.f32 0.0, %v901
  %v903 = vpop.f32.mrf.mxu0
  %904 = vmatprep.mubr.f32.mxu0 %v174
  %905 = vmatmul.mubr.f32.gmra.mxu0 %v173
  %v906 = vpop.f32.mrf.mxu0
  %v907 = vadd.f32 0.0, %v906
  %v908 = vpop.f32.mrf.mxu0
  %909 = vmatprep.mubr.f32.mxu0 %v176
  %910 = vmatmul.mubr.f32.gmra.mxu0 %v175
  %v911 = vpop.f32.mrf.mxu0
  %v912 = vadd.f32 0.0, %v911
  %v913 = vpop.f32.mrf.mxu0
  %914 = vmatprep.mubr.f32.mxu0 %v178
  %915 = vmatmul.mubr.f32.gmra.mxu0 %v177
  %v916 = vpop.f32.mrf.mxu0
  %v917 = vadd.f32 0.0, %v916
  %v918 = vpop.f32.mrf.mxu0
  %919 = vmatprep.mubr.f32.mxu0 %v180
  %920 = vmatmul.mubr.f32.gmra.mxu0 %v179
  %v921 = vpop.f32.mrf.mxu0
  %v922 = vadd.f32 0.0, %v921
  %v923 = vpop.f32.mrf.mxu0
  %924 = vmatprep.mubr.f32.mxu0 %v182
  %925 = vmatmul.mubr.f32.gmra.mxu0 %v181
  %v926 = vpop.f32.mrf.mxu0
  %v927 = vadd.f32 0.0, %v926
  %v928 = vpop.f32.mrf.mxu0
  %929 = vmatprep.mubr.f32.mxu0 %v184
  %930 = vmatmul.mubr.f32.gmra.mxu0 %v183
  %v931 = vpop.f32.mrf.mxu0
  %v932 = vadd.f32 0.0, %v931
  %v933 = vpop.f32.mrf.mxu0
  %934 = vmatprep.mubr.f32.mxu0 %v186
  %935 = vmatmul.mubr.f32.gmra.mxu0 %v185
  %v936 = vpop.f32.mrf.mxu0
  %v937 = vadd.f32 0.0, %v936
  %v938 = vpop.f32.mrf.mxu0
  %939 = vmatprep.mubr.f32.mxu0 %v188
  %940 = vmatmul.mubr.f32.gmra.mxu0 %v187
  %v941 = vpop.f32.mrf.mxu0
  %v942 = vadd.f32 0.0, %v941
  %v943 = vpop.f32.mrf.mxu0
  %944 = vmatprep.mubr.f32.mxu0 %v190
  %945 = vmatmul.mubr.f32.gmra.mxu0 %v189
  %v946 = vpop.f32.mrf.mxu0
  %v947 = vadd.f32 0.0, %v946
  %v948 = vpop.f32.mrf.mxu0
  %949 = vmatprep.mubr.f32.mxu0 %v192
  %950 = vmatmul.mubr.f32.gmra.mxu0 %v191
  %v951 = vpop.f32.mrf.mxu0
  %v952 = vadd.f32 0.0, %v951
  %v953 = vpop.f32.mrf.mxu0
  %954 = vmatprep.mubr.f32.mxu0 %v194
  %955 = vmatmul.mubr.f32.gmra.mxu0 %v193
  %v956 = vpop.f32.mrf.mxu0
  %v957 = vadd.f32 0.0, %v956
  %v958 = vpop.f32.mrf.mxu0
  %959 = vmatprep.mubr.f32.mxu0 %v196
  %960 = vmatmul.mubr.f32.gmra.mxu0 %v195
  %v961 = vpop.f32.mrf.mxu0
  %v962 = vadd.f32 0.0, %v961
  %v963 = vpop.f32.mrf.mxu0
  %964 = vmatprep.mubr.f32.mxu0 %v198
  %965 = vmatmul.mubr.f32.gmra.mxu0 %v197
  %v966 = vpop.f32.mrf.mxu0
  %v967 = vadd.f32 0.0, %v966
  %v968 = vpop.f32.mrf.mxu0
  %969 = vmatprep.mubr.f32.mxu0 %v200
  %970 = vmatmul.mubr.f32.gmra.mxu0 %v199
  %v971 = vpop.f32.mrf.mxu0
  %v972 = vadd.f32 0.0, %v971
  %v973 = vpop.f32.mrf.mxu0
  %974 = vmatprep.mubr.f32.mxu0 %v202
  %975 = vmatmul.mubr.f32.gmra.mxu0 %v201
  %v976 = vpop.f32.mrf.mxu0
  %v977 = vadd.f32 0.0, %v976
  %v978 = vpop.f32.mrf.mxu0
  %979 = vmatprep.mubr.f32.mxu0 %v204
  %980 = vmatmul.mubr.f32.gmra.mxu0 %v203
  %v981 = vpop.f32.mrf.mxu0
  %v982 = vadd.f32 0.0, %v981
  %v983 = vpop.f32.mrf.mxu0
  %984 = vmatprep.mubr.f32.mxu0 %v206
  %985 = vmatmul.mubr.f32.gmra.mxu0 %v205
  %v986 = vpop.f32.mrf.mxu0
  %v987 = vadd.f32 0.0, %v986
  %v988 = vpop.f32.mrf.mxu0
  %989 = vmatprep.mubr.f32.mxu0 %v208
  %990 = vmatmul.mubr.f32.gmra.mxu0 %v207
  %v991 = vpop.f32.mrf.mxu0
  %v992 = vadd.f32 0.0, %v991
  %v993 = vpop.f32.mrf.mxu0
  %994 = vmatprep.mubr.f32.mxu0 %v210
  %995 = vmatmul.mubr.f32.gmra.mxu0 %v209
  %v996 = vpop.f32.mrf.mxu0
  %v997 = vadd.f32 0.0, %v996
  %v998 = vpop.f32.mrf.mxu0
  %999 = vmatprep.mubr.f32.mxu0 %v212
  %1000 = vmatmul.mubr.f32.gmra.mxu0 %v211
  %v1001 = vpop.f32.mrf.mxu0
  %v1002 = vadd.f32 0.0, %v1001
  %v1003 = vpop.f32.mrf.mxu0
  %1004 = vmatprep.mubr.f32.mxu0 %v214
  %1005 = vmatmul.mubr.f32.gmra.mxu0 %v213
  %v1006 = vpop.f32.mrf.mxu0
  %v1007 = vadd.f32 0.0, %v1006
  %v1008 = vpop.f32.mrf.mxu0
  %1009 = vmatprep.mubr.f32.mxu0 %v216
  %1010 = vmatmul.mubr.f32.gmra.mxu0 %v215
  %v1011 = vpop.f32.mrf.mxu0
  %v1012 = vadd.f32 0.0, %v1011
  %v1013 = vpop.f32.mrf.mxu0
  %1014 = vmatprep.mubr.f32.mxu0 %v218
  %1015 = vmatmul.mubr.f32.gmra.mxu0 %v217
  %v1016 = vpop.f32.mrf.mxu0
  %v1017 = vadd.f32 0.0, %v1016
  %v1018 = vpop.f32.mrf.mxu0
  %1019 = vmatprep.mubr.f32.mxu0 %v220
  %1020 = vmatmul.mubr.f32.gmra.mxu0 %v219
  %v1021 = vpop.f32.mrf.mxu0
  %v1022 = vadd.f32 0.0, %v1021
  %v1023 = vpop.f32.mrf.mxu0
  %1024 = vmatprep.mubr.f32.mxu0 %v222
  %1025 = vmatmul.mubr.f32.gmra.mxu0 %v221
  %v1026 = vpop.f32.mrf.mxu0
  %v1027 = vadd.f32 0.0, %v1026
  %v1028 = vpop.f32.mrf.mxu0
  %1029 = vmatprep.mubr.f32.mxu0 %v224
  %1030 = vmatmul.mubr.f32.gmra.mxu0 %v223
  %v1031 = vpop.f32.mrf.mxu0
  %v1032 = vadd.f32 0.0, %v1031
  %v1033 = vpop.f32.mrf.mxu0
  %1034 = vmatprep.mubr.f32.mxu0 %v226
  %1035 = vmatmul.mubr.f32.gmra.mxu0 %v225
  %v1036 = vpop.f32.mrf.mxu0
  %v1037 = vadd.f32 0.0, %v1036
  %v1038 = vpop.f32.mrf.mxu0
  %1039 = vmatprep.mubr.f32.mxu0 %v228
  %1040 = vmatmul.mubr.f32.gmra.mxu0 %v227
  %v1041 = vpop.f32.mrf.mxu0
  %v1042 = vadd.f32 0.0, %v1041
  %v1043 = vpop.f32.mrf.mxu0
  %1044 = vmatprep.mubr.f32.mxu0 %v230
  %1045 = vmatmul.mubr.f32.gmra.mxu0 %v229
  %v1046 = vpop.f32.mrf.mxu0
  %v1047 = vadd.f32 0.0, %v1046
  %v1048 = vpop.f32.mrf.mxu0
  %1049 = vmatprep.mubr.f32.mxu0 %v232
  %1050 = vmatmul.mubr.f32.gmra.mxu0 %v231
  %v1051 = vpop.f32.mrf.mxu0
  %v1052 = vadd.f32 0.0, %v1051
  %v1053 = vpop.f32.mrf.mxu0
  %1054 = vmatprep.mubr.f32.mxu0 %v234
  %1055 = vmatmul.mubr.f32.gmra.mxu0 %v233
  %v1056 = vpop.f32.mrf.mxu0
  %v1057 = vadd.f32 0.0, %v1056
  %v1058 = vpop.f32.mrf.mxu0
  %1059 = vmatprep.mubr.f32.mxu0 %v236
  %1060 = vmatmul.mubr.f32.gmra.mxu0 %v235
  %v1061 = vpop.f32.mrf.mxu0
  %v1062 = vadd.f32 0.0, %v1061
  %v1063 = vpop.f32.mrf.mxu0
  %1064 = vmatprep.mubr.f32.mxu0 %v238
  %1065 = vmatmul.mubr.f32.gmra.mxu0 %v237
  %v1066 = vpop.f32.mrf.mxu0
  %v1067 = vadd.f32 0.0, %v1066
  %v1068 = vpop.f32.mrf.mxu0
  %1069 = vmatprep.mubr.f32.mxu0 %v240
  %1070 = vmatmul.mubr.f32.gmra.mxu0 %v239
  %v1071 = vpop.f32.mrf.mxu0
  %v1072 = vadd.f32 0.0, %v1071
  %v1073 = vpop.f32.mrf.mxu0
  %1074 = vmatprep.mubr.f32.mxu0 %v242
  %1075 = vmatmul.mubr.f32.gmra.mxu0 %v241
  %v1076 = vpop.f32.mrf.mxu0
  %v1077 = vadd.f32 0.0, %v1076
  %v1078 = vpop.f32.mrf.mxu0
  %1079 = vmatprep.mubr.f32.mxu0 %v244
  %1080 = vmatmul.mubr.f32.gmra.mxu0 %v243
  %v1081 = vpop.f32.mrf.mxu0
  %v1082 = vadd.f32 0.0, %v1081
  %v1083 = vpop.f32.mrf.mxu0
  %1084 = vmatprep.mubr.f32.mxu0 %v246
  %1085 = vmatmul.mubr.f32.gmra.mxu0 %v245
  %v1086 = vpop.f32.mrf.mxu0
  %v1087 = vadd.f32 0.0, %v1086
  %v1088 = vpop.f32.mrf.mxu0
  %1089 = vmatprep.mubr.f32.mxu0 %v248
  %1090 = vmatmul.mubr.f32.gmra.mxu0 %v247
  %v1091 = vpop.f32.mrf.mxu0
  %v1092 = vadd.f32 0.0, %v1091
  %v1093 = vpop.f32.mrf.mxu0
  %1094 = vmatprep.mubr.f32.mxu0 %v250
  %1095 = vmatmul.mubr.f32.gmra.mxu0 %v249
  %v1096 = vpop.f32.mrf.mxu0
  %v1097 = vadd.f32 0.0, %v1096
  %v1098 = vpop.f32.mrf.mxu0
  %1099 = vmatprep.mubr.f32.mxu0 %v252
  %1100 = vmatmul.mubr.f32.gmra.mxu0 %v251
  %v1101 = vpop.f32.mrf.mxu0
  %v1102 = vadd.f32 0.0, %v1101
  %v1103 = vpop.f32.mrf.mxu0
  %1104 = vmatprep.mubr.f32.mxu0 %v254
  %1105 = vmatmul.mubr.f32.gmra.mxu0 %v253
  %v1106 = vpop.f32.mrf.mxu0
  %v1107 = vadd.f32 0.0, %v1106
  %v1108 = vpop.f32.mrf.mxu0
  %1109 = vmatprep.mubr.f32.mxu0 %v256
  %1110 = vmatmul.mubr.f32.gmra.mxu0 %v255
  %v1111 = vpop.f32.mrf.mxu0
  %v1112 = vadd.f32 0.0, %v1111
  %v1113 = vpop.f32.mrf.mxu0
  %1114 = vmatprep.mubr.f32.mxu0 %v258
  %1115 = vmatmul.mubr.f32.gmra.mxu0 %v257
  %v1116 = vpop.f32.mrf.mxu0
  %v1117 = vadd.f32 0.0, %v1116
  %v1118 = vpop.f32.mrf.mxu0
  %1119 = vmatprep.mubr.f32.mxu0 %v260
  %1120 = vmatmul.mubr.f32.gmra.mxu0 %v259
  %v1121 = vpop.f32.mrf.mxu0
  %v1122 = vadd.f32 0.0, %v1121
  %v1123 = vpop.f32.mrf.mxu0
  %1124 = vmatprep.mubr.f32.mxu0 %v262
  %1125 = vmatmul.mubr.f32.gmra.mxu0 %v261
  %v1126 = vpop.f32.mrf.mxu0
  %v1127 = vadd.f32 0.0, %v1126
  %v1128 = vpop.f32.mrf.mxu0
  %1129 = vmatprep.mubr.f32.mxu0 %v264
  %1130 = vmatmul.mubr.f32.gmra.mxu0 %v263
  %v1131 = vpop.f32.mrf.mxu0
  %v1132 = vadd.f32 0.0, %v1131
  %v1133 = vpop.f32.mrf.mxu0
  %1134 = vmatprep.mubr.f32.mxu0 %v266
  %1135 = vmatmul.mubr.f32.gmra.mxu0 %v265
  %v1136 = vpop.f32.mrf.mxu0
  %v1137 = vadd.f32 0.0, %v1136
  %v1138 = vpop.f32.mrf.mxu0
  %1139 = vmatprep.mubr.f32.mxu0 %v268
  %1140 = vmatmul.mubr.f32.gmra.mxu0 %v267
  %v1141 = vpop.f32.mrf.mxu0
  %v1142 = vadd.f32 0.0, %v1141
  %v1143 = vpop.f32.mrf.mxu0
  %1144 = vmatprep.mubr.f32.mxu0 %v270
  %1145 = vmatmul.mubr.f32.gmra.mxu0 %v269
  %v1146 = vpop.f32.mrf.mxu0
  %v1147 = vadd.f32 0.0, %v1146
  %v1148 = vpop.f32.mrf.mxu0
  %1149 = vmatprep.mubr.f32.mxu0 %v272
  %1150 = vmatmul.mubr.f32.gmra.mxu0 %v271
  %v1151 = vpop.f32.mrf.mxu0
  %v1152 = vadd.f32 0.0, %v1151
  %v1153 = vpop.f32.mrf.mxu0
  %1154 = vmatprep.mubr.f32.mxu0 %v274
  %1155 = vmatmul.mubr.f32.gmra.mxu0 %v273
  %v1156 = vpop.f32.mrf.mxu0
  %v1157 = vadd.f32 0.0, %v1156
  %v1158 = vpop.f32.mrf.mxu0
  %1159 = vmatprep.mubr.f32.mxu0 %v276
  %1160 = vmatmul.mubr.f32.gmra.mxu0 %v275
  %v1161 = vpop.f32.mrf.mxu0
  %v1162 = vadd.f32 0.0, %v1161
  %v1163 = vpop.f32.mrf.mxu0
  %1164 = vmatprep.mubr.f32.mxu0 %v278
  %1165 = vmatmul.mubr.f32.gmra.mxu0 %v277
  %v1166 = vpop.f32.mrf.mxu0
  %v1167 = vadd.f32 0.0, %v1166
  %v1168 = vpop.f32.mrf.mxu0
  %1169 = vmatprep.mubr.f32.mxu0 %v280
  %1170 = vmatmul.mubr.f32.gmra.mxu0 %v279
  %v1171 = vpop.f32.mrf.mxu0
  %v1172 = vadd.f32 0.0, %v1171
  %v1173 = vpop.f32.mrf.mxu0
  %1174 = vmatprep.mubr.f32.mxu0 %v282
  %1175 = vmatmul.mubr.f32.gmra.mxu0 %v281
  %v1176 = vpop.f32.mrf.mxu0
  %v1177 = vadd.f32 0.0, %v1176
  %v1178 = vpop.f32.mrf.mxu0
  %1179 = vmatprep.mubr.f32.mxu0 %v284
  %1180 = vmatmul.mubr.f32.gmra.mxu0 %v283
  %v1181 = vpop.f32.mrf.mxu0
  %v1182 = vadd.f32 0.0, %v1181
  %v1183 = vpop.f32.mrf.mxu0
  %1184 = vmatprep.mubr.f32.mxu0 %v286
  %1185 = vmatmul.mubr.f32.gmra.mxu0 %v285
  %v1186 = vpop.f32.mrf.mxu0
  %v1187 = vadd.f32 0.0, %v1186
  %v1188 = vpop.f32.mrf.mxu0
  %1189 = vmatprep.mubr.f32.mxu0 %v288
  %1190 = vmatmul.mubr.f32.gmra.mxu0 %v287
  %v1191 = vpop.f32.mrf.mxu0
  %v1192 = vadd.f32 0.0, %v1191
  %v1193 = vpop.f32.mrf.mxu0
  %1194 = vmatprep.mubr.f32.mxu0 %v290
  %1195 = vmatmul.mubr.f32.gmra.mxu0 %v289
  %v1196 = vpop.f32.mrf.mxu0
  %v1197 = vadd.f32 0.0, %v1196
  %v1198 = vpop.f32.mrf.mxu0
  %1199 = vmatprep.mubr.f32.mxu0 %v292
  %1200 = vmatmul.mubr.f32.gmra.mxu0 %v291
  %v1201 = vpop.f32.mrf.mxu0
  %v1202 = vadd.f32 0.0, %v1201
  %v1203 = vpop.f32.mrf.mxu0
  %1204 = vmatprep.mubr.f32.mxu0 %v294
  %1205 = vmatmul.mubr.f32.gmra.mxu0 %v293
  %v1206 = vpop.f32.mrf.mxu0
  %v1207 = vadd.f32 0.0, %v1206
  %v1208 = vpop.f32.mrf.mxu0
  %1209 = vmatprep.mubr.f32.mxu0 %v296
  %1210 = vmatmul.mubr.f32.gmra.mxu0 %v295
  %v1211 = vpop.f32.mrf.mxu0
  %v1212 = vadd.f32 0.0, %v1211
  %v1213 = vpop.f32.mrf.mxu0
  %1214 = vmatprep.mubr.f32.mxu0 %v298
  %1215 = vmatmul.mubr.f32.gmra.mxu0 %v297
  %v1216 = vpop.f32.mrf.mxu0
  %v1217 = vadd.f32 0.0, %v1216
  %v1218 = vpop.f32.mrf.mxu0
  %1219 = vmatprep.mubr.f32.mxu0 %v300
  %1220 = vmatmul.mubr.f32.gmra.mxu0 %v299
  %v1221 = vpop.f32.mrf.mxu0
  %v1222 = vadd.f32 0.0, %v1221
  %v1223 = vpop.f32.mrf.mxu0
  %1224 = vmatprep.mubr.f32.mxu0 %v302
  %1225 = vmatmul.mubr.f32.gmra.mxu0 %v301
  %v1226 = vpop.f32.mrf.mxu0
  %v1227 = vadd.f32 0.0, %v1226
  %v1228 = vpop.f32.mrf.mxu0
  %1229 = vmatprep.mubr.f32.mxu0 %v304
  %1230 = vmatmul.mubr.f32.gmra.mxu0 %v303
  %v1231 = vpop.f32.mrf.mxu0
  %v1232 = vadd.f32 0.0, %v1231
  %v1233 = vpop.f32.mrf.mxu0
  %1234 = vmatprep.mubr.f32.mxu0 %v306
  %1235 = vmatmul.mubr.f32.gmra.mxu0 %v305
  %v1236 = vpop.f32.mrf.mxu0
  %v1237 = vadd.f32 0.0, %v1236
  %v1238 = vpop.f32.mrf.mxu0
  %1239 = vmatprep.mubr.f32.mxu0 %v308
  %1240 = vmatmul.mubr.f32.gmra.mxu0 %v307
  %v1241 = vpop.f32.mrf.mxu0
  %v1242 = vadd.f32 0.0, %v1241
  %v1243 = vpop.f32.mrf.mxu0
  %1244 = vmatprep.mubr.f32.mxu0 %v310
  %1245 = vmatmul.mubr.f32.gmra.mxu0 %v309
  %v1246 = vpop.f32.mrf.mxu0
  %v1247 = vadd.f32 0.0, %v1246
  %v1248 = vpop.f32.mrf.mxu0
  %1249 = vmatprep.mubr.f32.mxu0 %v312
  %1250 = vmatmul.mubr.f32.gmra.mxu0 %v311
  %v1251 = vpop.f32.mrf.mxu0
  %v1252 = vadd.f32 0.0, %v1251
  %v1253 = vpop.f32.mrf.mxu0
  %1254 = vmatprep.mubr.f32.mxu0 %v314
  %1255 = vmatmul.mubr.f32.gmra.mxu0 %v313
  %v1256 = vpop.f32.mrf.mxu0
  %v1257 = vadd.f32 0.0, %v1256
  %v1258 = vpop.f32.mrf.mxu0
  %1259 = vmatprep.mubr.f32.mxu0 %v316
  %1260 = vmatmul.mubr.f32.gmra.mxu0 %v315
  %v1261 = vpop.f32.mrf.mxu0
  %v1262 = vadd.f32 0.0, %v1261
  %v1263 = vpop.f32.mrf.mxu0
  %1264 = vmatprep.mubr.f32.mxu0 %v318
  %1265 = vmatmul.mubr.f32.gmra.mxu0 %v317
  %v1266 = vpop.f32.mrf.mxu0
  %v1267 = vadd.f32 0.0, %v1266
  %v1268 = vpop.f32.mrf.mxu0
  %1269 = vmatprep.mubr.f32.mxu0 %v320
  %1270 = vmatmul.mubr.f32.gmra.mxu0 %v319
  %v1271 = vpop.f32.mrf.mxu0
  %v1272 = vadd.f32 0.0, %v1271
  %v1273 = vpop.f32.mrf.mxu0
  %1274 = vmatprep.mubr.f32.mxu0 %v322
  %1275 = vmatmul.mubr.f32.gmra.mxu0 %v321
  %v1276 = vpop.f32.mrf.mxu0
  %v1277 = vadd.f32 0.0, %v1276
  %v1278 = vpop.f32.mrf.mxu0
  %1279 = vmatprep.mubr.f32.mxu0 %v324
  %1280 = vmatmul.mubr.f32.gmra.mxu0 %v323
  %v1281 = vpop.f32.mrf.mxu0
  %v1282 = vadd.f32 0.0, %v1281
  %v1283 = vpop.f32.mrf.mxu0
  %1284 = vmatprep.mubr.f32.mxu0 %v326
  %1285 = vmatmul.mubr.f32.gmra.mxu0 %v325
  %v1286 = vpop.f32.mrf.mxu0
  %v1287 = vadd.f32 0.0, %v1286
  %v1288 = vpop.f32.mrf.mxu0
  %1289 = vmatprep.mubr.f32.mxu0 %v328
  %1290 = vmatmul.mubr.f32.gmra.mxu0 %v327
  %v1291 = vpop.f32.mrf.mxu0
  %v1292 = vadd.f32 0.0, %v1291
  %v1293 = vpop.f32.mrf.mxu0
  %1294 = vmatprep.mubr.f32.mxu0 %v330
  %1295 = vmatmul.mubr.f32.gmra.mxu0 %v329
  %v1296 = vpop.f32.mrf.mxu0
  %v1297 = vadd.f32 0.0, %v1296
  %v1298 = vpop.f32.mrf.mxu0
  %1299 = vmatprep.mubr.f32.mxu0 %v332
  %1300 = vmatmul.mubr.f32.gmra.mxu0 %v331
  %v1301 = vpop.f32.mrf.mxu0
  %v1302 = vadd.f32 0.0, %v1301
  %v1303 = vpop.f32.mrf.mxu0
  %1304 = vmatprep.mubr.f32.mxu0 %v334
  %1305 = vmatmul.mubr.f32.gmra.mxu0 %v333
  %v1306 = vpop.f32.mrf.mxu0
  %v1307 = vadd.f32 0.0, %v1306
  %v1308 = vpop.f32.mrf.mxu0
  %1309 = vmatprep.mubr.f32.mxu0 %v336
  %1310 = vmatmul.mubr.f32.gmra.mxu0 %v335
  %v1311 = vpop.f32.mrf.mxu0
  %v1312 = vadd.f32 0.0, %v1311
  %v1313 = vpop.f32.mrf.mxu0
  %1314 = vmatprep.mubr.f32.mxu0 %v338
  %1315 = vmatmul.mubr.f32.gmra.mxu0 %v337
  %v1316 = vpop.f32.mrf.mxu0
  %v1317 = vadd.f32 0.0, %v1316
  %v1318 = vpop.f32.mrf.mxu0
  %1319 = vmatprep.mubr.f32.mxu0 %v340
  %1320 = vmatmul.mubr.f32.gmra.mxu0 %v339
  %v1321 = vpop.f32.mrf.mxu0
  %v1322 = vadd.f32 0.0, %v1321
  %v1323 = vpop.f32.mrf.mxu0
  %1324 = vmatprep.mubr.f32.mxu0 %v342
  %1325 = vmatmul.mubr.f32.gmra.mxu0 %v341
  %v1326 = vpop.f32.mrf.mxu0
  %v1327 = vadd.f32 0.0, %v1326
  %v1328 = vpop.f32.mrf.mxu0
  %1329 = vmatprep.mubr.f32.mxu0 %v344
  %1330 = vmatmul.mubr.f32.gmra.mxu0 %v343
  %v1331 = vpop.f32.mrf.mxu0
  %v1332 = vadd.f32 0.0, %v1331
  %v1333 = vpop.f32.mrf.mxu0
  %1334 = vmatprep.mubr.f32.mxu0 %v346
  %1335 = vmatmul.mubr.f32.gmra.mxu0 %v345
  %v1336 = vpop.f32.mrf.mxu0
  %v1337 = vadd.f32 0.0, %v1336
  %v1338 = vpop.f32.mrf.mxu0
  %1339 = vmatprep.mubr.f32.mxu0 %v348
  %1340 = vmatmul.mubr.f32.gmra.mxu0 %v347
  %v1341 = vpop.f32.mrf.mxu0
  %v1342 = vadd.f32 0.0, %v1341
  %v1343 = vpop.f32.mrf.mxu0
  %1344 = vmatprep.mubr.f32.mxu0 %v350
  %1345 = vmatmul.mubr.f32.gmra.mxu0 %v349
  %v1346 = vpop.f32.mrf.mxu0
  %v1347 = vadd.f32 0.0, %v1346
  %v1348 = vpop.f32.mrf.mxu0
  %1349 = vmatprep.mubr.f32.mxu0 %v352
  %1350 = vmatmul.mubr.f32.gmra.mxu0 %v351
  %v1351 = vpop.f32.mrf.mxu0
  %v1352 = vadd.f32 0.0, %v1351
  %v1353 = vpop.f32.mrf.mxu0
  %1354 = vmatprep.mubr.f32.mxu0 %v354
  %1355 = vmatmul.mubr.f32.gmra.mxu0 %v353
  %v1356 = vpop.f32.mrf.mxu0
  %v1357 = vadd.f32 0.0, %v1356
  %v1358 = vpop.f32.mrf.mxu0
  %1359 = vmatprep.mubr.f32.mxu0 %v356
  %1360 = vmatmul.mubr.f32.gmra.mxu0 %v355
  %v1361 = vpop.f32.mrf.mxu0
  %v1362 = vadd.f32 0.0, %v1361
  %v1363 = vpop.f32.mrf.mxu0
  %1364 = vmatprep.mubr.f32.mxu0 %v358
  %1365 = vmatmul.mubr.f32.gmra.mxu0 %v357
  %v1366 = vpop.f32.mrf.mxu0
  %v1367 = vadd.f32 0.0, %v1366
  %v1368 = vpop.f32.mrf.mxu0
  %1369 = vmatprep.mubr.f32.mxu0 %v360
  %1370 = vmatmul.mubr.f32.gmra.mxu0 %v359
  %v1371 = vpop.f32.mrf.mxu0
  %v1372 = vadd.f32 0.0, %v1371
  %v1373 = vpop.f32.mrf.mxu0
  %1374 = vmatprep.mubr.f32.mxu0 %v362
  %1375 = vmatmul.mubr.f32.gmra.mxu0 %v361
  %v1376 = vpop.f32.mrf.mxu0
  %v1377 = vadd.f32 0.0, %v1376
  %v1378 = vpop.f32.mrf.mxu0
  %1379 = vmatprep.mubr.f32.mxu0 %v364
  %1380 = vmatmul.mubr.f32.gmra.mxu0 %v363
  %v1381 = vpop.f32.mrf.mxu0
  %v1382 = vadd.f32 0.0, %v1381
  %v1383 = vpop.f32.mrf.mxu0
  %1384 = vmatprep.mubr.f32.mxu0 %v366
  %1385 = vmatmul.mubr.f32.gmra.mxu0 %v365
  %v1386 = vpop.f32.mrf.mxu0
  %v1387 = vadd.f32 0.0, %v1386
  %v1388 = vpop.f32.mrf.mxu0
  %1389 = vmatprep.mubr.f32.mxu0 %v368
  %1390 = vmatmul.mubr.f32.gmra.mxu0 %v367
  %v1391 = vpop.f32.mrf.mxu0
  %v1392 = vadd.f32 0.0, %v1391
  %v1393 = vpop.f32.mrf.mxu0
  %1394 = vmatprep.mubr.f32.mxu0 %v370
  %1395 = vmatmul.mubr.f32.gmra.mxu0 %v369
  %v1396 = vpop.f32.mrf.mxu0
  %v1397 = vadd.f32 0.0, %v1396
  %v1398 = vpop.f32.mrf.mxu0
  %1399 = vmatprep.mubr.f32.mxu0 %v372
  %1400 = vmatmul.mubr.f32.gmra.mxu0 %v371
  %v1401 = vpop.f32.mrf.mxu0
  %v1402 = vadd.f32 0.0, %v1401
  %v1403 = vpop.f32.mrf.mxu0
  %1404 = vmatprep.mubr.f32.mxu0 %v374
  %1405 = vmatmul.mubr.f32.gmra.mxu0 %v373
  %v1406 = vpop.f32.mrf.mxu0
  %v1407 = vadd.f32 0.0, %v1406
  %v1408 = vpop.f32.mrf.mxu0
  %1409 = vmatprep.mubr.f32.mxu0 %v376
  %1410 = vmatmul.mubr.f32.gmra.mxu0 %v375
  %v1411 = vpop.f32.mrf.mxu0
  %v1412 = vadd.f32 0.0, %v1411
  %v1413 = vpop.f32.mrf.mxu0
  %1414 = vmatprep.mubr.f32.mxu0 %v378
  %1415 = vmatmul.mubr.f32.gmra.mxu0 %v377
  %v1416 = vpop.f32.mrf.mxu0
  %v1417 = vadd.f32 0.0, %v1416
  %v1418 = vpop.f32.mrf.mxu0
  %1419 = vmatprep.mubr.f32.mxu0 %v380
  %1420 = vmatmul.mubr.f32.gmra.mxu0 %v379
  %v1421 = vpop.f32.mrf.mxu0
  %v1422 = vadd.f32 0.0, %v1421
  %v1423 = vpop.f32.mrf.mxu0
  %1424 = vmatprep.mubr.f32.mxu0 %v382
  %1425 = vmatmul.mubr.f32.gmra.mxu0 %v381
  %v1426 = vpop.f32.mrf.mxu0
  %v1427 = vadd.f32 0.0, %v1426
  %v1428 = vpop.f32.mrf.mxu0
  %1429 = vmatprep.mubr.f32.mxu0 %v384
  %1430 = vmatmul.mubr.f32.gmra.mxu0 %v383
  %v1431 = vpop.f32.mrf.mxu0
  %v1432 = vadd.f32 0.0, %v1431
  %v1433 = vpop.f32.mrf.mxu0
  %1434 = vmatprep.mubr.f32.mxu0 %v386
  %1435 = vmatmul.mubr.f32.gmra.mxu0 %v385
  %v1436 = vpop.f32.mrf.mxu0
  %v1437 = vadd.f32 0.0, %v1436
  %v1438 = vpop.f32.mrf.mxu0
  %1439 = vmatprep.mubr.f32.mxu0 %v388
  %1440 = vmatmul.mubr.f32.gmra.mxu0 %v387
  %v1441 = vpop.f32.mrf.mxu0
  %v1442 = vadd.f32 0.0, %v1441
  %v1443 = vpop.f32.mrf.mxu0
  %1444 = vmatprep.mubr.f32.mxu0 %v390
  %1445 = vmatmul.mubr.f32.gmra.mxu0 %v389
  %v1446 = vpop.f32.mrf.mxu0
  %v1447 = vadd.f32 0.0, %v1446
  %v1448 = vpop.f32.mrf.mxu0
  %1449 = vmatprep.mubr.f32.mxu0 %v392
  %1450 = vmatmul.mubr.f32.gmra.mxu0 %v391
  %v1451 = vpop.f32.mrf.mxu0
  %v1452 = vadd.f32 0.0, %v1451
  %v1453 = vpop.f32.mrf.mxu0
  %1454 = vmatprep.mubr.f32.mxu0 %v394
  %1455 = vmatmul.mubr.f32.gmra.mxu0 %v393
  %v1456 = vpop.f32.mrf.mxu0
  %v1457 = vadd.f32 0.0, %v1456
  %v1458 = vpop.f32.mrf.mxu0
  %1459 = vmatprep.mubr.f32.mxu0 %v396
  %1460 = vmatmul.mubr.f32.gmra.mxu0 %v395
  %v1461 = vpop.f32.mrf.mxu0
  %v1462 = vadd.f32 0.0, %v1461
  %v1463 = vpop.f32.mrf.mxu0
  %1464 = vmatprep.mubr.f32.mxu0 %v398
  %1465 = vmatmul.mubr.f32.gmra.mxu0 %v397
  %v1466 = vpop.f32.mrf.mxu0
  %v1467 = vadd.f32 0.0, %v1466
  %v1468 = vpop.f32.mrf.mxu0
  %1469 = vmatprep.mubr.f32.mxu0 %v400
  %1470 = vmatmul.mubr.f32.gmra.mxu0 %v399
  %v1471 = vpop.f32.mrf.mxu0
  %v1472 = vadd.f32 0.0, %v1471
  %v1473 = vpop.f32.mrf.mxu0
  %1474 = vmatprep.mubr.f32.mxu0 %v402
  %1475 = vmatmul.mubr.f32.gmra.mxu0 %v401
  %v1476 = vpop.f32.mrf.mxu0
  %v1477 = vadd.f32 0.0, %v1476
  %v1478 = vpop.f32.mrf.mxu0
  %1479 = vdwg.mxu0
  %v1480 = vtanh.pop %v502
  %v1481 = vtanh.pop %v507
  %v1482 = vtanh.pop %v512
  %v1483 = vtanh.pop %v517
  %v1484 = vtanh.pop %v522
  %v1485 = vtanh.pop %v527
  %v1486 = vtanh.pop %v532
  %v1487 = vtanh.pop %v537
  %v1488 = vtanh.pop %v542
  %v1489 = vtanh.pop %v547
  %v1490 = vtanh.pop %v552
  %v1491 = vtanh.pop %v557
  %v1492 = vtanh.pop %v562
  %v1493 = vtanh.pop %v567
  %v1494 = vtanh.pop %v572
  %v1495 = vtanh.pop %v577
  %v1496 = vtanh.pop %v582
  %v1497 = vtanh.pop %v587
  %v1498 = vtanh.pop %v592
  %v1499 = vtanh.pop %v597
  %v1500 = vtanh.pop %v602
  %v1501 = vtanh.pop %v607
  %v1502 = vtanh.pop %v612
  %v1503 = vtanh.pop %v617
  %v1504 = vtanh.pop %v622
  %v1505 = vtanh.pop %v627
  %v1506 = vtanh.pop %v632
  %v1507 = vtanh.pop %v637
  %v1508 = vtanh.pop %v642
  %v1509 = vtanh.pop %v647
  %v1510 = vtanh.pop %v652
  %v1511 = vtanh.pop %v657
  %v1512 = vtanh.pop %v662
  %v1513 = vtanh.pop %v667
  %v1514 = vtanh.pop %v672
  %v1515 = vtanh.pop %v677
  %v1516 = vtanh.pop %v682
  %v1517 = vtanh.pop %v687
  %v1518 = vtanh.pop %v692
  %v1519 = vtanh.pop %v697
  %v1520 = vtanh.pop %v702
  %v1521 = vtanh.pop %v707
  %v1522 = vtanh.pop %v712
  %v1523 = vtanh.pop %v717
  %v1524 = vtanh.pop %v722
  %v1525 = vtanh.pop %v727
  %v1526 = vtanh.pop %v732
  %v1527 = vtanh.pop %v737
  %v1528 = vtanh.pop %v742
  %v1529 = vtanh.pop %v747
  %v1530 = vtanh.pop %v752
  %v1531 = vtanh.pop %v757
  %v1532 = vtanh.pop %v762
  %v1533 = vtanh.pop %v767
  %v1534 = vtanh.pop %v772
  %v1535 = vtanh.pop %v777
  %v1536 = vtanh.pop %v782
  %v1537 = vtanh.pop %v787
  %v1538 = vtanh.pop %v792
  %v1539 = vtanh.pop %v797
  %v1540 = vtanh.pop %v802
  %v1541 = vtanh.pop %v807
  %v1542 = vtanh.pop %v812
  %v1543 = vtanh.pop %v817
  %v1544 = vtanh.pop %v822
  %v1545 = vtanh.pop %v827
  %v1546 = vtanh.pop %v832
  %v1547 = vtanh.pop %v837
  %v1548 = vtanh.pop %v842
  %v1549 = vtanh.pop %v847
  %v1550 = vtanh.pop %v852
  %v1551 = vtanh.pop %v857
  %v1552 = vtanh.pop %v862
  %v1553 = vtanh.pop %v867
  %v1554 = vtanh.pop %v872
  %v1555 = vtanh.pop %v877
  %v1556 = vtanh.pop %v882
  %v1557 = vtanh.pop %v887
  %v1558 = vtanh.pop %v892
  %v1559 = vtanh.pop %v897
  %v1560 = vtanh.pop %v902
  %v1561 = vtanh.pop %v907
  %v1562 = vtanh.pop %v912
  %v1563 = vtanh.pop %v917
  %v1564 = vtanh.pop %v922
  %v1565 = vtanh.pop %v927
  %v1566 = vtanh.pop %v932
  %v1567 = vtanh.pop %v937
  %v1568 = vtanh.pop %v942
  %v1569 = vtanh.pop %v947
  %v1570 = vtanh.pop %v952
  %v1571 = vtanh.pop %v957
  %v1572 = vtanh.pop %v962
  %v1573 = vtanh.pop %v967
  %v1574 = vtanh.pop %v972
  %v1575 = vtanh.pop %v977
  %v1576 = vtanh.pop %v982
  %v1577 = vtanh.pop %v987
  %v1578 = vtanh.pop %v992
  %v1579 = vtanh.pop %v997
  %v1580 = vtanh.pop %v1002
  %v1581 = vtanh.pop %v1007
  %v1582 = vtanh.pop %v1012
  %v1583 = vtanh.pop %v1017
  %v1584 = vtanh.pop %v1022
  %v1585 = vtanh.pop %v1027
  %v1586 = vtanh.pop %v1032
  %v1587 = vtanh.pop %v1037
  %v1588 = vtanh.pop %v1042
  %v1589 = vtanh.pop %v1047
  %v1590 = vtanh.pop %v1052
  %v1591 = vtanh.pop %v1057
  %v1592 = vtanh.pop %v1062
  %v1593 = vtanh.pop %v1067
  %v1594 = vtanh.pop %v1072
  %v1595 = vtanh.pop %v1077
  %v1596 = vtanh.pop %v1082
  %v1597 = vtanh.pop %v1087
  %v1598 = vtanh.pop %v1092
  %v1599 = vtanh.pop %v1097
  %v1600 = vtanh.pop %v1102
  %v1601 = vtanh.pop %v1107
  %v1602 = vtanh.pop %v1112
  %v1603 = vtanh.pop %v1117
  %v1604 = vtanh.pop %v1122
  %v1605 = vtanh.pop %v1127
  %v1606 = vtanh.pop %v1132
  %v1607 = vtanh.pop %v1137
  %v1608 = vtanh.pop %v1142
  %v1609 = vtanh.pop %v1147
  %v1610 = vtanh.pop %v1152
  %v1611 = vtanh.pop %v1157
  %v1612 = vtanh.pop %v1162
  %v1613 = vtanh.pop %v1167
  %v1614 = vtanh.pop %v1172
  %v1615 = vtanh.pop %v1177
  %v1616 = vtanh.pop %v1182
  %v1617 = vtanh.pop %v1187
  %v1618 = vtanh.pop %v1192
  %v1619 = vtanh.pop %v1197
  %v1620 = vtanh.pop %v1202
  %v1621 = vtanh.pop %v1207
  %v1622 = vtanh.pop %v1212
  %v1623 = vtanh.pop %v1217
  %v1624 = vtanh.pop %v1222
  %v1625 = vtanh.pop %v1227
  %v1626 = vtanh.pop %v1232
  %v1627 = vtanh.pop %v1237
  %v1628 = vtanh.pop %v1242
  %v1629 = vtanh.pop %v1247
  %v1630 = vtanh.pop %v1252
  %v1631 = vtanh.pop %v1257
  %v1632 = vtanh.pop %v1262
  %v1633 = vtanh.pop %v1267
  %v1634 = vtanh.pop %v1272
  %v1635 = vtanh.pop %v1277
  %v1636 = vtanh.pop %v1282
  %v1637 = vtanh.pop %v1287
  %v1638 = vtanh.pop %v1292
  %v1639 = vtanh.pop %v1297
  %v1640 = vtanh.pop %v1302
  %v1641 = vtanh.pop %v1307
  %v1642 = vtanh.pop %v1312
  %v1643 = vtanh.pop %v1317
  %v1644 = vtanh.pop %v1322
  %v1645 = vtanh.pop %v1327
  %v1646 = vtanh.pop %v1332
  %v1647 = vtanh.pop %v1337
  %v1648 = vtanh.pop %v1342
  %v1649 = vtanh.pop %v1347
  %v1650 = vtanh.pop %v1352
  %v1651 = vtanh.pop %v1357
  %v1652 = vtanh.pop %v1362
  %v1653 = vtanh.pop %v1367
  %v1654 = vtanh.pop %v1372
  %v1655 = vtanh.pop %v1377
  %v1656 = vtanh.pop %v1382
  %v1657 = vtanh.pop %v1387
  %v1658 = vtanh.pop %v1392
  %v1659 = vtanh.pop %v1397
  %v1660 = vtanh.pop %v1402
  %v1661 = vtanh.pop %v1407
  %v1662 = vtanh.pop %v1412
  %v1663 = vtanh.pop %v1417
  %v1664 = vtanh.pop %v1422
  %v1665 = vtanh.pop %v1427
  %v1666 = vtanh.pop %v1432
  %v1667 = vtanh.pop %v1437
  %v1668 = vtanh.pop %v1442
  %v1669 = vtanh.pop %v1447
  %v1670 = vtanh.pop %v1452
  %v1671 = vtanh.pop %v1457
  %v1672 = vtanh.pop %v1462
  %v1673 = vtanh.pop %v1467
  %v1674 = vtanh.pop %v1472
  %v1675 = vtanh.pop %v1477
  %vm1676 = vcmask 7168
  %1677 = vst.msk [vmem:[%s2] sm:$0xff] %vm1676, %v1480
  %1678 = vst.msk [vmem:[%s2 + $0x8] sm:$0xff] %vm1676, %v1481
  %1679 = vst.msk [vmem:[%s2 + $0x10] sm:$0xff] %vm1676, %v1482
  %1680 = vst.msk [vmem:[%s2 + $0x18] sm:$0xff] %vm1676, %v1483
  %1681 = vst.msk [vmem:[%s2 + $0x20] sm:$0xff] %vm1676, %v1484
  %1682 = vst.msk [vmem:[%s2 + $0x28] sm:$0xff] %vm1676, %v1485
  %1683 = vst.msk [vmem:[%s2 + $0x30] sm:$0xff] %vm1676, %v1486
  %1684 = vst.msk [vmem:[%s2 + $0x38] sm:$0xff] %vm1676, %v1487
  %1685 = vst.msk [vmem:[%s2 + $0x40] sm:$0xff] %vm1676, %v1488
  %1686 = vst.msk [vmem:[%s2 + $0x48] sm:$0xff] %vm1676, %v1489
  %1687 = vst.msk [vmem:[%s2 + $0x50] sm:$0xff] %vm1676, %v1490
  %1688 = vst.msk [vmem:[%s2 + $0x58] sm:$0xff] %vm1676, %v1491
  %1689 = vst.msk [vmem:[%s2 + $0x60] sm:$0xff] %vm1676, %v1492
  %1690 = vst.msk [vmem:[%s2 + $0x68] sm:$0xff] %vm1676, %v1493
  %1691 = vst.msk [vmem:[%s2 + $0x70] sm:$0xff] %vm1676, %v1494
  %1692 = vst.msk [vmem:[%s2 + $0x78] sm:$0xff] %vm1676, %v1495
  %1693 = vst.msk [vmem:[%s2 + $0x80] sm:$0xff] %vm1676, %v1496
  %1694 = vst.msk [vmem:[%s2 + $0x88] sm:$0xff] %vm1676, %v1497
  %1695 = vst.msk [vmem:[%s2 + $0x90] sm:$0xff] %vm1676, %v1498
  %1696 = vst.msk [vmem:[%s2 + $0x98] sm:$0xff] %vm1676, %v1499
  %1697 = vst.msk [vmem:[%s2 + $0xa0] sm:$0xff] %vm1676, %v1500
  %1698 = vst.msk [vmem:[%s2 + $0xa8] sm:$0xff] %vm1676, %v1501
  %1699 = vst.msk [vmem:[%s2 + $0xb0] sm:$0xff] %vm1676, %v1502
  %1700 = vst.msk [vmem:[%s2 + $0xb8] sm:$0xff] %vm1676, %v1503
  %1701 = vst.msk [vmem:[%s2 + $0xc0] sm:$0xff] %vm1676, %v1504
  %1702 = vst.msk [vmem:[%s2 + $0xc8] sm:$0xff] %vm1676, %v1505
  %1703 = vst.msk [vmem:[%s2 + $0xd0] sm:$0xff] %vm1676, %v1506
  %1704 = vst.msk [vmem:[%s2 + $0xd8] sm:$0xff] %vm1676, %v1507
  %1705 = vst.msk [vmem:[%s2 + $0xe0] sm:$0xff] %vm1676, %v1508
  %1706 = vst.msk [vmem:[%s2 + $0xe8] sm:$0xff] %vm1676, %v1509
  %1707 = vst.msk [vmem:[%s2 + $0xf0] sm:$0xff] %vm1676, %v1510
  %1708 = vst.msk [vmem:[%s2 + $0xf8] sm:$0xff] %vm1676, %v1511
  %1709 = vst.msk [vmem:[%s2 + $0x100] sm:$0xff] %vm1676, %v1512
  %1710 = vst.msk [vmem:[%s2 + $0x108] sm:$0xff] %vm1676, %v1513
  %1711 = vst.msk [vmem:[%s2 + $0x110] sm:$0xff] %vm1676, %v1514
  %1712 = vst.msk [vmem:[%s2 + $0x118] sm:$0xff] %vm1676, %v1515
  %1713 = vst.msk [vmem:[%s2 + $0x120] sm:$0xff] %vm1676, %v1516
  %1714 = vst.msk [vmem:[%s2 + $0x128] sm:$0xff] %vm1676, %v1517
  %1715 = vst.msk [vmem:[%s2 + $0x130] sm:$0xff] %vm1676, %v1518
  %1716 = vst.msk [vmem:[%s2 + $0x138] sm:$0xff] %vm1676, %v1519
  %1717 = vst.msk [vmem:[%s2 + $0x140] sm:$0xff] %vm1676, %v1520
  %1718 = vst.msk [vmem:[%s2 + $0x148] sm:$0xff] %vm1676, %v1521
  %1719 = vst.msk [vmem:[%s2 + $0x150] sm:$0xff] %vm1676, %v1522
  %1720 = vst.msk [vmem:[%s2 + $0x158] sm:$0xff] %vm1676, %v1523
  %1721 = vst.msk [vmem:[%s2 + $0x160] sm:$0xff] %vm1676, %v1524
  %1722 = vst.msk [vmem:[%s2 + $0x168] sm:$0xff] %vm1676, %v1525
  %1723 = vst.msk [vmem:[%s2 + $0x170] sm:$0xff] %vm1676, %v1526
  %1724 = vst.msk [vmem:[%s2 + $0x178] sm:$0xff] %vm1676, %v1527
  %1725 = vst.msk [vmem:[%s2 + $0x180] sm:$0xff] %vm1676, %v1528
  %1726 = vst.msk [vmem:[%s2 + $0x188] sm:$0xff] %vm1676, %v1529
  %1727 = vst.msk [vmem:[%s2 + $0x190] sm:$0xff] %vm1676, %v1530
  %1728 = vst.msk [vmem:[%s2 + $0x198] sm:$0xff] %vm1676, %v1531
  %1729 = vst.msk [vmem:[%s2 + $0x1a0] sm:$0xff] %vm1676, %v1532
  %1730 = vst.msk [vmem:[%s2 + $0x1a8] sm:$0xff] %vm1676, %v1533
  %1731 = vst.msk [vmem:[%s2 + $0x1b0] sm:$0xff] %vm1676, %v1534
  %1732 = vst.msk [vmem:[%s2 + $0x1b8] sm:$0xff] %vm1676, %v1535
  %1733 = vst.msk [vmem:[%s2 + $0x1c0] sm:$0xff] %vm1676, %v1536
  %1734 = vst.msk [vmem:[%s2 + $0x1c8] sm:$0xff] %vm1676, %v1537
  %1735 = vst.msk [vmem:[%s2 + $0x1d0] sm:$0xff] %vm1676, %v1538
  %1736 = vst.msk [vmem:[%s2 + $0x1d8] sm:$0xff] %vm1676, %v1539
  %1737 = vst.msk [vmem:[%s2 + $0x1e0] sm:$0xff] %vm1676, %v1540
  %1738 = vst.msk [vmem:[%s2 + $0x1e8] sm:$0xff] %vm1676, %v1541
  %1739 = vst.msk [vmem:[%s2 + $0x1f0] sm:$0xff] %vm1676, %v1542
  %1740 = vst.msk [vmem:[%s2 + $0x1f8] sm:$0xff] %vm1676, %v1543
  %1741 = vst.msk [vmem:[%s2 + $0x200] sm:$0xff] %vm1676, %v1544
  %1742 = vst.msk [vmem:[%s2 + $0x208] sm:$0xff] %vm1676, %v1545
  %1743 = vst.msk [vmem:[%s2 + $0x210] sm:$0xff] %vm1676, %v1546
  %1744 = vst.msk [vmem:[%s2 + $0x218] sm:$0xff] %vm1676, %v1547
  %1745 = vst.msk [vmem:[%s2 + $0x220] sm:$0xff] %vm1676, %v1548
  %1746 = vst.msk [vmem:[%s2 + $0x228] sm:$0xff] %vm1676, %v1549
  %1747 = vst.msk [vmem:[%s2 + $0x230] sm:$0xff] %vm1676, %v1550
  %1748 = vst.msk [vmem:[%s2 + $0x238] sm:$0xff] %vm1676, %v1551
  %1749 = vst.msk [vmem:[%s2 + $0x240] sm:$0xff] %vm1676, %v1552
  %1750 = vst.msk [vmem:[%s2 + $0x248] sm:$0xff] %vm1676, %v1553
  %1751 = vst.msk [vmem:[%s2 + $0x250] sm:$0xff] %vm1676, %v1554
  %1752 = vst.msk [vmem:[%s2 + $0x258] sm:$0xff] %vm1676, %v1555
  %1753 = vst.msk [vmem:[%s2 + $0x260] sm:$0xff] %vm1676, %v1556
  %1754 = vst.msk [vmem:[%s2 + $0x268] sm:$0xff] %vm1676, %v1557
  %1755 = vst.msk [vmem:[%s2 + $0x270] sm:$0xff] %vm1676, %v1558
  %1756 = vst.msk [vmem:[%s2 + $0x278] sm:$0xff] %vm1676, %v1559
  %1757 = vst.msk [vmem:[%s2 + $0x280] sm:$0xff] %vm1676, %v1560
  %1758 = vst.msk [vmem:[%s2 + $0x288] sm:$0xff] %vm1676, %v1561
  %1759 = vst.msk [vmem:[%s2 + $0x290] sm:$0xff] %vm1676, %v1562
  %1760 = vst.msk [vmem:[%s2 + $0x298] sm:$0xff] %vm1676, %v1563
  %1761 = vst.msk [vmem:[%s2 + $0x2a0] sm:$0xff] %vm1676, %v1564
  %1762 = vst.msk [vmem:[%s2 + $0x2a8] sm:$0xff] %vm1676, %v1565
  %1763 = vst.msk [vmem:[%s2 + $0x2b0] sm:$0xff] %vm1676, %v1566
  %1764 = vst.msk [vmem:[%s2 + $0x2b8] sm:$0xff] %vm1676, %v1567
  %1765 = vst.msk [vmem:[%s2 + $0x2c0] sm:$0xff] %vm1676, %v1568
  %1766 = vst.msk [vmem:[%s2 + $0x2c8] sm:$0xff] %vm1676, %v1569
  %1767 = vst.msk [vmem:[%s2 + $0x2d0] sm:$0xff] %vm1676, %v1570
  %1768 = vst.msk [vmem:[%s2 + $0x2d8] sm:$0xff] %vm1676, %v1571
  %1769 = vst.msk [vmem:[%s2 + $0x2e0] sm:$0xff] %vm1676, %v1572
  %1770 = vst.msk [vmem:[%s2 + $0x2e8] sm:$0xff] %vm1676, %v1573
  %1771 = vst.msk [vmem:[%s2 + $0x2f0] sm:$0xff] %vm1676, %v1574
  %1772 = vst.msk [vmem:[%s2 + $0x2f8] sm:$0xff] %vm1676, %v1575
  %1773 = vst.msk [vmem:[%s2 + $0x300] sm:$0xff] %vm1676, %v1576
  %1774 = vst.msk [vmem:[%s2 + $0x308] sm:$0xff] %vm1676, %v1577
  %1775 = vst.msk [vmem:[%s2 + $0x310] sm:$0xff] %vm1676, %v1578
  %1776 = vst.msk [vmem:[%s2 + $0x318] sm:$0xff] %vm1676, %v1579
  %1777 = vst.msk [vmem:[%s2 + $0x320] sm:$0xff] %vm1676, %v1580
  %1778 = vst.msk [vmem:[%s2 + $0x328] sm:$0xff] %vm1676, %v1581
  %1779 = vst.msk [vmem:[%s2 + $0x330] sm:$0xff] %vm1676, %v1582
  %1780 = vst.msk [vmem:[%s2 + $0x338] sm:$0xff] %vm1676, %v1583
  %1781 = vst.msk [vmem:[%s2 + $0x340] sm:$0xff] %vm1676, %v1584
  %1782 = vst.msk [vmem:[%s2 + $0x348] sm:$0xff] %vm1676, %v1585
  %1783 = vst.msk [vmem:[%s2 + $0x350] sm:$0xff] %vm1676, %v1586
  %1784 = vst.msk [vmem:[%s2 + $0x358] sm:$0xff] %vm1676, %v1587
  %1785 = vst.msk [vmem:[%s2 + $0x360] sm:$0xff] %vm1676, %v1588
  %1786 = vst.msk [vmem:[%s2 + $0x368] sm:$0xff] %vm1676, %v1589
  %1787 = vst.msk [vmem:[%s2 + $0x370] sm:$0xff] %vm1676, %v1590
  %1788 = vst.msk [vmem:[%s2 + $0x378] sm:$0xff] %vm1676, %v1591
  %1789 = vst.msk [vmem:[%s2 + $0x380] sm:$0xff] %vm1676, %v1592
  %1790 = vst.msk [vmem:[%s2 + $0x388] sm:$0xff] %vm1676, %v1593
  %1791 = vst.msk [vmem:[%s2 + $0x390] sm:$0xff] %vm1676, %v1594
  %1792 = vst.msk [vmem:[%s2 + $0x398] sm:$0xff] %vm1676, %v1595
  %1793 = vst.msk [vmem:[%s2 + $0x3a0] sm:$0xff] %vm1676, %v1596
  %1794 = vst.msk [vmem:[%s2 + $0x3a8] sm:$0xff] %vm1676, %v1597
  %1795 = vst.msk [vmem:[%s2 + $0x3b0] sm:$0xff] %vm1676, %v1598
  %1796 = vst.msk [vmem:[%s2 + $0x3b8] sm:$0xff] %vm1676, %v1599
  %1797 = vst.msk [vmem:[%s2 + $0x3c0] sm:$0xff] %vm1676, %v1600
  %1798 = vst.msk [vmem:[%s2 + $0x3c8] sm:$0xff] %vm1676, %v1601
  %1799 = vst.msk [vmem:[%s2 + $0x3d0] sm:$0xff] %vm1676, %v1602
  %1800 = vst.msk [vmem:[%s2 + $0x3d8] sm:$0xff] %vm1676, %v1603
  %1801 = vst.msk [vmem:[%s2 + $0x3e0] sm:$0xff] %vm1676, %v1604
  %1802 = vst.msk [vmem:[%s2 + $0x3e8] sm:$0xff] %vm1676, %v1605
  %1803 = vst.msk [vmem:[%s2 + $0x3f0] sm:$0xff] %vm1676, %v1606
  %1804 = vst.msk [vmem:[%s2 + $0x3f8] sm:$0xff] %vm1676, %v1607
  %1805 = vst.msk [vmem:[%s2 + $0x400] sm:$0xff] %vm1676, %v1608
  %1806 = vst.msk [vmem:[%s2 + $0x408] sm:$0xff] %vm1676, %v1609
  %1807 = vst.msk [vmem:[%s2 + $0x410] sm:$0xff] %vm1676, %v1610
  %1808 = vst.msk [vmem:[%s2 + $0x418] sm:$0xff] %vm1676, %v1611
  %1809 = vst.msk [vmem:[%s2 + $0x420] sm:$0xff] %vm1676, %v1612
  %1810 = vst.msk [vmem:[%s2 + $0x428] sm:$0xff] %vm1676, %v1613
  %1811 = vst.msk [vmem:[%s2 + $0x430] sm:$0xff] %vm1676, %v1614
  %1812 = vst.msk [vmem:[%s2 + $0x438] sm:$0xff] %vm1676, %v1615
  %1813 = vst.msk [vmem:[%s2 + $0x440] sm:$0xff] %vm1676, %v1616
  %1814 = vst.msk [vmem:[%s2 + $0x448] sm:$0xff] %vm1676, %v1617
  %1815 = vst.msk [vmem:[%s2 + $0x450] sm:$0xff] %vm1676, %v1618
  %1816 = vst.msk [vmem:[%s2 + $0x458] sm:$0xff] %vm1676, %v1619
  %1817 = vst.msk [vmem:[%s2 + $0x460] sm:$0xff] %vm1676, %v1620
  %1818 = vst.msk [vmem:[%s2 + $0x468] sm:$0xff] %vm1676, %v1621
  %1819 = vst.msk [vmem:[%s2 + $0x470] sm:$0xff] %vm1676, %v1622
  %1820 = vst.msk [vmem:[%s2 + $0x478] sm:$0xff] %vm1676, %v1623
  %1821 = vst.msk [vmem:[%s2 + $0x480] sm:$0xff] %vm1676, %v1624
  %1822 = vst.msk [vmem:[%s2 + $0x488] sm:$0xff] %vm1676, %v1625
  %1823 = vst.msk [vmem:[%s2 + $0x490] sm:$0xff] %vm1676, %v1626
  %1824 = vst.msk [vmem:[%s2 + $0x498] sm:$0xff] %vm1676, %v1627
  %1825 = vst.msk [vmem:[%s2 + $0x4a0] sm:$0xff] %vm1676, %v1628
  %1826 = vst.msk [vmem:[%s2 + $0x4a8] sm:$0xff] %vm1676, %v1629
  %1827 = vst.msk [vmem:[%s2 + $0x4b0] sm:$0xff] %vm1676, %v1630
  %1828 = vst.msk [vmem:[%s2 + $0x4b8] sm:$0xff] %vm1676, %v1631
  %1829 = vst.msk [vmem:[%s2 + $0x4c0] sm:$0xff] %vm1676, %v1632
  %1830 = vst.msk [vmem:[%s2 + $0x4c8] sm:$0xff] %vm1676, %v1633
  %1831 = vst.msk [vmem:[%s2 + $0x4d0] sm:$0xff] %vm1676, %v1634
  %1832 = vst.msk [vmem:[%s2 + $0x4d8] sm:$0xff] %vm1676, %v1635
  %1833 = vst.msk [vmem:[%s2 + $0x4e0] sm:$0xff] %vm1676, %v1636
  %1834 = vst.msk [vmem:[%s2 + $0x4e8] sm:$0xff] %vm1676, %v1637
  %1835 = vst.msk [vmem:[%s2 + $0x4f0] sm:$0xff] %vm1676, %v1638
  %1836 = vst.msk [vmem:[%s2 + $0x4f8] sm:$0xff] %vm1676, %v1639
  %1837 = vst.msk [vmem:[%s2 + $0x500] sm:$0xff] %vm1676, %v1640
  %1838 = vst.msk [vmem:[%s2 + $0x508] sm:$0xff] %vm1676, %v1641
  %1839 = vst.msk [vmem:[%s2 + $0x510] sm:$0xff] %vm1676, %v1642
  %1840 = vst.msk [vmem:[%s2 + $0x518] sm:$0xff] %vm1676, %v1643
  %1841 = vst.msk [vmem:[%s2 + $0x520] sm:$0xff] %vm1676, %v1644
  %1842 = vst.msk [vmem:[%s2 + $0x528] sm:$0xff] %vm1676, %v1645
  %1843 = vst.msk [vmem:[%s2 + $0x530] sm:$0xff] %vm1676, %v1646
  %1844 = vst.msk [vmem:[%s2 + $0x538] sm:$0xff] %vm1676, %v1647
  %1845 = vst.msk [vmem:[%s2 + $0x540] sm:$0xff] %vm1676, %v1648
  %1846 = vst.msk [vmem:[%s2 + $0x548] sm:$0xff] %vm1676, %v1649
  %1847 = vst.msk [vmem:[%s2 + $0x550] sm:$0xff] %vm1676, %v1650
  %1848 = vst.msk [vmem:[%s2 + $0x558] sm:$0xff] %vm1676, %v1651
  %1849 = vst.msk [vmem:[%s2 + $0x560] sm:$0xff] %vm1676, %v1652
  %1850 = vst.msk [vmem:[%s2 + $0x568] sm:$0xff] %vm1676, %v1653
  %1851 = vst.msk [vmem:[%s2 + $0x570] sm:$0xff] %vm1676, %v1654
  %1852 = vst.msk [vmem:[%s2 + $0x578] sm:$0xff] %vm1676, %v1655
  %1853 = vst.msk [vmem:[%s2 + $0x580] sm:$0xff] %vm1676, %v1656
  %1854 = vst.msk [vmem:[%s2 + $0x588] sm:$0xff] %vm1676, %v1657
  %1855 = vst.msk [vmem:[%s2 + $0x590] sm:$0xff] %vm1676, %v1658
  %1856 = vst.msk [vmem:[%s2 + $0x598] sm:$0xff] %vm1676, %v1659
  %1857 = vst.msk [vmem:[%s2 + $0x5a0] sm:$0xff] %vm1676, %v1660
  %1858 = vst.msk [vmem:[%s2 + $0x5a8] sm:$0xff] %vm1676, %v1661
  %1859 = vst.msk [vmem:[%s2 + $0x5b0] sm:$0xff] %vm1676, %v1662
  %1860 = vst.msk [vmem:[%s2 + $0x5b8] sm:$0xff] %vm1676, %v1663
  %1861 = vst.msk [vmem:[%s2 + $0x5c0] sm:$0xff] %vm1676, %v1664
  %1862 = vst.msk [vmem:[%s2 + $0x5c8] sm:$0xff] %vm1676, %v1665
  %1863 = vst.msk [vmem:[%s2 + $0x5d0] sm:$0xff] %vm1676, %v1666
  %1864 = vst.msk [vmem:[%s2 + $0x5d8] sm:$0xff] %vm1676, %v1667
  %1865 = vst.msk [vmem:[%s2 + $0x5e0] sm:$0xff] %vm1676, %v1668
  %1866 = vst.msk [vmem:[%s2 + $0x5e8] sm:$0xff] %vm1676, %v1669
  %1867 = vst.msk [vmem:[%s2 + $0x5f0] sm:$0xff] %vm1676, %v1670
  %1868 = vst.msk [vmem:[%s2 + $0x5f8] sm:$0xff] %vm1676, %v1671
  %1869 = vst.msk [vmem:[%s2 + $0x600] sm:$0xff] %vm1676, %v1672
  %1870 = vst.msk [vmem:[%s2 + $0x608] sm:$0xff] %vm1676, %v1673
  %1871 = vst.msk [vmem:[%s2 + $0x610] sm:$0xff] %vm1676, %v1674
  %1872 = vst.msk [vmem:[%s2 + $0x618] sm:$0xff] %vm1676, %v1675
  // Predicated region
  $region10: #{generator_forward.7} parent=0 // pred_check
    _
  $region11: #{generator_forward.7} parent=0 // pred_check_branch
    %1874 = sbr.rel (0) target = $region13
  $region12: #{generator_forward.7} parent=0 // pred_region
    _
  $region13: #{generator_forward.7} parent=0 // pred_fallthru
    _
  // Predicated region
  $region14: #{generator_forward.7} parent=0 // pred_check
    _
  $region15: #{generator_forward.7} parent=0 // pred_check_branch
    %1876 = sbr.rel (0) target = $region17
  $region16: #{generator_forward.7} parent=0 // pred_region
    _
  $region17: #{generator_forward.7} parent=0 // pred_fallthru
    _

</llo_original>
